<compile_context>
chip_gen: v6e
topology: v6e:2x2x1
jax: 0.10.0
libtpu: 0.0.40
codegen_flags: <defaults>
</compile_context>

<pallas_src>
import functools

import jax
import jax.numpy as jnp
from jax import lax
from jax.experimental import pallas as pl
from jax.experimental.pallas import tpu as pltpu


def _round_up(x, m):
    return (x + m - 1) // m * m


# ---------------------------------------------------------------------------
# Fused Pallas kernel: conv1..conv4 (+ReLU) and the output conv, one image.
# ---------------------------------------------------------------------------
def _head_kernel(x_ref, w1, w2, w3, w4, w5, b1, b2, b3, b4, b5,
                 o_ref, s0, sa, sb, *, H, W, pad_a, row_chunk):
    # x_ref : (1, H*W, Cin)            bf16, flattened NHWC image
    # w*    : (9, Cin_l, Cout_l)       bf16, 3x3 taps flattened on dim 0
    # b*    : (1, Cout_l)              f32
    # o_ref : (1, H*W, Cout_padded)    f32
    # s0/sa/sb : (n_tot, C) bf16 scratch with `pad_a` zero halo rows top/bottom.
    M = H * W

    # Zero ONLY the halo rows; interiors are fully overwritten below.
    s0[:pad_a, :] = jnp.zeros((pad_a, s0.shape[1]), s0.dtype)
    s0[pad_a + M:, :] = jnp.zeros((s0.shape[0] - pad_a - M, s0.shape[1]), s0.dtype)
    sa[:pad_a, :] = jnp.zeros((pad_a, sa.shape[1]), sa.dtype)
    sa[pad_a + M:, :] = jnp.zeros((sa.shape[0] - pad_a - M, sa.shape[1]), sa.dtype)
    sb[:pad_a, :] = jnp.zeros((pad_a, sb.shape[1]), sb.dtype)
    sb[pad_a + M:, :] = jnp.zeros((sb.shape[0] - pad_a - M, sb.shape[1]), sb.dtype)

    # Stage the input image into the zero-padded flat buffer.
    s0[pad_a:pad_a + M, :] = x_ref[0]

    def conv3x3_rows(src, w_ref, b_ref, relu, r0, rows):
        """3x3 conv for flattened output rows [r0, r0+rows)."""
        cout = w_ref.shape[-1]
        # Column index of every output pixel in this row chunk (hoisted).
        col = (lax.broadcasted_iota(jnp.int32, (rows, 1), 0) + r0) % W
        not_left = col != 0            # zero the left-neighbor tap at column 0
        not_right = col != (W - 1)     # zero the right-neighbor tap at col W-1
        zero = jnp.zeros((), src.dtype)
        # Accumulator starts from the broadcast bias: no zeros fill and no
        # separate (rows, cout) bias-add pass.
        acc = jnp.broadcast_to(b_ref[...], (rows, cout)).astype(jnp.float32)
        # TODO(synk): pack the 3 kx taps into one K=3*Cin contraction (and use
        # the v7x MRB in-place accumulate) to cut the per-layer f32 adds.
        # TODO(synk): derive the kx=0/2 operands with pltpu.roll(xs, +-1, axis=0)
        # (wrap-around row is already masked) once sublane rotate of packed
        # bf16 is verified on the target toolchain.
        for ky in range(3):
            for kx in range(3):
                # Flat shift of (ky-1, kx-1); rows outside the image land in
                # the zeroed halo, column wrap-around is masked out.
                off = pad_a + r0 + (ky - 1) * W + (kx - 1)
                xs = src[off:off + rows, :]
                if kx == 0:
                    xs = jnp.where(not_left, xs, zero)
                elif kx == 2:
                    xs = jnp.where(not_right, xs, zero)
                acc = acc + jnp.dot(xs, w_ref[3 * ky + kx],
                                    preferred_element_type=jnp.float32)
        if relu:
            acc = jnp.maximum(acc, 0.0)
        return acc

    def run_layer(src, dst, w_ref, b_ref, relu):
        # Row-chunked: bounds the live f32 accumulator and, for the final
        # layer (dst is None -> o_ref), stores chunks as they are produced so
        # the output write-back overlaps the remaining matmuls.
        for r0 in range(0, M, row_chunk):
            rows = min(row_chunk, M - r0)
            acc = conv3x3_rows(src, w_ref, b_ref, relu, r0, rows)
            if dst is None:
                o_ref[0, r0:r0 + rows, :] = acc
            else:
                dst[pad_a + r0:pad_a + r0 + rows, :] = acc.astype(dst.dtype)

    # Layer pipeline, ping-ponging between the two feature-size buffers.
    run_layer(s0, sa, w1, b1, True)
    run_layer(sa, sb, w2, b2, True)
    run_layer(sb, sa, w3, b3, True)
    run_layer(sa, sb, w4, b4, True)
    run_layer(sb, None, w5, b5, False)


# ---------------------------------------------------------------------------
# Wrappers
# ---------------------------------------------------------------------------
def classification_head_nhwc(x_nhwc, params, out_channels):
    """Fused head on an NHWC input; returns NHWC f32 output (no transposes)."""
    B, H, W, Cin = x_nhwc.shape
    M = H * W
    pad_a = _round_up(W + 1, 16)           # halo size, sublane aligned, >= W+1
    n_tot = 2 * pad_a + M
    row_chunk = M if M <= 1024 else 1024   # chunk size for the in-kernel M loop

    x_flat = x_nhwc.reshape(B, M, Cin).astype(jnp.bfloat16)

    n_layers = len(params)
    ws, bs = [], []
    for i, (w, b) in enumerate(params):
        cin_l, cout_l = w.shape[2], w.shape[3]
        if i == n_layers - 1:
            # Lane-dense final stores: pad Cout up to a multiple of 128
            # (padded channels are sliced off below).
            cpad = _round_up(cout_l, 128)
            w = jnp.pad(w, ((0, 0), (0, 0), (0, 0), (0, cpad - cout_l)))
            b = jnp.pad(b, (0, cpad - cout_l))
            cout_l = cpad
        ws.append(jnp.reshape(w, (9, cin_l, cout_l)).astype(jnp.bfloat16))
        bs.append(jnp.reshape(b, (1, cout_l)).astype(jnp.float32))

    feat = ws[0].shape[-1]          # feature_size
    cout_pad = ws[-1].shape[-1]     # padded output channels

    # Grid-invariant weights / biases: whole-array VMEM residents (single
    # copy, no per-grid-step double buffering).
    const_spec = pl.BlockSpec(memory_space=pltpu.MemorySpace.VMEM)

    kernel = functools.partial(_head_kernel, H=H, W=W, pad_a=pad_a,
                               row_chunk=row_chunk)

    # TODO(synk): for production FPN resolutions add a row-tiled grid axis
    # (halo rows re-fetched per tile) so whole-image blocks need not fit
    # v7x's 64 MiB VMEM and both TensorCores split work even at B=1; size
    # vmem_limit_bytes per chip generation at that point.
    out_flat = pl.pallas_call(
        kernel,
        out_shape=jax.ShapeDtypeStruct((B, M, cout_pad), jnp.float32),
        grid_spec=pltpu.PrefetchScalarGridSpec(
            num_scalar_prefetch=0,
            grid=(B,),
            in_specs=[pl.BlockSpec((1, M, Cin), lambda bi: (bi, 0, 0))]
                     + [const_spec] * (2 * n_layers),
            out_specs=pl.BlockSpec((1, M, cout_pad), lambda bi: (bi, 0, 0)),
            scratch_shapes=[
                pltpu.VMEM((n_tot, Cin), jnp.bfloat16),
                pltpu.VMEM((n_tot, feat), jnp.bfloat16),
                pltpu.VMEM((n_tot, feat), jnp.bfloat16),
            ]),
        compiler_params=pltpu.CompilerParams(
            dimension_semantics=("parallel",),
            vmem_limit_bytes=48 * 1024 * 1024),
    )(x_flat, *ws, *bs)

    return out_flat[:, :, :out_channels].reshape(B, H, W, out_channels)


def classification_head(x_nchw, params, out_channels):
    # NCHW adapter kept for parity with the PyTorch module.
    # TODO(synk): production callers should use classification_head_nhwc
    # directly to avoid these two extra HBM transpose passes at the boundary.
    x_nhwc = jnp.transpose(x_nchw, (0, 2, 3, 1))
    out = classification_head_nhwc(x_nhwc, params, out_channels)
    return jnp.transpose(out, (0, 3, 1, 2))


# ---------------------------------------------------------------------------
# ClassificationModel (RetinaNet classification head)
# ---------------------------------------------------------------------------
class ClassificationModelPallas:
    def __init__(self, num_features_in, num_anchors=9, num_classes=80,
                 prior=0.01, feature_size=256, key=jax.random.PRNGKey(0)):
        self.num_anchors = num_anchors
        self.num_classes = num_classes
        chans = [
            (num_features_in, feature_size),             # conv1
            (feature_size, feature_size),                # conv2
            (feature_size, feature_size),                # conv3
            (feature_size, feature_size),                # conv4
            (feature_size, num_anchors * num_classes),   # output
        ]
        self.params = []
        for i, (cin, cout) in enumerate(chans):
            kw_key, kb_key = jax.random.split(jax.random.fold_in(key, i))
            bound = 1.0 / float(jnp.sqrt(9.0 * cin))
            w = jax.random.uniform(kw_key, (3, 3, cin, cout), jnp.float32,
                                   minval=-bound, maxval=bound)
            b = jax.random.uniform(kb_key, (cout,), jnp.float32,
                                   minval=-bound, maxval=bound)
            self.params.append((w, b))

    def __call__(self, x_nchw):
        return classification_head(x_nchw, self.params,
                                   self.num_anchors * self.num_classes)


# ---------------------------------------------------------------------------
# Pure-JAX reference with matching bf16 quantization points (correctness).
# ---------------------------------------------------------------------------
def _ref_forward(params, x_nchw):
    out = jnp.transpose(x_nchw, (0, 2, 3, 1)).astype(jnp.bfloat16)
    n = len(params)
    for i, (w, b) in enumerate(params):
        out = lax.conv_general_dilated(
            out, w.astype(jnp.bfloat16), window_strides=(1, 1), padding="SAME",
            dimension_numbers=("NHWC", "HWIO", "NHWC"),
            preferred_element_type=jnp.float32)
        out = out + b
        if i < n - 1:
            out = jnp.maximum(out, 0.0).astype(jnp.bfloat16)
    return jnp.transpose(out, (0, 3, 1, 2))


if __name__ == "__main__":
    key = jax.random.PRNGKey(0)
    k_param, k_x = jax.random.split(key)

    # Small shapes consistent with the module's forward pass.
    B, Cin, H, W = 2, 16, 8, 8
    feature_size = 32
    num_anchors, num_classes = 9, 8   # output channels = 72 (padded to 128 inside)

    model = ClassificationModelPallas(
        num_features_in=Cin, num_anchors=num_anchors, num_classes=num_classes,
        feature_size=feature_size, key=k_param)

    x = jax.random.normal(k_x, (B, Cin, H, W), jnp.float32)

    out = jax.block_until_ready(model(x))
    assert out.shape == (B, num_anchors * num_classes, H, W), out.shape

    ref = jax.block_until_ready(_ref_forward(model.params, x))
    max_err = float(jnp.max(jnp.abs(out - ref)))
    assert max_err < 5e-3, f"max abs error {max_err}"

    print("KERNEL_OK")
</pallas_src>

<mosaic_0001>
module attributes {stable_mosaic.version = 11 : i64} {
  func.func @_head_kernel(%arg0: i32, %arg1: memref<1x64x16xbf16, #tpu.memory_space<vmem>>, %arg2: memref<9x16x32xbf16, #tpu.memory_space<vmem>>, %arg3: memref<9x32x32xbf16, #tpu.memory_space<vmem>>, %arg4: memref<9x32x32xbf16, #tpu.memory_space<vmem>>, %arg5: memref<9x32x32xbf16, #tpu.memory_space<vmem>>, %arg6: memref<9x32x128xbf16, #tpu.memory_space<vmem>>, %arg7: memref<1x32xf32, #tpu.memory_space<vmem>>, %arg8: memref<1x32xf32, #tpu.memory_space<vmem>>, %arg9: memref<1x32xf32, #tpu.memory_space<vmem>>, %arg10: memref<1x32xf32, #tpu.memory_space<vmem>>, %arg11: memref<1x128xf32, #tpu.memory_space<vmem>>, %arg12: memref<1x64x128xf32, #tpu.memory_space<vmem>>, %arg13: memref<96x16xbf16, #tpu.memory_space<vmem>>, %arg14: memref<96x32xbf16, #tpu.memory_space<vmem>>, %arg15: memref<96x32xbf16, #tpu.memory_space<vmem>>) attributes {dimension_semantics = [#tpu.dimension_semantics<parallel>], iteration_bounds = array<i64: 2>, scalar_prefetch = 0 : i64, scratch_operands = 3 : i64, tpu.core_type = #tpu.core_type<tc>, window_params = [{transform_indices = @transform_0, window_bounds = array<i64: 1, 64, 16>}, {pipeline_mode = #tpu.pipeline_mode<synchronous>, transform_indices = @transform_1, window_bounds = array<i64: 9, 16, 32>}, {pipeline_mode = #tpu.pipeline_mode<synchronous>, transform_indices = @transform_2, window_bounds = array<i64: 9, 32, 32>}, {pipeline_mode = #tpu.pipeline_mode<synchronous>, transform_indices = @transform_3, window_bounds = array<i64: 9, 32, 32>}, {pipeline_mode = #tpu.pipeline_mode<synchronous>, transform_indices = @transform_4, window_bounds = array<i64: 9, 32, 32>}, {pipeline_mode = #tpu.pipeline_mode<synchronous>, transform_indices = @transform_5, window_bounds = array<i64: 9, 32, 128>}, {pipeline_mode = #tpu.pipeline_mode<synchronous>, transform_indices = @transform_6, window_bounds = array<i64: 1, 32>}, {pipeline_mode = #tpu.pipeline_mode<synchronous>, transform_indices = @transform_7, window_bounds = array<i64: 1, 32>}, {pipeline_mode = #tpu.pipeline_mode<synchronous>, transform_indices = @transform_8, window_bounds = array<i64: 1, 32>}, {pipeline_mode = #tpu.pipeline_mode<synchronous>, transform_indices = @transform_9, window_bounds = array<i64: 1, 32>}, {pipeline_mode = #tpu.pipeline_mode<synchronous>, transform_indices = @transform_10, window_bounds = array<i64: 1, 128>}, {transform_indices = @transform_11, window_bounds = array<i64: 1, 64, 128>}]} {
    %cst = arith.constant 0.000000e+00 : bf16
    %0 = vector.broadcast %cst : bf16 to vector<16x16xbf16>
    %c0 = arith.constant 0 : index
    %c0_0 = arith.constant 0 : index
    %1 = vector.load %arg13[%c0, %c0_0] : memref<96x16xbf16, #tpu.memory_space<vmem>>, vector<16x16xbf16>
    tpu.vector_store %arg13[%c0, %c0_0], %0 {strides = array<i32>} : memref<96x16xbf16, #tpu.memory_space<vmem>>, vector<16x16xbf16>,
    %cst_1 = arith.constant 0.000000e+00 : bf16
    %2 = vector.broadcast %cst_1 : bf16 to vector<16x16xbf16>
    %c80 = arith.constant 80 : index
    %c0_2 = arith.constant 0 : index
    %3 = vector.load %arg13[%c80, %c0_2] : memref<96x16xbf16, #tpu.memory_space<vmem>>, vector<16x16xbf16>
    tpu.vector_store %arg13[%c80, %c0_2], %2 {strides = array<i32>} : memref<96x16xbf16, #tpu.memory_space<vmem>>, vector<16x16xbf16>,
    %cst_3 = arith.constant 0.000000e+00 : bf16
    %4 = vector.broadcast %cst_3 : bf16 to vector<16x32xbf16>
    %c0_4 = arith.constant 0 : index
    %c0_5 = arith.constant 0 : index
    %5 = vector.load %arg14[%c0_4, %c0_5] : memref<96x32xbf16, #tpu.memory_space<vmem>>, vector<16x32xbf16>
    tpu.vector_store %arg14[%c0_4, %c0_5], %4 {strides = array<i32>} : memref<96x32xbf16, #tpu.memory_space<vmem>>, vector<16x32xbf16>,
    %cst_6 = arith.constant 0.000000e+00 : bf16
    %6 = vector.broadcast %cst_6 : bf16 to vector<16x32xbf16>
    %c80_7 = arith.constant 80 : index
    %c0_8 = arith.constant 0 : index
    %7 = vector.load %arg14[%c80_7, %c0_8] : memref<96x32xbf16, #tpu.memory_space<vmem>>, vector<16x32xbf16>
    tpu.vector_store %arg14[%c80_7, %c0_8], %6 {strides = array<i32>} : memref<96x32xbf16, #tpu.memory_space<vmem>>, vector<16x32xbf16>,
    %cst_9 = arith.constant 0.000000e+00 : bf16
    %8 = vector.broadcast %cst_9 : bf16 to vector<16x32xbf16>
    %c0_10 = arith.constant 0 : index
    %c0_11 = arith.constant 0 : index
    %9 = vector.load %arg15[%c0_10, %c0_11] : memref<96x32xbf16, #tpu.memory_space<vmem>>, vector<16x32xbf16>
    tpu.vector_store %arg15[%c0_10, %c0_11], %8 {strides = array<i32>} : memref<96x32xbf16, #tpu.memory_space<vmem>>, vector<16x32xbf16>,
    %cst_12 = arith.constant 0.000000e+00 : bf16
    %10 = vector.broadcast %cst_12 : bf16 to vector<16x32xbf16>
    %c80_13 = arith.constant 80 : index
    %c0_14 = arith.constant 0 : index
    %11 = vector.load %arg15[%c80_13, %c0_14] : memref<96x32xbf16, #tpu.memory_space<vmem>>, vector<16x32xbf16>
    tpu.vector_store %arg15[%c80_13, %c0_14], %10 {strides = array<i32>} : memref<96x32xbf16, #tpu.memory_space<vmem>>, vector<16x32xbf16>,
    %c0_15 = arith.constant 0 : index
    %c0_16 = arith.constant 0 : index
    %c0_17 = arith.constant 0 : index
    %12 = vector.load %arg1[%c0_15, %c0_16, %c0_17] : memref<1x64x16xbf16, #tpu.memory_space<vmem>>, vector<1x64x16xbf16>
    %13 = vector.shape_cast %12 : vector<1x64x16xbf16> to vector<64x16xbf16>
    %c16 = arith.constant 16 : index
    %c0_18 = arith.constant 0 : index
    %14 = vector.load %arg13[%c16, %c0_18] : memref<96x16xbf16, #tpu.memory_space<vmem>>, vector<64x16xbf16>
    tpu.vector_store %arg13[%c16, %c0_18], %13 {strides = array<i32>} : memref<96x16xbf16, #tpu.memory_space<vmem>>, vector<64x16xbf16>,
    %15 = tpu.iota {dimensions = array<i32: 0>} : vector<64x1xi32>
    %c0_i32 = arith.constant 0 : i32
    %16 = vector.broadcast %c0_i32 : i32 to vector<64x1xi32>
    %17 = arith.addi %15, %16 : vector<64x1xi32>
    %c8_i32 = arith.constant 8 : i32
    %c0_i32_19 = arith.constant 0 : i32
    %18 = arith.cmpi eq, %c8_i32, %c0_i32_19 : i32
    %c1_i32 = arith.constant 1 : i32
    %19 = arith.select %18, %c1_i32, %c8_i32 : i32
    %20 = vector.broadcast %19 : i32 to vector<64x1xi32>
    %21 = arith.remsi %17, %20 : vector<64x1xi32>
    %c0_i32_20 = arith.constant 0 : i32
    %22 = vector.broadcast %c0_i32_20 : i32 to vector<64x1xi32>
    %23 = arith.cmpi ne, %21, %22 : vector<64x1xi32>
    %c0_i32_21 = arith.constant 0 : i32
    %24 = vector.broadcast %c0_i32_21 : i32 to vector<64x1xi32>
    %25 = arith.cmpi slt, %21, %24 : vector<64x1xi32>
    %c0_i32_22 = arith.constant 0 : i32
    %26 = arith.cmpi slt, %19, %c0_i32_22 : i32
    %27 = vector.broadcast %26 : i1 to vector<64x1xi1>
    %28 = vector.broadcast %27 : vector<64x1xi1> to vector<64x1xi1>
    %29 = arith.xori %25, %28 : vector<64x1xi1>
    %30 = arith.andi %29, %23 : vector<64x1xi1>
    %31 = vector.broadcast %19 : i32 to vector<64x1xi32>
    %32 = arith.addi %21, %31 : vector<64x1xi32>
    %33 = arith.select %30, %32, %21 : vector<64x1xi1>, vector<64x1xi32>
    %c0_i32_23 = arith.constant 0 : i32
    %34 = vector.broadcast %c0_i32_23 : i32 to vector<64x1xi32>
    %35 = arith.cmpi ne, %33, %34 : vector<64x1xi32>
    %c7_i32 = arith.constant 7 : i32
    %36 = vector.broadcast %c7_i32 : i32 to vector<64x1xi32>
    %37 = arith.cmpi ne, %33, %36 : vector<64x1xi32>
    %c0_24 = arith.constant 0 : index
    %c0_25 = arith.constant 0 : index
    %38 = vector.load %arg7[%c0_24, %c0_25] : memref<1x32xf32, #tpu.memory_space<vmem>>, vector<1x32xf32>
    %39 = vector.shape_cast %38 : vector<1x32xf32> to vector<1x32xf32>
    %40 = vector.broadcast %39 : vector<1x32xf32> to vector<64x32xf32>
    %c7 = arith.constant 7 : index
    %c0_26 = arith.constant 0 : index
    %41 = vector.load %arg13[%c7, %c0_26] : memref<96x16xbf16, #tpu.memory_space<vmem>>, vector<64x16xbf16>
    %cst_27 = arith.constant 0.000000e+00 : bf16
    %42 = vector.shape_cast %35 : vector<64x1xi1> to vector<64x1xi1>
    %43 = vector.broadcast %42 : vector<64x1xi1> to vector<64x16xi1>
    %44 = vector.broadcast %cst_27 : bf16 to vector<64x16xbf16>
    %45 = arith.select %43, %41, %44 : vector<64x16xi1>, vector<64x16xbf16>
    %c0_28 = arith.constant 0 : index
    %c0_29 = arith.constant 0 : index
    %c0_30 = arith.constant 0 : index
    %46 = vector.load %arg2[%c0_28, %c0_29, %c0_30] : memref<9x16x32xbf16, #tpu.memory_space<vmem>>, vector<1x16x32xbf16>
    %47 = vector.shape_cast %46 : vector<1x16x32xbf16> to vector<16x32xbf16>
    %cst_31 = arith.constant dense<0.000000e+00> : vector<64x32xf32>
    %48 = tpu.matmul %45, %47, %cst_31 {dimension_numbers = #tpu.dot_dimension_numbers<[1], [0], [0], [1], [0, 0, 1, 1], [], []>} : vector<64x16xbf16>, vector<16x32xbf16>, vector<64x32xf32> -> vector<64x32xf32>
    %49 = arith.addf %40, %48 : vector<64x32xf32>
    %c8 = arith.constant 8 : index
    %c0_32 = arith.constant 0 : index
    %50 = vector.load %arg13[%c8, %c0_32] : memref<96x16xbf16, #tpu.memory_space<vmem>>, vector<64x16xbf16>
    %c1 = arith.constant 1 : index
    %c0_33 = arith.constant 0 : index
    %c0_34 = arith.constant 0 : index
    %51 = vector.load %arg2[%c1, %c0_33, %c0_34] : memref<9x16x32xbf16, #tpu.memory_space<vmem>>, vector<1x16x32xbf16>
    %52 = vector.shape_cast %51 : vector<1x16x32xbf16> to vector<16x32xbf16>
    %cst_35 = arith.constant dense<0.000000e+00> : vector<64x32xf32>
    %53 = tpu.matmul %50, %52, %cst_35 {dimension_numbers = #tpu.dot_dimension_numbers<[1], [0], [0], [1], [0, 0, 1, 1], [], []>} : vector<64x16xbf16>, vector<16x32xbf16>, vector<64x32xf32> -> vector<64x32xf32>
    %54 = arith.addf %49, %53 : vector<64x32xf32>
    %c9 = arith.constant 9 : index
    %c0_36 = arith.constant 0 : index
    %55 = vector.load %arg13[%c9, %c0_36] : memref<96x16xbf16, #tpu.memory_space<vmem>>, vector<64x16xbf16>
    %cst_37 = arith.constant 0.000000e+00 : bf16
    %56 = vector.shape_cast %37 : vector<64x1xi1> to vector<64x1xi1>
    %57 = vector.broadcast %56 : vector<64x1xi1> to vector<64x16xi1>
    %58 = vector.broadcast %cst_37 : bf16 to vector<64x16xbf16>
    %59 = arith.select %57, %55, %58 : vector<64x16xi1>, vector<64x16xbf16>
    %c2 = arith.constant 2 : index
    %c0_38 = arith.constant 0 : index
    %c0_39 = arith.constant 0 : index
    %60 = vector.load %arg2[%c2, %c0_38, %c0_39] : memref<9x16x32xbf16, #tpu.memory_space<vmem>>, vector<1x16x32xbf16>
    %61 = vector.shape_cast %60 : vector<1x16x32xbf16> to vector<16x32xbf16>
    %cst_40 = arith.constant dense<0.000000e+00> : vector<64x32xf32>
    %62 = tpu.matmul %59, %61, %cst_40 {dimension_numbers = #tpu.dot_dimension_numbers<[1], [0], [0], [1], [0, 0, 1, 1], [], []>} : vector<64x16xbf16>, vector<16x32xbf16>, vector<64x32xf32> -> vector<64x32xf32>
    %63 = arith.addf %54, %62 : vector<64x32xf32>
    %c15 = arith.constant 15 : index
    %c0_41 = arith.constant 0 : index
    %64 = vector.load %arg13[%c15, %c0_41] : memref<96x16xbf16, #tpu.memory_space<vmem>>, vector<64x16xbf16>
    %cst_42 = arith.constant 0.000000e+00 : bf16
    %65 = vector.shape_cast %35 : vector<64x1xi1> to vector<64x1xi1>
    %66 = vector.broadcast %65 : vector<64x1xi1> to vector<64x16xi1>
    %67 = vector.broadcast %cst_42 : bf16 to vector<64x16xbf16>
    %68 = arith.select %66, %64, %67 : vector<64x16xi1>, vector<64x16xbf16>
    %c3 = arith.constant 3 : index
    %c0_43 = arith.constant 0 : index
    %c0_44 = arith.constant 0 : index
    %69 = vector.load %arg2[%c3, %c0_43, %c0_44] : memref<9x16x32xbf16, #tpu.memory_space<vmem>>, vector<1x16x32xbf16>
    %70 = vector.shape_cast %69 : vector<1x16x32xbf16> to vector<16x32xbf16>
    %cst_45 = arith.constant dense<0.000000e+00> : vector<64x32xf32>
    %71 = tpu.matmul %68, %70, %cst_45 {dimension_numbers = #tpu.dot_dimension_numbers<[1], [0], [0], [1], [0, 0, 1, 1], [], []>} : vector<64x16xbf16>, vector<16x32xbf16>, vector<64x32xf32> -> vector<64x32xf32>
    %72 = arith.addf %63, %71 : vector<64x32xf32>
    %c16_46 = arith.constant 16 : index
    %c0_47 = arith.constant 0 : index
    %73 = vector.load %arg13[%c16_46, %c0_47] : memref<96x16xbf16, #tpu.memory_space<vmem>>, vector<64x16xbf16>
    %c4 = arith.constant 4 : index
    %c0_48 = arith.constant 0 : index
    %c0_49 = arith.constant 0 : index
    %74 = vector.load %arg2[%c4, %c0_48, %c0_49] : memref<9x16x32xbf16, #tpu.memory_space<vmem>>, vector<1x16x32xbf16>
    %75 = vector.shape_cast %74 : vector<1x16x32xbf16> to vector<16x32xbf16>
    %cst_50 = arith.constant dense<0.000000e+00> : vector<64x32xf32>
    %76 = tpu.matmul %73, %75, %cst_50 {dimension_numbers = #tpu.dot_dimension_numbers<[1], [0], [0], [1], [0, 0, 1, 1], [], []>} : vector<64x16xbf16>, vector<16x32xbf16>, vector<64x32xf32> -> vector<64x32xf32>
    %77 = arith.addf %72, %76 : vector<64x32xf32>
    %c17 = arith.constant 17 : index
    %c0_51 = arith.constant 0 : index
    %78 = vector.load %arg13[%c17, %c0_51] : memref<96x16xbf16, #tpu.memory_space<vmem>>, vector<64x16xbf16>
    %cst_52 = arith.constant 0.000000e+00 : bf16
    %79 = vector.shape_cast %37 : vector<64x1xi1> to vector<64x1xi1>
    %80 = vector.broadcast %79 : vector<64x1xi1> to vector<64x16xi1>
    %81 = vector.broadcast %cst_52 : bf16 to vector<64x16xbf16>
    %82 = arith.select %80, %78, %81 : vector<64x16xi1>, vector<64x16xbf16>
    %c5 = arith.constant 5 : index
    %c0_53 = arith.constant 0 : index
    %c0_54 = arith.constant 0 : index
    %83 = vector.load %arg2[%c5, %c0_53, %c0_54] : memref<9x16x32xbf16, #tpu.memory_space<vmem>>, vector<1x16x32xbf16>
    %84 = vector.shape_cast %83 : vector<1x16x32xbf16> to vector<16x32xbf16>
    %cst_55 = arith.constant dense<0.000000e+00> : vector<64x32xf32>
    %85 = tpu.matmul %82, %84, %cst_55 {dimension_numbers = #tpu.dot_dimension_numbers<[1], [0], [0], [1], [0, 0, 1, 1], [], []>} : vector<64x16xbf16>, vector<16x32xbf16>, vector<64x32xf32> -> vector<64x32xf32>
    %86 = arith.addf %77, %85 : vector<64x32xf32>
    %c23 = arith.constant 23 : index
    %c0_56 = arith.constant 0 : index
    %87 = vector.load %arg13[%c23, %c0_56] : memref<96x16xbf16, #tpu.memory_space<vmem>>, vector<64x16xbf16>
    %cst_57 = arith.constant 0.000000e+00 : bf16
    %88 = vector.shape_cast %35 : vector<64x1xi1> to vector<64x1xi1>
    %89 = vector.broadcast %88 : vector<64x1xi1> to vector<64x16xi1>
    %90 = vector.broadcast %cst_57 : bf16 to vector<64x16xbf16>
    %91 = arith.select %89, %87, %90 : vector<64x16xi1>, vector<64x16xbf16>
    %c6 = arith.constant 6 : index
    %c0_58 = arith.constant 0 : index
    %c0_59 = arith.constant 0 : index
    %92 = vector.load %arg2[%c6, %c0_58, %c0_59] : memref<9x16x32xbf16, #tpu.memory_space<vmem>>, vector<1x16x32xbf16>
    %93 = vector.shape_cast %92 : vector<1x16x32xbf16> to vector<16x32xbf16>
    %cst_60 = arith.constant dense<0.000000e+00> : vector<64x32xf32>
    %94 = tpu.matmul %91, %93, %cst_60 {dimension_numbers = #tpu.dot_dimension_numbers<[1], [0], [0], [1], [0, 0, 1, 1], [], []>} : vector<64x16xbf16>, vector<16x32xbf16>, vector<64x32xf32> -> vector<64x32xf32>
    %95 = arith.addf %86, %94 : vector<64x32xf32>
    %c24 = arith.constant 24 : index
    %c0_61 = arith.constant 0 : index
    %96 = vector.load %arg13[%c24, %c0_61] : memref<96x16xbf16, #tpu.memory_space<vmem>>, vector<64x16xbf16>
    %c7_62 = arith.constant 7 : index
    %c0_63 = arith.constant 0 : index
    %c0_64 = arith.constant 0 : index
    %97 = vector.load %arg2[%c7_62, %c0_63, %c0_64] : memref<9x16x32xbf16, #tpu.memory_space<vmem>>, vector<1x16x32xbf16>
    %98 = vector.shape_cast %97 : vector<1x16x32xbf16> to vector<16x32xbf16>
    %cst_65 = arith.constant dense<0.000000e+00> : vector<64x32xf32>
    %99 = tpu.matmul %96, %98, %cst_65 {dimension_numbers = #tpu.dot_dimension_numbers<[1], [0], [0], [1], [0, 0, 1, 1], [], []>} : vector<64x16xbf16>, vector<16x32xbf16>, vector<64x32xf32> -> vector<64x32xf32>
    %100 = arith.addf %95, %99 : vector<64x32xf32>
    %c25 = arith.constant 25 : index
    %c0_66 = arith.constant 0 : index
    %101 = vector.load %arg13[%c25, %c0_66] : memref<96x16xbf16, #tpu.memory_space<vmem>>, vector<64x16xbf16>
    %cst_67 = arith.constant 0.000000e+00 : bf16
    %102 = vector.shape_cast %37 : vector<64x1xi1> to vector<64x1xi1>
    %103 = vector.broadcast %102 : vector<64x1xi1> to vector<64x16xi1>
    %104 = vector.broadcast %cst_67 : bf16 to vector<64x16xbf16>
    %105 = arith.select %103, %101, %104 : vector<64x16xi1>, vector<64x16xbf16>
    %c8_68 = arith.constant 8 : index
    %c0_69 = arith.constant 0 : index
    %c0_70 = arith.constant 0 : index
    %106 = vector.load %arg2[%c8_68, %c0_69, %c0_70] : memref<9x16x32xbf16, #tpu.memory_space<vmem>>, vector<1x16x32xbf16>
    %107 = vector.shape_cast %106 : vector<1x16x32xbf16> to vector<16x32xbf16>
    %cst_71 = arith.constant dense<0.000000e+00> : vector<64x32xf32>
    %108 = tpu.matmul %105, %107, %cst_71 {dimension_numbers = #tpu.dot_dimension_numbers<[1], [0], [0], [1], [0, 0, 1, 1], [], []>} : vector<64x16xbf16>, vector<16x32xbf16>, vector<64x32xf32> -> vector<64x32xf32>
    %109 = arith.addf %100, %108 : vector<64x32xf32>
    %cst_72 = arith.constant 0.000000e+00 : f32
    %110 = vector.broadcast %cst_72 : f32 to vector<64x32xf32>
    %111 = arith.maximumf %109, %110 : vector<64x32xf32>
    %112 = arith.truncf %111 : vector<64x32xf32> to vector<64x32xbf16>
    %c16_73 = arith.constant 16 : index
    %c0_74 = arith.constant 0 : index
    %113 = vector.load %arg14[%c16_73, %c0_74] : memref<96x32xbf16, #tpu.memory_space<vmem>>, vector<64x32xbf16>
    tpu.vector_store %arg14[%c16_73, %c0_74], %112 {strides = array<i32>} : memref<96x32xbf16, #tpu.memory_space<vmem>>, vector<64x32xbf16>,
    %114 = tpu.iota {dimensions = array<i32: 0>} : vector<64x1xi32>
    %c0_i32_75 = arith.constant 0 : i32
    %115 = vector.broadcast %c0_i32_75 : i32 to vector<64x1xi32>
    %116 = arith.addi %114, %115 : vector<64x1xi32>
    %c8_i32_76 = arith.constant 8 : i32
    %c0_i32_77 = arith.constant 0 : i32
    %117 = arith.cmpi eq, %c8_i32_76, %c0_i32_77 : i32
    %c1_i32_78 = arith.constant 1 : i32
    %118 = arith.select %117, %c1_i32_78, %c8_i32_76 : i32
    %119 = vector.broadcast %118 : i32 to vector<64x1xi32>
    %120 = arith.remsi %116, %119 : vector<64x1xi32>
    %c0_i32_79 = arith.constant 0 : i32
    %121 = vector.broadcast %c0_i32_79 : i32 to vector<64x1xi32>
    %122 = arith.cmpi ne, %120, %121 : vector<64x1xi32>
    %c0_i32_80 = arith.constant 0 : i32
    %123 = vector.broadcast %c0_i32_80 : i32 to vector<64x1xi32>
    %124 = arith.cmpi slt, %120, %123 : vector<64x1xi32>
    %c0_i32_81 = arith.constant 0 : i32
    %125 = arith.cmpi slt, %118, %c0_i32_81 : i32
    %126 = vector.broadcast %125 : i1 to vector<64x1xi1>
    %127 = vector.broadcast %126 : vector<64x1xi1> to vector<64x1xi1>
    %128 = arith.xori %124, %127 : vector<64x1xi1>
    %129 = arith.andi %128, %122 : vector<64x1xi1>
    %130 = vector.broadcast %118 : i32 to vector<64x1xi32>
    %131 = arith.addi %120, %130 : vector<64x1xi32>
    %132 = arith.select %129, %131, %120 : vector<64x1xi1>, vector<64x1xi32>
    %c0_i32_82 = arith.constant 0 : i32
    %133 = vector.broadcast %c0_i32_82 : i32 to vector<64x1xi32>
    %134 = arith.cmpi ne, %132, %133 : vector<64x1xi32>
    %c7_i32_83 = arith.constant 7 : i32
    %135 = vector.broadcast %c7_i32_83 : i32 to vector<64x1xi32>
    %136 = arith.cmpi ne, %132, %135 : vector<64x1xi32>
    %c0_84 = arith.constant 0 : index
    %c0_85 = arith.constant 0 : index
    %137 = vector.load %arg8[%c0_84, %c0_85] : memref<1x32xf32, #tpu.memory_space<vmem>>, vector<1x32xf32>
    %138 = vector.shape_cast %137 : vector<1x32xf32> to vector<1x32xf32>
    %139 = vector.broadcast %138 : vector<1x32xf32> to vector<64x32xf32>
    %c7_86 = arith.constant 7 : index
    %c0_87 = arith.constant 0 : index
    %140 = vector.load %arg14[%c7_86, %c0_87] : memref<96x32xbf16, #tpu.memory_space<vmem>>, vector<64x32xbf16>
    %cst_88 = arith.constant 0.000000e+00 : bf16
    %141 = vector.shape_cast %134 : vector<64x1xi1> to vector<64x1xi1>
    %142 = vector.broadcast %141 : vector<64x1xi1> to vector<64x32xi1>
    %143 = vector.broadcast %cst_88 : bf16 to vector<64x32xbf16>
    %144 = arith.select %142, %140, %143 : vector<64x32xi1>, vector<64x32xbf16>
    %c0_89 = arith.constant 0 : index
    %c0_90 = arith.constant 0 : index
    %c0_91 = arith.constant 0 : index
    %145 = vector.load %arg3[%c0_89, %c0_90, %c0_91] : memref<9x32x32xbf16, #tpu.memory_space<vmem>>, vector<1x32x32xbf16>
    %146 = vector.shape_cast %145 : vector<1x32x32xbf16> to vector<32x32xbf16>
    %cst_92 = arith.constant dense<0.000000e+00> : vector<64x32xf32>
    %147 = tpu.matmul %144, %146, %cst_92 {dimension_numbers = #tpu.dot_dimension_numbers<[1], [0], [0], [1], [0, 0, 1, 1], [], []>} : vector<64x32xbf16>, vector<32x32xbf16>, vector<64x32xf32> -> vector<64x32xf32>
    %148 = arith.addf %139, %147 : vector<64x32xf32>
    %c8_93 = arith.constant 8 : index
    %c0_94 = arith.constant 0 : index
    %149 = vector.load %arg14[%c8_93, %c0_94] : memref<96x32xbf16, #tpu.memory_space<vmem>>, vector<64x32xbf16>
    %c1_95 = arith.constant 1 : index
    %c0_96 = arith.constant 0 : index
    %c0_97 = arith.constant 0 : index
    %150 = vector.load %arg3[%c1_95, %c0_96, %c0_97] : memref<9x32x32xbf16, #tpu.memory_space<vmem>>, vector<1x32x32xbf16>
    %151 = vector.shape_cast %150 : vector<1x32x32xbf16> to vector<32x32xbf16>
    %cst_98 = arith.constant dense<0.000000e+00> : vector<64x32xf32>
    %152 = tpu.matmul %149, %151, %cst_98 {dimension_numbers = #tpu.dot_dimension_numbers<[1], [0], [0], [1], [0, 0, 1, 1], [], []>} : vector<64x32xbf16>, vector<32x32xbf16>, vector<64x32xf32> -> vector<64x32xf32>
    %153 = arith.addf %148, %152 : vector<64x32xf32>
    %c9_99 = arith.constant 9 : index
    %c0_100 = arith.constant 0 : index
    %154 = vector.load %arg14[%c9_99, %c0_100] : memref<96x32xbf16, #tpu.memory_space<vmem>>, vector<64x32xbf16>
    %cst_101 = arith.constant 0.000000e+00 : bf16
    %155 = vector.shape_cast %136 : vector<64x1xi1> to vector<64x1xi1>
    %156 = vector.broadcast %155 : vector<64x1xi1> to vector<64x32xi1>
    %157 = vector.broadcast %cst_101 : bf16 to vector<64x32xbf16>
    %158 = arith.select %156, %154, %157 : vector<64x32xi1>, vector<64x32xbf16>
    %c2_102 = arith.constant 2 : index
    %c0_103 = arith.constant 0 : index
    %c0_104 = arith.constant 0 : index
    %159 = vector.load %arg3[%c2_102, %c0_103, %c0_104] : memref<9x32x32xbf16, #tpu.memory_space<vmem>>, vector<1x32x32xbf16>
    %160 = vector.shape_cast %159 : vector<1x32x32xbf16> to vector<32x32xbf16>
    %cst_105 = arith.constant dense<0.000000e+00> : vector<64x32xf32>
    %161 = tpu.matmul %158, %160, %cst_105 {dimension_numbers = #tpu.dot_dimension_numbers<[1], [0], [0], [1], [0, 0, 1, 1], [], []>} : vector<64x32xbf16>, vector<32x32xbf16>, vector<64x32xf32> -> vector<64x32xf32>
    %162 = arith.addf %153, %161 : vector<64x32xf32>
    %c15_106 = arith.constant 15 : index
    %c0_107 = arith.constant 0 : index
    %163 = vector.load %arg14[%c15_106, %c0_107] : memref<96x32xbf16, #tpu.memory_space<vmem>>, vector<64x32xbf16>
    %cst_108 = arith.constant 0.000000e+00 : bf16
    %164 = vector.shape_cast %134 : vector<64x1xi1> to vector<64x1xi1>
    %165 = vector.broadcast %164 : vector<64x1xi1> to vector<64x32xi1>
    %166 = vector.broadcast %cst_108 : bf16 to vector<64x32xbf16>
    %167 = arith.select %165, %163, %166 : vector<64x32xi1>, vector<64x32xbf16>
    %c3_109 = arith.constant 3 : index
    %c0_110 = arith.constant 0 : index
    %c0_111 = arith.constant 0 : index
    %168 = vector.load %arg3[%c3_109, %c0_110, %c0_111] : memref<9x32x32xbf16, #tpu.memory_space<vmem>>, vector<1x32x32xbf16>
    %169 = vector.shape_cast %168 : vector<1x32x32xbf16> to vector<32x32xbf16>
    %cst_112 = arith.constant dense<0.000000e+00> : vector<64x32xf32>
    %170 = tpu.matmul %167, %169, %cst_112 {dimension_numbers = #tpu.dot_dimension_numbers<[1], [0], [0], [1], [0, 0, 1, 1], [], []>} : vector<64x32xbf16>, vector<32x32xbf16>, vector<64x32xf32> -> vector<64x32xf32>
    %171 = arith.addf %162, %170 : vector<64x32xf32>
    %c16_113 = arith.constant 16 : index
    %c0_114 = arith.constant 0 : index
    %172 = vector.load %arg14[%c16_113, %c0_114] : memref<96x32xbf16, #tpu.memory_space<vmem>>, vector<64x32xbf16>
    %c4_115 = arith.constant 4 : index
    %c0_116 = arith.constant 0 : index
    %c0_117 = arith.constant 0 : index
    %173 = vector.load %arg3[%c4_115, %c0_116, %c0_117] : memref<9x32x32xbf16, #tpu.memory_space<vmem>>, vector<1x32x32xbf16>
    %174 = vector.shape_cast %173 : vector<1x32x32xbf16> to vector<32x32xbf16>
    %cst_118 = arith.constant dense<0.000000e+00> : vector<64x32xf32>
    %175 = tpu.matmul %172, %174, %cst_118 {dimension_numbers = #tpu.dot_dimension_numbers<[1], [0], [0], [1], [0, 0, 1, 1], [], []>} : vector<64x32xbf16>, vector<32x32xbf16>, vector<64x32xf32> -> vector<64x32xf32>
    %176 = arith.addf %171, %175 : vector<64x32xf32>
    %c17_119 = arith.constant 17 : index
    %c0_120 = arith.constant 0 : index
    %177 = vector.load %arg14[%c17_119, %c0_120] : memref<96x32xbf16, #tpu.memory_space<vmem>>, vector<64x32xbf16>
    %cst_121 = arith.constant 0.000000e+00 : bf16
    %178 = vector.shape_cast %136 : vector<64x1xi1> to vector<64x1xi1>
    %179 = vector.broadcast %178 : vector<64x1xi1> to vector<64x32xi1>
    %180 = vector.broadcast %cst_121 : bf16 to vector<64x32xbf16>
    %181 = arith.select %179, %177, %180 : vector<64x32xi1>, vector<64x32xbf16>
    %c5_122 = arith.constant 5 : index
    %c0_123 = arith.constant 0 : index
    %c0_124 = arith.constant 0 : index
    %182 = vector.load %arg3[%c5_122, %c0_123, %c0_124] : memref<9x32x32xbf16, #tpu.memory_space<vmem>>, vector<1x32x32xbf16>
    %183 = vector.shape_cast %182 : vector<1x32x32xbf16> to vector<32x32xbf16>
    %cst_125 = arith.constant dense<0.000000e+00> : vector<64x32xf32>
    %184 = tpu.matmul %181, %183, %cst_125 {dimension_numbers = #tpu.dot_dimension_numbers<[1], [0], [0], [1], [0, 0, 1, 1], [], []>} : vector<64x32xbf16>, vector<32x32xbf16>, vector<64x32xf32> -> vector<64x32xf32>
    %185 = arith.addf %176, %184 : vector<64x32xf32>
    %c23_126 = arith.constant 23 : index
    %c0_127 = arith.constant 0 : index
    %186 = vector.load %arg14[%c23_126, %c0_127] : memref<96x32xbf16, #tpu.memory_space<vmem>>, vector<64x32xbf16>
    %cst_128 = arith.constant 0.000000e+00 : bf16
    %187 = vector.shape_cast %134 : vector<64x1xi1> to vector<64x1xi1>
    %188 = vector.broadcast %187 : vector<64x1xi1> to vector<64x32xi1>
    %189 = vector.broadcast %cst_128 : bf16 to vector<64x32xbf16>
    %190 = arith.select %188, %186, %189 : vector<64x32xi1>, vector<64x32xbf16>
    %c6_129 = arith.constant 6 : index
    %c0_130 = arith.constant 0 : index
    %c0_131 = arith.constant 0 : index
    %191 = vector.load %arg3[%c6_129, %c0_130, %c0_131] : memref<9x32x32xbf16, #tpu.memory_space<vmem>>, vector<1x32x32xbf16>
    %192 = vector.shape_cast %191 : vector<1x32x32xbf16> to vector<32x32xbf16>
    %cst_132 = arith.constant dense<0.000000e+00> : vector<64x32xf32>
    %193 = tpu.matmul %190, %192, %cst_132 {dimension_numbers = #tpu.dot_dimension_numbers<[1], [0], [0], [1], [0, 0, 1, 1], [], []>} : vector<64x32xbf16>, vector<32x32xbf16>, vector<64x32xf32> -> vector<64x32xf32>
    %194 = arith.addf %185, %193 : vector<64x32xf32>
    %c24_133 = arith.constant 24 : index
    %c0_134 = arith.constant 0 : index
    %195 = vector.load %arg14[%c24_133, %c0_134] : memref<96x32xbf16, #tpu.memory_space<vmem>>, vector<64x32xbf16>
    %c7_135 = arith.constant 7 : index
    %c0_136 = arith.constant 0 : index
    %c0_137 = arith.constant 0 : index
    %196 = vector.load %arg3[%c7_135, %c0_136, %c0_137] : memref<9x32x32xbf16, #tpu.memory_space<vmem>>, vector<1x32x32xbf16>
    %197 = vector.shape_cast %196 : vector<1x32x32xbf16> to vector<32x32xbf16>
    %cst_138 = arith.constant dense<0.000000e+00> : vector<64x32xf32>
    %198 = tpu.matmul %195, %197, %cst_138 {dimension_numbers = #tpu.dot_dimension_numbers<[1], [0], [0], [1], [0, 0, 1, 1], [], []>} : vector<64x32xbf16>, vector<32x32xbf16>, vector<64x32xf32> -> vector<64x32xf32>
    %199 = arith.addf %194, %198 : vector<64x32xf32>
    %c25_139 = arith.constant 25 : index
    %c0_140 = arith.constant 0 : index
    %200 = vector.load %arg14[%c25_139, %c0_140] : memref<96x32xbf16, #tpu.memory_space<vmem>>, vector<64x32xbf16>
    %cst_141 = arith.constant 0.000000e+00 : bf16
    %201 = vector.shape_cast %136 : vector<64x1xi1> to vector<64x1xi1>
    %202 = vector.broadcast %201 : vector<64x1xi1> to vector<64x32xi1>
    %203 = vector.broadcast %cst_141 : bf16 to vector<64x32xbf16>
    %204 = arith.select %202, %200, %203 : vector<64x32xi1>, vector<64x32xbf16>
    %c8_142 = arith.constant 8 : index
    %c0_143 = arith.constant 0 : index
    %c0_144 = arith.constant 0 : index
    %205 = vector.load %arg3[%c8_142, %c0_143, %c0_144] : memref<9x32x32xbf16, #tpu.memory_space<vmem>>, vector<1x32x32xbf16>
    %206 = vector.shape_cast %205 : vector<1x32x32xbf16> to vector<32x32xbf16>
    %cst_145 = arith.constant dense<0.000000e+00> : vector<64x32xf32>
    %207 = tpu.matmul %204, %206, %cst_145 {dimension_numbers = #tpu.dot_dimension_numbers<[1], [0], [0], [1], [0, 0, 1, 1], [], []>} : vector<64x32xbf16>, vector<32x32xbf16>, vector<64x32xf32> -> vector<64x32xf32>
    %208 = arith.addf %199, %207 : vector<64x32xf32>
    %cst_146 = arith.constant 0.000000e+00 : f32
    %209 = vector.broadcast %cst_146 : f32 to vector<64x32xf32>
    %210 = arith.maximumf %208, %209 : vector<64x32xf32>
    %211 = arith.truncf %210 : vector<64x32xf32> to vector<64x32xbf16>
    %c16_147 = arith.constant 16 : index
    %c0_148 = arith.constant 0 : index
    %212 = vector.load %arg15[%c16_147, %c0_148] : memref<96x32xbf16, #tpu.memory_space<vmem>>, vector<64x32xbf16>
    tpu.vector_store %arg15[%c16_147, %c0_148], %211 {strides = array<i32>} : memref<96x32xbf16, #tpu.memory_space<vmem>>, vector<64x32xbf16>,
    %213 = tpu.iota {dimensions = array<i32: 0>} : vector<64x1xi32>
    %c0_i32_149 = arith.constant 0 : i32
    %214 = vector.broadcast %c0_i32_149 : i32 to vector<64x1xi32>
    %215 = arith.addi %213, %214 : vector<64x1xi32>
    %c8_i32_150 = arith.constant 8 : i32
    %c0_i32_151 = arith.constant 0 : i32
    %216 = arith.cmpi eq, %c8_i32_150, %c0_i32_151 : i32
    %c1_i32_152 = arith.constant 1 : i32
    %217 = arith.select %216, %c1_i32_152, %c8_i32_150 : i32
    %218 = vector.broadcast %217 : i32 to vector<64x1xi32>
    %219 = arith.remsi %215, %218 : vector<64x1xi32>
    %c0_i32_153 = arith.constant 0 : i32
    %220 = vector.broadcast %c0_i32_153 : i32 to vector<64x1xi32>
    %221 = arith.cmpi ne, %219, %220 : vector<64x1xi32>
    %c0_i32_154 = arith.constant 0 : i32
    %222 = vector.broadcast %c0_i32_154 : i32 to vector<64x1xi32>
    %223 = arith.cmpi slt, %219, %222 : vector<64x1xi32>
    %c0_i32_155 = arith.constant 0 : i32
    %224 = arith.cmpi slt, %217, %c0_i32_155 : i32
    %225 = vector.broadcast %224 : i1 to vector<64x1xi1>
    %226 = vector.broadcast %225 : vector<64x1xi1> to vector<64x1xi1>
    %227 = arith.xori %223, %226 : vector<64x1xi1>
    %228 = arith.andi %227, %221 : vector<64x1xi1>
    %229 = vector.broadcast %217 : i32 to vector<64x1xi32>
    %230 = arith.addi %219, %229 : vector<64x1xi32>
    %231 = arith.select %228, %230, %219 : vector<64x1xi1>, vector<64x1xi32>
    %c0_i32_156 = arith.constant 0 : i32
    %232 = vector.broadcast %c0_i32_156 : i32 to vector<64x1xi32>
    %233 = arith.cmpi ne, %231, %232 : vector<64x1xi32>
    %c7_i32_157 = arith.constant 7 : i32
    %234 = vector.broadcast %c7_i32_157 : i32 to vector<64x1xi32>
    %235 = arith.cmpi ne, %231, %234 : vector<64x1xi32>
    %c0_158 = arith.constant 0 : index
    %c0_159 = arith.constant 0 : index
    %236 = vector.load %arg9[%c0_158, %c0_159] : memref<1x32xf32, #tpu.memory_space<vmem>>, vector<1x32xf32>
    %237 = vector.shape_cast %236 : vector<1x32xf32> to vector<1x32xf32>
    %238 = vector.broadcast %237 : vector<1x32xf32> to vector<64x32xf32>
    %c7_160 = arith.constant 7 : index
    %c0_161 = arith.constant 0 : index
    %239 = vector.load %arg15[%c7_160, %c0_161] : memref<96x32xbf16, #tpu.memory_space<vmem>>, vector<64x32xbf16>
    %cst_162 = arith.constant 0.000000e+00 : bf16
    %240 = vector.shape_cast %233 : vector<64x1xi1> to vector<64x1xi1>
    %241 = vector.broadcast %240 : vector<64x1xi1> to vector<64x32xi1>
    %242 = vector.broadcast %cst_162 : bf16 to vector<64x32xbf16>
    %243 = arith.select %241, %239, %242 : vector<64x32xi1>, vector<64x32xbf16>
    %c0_163 = arith.constant 0 : index
    %c0_164 = arith.constant 0 : index
    %c0_165 = arith.constant 0 : index
    %244 = vector.load %arg4[%c0_163, %c0_164, %c0_165] : memref<9x32x32xbf16, #tpu.memory_space<vmem>>, vector<1x32x32xbf16>
    %245 = vector.shape_cast %244 : vector<1x32x32xbf16> to vector<32x32xbf16>
    %cst_166 = arith.constant dense<0.000000e+00> : vector<64x32xf32>
    %246 = tpu.matmul %243, %245, %cst_166 {dimension_numbers = #tpu.dot_dimension_numbers<[1], [0], [0], [1], [0, 0, 1, 1], [], []>} : vector<64x32xbf16>, vector<32x32xbf16>, vector<64x32xf32> -> vector<64x32xf32>
    %247 = arith.addf %238, %246 : vector<64x32xf32>
    %c8_167 = arith.constant 8 : index
    %c0_168 = arith.constant 0 : index
    %248 = vector.load %arg15[%c8_167, %c0_168] : memref<96x32xbf16, #tpu.memory_space<vmem>>, vector<64x32xbf16>
    %c1_169 = arith.constant 1 : index
    %c0_170 = arith.constant 0 : index
    %c0_171 = arith.constant 0 : index
    %249 = vector.load %arg4[%c1_169, %c0_170, %c0_171] : memref<9x32x32xbf16, #tpu.memory_space<vmem>>, vector<1x32x32xbf16>
    %250 = vector.shape_cast %249 : vector<1x32x32xbf16> to vector<32x32xbf16>
    %cst_172 = arith.constant dense<0.000000e+00> : vector<64x32xf32>
    %251 = tpu.matmul %248, %250, %cst_172 {dimension_numbers = #tpu.dot_dimension_numbers<[1], [0], [0], [1], [0, 0, 1, 1], [], []>} : vector<64x32xbf16>, vector<32x32xbf16>, vector<64x32xf32> -> vector<64x32xf32>
    %252 = arith.addf %247, %251 : vector<64x32xf32>
    %c9_173 = arith.constant 9 : index
    %c0_174 = arith.constant 0 : index
    %253 = vector.load %arg15[%c9_173, %c0_174] : memref<96x32xbf16, #tpu.memory_space<vmem>>, vector<64x32xbf16>
    %cst_175 = arith.constant 0.000000e+00 : bf16
    %254 = vector.shape_cast %235 : vector<64x1xi1> to vector<64x1xi1>
    %255 = vector.broadcast %254 : vector<64x1xi1> to vector<64x32xi1>
    %256 = vector.broadcast %cst_175 : bf16 to vector<64x32xbf16>
    %257 = arith.select %255, %253, %256 : vector<64x32xi1>, vector<64x32xbf16>
    %c2_176 = arith.constant 2 : index
    %c0_177 = arith.constant 0 : index
    %c0_178 = arith.constant 0 : index
    %258 = vector.load %arg4[%c2_176, %c0_177, %c0_178] : memref<9x32x32xbf16, #tpu.memory_space<vmem>>, vector<1x32x32xbf16>
    %259 = vector.shape_cast %258 : vector<1x32x32xbf16> to vector<32x32xbf16>
    %cst_179 = arith.constant dense<0.000000e+00> : vector<64x32xf32>
    %260 = tpu.matmul %257, %259, %cst_179 {dimension_numbers = #tpu.dot_dimension_numbers<[1], [0], [0], [1], [0, 0, 1, 1], [], []>} : vector<64x32xbf16>, vector<32x32xbf16>, vector<64x32xf32> -> vector<64x32xf32>
    %261 = arith.addf %252, %260 : vector<64x32xf32>
    %c15_180 = arith.constant 15 : index
    %c0_181 = arith.constant 0 : index
    %262 = vector.load %arg15[%c15_180, %c0_181] : memref<96x32xbf16, #tpu.memory_space<vmem>>, vector<64x32xbf16>
    %cst_182 = arith.constant 0.000000e+00 : bf16
    %263 = vector.shape_cast %233 : vector<64x1xi1> to vector<64x1xi1>
    %264 = vector.broadcast %263 : vector<64x1xi1> to vector<64x32xi1>
    %265 = vector.broadcast %cst_182 : bf16 to vector<64x32xbf16>
    %266 = arith.select %264, %262, %265 : vector<64x32xi1>, vector<64x32xbf16>
    %c3_183 = arith.constant 3 : index
    %c0_184 = arith.constant 0 : index
    %c0_185 = arith.constant 0 : index
    %267 = vector.load %arg4[%c3_183, %c0_184, %c0_185] : memref<9x32x32xbf16, #tpu.memory_space<vmem>>, vector<1x32x32xbf16>
    %268 = vector.shape_cast %267 : vector<1x32x32xbf16> to vector<32x32xbf16>
    %cst_186 = arith.constant dense<0.000000e+00> : vector<64x32xf32>
    %269 = tpu.matmul %266, %268, %cst_186 {dimension_numbers = #tpu.dot_dimension_numbers<[1], [0], [0], [1], [0, 0, 1, 1], [], []>} : vector<64x32xbf16>, vector<32x32xbf16>, vector<64x32xf32> -> vector<64x32xf32>
    %270 = arith.addf %261, %269 : vector<64x32xf32>
    %c16_187 = arith.constant 16 : index
    %c0_188 = arith.constant 0 : index
    %271 = vector.load %arg15[%c16_187, %c0_188] : memref<96x32xbf16, #tpu.memory_space<vmem>>, vector<64x32xbf16>
    %c4_189 = arith.constant 4 : index
    %c0_190 = arith.constant 0 : index
    %c0_191 = arith.constant 0 : index
    %272 = vector.load %arg4[%c4_189, %c0_190, %c0_191] : memref<9x32x32xbf16, #tpu.memory_space<vmem>>, vector<1x32x32xbf16>
    %273 = vector.shape_cast %272 : vector<1x32x32xbf16> to vector<32x32xbf16>
    %cst_192 = arith.constant dense<0.000000e+00> : vector<64x32xf32>
    %274 = tpu.matmul %271, %273, %cst_192 {dimension_numbers = #tpu.dot_dimension_numbers<[1], [0], [0], [1], [0, 0, 1, 1], [], []>} : vector<64x32xbf16>, vector<32x32xbf16>, vector<64x32xf32> -> vector<64x32xf32>
    %275 = arith.addf %270, %274 : vector<64x32xf32>
    %c17_193 = arith.constant 17 : index
    %c0_194 = arith.constant 0 : index
    %276 = vector.load %arg15[%c17_193, %c0_194] : memref<96x32xbf16, #tpu.memory_space<vmem>>, vector<64x32xbf16>
    %cst_195 = arith.constant 0.000000e+00 : bf16
    %277 = vector.shape_cast %235 : vector<64x1xi1> to vector<64x1xi1>
    %278 = vector.broadcast %277 : vector<64x1xi1> to vector<64x32xi1>
    %279 = vector.broadcast %cst_195 : bf16 to vector<64x32xbf16>
    %280 = arith.select %278, %276, %279 : vector<64x32xi1>, vector<64x32xbf16>
    %c5_196 = arith.constant 5 : index
    %c0_197 = arith.constant 0 : index
    %c0_198 = arith.constant 0 : index
    %281 = vector.load %arg4[%c5_196, %c0_197, %c0_198] : memref<9x32x32xbf16, #tpu.memory_space<vmem>>, vector<1x32x32xbf16>
    %282 = vector.shape_cast %281 : vector<1x32x32xbf16> to vector<32x32xbf16>
    %cst_199 = arith.constant dense<0.000000e+00> : vector<64x32xf32>
    %283 = tpu.matmul %280, %282, %cst_199 {dimension_numbers = #tpu.dot_dimension_numbers<[1], [0], [0], [1], [0, 0, 1, 1], [], []>} : vector<64x32xbf16>, vector<32x32xbf16>, vector<64x32xf32> -> vector<64x32xf32>
    %284 = arith.addf %275, %283 : vector<64x32xf32>
    %c23_200 = arith.constant 23 : index
    %c0_201 = arith.constant 0 : index
    %285 = vector.load %arg15[%c23_200, %c0_201] : memref<96x32xbf16, #tpu.memory_space<vmem>>, vector<64x32xbf16>
    %cst_202 = arith.constant 0.000000e+00 : bf16
    %286 = vector.shape_cast %233 : vector<64x1xi1> to vector<64x1xi1>
    %287 = vector.broadcast %286 : vector<64x1xi1> to vector<64x32xi1>
    %288 = vector.broadcast %cst_202 : bf16 to vector<64x32xbf16>
    %289 = arith.select %287, %285, %288 : vector<64x32xi1>, vector<64x32xbf16>
    %c6_203 = arith.constant 6 : index
    %c0_204 = arith.constant 0 : index
    %c0_205 = arith.constant 0 : index
    %290 = vector.load %arg4[%c6_203, %c0_204, %c0_205] : memref<9x32x32xbf16, #tpu.memory_space<vmem>>, vector<1x32x32xbf16>
    %291 = vector.shape_cast %290 : vector<1x32x32xbf16> to vector<32x32xbf16>
    %cst_206 = arith.constant dense<0.000000e+00> : vector<64x32xf32>
    %292 = tpu.matmul %289, %291, %cst_206 {dimension_numbers = #tpu.dot_dimension_numbers<[1], [0], [0], [1], [0, 0, 1, 1], [], []>} : vector<64x32xbf16>, vector<32x32xbf16>, vector<64x32xf32> -> vector<64x32xf32>
    %293 = arith.addf %284, %292 : vector<64x32xf32>
    %c24_207 = arith.constant 24 : index
    %c0_208 = arith.constant 0 : index
    %294 = vector.load %arg15[%c24_207, %c0_208] : memref<96x32xbf16, #tpu.memory_space<vmem>>, vector<64x32xbf16>
    %c7_209 = arith.constant 7 : index
    %c0_210 = arith.constant 0 : index
    %c0_211 = arith.constant 0 : index
    %295 = vector.load %arg4[%c7_209, %c0_210, %c0_211] : memref<9x32x32xbf16, #tpu.memory_space<vmem>>, vector<1x32x32xbf16>
    %296 = vector.shape_cast %295 : vector<1x32x32xbf16> to vector<32x32xbf16>
    %cst_212 = arith.constant dense<0.000000e+00> : vector<64x32xf32>
    %297 = tpu.matmul %294, %296, %cst_212 {dimension_numbers = #tpu.dot_dimension_numbers<[1], [0], [0], [1], [0, 0, 1, 1], [], []>} : vector<64x32xbf16>, vector<32x32xbf16>, vector<64x32xf32> -> vector<64x32xf32>
    %298 = arith.addf %293, %297 : vector<64x32xf32>
    %c25_213 = arith.constant 25 : index
    %c0_214 = arith.constant 0 : index
    %299 = vector.load %arg15[%c25_213, %c0_214] : memref<96x32xbf16, #tpu.memory_space<vmem>>, vector<64x32xbf16>
    %cst_215 = arith.constant 0.000000e+00 : bf16
    %300 = vector.shape_cast %235 : vector<64x1xi1> to vector<64x1xi1>
    %301 = vector.broadcast %300 : vector<64x1xi1> to vector<64x32xi1>
    %302 = vector.broadcast %cst_215 : bf16 to vector<64x32xbf16>
    %303 = arith.select %301, %299, %302 : vector<64x32xi1>, vector<64x32xbf16>
    %c8_216 = arith.constant 8 : index
    %c0_217 = arith.constant 0 : index
    %c0_218 = arith.constant 0 : index
    %304 = vector.load %arg4[%c8_216, %c0_217, %c0_218] : memref<9x32x32xbf16, #tpu.memory_space<vmem>>, vector<1x32x32xbf16>
    %305 = vector.shape_cast %304 : vector<1x32x32xbf16> to vector<32x32xbf16>
    %cst_219 = arith.constant dense<0.000000e+00> : vector<64x32xf32>
    %306 = tpu.matmul %303, %305, %cst_219 {dimension_numbers = #tpu.dot_dimension_numbers<[1], [0], [0], [1], [0, 0, 1, 1], [], []>} : vector<64x32xbf16>, vector<32x32xbf16>, vector<64x32xf32> -> vector<64x32xf32>
    %307 = arith.addf %298, %306 : vector<64x32xf32>
    %cst_220 = arith.constant 0.000000e+00 : f32
    %308 = vector.broadcast %cst_220 : f32 to vector<64x32xf32>
    %309 = arith.maximumf %307, %308 : vector<64x32xf32>
    %310 = arith.truncf %309 : vector<64x32xf32> to vector<64x32xbf16>
    %c16_221 = arith.constant 16 : index
    %c0_222 = arith.constant 0 : index
    %311 = vector.load %arg14[%c16_221, %c0_222] : memref<96x32xbf16, #tpu.memory_space<vmem>>, vector<64x32xbf16>
    tpu.vector_store %arg14[%c16_221, %c0_222], %310 {strides = array<i32>} : memref<96x32xbf16, #tpu.memory_space<vmem>>, vector<64x32xbf16>,
    %312 = tpu.iota {dimensions = array<i32: 0>} : vector<64x1xi32>
    %c0_i32_223 = arith.constant 0 : i32
    %313 = vector.broadcast %c0_i32_223 : i32 to vector<64x1xi32>
    %314 = arith.addi %312, %313 : vector<64x1xi32>
    %c8_i32_224 = arith.constant 8 : i32
    %c0_i32_225 = arith.constant 0 : i32
    %315 = arith.cmpi eq, %c8_i32_224, %c0_i32_225 : i32
    %c1_i32_226 = arith.constant 1 : i32
    %316 = arith.select %315, %c1_i32_226, %c8_i32_224 : i32
    %317 = vector.broadcast %316 : i32 to vector<64x1xi32>
    %318 = arith.remsi %314, %317 : vector<64x1xi32>
    %c0_i32_227 = arith.constant 0 : i32
    %319 = vector.broadcast %c0_i32_227 : i32 to vector<64x1xi32>
    %320 = arith.cmpi ne, %318, %319 : vector<64x1xi32>
    %c0_i32_228 = arith.constant 0 : i32
    %321 = vector.broadcast %c0_i32_228 : i32 to vector<64x1xi32>
    %322 = arith.cmpi slt, %318, %321 : vector<64x1xi32>
    %c0_i32_229 = arith.constant 0 : i32
    %323 = arith.cmpi slt, %316, %c0_i32_229 : i32
    %324 = vector.broadcast %323 : i1 to vector<64x1xi1>
    %325 = vector.broadcast %324 : vector<64x1xi1> to vector<64x1xi1>
    %326 = arith.xori %322, %325 : vector<64x1xi1>
    %327 = arith.andi %326, %320 : vector<64x1xi1>
    %328 = vector.broadcast %316 : i32 to vector<64x1xi32>
    %329 = arith.addi %318, %328 : vector<64x1xi32>
    %330 = arith.select %327, %329, %318 : vector<64x1xi1>, vector<64x1xi32>
    %c0_i32_230 = arith.constant 0 : i32
    %331 = vector.broadcast %c0_i32_230 : i32 to vector<64x1xi32>
    %332 = arith.cmpi ne, %330, %331 : vector<64x1xi32>
    %c7_i32_231 = arith.constant 7 : i32
    %333 = vector.broadcast %c7_i32_231 : i32 to vector<64x1xi32>
    %334 = arith.cmpi ne, %330, %333 : vector<64x1xi32>
    %c0_232 = arith.constant 0 : index
    %c0_233 = arith.constant 0 : index
    %335 = vector.load %arg10[%c0_232, %c0_233] : memref<1x32xf32, #tpu.memory_space<vmem>>, vector<1x32xf32>
    %336 = vector.shape_cast %335 : vector<1x32xf32> to vector<1x32xf32>
    %337 = vector.broadcast %336 : vector<1x32xf32> to vector<64x32xf32>
    %c7_234 = arith.constant 7 : index
    %c0_235 = arith.constant 0 : index
    %338 = vector.load %arg14[%c7_234, %c0_235] : memref<96x32xbf16, #tpu.memory_space<vmem>>, vector<64x32xbf16>
    %cst_236 = arith.constant 0.000000e+00 : bf16
    %339 = vector.shape_cast %332 : vector<64x1xi1> to vector<64x1xi1>
    %340 = vector.broadcast %339 : vector<64x1xi1> to vector<64x32xi1>
    %341 = vector.broadcast %cst_236 : bf16 to vector<64x32xbf16>
    %342 = arith.select %340, %338, %341 : vector<64x32xi1>, vector<64x32xbf16>
    %c0_237 = arith.constant 0 : index
    %c0_238 = arith.constant 0 : index
    %c0_239 = arith.constant 0 : index
    %343 = vector.load %arg5[%c0_237, %c0_238, %c0_239] : memref<9x32x32xbf16, #tpu.memory_space<vmem>>, vector<1x32x32xbf16>
    %344 = vector.shape_cast %343 : vector<1x32x32xbf16> to vector<32x32xbf16>
    %cst_240 = arith.constant dense<0.000000e+00> : vector<64x32xf32>
    %345 = tpu.matmul %342, %344, %cst_240 {dimension_numbers = #tpu.dot_dimension_numbers<[1], [0], [0], [1], [0, 0, 1, 1], [], []>} : vector<64x32xbf16>, vector<32x32xbf16>, vector<64x32xf32> -> vector<64x32xf32>
    %346 = arith.addf %337, %345 : vector<64x32xf32>
    %c8_241 = arith.constant 8 : index
    %c0_242 = arith.constant 0 : index
    %347 = vector.load %arg14[%c8_241, %c0_242] : memref<96x32xbf16, #tpu.memory_space<vmem>>, vector<64x32xbf16>
    %c1_243 = arith.constant 1 : index
    %c0_244 = arith.constant 0 : index
    %c0_245 = arith.constant 0 : index
    %348 = vector.load %arg5[%c1_243, %c0_244, %c0_245] : memref<9x32x32xbf16, #tpu.memory_space<vmem>>, vector<1x32x32xbf16>
    %349 = vector.shape_cast %348 : vector<1x32x32xbf16> to vector<32x32xbf16>
    %cst_246 = arith.constant dense<0.000000e+00> : vector<64x32xf32>
    %350 = tpu.matmul %347, %349, %cst_246 {dimension_numbers = #tpu.dot_dimension_numbers<[1], [0], [0], [1], [0, 0, 1, 1], [], []>} : vector<64x32xbf16>, vector<32x32xbf16>, vector<64x32xf32> -> vector<64x32xf32>
    %351 = arith.addf %346, %350 : vector<64x32xf32>
    %c9_247 = arith.constant 9 : index
    %c0_248 = arith.constant 0 : index
    %352 = vector.load %arg14[%c9_247, %c0_248] : memref<96x32xbf16, #tpu.memory_space<vmem>>, vector<64x32xbf16>
    %cst_249 = arith.constant 0.000000e+00 : bf16
    %353 = vector.shape_cast %334 : vector<64x1xi1> to vector<64x1xi1>
    %354 = vector.broadcast %353 : vector<64x1xi1> to vector<64x32xi1>
    %355 = vector.broadcast %cst_249 : bf16 to vector<64x32xbf16>
    %356 = arith.select %354, %352, %355 : vector<64x32xi1>, vector<64x32xbf16>
    %c2_250 = arith.constant 2 : index
    %c0_251 = arith.constant 0 : index
    %c0_252 = arith.constant 0 : index
    %357 = vector.load %arg5[%c2_250, %c0_251, %c0_252] : memref<9x32x32xbf16, #tpu.memory_space<vmem>>, vector<1x32x32xbf16>
    %358 = vector.shape_cast %357 : vector<1x32x32xbf16> to vector<32x32xbf16>
    %cst_253 = arith.constant dense<0.000000e+00> : vector<64x32xf32>
    %359 = tpu.matmul %356, %358, %cst_253 {dimension_numbers = #tpu.dot_dimension_numbers<[1], [0], [0], [1], [0, 0, 1, 1], [], []>} : vector<64x32xbf16>, vector<32x32xbf16>, vector<64x32xf32> -> vector<64x32xf32>
    %360 = arith.addf %351, %359 : vector<64x32xf32>
    %c15_254 = arith.constant 15 : index
    %c0_255 = arith.constant 0 : index
    %361 = vector.load %arg14[%c15_254, %c0_255] : memref<96x32xbf16, #tpu.memory_space<vmem>>, vector<64x32xbf16>
    %cst_256 = arith.constant 0.000000e+00 : bf16
    %362 = vector.shape_cast %332 : vector<64x1xi1> to vector<64x1xi1>
    %363 = vector.broadcast %362 : vector<64x1xi1> to vector<64x32xi1>
    %364 = vector.broadcast %cst_256 : bf16 to vector<64x32xbf16>
    %365 = arith.select %363, %361, %364 : vector<64x32xi1>, vector<64x32xbf16>
    %c3_257 = arith.constant 3 : index
    %c0_258 = arith.constant 0 : index
    %c0_259 = arith.constant 0 : index
    %366 = vector.load %arg5[%c3_257, %c0_258, %c0_259] : memref<9x32x32xbf16, #tpu.memory_space<vmem>>, vector<1x32x32xbf16>
    %367 = vector.shape_cast %366 : vector<1x32x32xbf16> to vector<32x32xbf16>
    %cst_260 = arith.constant dense<0.000000e+00> : vector<64x32xf32>
    %368 = tpu.matmul %365, %367, %cst_260 {dimension_numbers = #tpu.dot_dimension_numbers<[1], [0], [0], [1], [0, 0, 1, 1], [], []>} : vector<64x32xbf16>, vector<32x32xbf16>, vector<64x32xf32> -> vector<64x32xf32>
    %369 = arith.addf %360, %368 : vector<64x32xf32>
    %c16_261 = arith.constant 16 : index
    %c0_262 = arith.constant 0 : index
    %370 = vector.load %arg14[%c16_261, %c0_262] : memref<96x32xbf16, #tpu.memory_space<vmem>>, vector<64x32xbf16>
    %c4_263 = arith.constant 4 : index
    %c0_264 = arith.constant 0 : index
    %c0_265 = arith.constant 0 : index
    %371 = vector.load %arg5[%c4_263, %c0_264, %c0_265] : memref<9x32x32xbf16, #tpu.memory_space<vmem>>, vector<1x32x32xbf16>
    %372 = vector.shape_cast %371 : vector<1x32x32xbf16> to vector<32x32xbf16>
    %cst_266 = arith.constant dense<0.000000e+00> : vector<64x32xf32>
    %373 = tpu.matmul %370, %372, %cst_266 {dimension_numbers = #tpu.dot_dimension_numbers<[1], [0], [0], [1], [0, 0, 1, 1], [], []>} : vector<64x32xbf16>, vector<32x32xbf16>, vector<64x32xf32> -> vector<64x32xf32>
    %374 = arith.addf %369, %373 : vector<64x32xf32>
    %c17_267 = arith.constant 17 : index
    %c0_268 = arith.constant 0 : index
    %375 = vector.load %arg14[%c17_267, %c0_268] : memref<96x32xbf16, #tpu.memory_space<vmem>>, vector<64x32xbf16>
    %cst_269 = arith.constant 0.000000e+00 : bf16
    %376 = vector.shape_cast %334 : vector<64x1xi1> to vector<64x1xi1>
    %377 = vector.broadcast %376 : vector<64x1xi1> to vector<64x32xi1>
    %378 = vector.broadcast %cst_269 : bf16 to vector<64x32xbf16>
    %379 = arith.select %377, %375, %378 : vector<64x32xi1>, vector<64x32xbf16>
    %c5_270 = arith.constant 5 : index
    %c0_271 = arith.constant 0 : index
    %c0_272 = arith.constant 0 : index
    %380 = vector.load %arg5[%c5_270, %c0_271, %c0_272] : memref<9x32x32xbf16, #tpu.memory_space<vmem>>, vector<1x32x32xbf16>
    %381 = vector.shape_cast %380 : vector<1x32x32xbf16> to vector<32x32xbf16>
    %cst_273 = arith.constant dense<0.000000e+00> : vector<64x32xf32>
    %382 = tpu.matmul %379, %381, %cst_273 {dimension_numbers = #tpu.dot_dimension_numbers<[1], [0], [0], [1], [0, 0, 1, 1], [], []>} : vector<64x32xbf16>, vector<32x32xbf16>, vector<64x32xf32> -> vector<64x32xf32>
    %383 = arith.addf %374, %382 : vector<64x32xf32>
    %c23_274 = arith.constant 23 : index
    %c0_275 = arith.constant 0 : index
    %384 = vector.load %arg14[%c23_274, %c0_275] : memref<96x32xbf16, #tpu.memory_space<vmem>>, vector<64x32xbf16>
    %cst_276 = arith.constant 0.000000e+00 : bf16
    %385 = vector.shape_cast %332 : vector<64x1xi1> to vector<64x1xi1>
    %386 = vector.broadcast %385 : vector<64x1xi1> to vector<64x32xi1>
    %387 = vector.broadcast %cst_276 : bf16 to vector<64x32xbf16>
    %388 = arith.select %386, %384, %387 : vector<64x32xi1>, vector<64x32xbf16>
    %c6_277 = arith.constant 6 : index
    %c0_278 = arith.constant 0 : index
    %c0_279 = arith.constant 0 : index
    %389 = vector.load %arg5[%c6_277, %c0_278, %c0_279] : memref<9x32x32xbf16, #tpu.memory_space<vmem>>, vector<1x32x32xbf16>
    %390 = vector.shape_cast %389 : vector<1x32x32xbf16> to vector<32x32xbf16>
    %cst_280 = arith.constant dense<0.000000e+00> : vector<64x32xf32>
    %391 = tpu.matmul %388, %390, %cst_280 {dimension_numbers = #tpu.dot_dimension_numbers<[1], [0], [0], [1], [0, 0, 1, 1], [], []>} : vector<64x32xbf16>, vector<32x32xbf16>, vector<64x32xf32> -> vector<64x32xf32>
    %392 = arith.addf %383, %391 : vector<64x32xf32>
    %c24_281 = arith.constant 24 : index
    %c0_282 = arith.constant 0 : index
    %393 = vector.load %arg14[%c24_281, %c0_282] : memref<96x32xbf16, #tpu.memory_space<vmem>>, vector<64x32xbf16>
    %c7_283 = arith.constant 7 : index
    %c0_284 = arith.constant 0 : index
    %c0_285 = arith.constant 0 : index
    %394 = vector.load %arg5[%c7_283, %c0_284, %c0_285] : memref<9x32x32xbf16, #tpu.memory_space<vmem>>, vector<1x32x32xbf16>
    %395 = vector.shape_cast %394 : vector<1x32x32xbf16> to vector<32x32xbf16>
    %cst_286 = arith.constant dense<0.000000e+00> : vector<64x32xf32>
    %396 = tpu.matmul %393, %395, %cst_286 {dimension_numbers = #tpu.dot_dimension_numbers<[1], [0], [0], [1], [0, 0, 1, 1], [], []>} : vector<64x32xbf16>, vector<32x32xbf16>, vector<64x32xf32> -> vector<64x32xf32>
    %397 = arith.addf %392, %396 : vector<64x32xf32>
    %c25_287 = arith.constant 25 : index
    %c0_288 = arith.constant 0 : index
    %398 = vector.load %arg14[%c25_287, %c0_288] : memref<96x32xbf16, #tpu.memory_space<vmem>>, vector<64x32xbf16>
    %cst_289 = arith.constant 0.000000e+00 : bf16
    %399 = vector.shape_cast %334 : vector<64x1xi1> to vector<64x1xi1>
    %400 = vector.broadcast %399 : vector<64x1xi1> to vector<64x32xi1>
    %401 = vector.broadcast %cst_289 : bf16 to vector<64x32xbf16>
    %402 = arith.select %400, %398, %401 : vector<64x32xi1>, vector<64x32xbf16>
    %c8_290 = arith.constant 8 : index
    %c0_291 = arith.constant 0 : index
    %c0_292 = arith.constant 0 : index
    %403 = vector.load %arg5[%c8_290, %c0_291, %c0_292] : memref<9x32x32xbf16, #tpu.memory_space<vmem>>, vector<1x32x32xbf16>
    %404 = vector.shape_cast %403 : vector<1x32x32xbf16> to vector<32x32xbf16>
    %cst_293 = arith.constant dense<0.000000e+00> : vector<64x32xf32>
    %405 = tpu.matmul %402, %404, %cst_293 {dimension_numbers = #tpu.dot_dimension_numbers<[1], [0], [0], [1], [0, 0, 1, 1], [], []>} : vector<64x32xbf16>, vector<32x32xbf16>, vector<64x32xf32> -> vector<64x32xf32>
    %406 = arith.addf %397, %405 : vector<64x32xf32>
    %cst_294 = arith.constant 0.000000e+00 : f32
    %407 = vector.broadcast %cst_294 : f32 to vector<64x32xf32>
    %408 = arith.maximumf %406, %407 : vector<64x32xf32>
    %409 = arith.truncf %408 : vector<64x32xf32> to vector<64x32xbf16>
    %c16_295 = arith.constant 16 : index
    %c0_296 = arith.constant 0 : index
    %410 = vector.load %arg15[%c16_295, %c0_296] : memref<96x32xbf16, #tpu.memory_space<vmem>>, vector<64x32xbf16>
    tpu.vector_store %arg15[%c16_295, %c0_296], %409 {strides = array<i32>} : memref<96x32xbf16, #tpu.memory_space<vmem>>, vector<64x32xbf16>,
    %411 = tpu.iota {dimensions = array<i32: 0>} : vector<64x1xi32>
    %c0_i32_297 = arith.constant 0 : i32
    %412 = vector.broadcast %c0_i32_297 : i32 to vector<64x1xi32>
    %413 = arith.addi %411, %412 : vector<64x1xi32>
    %c8_i32_298 = arith.constant 8 : i32
    %c0_i32_299 = arith.constant 0 : i32
    %414 = arith.cmpi eq, %c8_i32_298, %c0_i32_299 : i32
    %c1_i32_300 = arith.constant 1 : i32
    %415 = arith.select %414, %c1_i32_300, %c8_i32_298 : i32
    %416 = vector.broadcast %415 : i32 to vector<64x1xi32>
    %417 = arith.remsi %413, %416 : vector<64x1xi32>
    %c0_i32_301 = arith.constant 0 : i32
    %418 = vector.broadcast %c0_i32_301 : i32 to vector<64x1xi32>
    %419 = arith.cmpi ne, %417, %418 : vector<64x1xi32>
    %c0_i32_302 = arith.constant 0 : i32
    %420 = vector.broadcast %c0_i32_302 : i32 to vector<64x1xi32>
    %421 = arith.cmpi slt, %417, %420 : vector<64x1xi32>
    %c0_i32_303 = arith.constant 0 : i32
    %422 = arith.cmpi slt, %415, %c0_i32_303 : i32
    %423 = vector.broadcast %422 : i1 to vector<64x1xi1>
    %424 = vector.broadcast %423 : vector<64x1xi1> to vector<64x1xi1>
    %425 = arith.xori %421, %424 : vector<64x1xi1>
    %426 = arith.andi %425, %419 : vector<64x1xi1>
    %427 = vector.broadcast %415 : i32 to vector<64x1xi32>
    %428 = arith.addi %417, %427 : vector<64x1xi32>
    %429 = arith.select %426, %428, %417 : vector<64x1xi1>, vector<64x1xi32>
    %c0_i32_304 = arith.constant 0 : i32
    %430 = vector.broadcast %c0_i32_304 : i32 to vector<64x1xi32>
    %431 = arith.cmpi ne, %429, %430 : vector<64x1xi32>
    %c7_i32_305 = arith.constant 7 : i32
    %432 = vector.broadcast %c7_i32_305 : i32 to vector<64x1xi32>
    %433 = arith.cmpi ne, %429, %432 : vector<64x1xi32>
    %c0_306 = arith.constant 0 : index
    %c0_307 = arith.constant 0 : index
    %434 = vector.load %arg11[%c0_306, %c0_307] : memref<1x128xf32, #tpu.memory_space<vmem>>, vector<1x128xf32>
    %435 = vector.shape_cast %434 : vector<1x128xf32> to vector<1x128xf32>
    %436 = vector.broadcast %435 : vector<1x128xf32> to vector<64x128xf32>
    %c7_308 = arith.constant 7 : index
    %c0_309 = arith.constant 0 : index
    %437 = vector.load %arg15[%c7_308, %c0_309] : memref<96x32xbf16, #tpu.memory_space<vmem>>, vector<64x32xbf16>
    %cst_310 = arith.constant 0.000000e+00 : bf16
    %438 = vector.shape_cast %431 : vector<64x1xi1> to vector<64x1xi1>
    %439 = vector.broadcast %438 : vector<64x1xi1> to vector<64x32xi1>
    %440 = vector.broadcast %cst_310 : bf16 to vector<64x32xbf16>
    %441 = arith.select %439, %437, %440 : vector<64x32xi1>, vector<64x32xbf16>
    %c0_311 = arith.constant 0 : index
    %c0_312 = arith.constant 0 : index
    %c0_313 = arith.constant 0 : index
    %442 = vector.load %arg6[%c0_311, %c0_312, %c0_313] : memref<9x32x128xbf16, #tpu.memory_space<vmem>>, vector<1x32x128xbf16>
    %443 = vector.shape_cast %442 : vector<1x32x128xbf16> to vector<32x128xbf16>
    %cst_314 = arith.constant dense<0.000000e+00> : vector<64x128xf32>
    %444 = tpu.matmul %441, %443, %cst_314 {dimension_numbers = #tpu.dot_dimension_numbers<[1], [0], [0], [1], [0, 0, 1, 1], [], []>} : vector<64x32xbf16>, vector<32x128xbf16>, vector<64x128xf32> -> vector<64x128xf32>
    %445 = arith.addf %436, %444 : vector<64x128xf32>
    %c8_315 = arith.constant 8 : index
    %c0_316 = arith.constant 0 : index
    %446 = vector.load %arg15[%c8_315, %c0_316] : memref<96x32xbf16, #tpu.memory_space<vmem>>, vector<64x32xbf16>
    %c1_317 = arith.constant 1 : index
    %c0_318 = arith.constant 0 : index
    %c0_319 = arith.constant 0 : index
    %447 = vector.load %arg6[%c1_317, %c0_318, %c0_319] : memref<9x32x128xbf16, #tpu.memory_space<vmem>>, vector<1x32x128xbf16>
    %448 = vector.shape_cast %447 : vector<1x32x128xbf16> to vector<32x128xbf16>
    %cst_320 = arith.constant dense<0.000000e+00> : vector<64x128xf32>
    %449 = tpu.matmul %446, %448, %cst_320 {dimension_numbers = #tpu.dot_dimension_numbers<[1], [0], [0], [1], [0, 0, 1, 1], [], []>} : vector<64x32xbf16>, vector<32x128xbf16>, vector<64x128xf32> -> vector<64x128xf32>
    %450 = arith.addf %445, %449 : vector<64x128xf32>
    %c9_321 = arith.constant 9 : index
    %c0_322 = arith.constant 0 : index
    %451 = vector.load %arg15[%c9_321, %c0_322] : memref<96x32xbf16, #tpu.memory_space<vmem>>, vector<64x32xbf16>
    %cst_323 = arith.constant 0.000000e+00 : bf16
    %452 = vector.shape_cast %433 : vector<64x1xi1> to vector<64x1xi1>
    %453 = vector.broadcast %452 : vector<64x1xi1> to vector<64x32xi1>
    %454 = vector.broadcast %cst_323 : bf16 to vector<64x32xbf16>
    %455 = arith.select %453, %451, %454 : vector<64x32xi1>, vector<64x32xbf16>
    %c2_324 = arith.constant 2 : index
    %c0_325 = arith.constant 0 : index
    %c0_326 = arith.constant 0 : index
    %456 = vector.load %arg6[%c2_324, %c0_325, %c0_326] : memref<9x32x128xbf16, #tpu.memory_space<vmem>>, vector<1x32x128xbf16>
    %457 = vector.shape_cast %456 : vector<1x32x128xbf16> to vector<32x128xbf16>
    %cst_327 = arith.constant dense<0.000000e+00> : vector<64x128xf32>
    %458 = tpu.matmul %455, %457, %cst_327 {dimension_numbers = #tpu.dot_dimension_numbers<[1], [0], [0], [1], [0, 0, 1, 1], [], []>} : vector<64x32xbf16>, vector<32x128xbf16>, vector<64x128xf32> -> vector<64x128xf32>
    %459 = arith.addf %450, %458 : vector<64x128xf32>
    %c15_328 = arith.constant 15 : index
    %c0_329 = arith.constant 0 : index
    %460 = vector.load %arg15[%c15_328, %c0_329] : memref<96x32xbf16, #tpu.memory_space<vmem>>, vector<64x32xbf16>
    %cst_330 = arith.constant 0.000000e+00 : bf16
    %461 = vector.shape_cast %431 : vector<64x1xi1> to vector<64x1xi1>
    %462 = vector.broadcast %461 : vector<64x1xi1> to vector<64x32xi1>
    %463 = vector.broadcast %cst_330 : bf16 to vector<64x32xbf16>
    %464 = arith.select %462, %460, %463 : vector<64x32xi1>, vector<64x32xbf16>
    %c3_331 = arith.constant 3 : index
    %c0_332 = arith.constant 0 : index
    %c0_333 = arith.constant 0 : index
    %465 = vector.load %arg6[%c3_331, %c0_332, %c0_333] : memref<9x32x128xbf16, #tpu.memory_space<vmem>>, vector<1x32x128xbf16>
    %466 = vector.shape_cast %465 : vector<1x32x128xbf16> to vector<32x128xbf16>
    %cst_334 = arith.constant dense<0.000000e+00> : vector<64x128xf32>
    %467 = tpu.matmul %464, %466, %cst_334 {dimension_numbers = #tpu.dot_dimension_numbers<[1], [0], [0], [1], [0, 0, 1, 1], [], []>} : vector<64x32xbf16>, vector<32x128xbf16>, vector<64x128xf32> -> vector<64x128xf32>
    %468 = arith.addf %459, %467 : vector<64x128xf32>
    %c16_335 = arith.constant 16 : index
    %c0_336 = arith.constant 0 : index
    %469 = vector.load %arg15[%c16_335, %c0_336] : memref<96x32xbf16, #tpu.memory_space<vmem>>, vector<64x32xbf16>
    %c4_337 = arith.constant 4 : index
    %c0_338 = arith.constant 0 : index
    %c0_339 = arith.constant 0 : index
    %470 = vector.load %arg6[%c4_337, %c0_338, %c0_339] : memref<9x32x128xbf16, #tpu.memory_space<vmem>>, vector<1x32x128xbf16>
    %471 = vector.shape_cast %470 : vector<1x32x128xbf16> to vector<32x128xbf16>
    %cst_340 = arith.constant dense<0.000000e+00> : vector<64x128xf32>
    %472 = tpu.matmul %469, %471, %cst_340 {dimension_numbers = #tpu.dot_dimension_numbers<[1], [0], [0], [1], [0, 0, 1, 1], [], []>} : vector<64x32xbf16>, vector<32x128xbf16>, vector<64x128xf32> -> vector<64x128xf32>
    %473 = arith.addf %468, %472 : vector<64x128xf32>
    %c17_341 = arith.constant 17 : index
    %c0_342 = arith.constant 0 : index
    %474 = vector.load %arg15[%c17_341, %c0_342] : memref<96x32xbf16, #tpu.memory_space<vmem>>, vector<64x32xbf16>
    %cst_343 = arith.constant 0.000000e+00 : bf16
    %475 = vector.shape_cast %433 : vector<64x1xi1> to vector<64x1xi1>
    %476 = vector.broadcast %475 : vector<64x1xi1> to vector<64x32xi1>
    %477 = vector.broadcast %cst_343 : bf16 to vector<64x32xbf16>
    %478 = arith.select %476, %474, %477 : vector<64x32xi1>, vector<64x32xbf16>
    %c5_344 = arith.constant 5 : index
    %c0_345 = arith.constant 0 : index
    %c0_346 = arith.constant 0 : index
    %479 = vector.load %arg6[%c5_344, %c0_345, %c0_346] : memref<9x32x128xbf16, #tpu.memory_space<vmem>>, vector<1x32x128xbf16>
    %480 = vector.shape_cast %479 : vector<1x32x128xbf16> to vector<32x128xbf16>
    %cst_347 = arith.constant dense<0.000000e+00> : vector<64x128xf32>
    %481 = tpu.matmul %478, %480, %cst_347 {dimension_numbers = #tpu.dot_dimension_numbers<[1], [0], [0], [1], [0, 0, 1, 1], [], []>} : vector<64x32xbf16>, vector<32x128xbf16>, vector<64x128xf32> -> vector<64x128xf32>
    %482 = arith.addf %473, %481 : vector<64x128xf32>
    %c23_348 = arith.constant 23 : index
    %c0_349 = arith.constant 0 : index
    %483 = vector.load %arg15[%c23_348, %c0_349] : memref<96x32xbf16, #tpu.memory_space<vmem>>, vector<64x32xbf16>
    %cst_350 = arith.constant 0.000000e+00 : bf16
    %484 = vector.shape_cast %431 : vector<64x1xi1> to vector<64x1xi1>
    %485 = vector.broadcast %484 : vector<64x1xi1> to vector<64x32xi1>
    %486 = vector.broadcast %cst_350 : bf16 to vector<64x32xbf16>
    %487 = arith.select %485, %483, %486 : vector<64x32xi1>, vector<64x32xbf16>
    %c6_351 = arith.constant 6 : index
    %c0_352 = arith.constant 0 : index
    %c0_353 = arith.constant 0 : index
    %488 = vector.load %arg6[%c6_351, %c0_352, %c0_353] : memref<9x32x128xbf16, #tpu.memory_space<vmem>>, vector<1x32x128xbf16>
    %489 = vector.shape_cast %488 : vector<1x32x128xbf16> to vector<32x128xbf16>
    %cst_354 = arith.constant dense<0.000000e+00> : vector<64x128xf32>
    %490 = tpu.matmul %487, %489, %cst_354 {dimension_numbers = #tpu.dot_dimension_numbers<[1], [0], [0], [1], [0, 0, 1, 1], [], []>} : vector<64x32xbf16>, vector<32x128xbf16>, vector<64x128xf32> -> vector<64x128xf32>
    %491 = arith.addf %482, %490 : vector<64x128xf32>
    %c24_355 = arith.constant 24 : index
    %c0_356 = arith.constant 0 : index
    %492 = vector.load %arg15[%c24_355, %c0_356] : memref<96x32xbf16, #tpu.memory_space<vmem>>, vector<64x32xbf16>
    %c7_357 = arith.constant 7 : index
    %c0_358 = arith.constant 0 : index
    %c0_359 = arith.constant 0 : index
    %493 = vector.load %arg6[%c7_357, %c0_358, %c0_359] : memref<9x32x128xbf16, #tpu.memory_space<vmem>>, vector<1x32x128xbf16>
    %494 = vector.shape_cast %493 : vector<1x32x128xbf16> to vector<32x128xbf16>
    %cst_360 = arith.constant dense<0.000000e+00> : vector<64x128xf32>
    %495 = tpu.matmul %492, %494, %cst_360 {dimension_numbers = #tpu.dot_dimension_numbers<[1], [0], [0], [1], [0, 0, 1, 1], [], []>} : vector<64x32xbf16>, vector<32x128xbf16>, vector<64x128xf32> -> vector<64x128xf32>
    %496 = arith.addf %491, %495 : vector<64x128xf32>
    %c25_361 = arith.constant 25 : index
    %c0_362 = arith.constant 0 : index
    %497 = vector.load %arg15[%c25_361, %c0_362] : memref<96x32xbf16, #tpu.memory_space<vmem>>, vector<64x32xbf16>
    %cst_363 = arith.constant 0.000000e+00 : bf16
    %498 = vector.shape_cast %433 : vector<64x1xi1> to vector<64x1xi1>
    %499 = vector.broadcast %498 : vector<64x1xi1> to vector<64x32xi1>
    %500 = vector.broadcast %cst_363 : bf16 to vector<64x32xbf16>
    %501 = arith.select %499, %497, %500 : vector<64x32xi1>, vector<64x32xbf16>
    %c8_364 = arith.constant 8 : index
    %c0_365 = arith.constant 0 : index
    %c0_366 = arith.constant 0 : index
    %502 = vector.load %arg6[%c8_364, %c0_365, %c0_366] : memref<9x32x128xbf16, #tpu.memory_space<vmem>>, vector<1x32x128xbf16>
    %503 = vector.shape_cast %502 : vector<1x32x128xbf16> to vector<32x128xbf16>
    %cst_367 = arith.constant dense<0.000000e+00> : vector<64x128xf32>
    %504 = tpu.matmul %501, %503, %cst_367 {dimension_numbers = #tpu.dot_dimension_numbers<[1], [0], [0], [1], [0, 0, 1, 1], [], []>} : vector<64x32xbf16>, vector<32x128xbf16>, vector<64x128xf32> -> vector<64x128xf32>
    %505 = arith.addf %496, %504 : vector<64x128xf32>
    %c0_368 = arith.constant 0 : index
    %c0_369 = arith.constant 0 : index
    %c0_370 = arith.constant 0 : index
    %506 = vector.load %arg12[%c0_368, %c0_369, %c0_370] : memref<1x64x128xf32, #tpu.memory_space<vmem>>, vector<1x64x128xf32>
    %507 = vector.shape_cast %506 : vector<1x64x128xf32> to vector<64x128xf32>
    %508 = vector.shape_cast %505 : vector<64x128xf32> to vector<1x64x128xf32>
    tpu.vector_store %arg12[%c0_368, %c0_369, %c0_370], %508 {strides = array<i32>} : memref<1x64x128xf32, #tpu.memory_space<vmem>>, vector<1x64x128xf32>,
    return
  }
  func.func @transform_0(%arg0: i32) -> (i32, i32, i32) {
    %c0_i32 = arith.constant 0 : i32
    %c0_i32_0 = arith.constant 0 : i32
    %c0_i32_1 = arith.constant 0 : i32
    return %arg0, %c0_i32, %c0_i32_0 : i32, i32, i32
  }
  func.func @transform_1(%arg0: i32) -> (i32, i32, i32) {
    %c0_i32 = arith.constant 0 : i32
    %c0_i32_0 = arith.constant 0 : i32
    %c0_i32_1 = arith.constant 0 : i32
    %c0_i32_2 = arith.constant 0 : i32
    return %c0_i32, %c0_i32_0, %c0_i32_1 : i32, i32, i32
  }
  func.func @transform_2(%arg0: i32) -> (i32, i32, i32) {
    %c0_i32 = arith.constant 0 : i32
    %c0_i32_0 = arith.constant 0 : i32
    %c0_i32_1 = arith.constant 0 : i32
    %c0_i32_2 = arith.constant 0 : i32
    return %c0_i32, %c0_i32_0, %c0_i32_1 : i32, i32, i32
  }
  func.func @transform_3(%arg0: i32) -> (i32, i32, i32) {
    %c0_i32 = arith.constant 0 : i32
    %c0_i32_0 = arith.constant 0 : i32
    %c0_i32_1 = arith.constant 0 : i32
    %c0_i32_2 = arith.constant 0 : i32
    return %c0_i32, %c0_i32_0, %c0_i32_1 : i32, i32, i32
  }
  func.func @transform_4(%arg0: i32) -> (i32, i32, i32) {
    %c0_i32 = arith.constant 0 : i32
    %c0_i32_0 = arith.constant 0 : i32
    %c0_i32_1 = arith.constant 0 : i32
    %c0_i32_2 = arith.constant 0 : i32
    return %c0_i32, %c0_i32_0, %c0_i32_1 : i32, i32, i32
  }
  func.func @transform_5(%arg0: i32) -> (i32, i32, i32) {
    %c0_i32 = arith.constant 0 : i32
    %c0_i32_0 = arith.constant 0 : i32
    %c0_i32_1 = arith.constant 0 : i32
    %c0_i32_2 = arith.constant 0 : i32
    return %c0_i32, %c0_i32_0, %c0_i32_1 : i32, i32, i32
  }
  func.func @transform_6(%arg0: i32) -> (i32, i32) {
    %c0_i32 = arith.constant 0 : i32
    %c0_i32_0 = arith.constant 0 : i32
    %c0_i32_1 = arith.constant 0 : i32
    return %c0_i32, %c0_i32_0 : i32, i32
  }
  func.func @transform_7(%arg0: i32) -> (i32, i32) {
    %c0_i32 = arith.constant 0 : i32
    %c0_i32_0 = arith.constant 0 : i32
    %c0_i32_1 = arith.constant 0 : i32
    return %c0_i32, %c0_i32_0 : i32, i32
  }
  func.func @transform_8(%arg0: i32) -> (i32, i32) {
    %c0_i32 = arith.constant 0 : i32
    %c0_i32_0 = arith.constant 0 : i32
    %c0_i32_1 = arith.constant 0 : i32
    return %c0_i32, %c0_i32_0 : i32, i32
  }
  func.func @transform_9(%arg0: i32) -> (i32, i32) {
    %c0_i32 = arith.constant 0 : i32
    %c0_i32_0 = arith.constant 0 : i32
    %c0_i32_1 = arith.constant 0 : i32
    return %c0_i32, %c0_i32_0 : i32, i32
  }
  func.func @transform_10(%arg0: i32) -> (i32, i32) {
    %c0_i32 = arith.constant 0 : i32
    %c0_i32_0 = arith.constant 0 : i32
    %c0_i32_1 = arith.constant 0 : i32
    return %c0_i32, %c0_i32_0 : i32, i32
  }
  func.func @transform_11(%arg0: i32) -> (i32, i32, i32) {
    %c0_i32 = arith.constant 0 : i32
    %c0_i32_0 = arith.constant 0 : i32
    %c0_i32_1 = arith.constant 0 : i32
    return %arg0, %c0_i32, %c0_i32_0 : i32, i32, i32
  }
}

</mosaic_0001>

<llo_original>
// kernel: tpu_custom_call.1
$region0: #{tpu_custom_call.1}
  #allocation0 [shape = 'u32[]', space=smem, size = 0x4, offset = 0x4, fixed_abs, tag = 'smem constant byte address 0x4 - core index']
  #allocation1 [shape = 'u32[144,128]{1,0:T(1,128)}', space=vmem, size = 0x12000, scoped, tag = 'internal scratch']
  #allocation2 [shape = 'bf16[96,16]{1,0:T(8,128)(2,1)}', space=vmem, size = 0x6000, scoped, tag = 'scratch operand']
  #allocation3 [shape = 'bf16[96,32]{1,0:T(8,128)(2,1)}', space=vmem, size = 0x6000, scoped, tag = 'scratch operand']
  #allocation4 [shape = 'bf16[96,32]{1,0:T(8,128)(2,1)}', space=vmem, size = 0x6000, scoped, tag = 'scratch operand']
  %s0 = inlined_call_operand.vmem [shape: bf16[2,64,16], index: 0, kind: input, shape index: {}]
  %s1 = inlined_call_operand.vmem [shape: bf16[9,16,32], index: 1, kind: input, shape index: {}]
  %s2 = inlined_call_operand.hbm [shape: bf16[9,32,32], index: 2, kind: input, shape index: {}]
  %s3 = inlined_call_operand.hbm [shape: bf16[9,32,32], index: 3, kind: input, shape index: {}]
  %s4 = inlined_call_operand.hbm [shape: bf16[9,32,32], index: 4, kind: input, shape index: {}]
  %s5 = inlined_call_operand.hbm [shape: bf16[9,32,128], index: 5, kind: input, shape index: {}]
  %s6 = inlined_call_operand.vmem [shape: f32[1,32], index: 6, kind: input, shape index: {}]
  %s7 = inlined_call_operand.vmem [shape: f32[1,32], index: 7, kind: input, shape index: {}]
  %s8 = inlined_call_operand.vmem [shape: f32[1,32], index: 8, kind: input, shape index: {}]
  %s9 = inlined_call_operand.vmem [shape: f32[1,32], index: 9, kind: input, shape index: {}]
  %s10 = inlined_call_operand.vmem [shape: f32[1,128], index: 10, kind: input, shape index: {}]
  %s11 = inlined_call_operand.hbm [shape: f32[2,64,128], index: 11, kind: output, shape index: {}]
  %s12 = sld [smem:[#allocation0]]
  $region93: #{tpu_custom_call.1} parent=0
    _
  %s14 = ssub.s32 1, %s12
  %s15 = scalar_select 0, %s14, %s12
  $region1: #{tpu_custom_call.1} parent=0
    #allocation5 [shape = 'u8[73728]{0}', space=vmem, size = 0x12000, scoped, tag = 'input window, operand 2, single buffered']
    #allocation6 [shape = 's32[2]{0}', space=sflag, size = 0x8, scoped, tag = 'scoped memory for tpu_custom_call.1']
    #allocation7 [shape = 's32[2]{0}', space=sflag, size = 0x8, scoped, tag = 'scoped memory for tpu_custom_call.1']
    #allocation8 [shape = 'u8[73728]{0}', space=vmem, size = 0x12000, scoped, tag = 'input window, operand 3, single buffered']
    #allocation9 [shape = 's32[1]{0}', space=sflag, size = 0x4, scoped, tag = 'scoped memory for tpu_custom_call.1']
    #allocation10 [shape = 'u8[73728]{0}', space=vmem, size = 0x12000, scoped, tag = 'input window, operand 4, single buffered']
    #allocation11 [shape = 'u8[73728]{0}', space=vmem, size = 0x12000, scoped, tag = 'input window, operand 5, single buffered']
    #allocation12 [shape = 's32[1]{0}', space=sflag, size = 0x4, scoped, tag = 'scoped memory for tpu_custom_call.1']
    #allocation13 [shape = 'u8[65536]{0}', space=vmem, size = 0x10000, scoped, tag = 'output window, operand 0']
    %16 = vsyncpa [#allocation6], 0
    %17 = vsyncpa [#allocation9], 0
    %18 = vsyncpa [#allocation12], 0
    %19 = vsyncpa [#allocation7], 0
    %s20 = scalar_lea.sflag [#allocation7], 1
    %21 = vsyncpa %s20, 0
    loop: start=0, step=1, limit=4
    $region2: #{tpu_custom_call.1} parent=1 // loop_pre_header
      _
    $region3: #{tpu_custom_call.1} parent=1 // loop_header
      %s23 = sphi 0, %s27
      %p24 = scmp.ge.s32.totalorder %s23, 4
      %s33 = sphi 0, %s35
      %s36 = sphi 0, %s33
      %s37 = sphi 0, %s36
      %s53 = sphi 0, %s37
      %s57 = sphi 0, %s57
      %s59 = sphi 0, %s57
      %s60 = sphi 0, %s59
      %s74 = sphi 0, %s60
      %s78 = sphi 0, %s78
      %s80 = sphi 0, %s78
      %s81 = sphi 0, %s80
      %s95 = sphi 0, %s81
      %s99 = sphi 0, %s99
      %s101 = sphi 0, %s99
      %s102 = sphi 0, %s101
      %s116 = sphi 0, %s102
      %s120 = sphi 0, %s120
      %s122 = sphi 0, %s120
      %s123 = sphi 0, %s122
      %s137 = sphi 0, %s123
      %s141 = sphi 0, %s141
      %s143 = sphi 0, %s141
      %s144 = sphi 0, %s143
      %s158 = sphi 0, %s144
      %s162 = sphi 0, %s162
      %s164 = sphi 0, %s162
      %s165 = sphi 0, %s164
      %s179 = sphi 0, %s165
      %s183 = sphi 0, %s183
      %s185 = sphi 0, %s183
      %s186 = sphi 0, %s185
      %s200 = sphi 0, %s186
      %s204 = sphi 0, %s204
      %s206 = sphi 0, %s204
      %s207 = sphi 0, %s206
      %s221 = sphi 0, %s207
      %s225 = sphi 0, %s225
      %s227 = sphi 0, %s225
      %s228 = sphi 0, %s227
      %s242 = sphi 0, %s228
      %s246 = sphi 0, %s246
      %s248 = sphi 0, %s246
      %s249 = sphi 0, %s248
      %s263 = sphi 0, %s249
      %s269 = sphi 0, %s271
      %s272 = sphi 0, %s269
      %s273 = sphi 0, %s272
      %s289 = sphi 0, %s273
    $region4: #{tpu_custom_call.1} parent=1 // loop_header_branch
      %26 = sbr.rel (%p24) target = $region8
    $region5: #{tpu_custom_call.1} parent=1 // loop_body
      %s28 = ssub.s32 %s23, 1
      %s29 = ssub.s32 %s23, 2
      %s30 = sadd.s32 %s23, 1
      %s31 = ssub.s32 %s23, %s30
      %p32 = scmp.eq.s32.totalorder %s31, 0
      %s34 = sadd.s32 %s33, 1
      %s35 = scalar_select %p32, %s33, %s34
      %p38 = pneg %p32
      %p39 = scmp.eq.s32.totalorder %s23, 1
      %p40 = por %p38, %p39
      %p41 = scmp.ne.s32.totalorder %s33, %s36
      %p42 = scmp.eq.s32.totalorder %s23, 0
      %p43 = por %p41, %p42
      %p44 = scmp.ne.s32.totalorder %s33, %s36
      %p45 = scmp.eq.s32.totalorder %s28, 1
      %p46 = por %p44, %p45
      %p47 = scmp.ne.s32.totalorder %s36, %s37
      %p48 = scmp.eq.s32.totalorder %s28, 0
      %p49 = por %p47, %p48
      %p50 = scmp.ne.s32.totalorder %s36, %s37
      %p51 = scmp.eq.s32.totalorder %s29, 1
      %p52 = por %p50, %p51
      %p54 = scmp.ne.s32.totalorder %s37, %s53
      %p55 = scmp.eq.s32.totalorder %s29, 0
      %p56 = por %p54, %p55
      %s58 = sadd.s32 %s57, 1
      %p61 = scmp.eq.s32.totalorder %s23, 1
      %p62 = scmp.ne.s32.totalorder %s57, %s59
      %p63 = scmp.eq.s32.totalorder %s23, 0
      %p64 = por %p62, %p63
      %p65 = scmp.ne.s32.totalorder %s57, %s59
      %p66 = scmp.eq.s32.totalorder %s28, 1
      %p67 = por %p65, %p66
      %p68 = scmp.ne.s32.totalorder %s59, %s60
      %p69 = scmp.eq.s32.totalorder %s28, 0
      %p70 = por %p68, %p69
      %p71 = scmp.ne.s32.totalorder %s59, %s60
      %p72 = scmp.eq.s32.totalorder %s29, 1
      %p73 = por %p71, %p72
      %p75 = scmp.ne.s32.totalorder %s60, %s74
      %p76 = scmp.eq.s32.totalorder %s29, 0
      %p77 = por %p75, %p76
      %s79 = sadd.s32 %s78, 1
      %p82 = scmp.eq.s32.totalorder %s23, 1
      %p83 = scmp.ne.s32.totalorder %s78, %s80
      %p84 = scmp.eq.s32.totalorder %s23, 0
      %p85 = por %p83, %p84
      %p86 = scmp.ne.s32.totalorder %s78, %s80
      %p87 = scmp.eq.s32.totalorder %s28, 1
      %p88 = por %p86, %p87
      %p89 = scmp.ne.s32.totalorder %s80, %s81
      %p90 = scmp.eq.s32.totalorder %s28, 0
      %p91 = por %p89, %p90
      %p92 = scmp.ne.s32.totalorder %s80, %s81
      %p93 = scmp.eq.s32.totalorder %s29, 1
      %p94 = por %p92, %p93
      %p96 = scmp.ne.s32.totalorder %s81, %s95
      %p97 = scmp.eq.s32.totalorder %s29, 0
      %p98 = por %p96, %p97
      %s100 = sadd.s32 %s99, 1
      %p103 = scmp.eq.s32.totalorder %s23, 1
      %p104 = scmp.ne.s32.totalorder %s99, %s101
      %p105 = scmp.eq.s32.totalorder %s23, 0
      %p106 = por %p104, %p105
      %p107 = scmp.ne.s32.totalorder %s99, %s101
      %p108 = scmp.eq.s32.totalorder %s28, 1
      %p109 = por %p107, %p108
      %p110 = scmp.ne.s32.totalorder %s101, %s102
      %p111 = scmp.eq.s32.totalorder %s28, 0
      %p112 = por %p110, %p111
      %p113 = scmp.ne.s32.totalorder %s101, %s102
      %p114 = scmp.eq.s32.totalorder %s29, 1
      %p115 = por %p113, %p114
      %p117 = scmp.ne.s32.totalorder %s102, %s116
      %p118 = scmp.eq.s32.totalorder %s29, 0
      %p119 = por %p117, %p118
      %s121 = sadd.s32 %s120, 1
      %p124 = scmp.eq.s32.totalorder %s23, 1
      %p125 = scmp.ne.s32.totalorder %s120, %s122
      %p126 = scmp.eq.s32.totalorder %s23, 0
      %p127 = por %p125, %p126
      %p128 = scmp.ne.s32.totalorder %s120, %s122
      %p129 = scmp.eq.s32.totalorder %s28, 1
      %p130 = por %p128, %p129
      %p131 = scmp.ne.s32.totalorder %s122, %s123
      %p132 = scmp.eq.s32.totalorder %s28, 0
      %p133 = por %p131, %p132
      %p134 = scmp.ne.s32.totalorder %s122, %s123
      %p135 = scmp.eq.s32.totalorder %s29, 1
      %p136 = por %p134, %p135
      %p138 = scmp.ne.s32.totalorder %s123, %s137
      %p139 = scmp.eq.s32.totalorder %s29, 0
      %p140 = por %p138, %p139
      %s142 = sadd.s32 %s141, 1
      %p145 = scmp.eq.s32.totalorder %s23, 1
      %p146 = scmp.ne.s32.totalorder %s141, %s143
      %p147 = scmp.eq.s32.totalorder %s23, 0
      %p148 = por %p146, %p147
      %p149 = scmp.ne.s32.totalorder %s141, %s143
      %p150 = scmp.eq.s32.totalorder %s28, 1
      %p151 = por %p149, %p150
      %p152 = scmp.ne.s32.totalorder %s143, %s144
      %p153 = scmp.eq.s32.totalorder %s28, 0
      %p154 = por %p152, %p153
      %p155 = scmp.ne.s32.totalorder %s143, %s144
      %p156 = scmp.eq.s32.totalorder %s29, 1
      %p157 = por %p155, %p156
      %p159 = scmp.ne.s32.totalorder %s144, %s158
      %p160 = scmp.eq.s32.totalorder %s29, 0
      %p161 = por %p159, %p160
      %s163 = sadd.s32 %s162, 1
      %p166 = scmp.eq.s32.totalorder %s23, 1
      %p167 = scmp.ne.s32.totalorder %s162, %s164
      %p168 = scmp.eq.s32.totalorder %s23, 0
      %p169 = por %p167, %p168
      %p170 = scmp.ne.s32.totalorder %s162, %s164
      %p171 = scmp.eq.s32.totalorder %s28, 1
      %p172 = por %p170, %p171
      %p173 = scmp.ne.s32.totalorder %s164, %s165
      %p174 = scmp.eq.s32.totalorder %s28, 0
      %p175 = por %p173, %p174
      %p176 = scmp.ne.s32.totalorder %s164, %s165
      %p177 = scmp.eq.s32.totalorder %s29, 1
      %p178 = por %p176, %p177
      %p180 = scmp.ne.s32.totalorder %s165, %s179
      %p181 = scmp.eq.s32.totalorder %s29, 0
      %p182 = por %p180, %p181
      %s184 = sadd.s32 %s183, 1
      %p187 = scmp.eq.s32.totalorder %s23, 1
      %p188 = scmp.ne.s32.totalorder %s183, %s185
      %p189 = scmp.eq.s32.totalorder %s23, 0
      %p190 = por %p188, %p189
      %p191 = scmp.ne.s32.totalorder %s183, %s185
      %p192 = scmp.eq.s32.totalorder %s28, 1
      %p193 = por %p191, %p192
      %p194 = scmp.ne.s32.totalorder %s185, %s186
      %p195 = scmp.eq.s32.totalorder %s28, 0
      %p196 = por %p194, %p195
      %p197 = scmp.ne.s32.totalorder %s185, %s186
      %p198 = scmp.eq.s32.totalorder %s29, 1
      %p199 = por %p197, %p198
      %p201 = scmp.ne.s32.totalorder %s186, %s200
      %p202 = scmp.eq.s32.totalorder %s29, 0
      %p203 = por %p201, %p202
      %s205 = sadd.s32 %s204, 1
      %p208 = scmp.eq.s32.totalorder %s23, 1
      %p209 = scmp.ne.s32.totalorder %s204, %s206
      %p210 = scmp.eq.s32.totalorder %s23, 0
      %p211 = por %p209, %p210
      %p212 = scmp.ne.s32.totalorder %s204, %s206
      %p213 = scmp.eq.s32.totalorder %s28, 1
      %p214 = por %p212, %p213
      %p215 = scmp.ne.s32.totalorder %s206, %s207
      %p216 = scmp.eq.s32.totalorder %s28, 0
      %p217 = por %p215, %p216
      %p218 = scmp.ne.s32.totalorder %s206, %s207
      %p219 = scmp.eq.s32.totalorder %s29, 1
      %p220 = por %p218, %p219
      %p222 = scmp.ne.s32.totalorder %s207, %s221
      %p223 = scmp.eq.s32.totalorder %s29, 0
      %p224 = por %p222, %p223
      %s226 = sadd.s32 %s225, 1
      %p229 = scmp.eq.s32.totalorder %s23, 1
      %p230 = scmp.ne.s32.totalorder %s225, %s227
      %p231 = scmp.eq.s32.totalorder %s23, 0
      %p232 = por %p230, %p231
      %p233 = scmp.ne.s32.totalorder %s225, %s227
      %p234 = scmp.eq.s32.totalorder %s28, 1
      %p235 = por %p233, %p234
      %p236 = scmp.ne.s32.totalorder %s227, %s228
      %p237 = scmp.eq.s32.totalorder %s28, 0
      %p238 = por %p236, %p237
      %p239 = scmp.ne.s32.totalorder %s227, %s228
      %p240 = scmp.eq.s32.totalorder %s29, 1
      %p241 = por %p239, %p240
      %p243 = scmp.ne.s32.totalorder %s228, %s242
      %p244 = scmp.eq.s32.totalorder %s29, 0
      %p245 = por %p243, %p244
      %s247 = sadd.s32 %s246, 1
      %p250 = scmp.eq.s32.totalorder %s23, 1
      %p251 = scmp.ne.s32.totalorder %s246, %s248
      %p252 = scmp.eq.s32.totalorder %s23, 0
      %p253 = por %p251, %p252
      %p254 = scmp.ne.s32.totalorder %s246, %s248
      %p255 = scmp.eq.s32.totalorder %s28, 1
      %p256 = por %p254, %p255
      %p257 = scmp.ne.s32.totalorder %s248, %s249
      %p258 = scmp.eq.s32.totalorder %s28, 0
      %p259 = por %p257, %p258
      %p260 = scmp.ne.s32.totalorder %s248, %s249
      %p261 = scmp.eq.s32.totalorder %s29, 1
      %p262 = por %p260, %p261
      %p264 = scmp.ne.s32.totalorder %s249, %s263
      %p265 = scmp.eq.s32.totalorder %s29, 0
      %p266 = por %p264, %p265
      %s267 = ssub.s32 %s23, %s30
      %p268 = scmp.eq.s32.totalorder %s267, 0
      %s270 = sadd.s32 %s269, 1
      %s271 = scalar_select %p268, %s269, %s270
      %p274 = pneg %p268
      %p275 = scmp.eq.s32.totalorder %s23, 1
      %p276 = por %p274, %p275
      %p277 = scmp.ne.s32.totalorder %s269, %s272
      %p278 = scmp.eq.s32.totalorder %s23, 0
      %p279 = por %p277, %p278
      %p280 = scmp.ne.s32.totalorder %s269, %s272
      %p281 = scmp.eq.s32.totalorder %s28, 1
      %p282 = por %p280, %p281
      %p283 = scmp.ne.s32.totalorder %s272, %s273
      %p284 = scmp.eq.s32.totalorder %s28, 0
      %p285 = por %p283, %p284
      %p286 = scmp.ne.s32.totalorder %s272, %s273
      %p287 = scmp.eq.s32.totalorder %s29, 1
      %p288 = por %p286, %p287
      %p290 = scmp.ne.s32.totalorder %s273, %s289
      %p291 = scmp.eq.s32.totalorder %s29, 0
      %p292 = por %p290, %p291
      %p293 = scmp.le.s32.totalorder 1, %s23
      %p294 = scmp.lt.s32.totalorder %s23, 3
      %p295 = pnand %p293, %p294
      %p296 = pneg %p295
      // Predicated region
      $region9: #{tpu_custom_call.1} parent=5 // pred_check
        _
      $region10: #{tpu_custom_call.1} parent=5 // pred_check_branch
        %298 = sbr.rel (%p295) target = $region12
      $region11: #{tpu_custom_call.1} parent=5 // pred_region
        %s299 = ssub.s32 %s23, 1
        // Predicated region
        $region13: #{tpu_custom_call.1} parent=11 // pred_check
          %p300 = pneg %p70
        $region14: #{tpu_custom_call.1} parent=11 // pred_check_branch
          %302 = sbr.rel (%p300) target = $region16
        $region15: #{tpu_custom_call.1} parent=11 // pred_region
          _
        $region16: #{tpu_custom_call.1} parent=11 // pred_fallthru
          _
        // Predicated region
        $region17: #{tpu_custom_call.1} parent=11 // pred_check
          %p303 = pneg %p91
        $region18: #{tpu_custom_call.1} parent=11 // pred_check_branch
          %305 = sbr.rel (%p303) target = $region20
        $region19: #{tpu_custom_call.1} parent=11 // pred_region
          %s307 = ssub.s32 2304, 2304
          %308 = vsyncadd [#allocation6], %s307
          %s309 = sshll.u32 [#allocation5], 4
          %s310 = int_to_ptr.vmem [resolvable:$true] %s309
          %315 = dma.hbm_to_vmem [thread:$0]  %s2, 2304, %s310, [#allocation6], 64, 64, 4
        $region20: #{tpu_custom_call.1} parent=11 // pred_fallthru
          _
        // Predicated region
        $region21: #{tpu_custom_call.1} parent=11 // pred_check
          %p316 = pneg %p112
        $region22: #{tpu_custom_call.1} parent=11 // pred_check_branch
          %318 = sbr.rel (%p316) target = $region24
        $region23: #{tpu_custom_call.1} parent=11 // pred_region
          %s320 = ssub.s32 2304, 2304
          %321 = vsyncadd [#allocation9], %s320
          %s322 = sshll.u32 [#allocation8], 4
          %s323 = int_to_ptr.vmem [resolvable:$true] %s322
          %328 = dma.hbm_to_vmem [thread:$0]  %s3, 2304, %s323, [#allocation9], 64, 64, 4
        $region24: #{tpu_custom_call.1} parent=11 // pred_fallthru
          _
        // Predicated region
        $region25: #{tpu_custom_call.1} parent=11 // pred_check
          %p329 = pneg %p133
        $region26: #{tpu_custom_call.1} parent=11 // pred_check_branch
          %331 = sbr.rel (%p329) target = $region28
        $region27: #{tpu_custom_call.1} parent=11 // pred_region
          %s333 = ssub.s32 2304, 2304
          %334 = vsyncadd [#allocation9], %s333
          %s335 = sshll.u32 [#allocation10], 4
          %s336 = int_to_ptr.vmem [resolvable:$true] %s335
          %341 = dma.hbm_to_vmem [thread:$0]  %s4, 2304, %s336, [#allocation9], 64, 64, 4
        $region28: #{tpu_custom_call.1} parent=11 // pred_fallthru
          _
        // Predicated region
        $region29: #{tpu_custom_call.1} parent=11 // pred_check
          %p342 = pneg %p154
        $region30: #{tpu_custom_call.1} parent=11 // pred_check_branch
          %344 = sbr.rel (%p342) target = $region32
        $region31: #{tpu_custom_call.1} parent=11 // pred_region
          %s346 = ssub.s32 2304, 2304
          %347 = vsyncadd [#allocation12], %s346
          %s348 = sshll.u32 [#allocation11], 4
          %s349 = int_to_ptr.vmem [resolvable:$true] %s348
          %354 = dma.hbm_to_vmem [thread:$0]  %s5, 2304, %s349, [#allocation12], 64, 64, 4
        $region32: #{tpu_custom_call.1} parent=11 // pred_fallthru
          _
        // Predicated region
        $region33: #{tpu_custom_call.1} parent=11 // pred_check
          %p355 = pneg %p175
        $region34: #{tpu_custom_call.1} parent=11 // pred_check_branch
          %357 = sbr.rel (%p355) target = $region36
        $region35: #{tpu_custom_call.1} parent=11 // pred_region
          _
        $region36: #{tpu_custom_call.1} parent=11 // pred_fallthru
          _
        // Predicated region
        $region37: #{tpu_custom_call.1} parent=11 // pred_check
          %p358 = pneg %p196
        $region38: #{tpu_custom_call.1} parent=11 // pred_check_branch
          %360 = sbr.rel (%p358) target = $region40
        $region39: #{tpu_custom_call.1} parent=11 // pred_region
          _
        $region40: #{tpu_custom_call.1} parent=11 // pred_fallthru
          _
        // Predicated region
        $region41: #{tpu_custom_call.1} parent=11 // pred_check
          %p361 = pneg %p217
        $region42: #{tpu_custom_call.1} parent=11 // pred_check_branch
          %363 = sbr.rel (%p361) target = $region44
        $region43: #{tpu_custom_call.1} parent=11 // pred_region
          _
        $region44: #{tpu_custom_call.1} parent=11 // pred_fallthru
          _
        // Predicated region
        $region45: #{tpu_custom_call.1} parent=11 // pred_check
          %p364 = pneg %p238
        $region46: #{tpu_custom_call.1} parent=11 // pred_check_branch
          %366 = sbr.rel (%p364) target = $region48
        $region47: #{tpu_custom_call.1} parent=11 // pred_region
          _
        $region48: #{tpu_custom_call.1} parent=11 // pred_fallthru
          _
        // Predicated region
        $region49: #{tpu_custom_call.1} parent=11 // pred_check
          %p367 = pneg %p259
        $region50: #{tpu_custom_call.1} parent=11 // pred_check_branch
          %369 = sbr.rel (%p367) target = $region52
        $region51: #{tpu_custom_call.1} parent=11 // pred_region
          _
        $region52: #{tpu_custom_call.1} parent=11 // pred_fallthru
          _
      $region12: #{tpu_custom_call.1} parent=5 // pred_fallthru
        _
      %p370 = scmp.lt.s32.totalorder %s23, 2
      // Predicated region
      $region53: #{tpu_custom_call.1} parent=5 // pred_check
        %p371 = pneg %p370
      $region54: #{tpu_custom_call.1} parent=5 // pred_check_branch
        %373 = sbr.rel (%p371) target = $region56
      $region55: #{tpu_custom_call.1} parent=5 // pred_region
        // Predicated region
        $region57: #{tpu_custom_call.1} parent=55 // pred_check
          %p374 = pneg %p43
        $region58: #{tpu_custom_call.1} parent=55 // pred_check_branch
          %376 = sbr.rel (%p374) target = $region60
        $region59: #{tpu_custom_call.1} parent=55 // pred_region
          %p377 = scmp.lt.s32.totalorder %s23, 1
          %s378 = scalar_select %p377, %s23, 1
          %s379 = smul.addr %s378, 8
          %s380 = smul.addr %s379, 4
          %s381 = scalar_lea.vmem %s0, %s380
        $region60: #{tpu_custom_call.1} parent=55 // pred_fallthru
          _
      $region56: #{tpu_custom_call.1} parent=5 // pred_fallthru
        _
      %p382 = scmp.le.s32.totalorder 1, %s23
      %p383 = scmp.lt.s32.totalorder %s23, 3
      %p384 = pnand %p382, %p383
      %p385 = pneg %p384
      // Predicated region
      $region61: #{tpu_custom_call.1} parent=5 // pred_check
        _
      $region62: #{tpu_custom_call.1} parent=5 // pred_check_branch
        %387 = sbr.rel (%p384) target = $region64
      $region63: #{tpu_custom_call.1} parent=5 // pred_region
        %s388 = ssub.s32 %s23, 1
        // Predicated region
        $region65: #{tpu_custom_call.1} parent=63 // pred_check
          %p389 = pneg %p91
        $region66: #{tpu_custom_call.1} parent=63 // pred_check_branch
          %391 = sbr.rel (%p389) target = $region68
        $region67: #{tpu_custom_call.1} parent=63 // pred_region
          %392 = dma.done [#allocation6], 2304
        $region68: #{tpu_custom_call.1} parent=63 // pred_fallthru
          _
        // Predicated region
        $region69: #{tpu_custom_call.1} parent=63 // pred_check
          %p393 = pneg %p112
        $region70: #{tpu_custom_call.1} parent=63 // pred_check_branch
          %395 = sbr.rel (%p393) target = $region72
        $region71: #{tpu_custom_call.1} parent=63 // pred_region
          %396 = dma.done [#allocation9], 2304
        $region72: #{tpu_custom_call.1} parent=63 // pred_fallthru
          _
        // Predicated region
        $region73: #{tpu_custom_call.1} parent=63 // pred_check
          %p397 = pneg %p133
        $region74: #{tpu_custom_call.1} parent=63 // pred_check_branch
          %399 = sbr.rel (%p397) target = $region76
        $region75: #{tpu_custom_call.1} parent=63 // pred_region
          %400 = dma.done [#allocation9], 2304
        $region76: #{tpu_custom_call.1} parent=63 // pred_fallthru
          _
        // Predicated region
        $region77: #{tpu_custom_call.1} parent=63 // pred_check
          %p401 = pneg %p154
        $region78: #{tpu_custom_call.1} parent=63 // pred_check_branch
          %403 = sbr.rel (%p401) target = $region80
        $region79: #{tpu_custom_call.1} parent=63 // pred_region
          %404 = dma.done [#allocation12], 2304
        $region80: #{tpu_custom_call.1} parent=63 // pred_fallthru
          _
        %p405 = scmp.lt.s32.totalorder %s28, 1
        %s406 = scalar_select %p405, %s28, 1
        %s407 = smul.addr %s406, 8
        %s408 = smul.addr %s407, 4
        %s409 = scalar_lea.vmem %s0, %s408
        %p410 = pneg %p49
        %p411 = pneg %p46
        %p412 = pneg %p70
        %p413 = pneg %p67
        %p414 = pneg %p91
        %p415 = pneg %p88
        %p416 = pneg %p112
        %p417 = pneg %p109
        %p418 = pneg %p133
        %p419 = pneg %p130
        %p420 = pneg %p154
        %p421 = pneg %p151
        %p422 = pneg %p175
        %p423 = pneg %p172
        %p424 = pneg %p196
        %p425 = pneg %p193
        %p426 = pneg %p217
        %p427 = pneg %p214
        %p428 = pneg %p238
        %p429 = pneg %p235
        %p430 = pneg %p259
        %p431 = pneg %p256
        %p432 = pneg %p285
        %p433 = pneg %p282
        %s434 = sand.u32 %s272, 1
        %s435 = scalar_lea.sflag [#allocation7], %s434
        %s436 = sand.u32 %s272, 1
        %s437 = smul.addr %s436, 64
        %s438 = scalar_lea.vmem [#allocation13], %s437
        %p439 = scmp.lt.s32.totalorder %s28, 1
        %s440 = scalar_select %p439, %s28, 1
        %s441 = smul.addr %s440, 8
        %s442 = smul.addr %s441, 4
        %s443 = scalar_lea.vmem %s0, %s442
        %vm447 = vcmask 125952
        %448 = vst.msk [vmem:[#allocation2] sm:$0xf] %vm447, 0
        %449 = vst.msk [vmem:[#allocation2 + $0x4] sm:$0xf] %vm447, 0
        %450 = vst.msk [vmem:[#allocation2 + $0x28] sm:$0xf] %vm447, 0
        %451 = vst.msk [vmem:[#allocation2 + $0x2c] sm:$0xf] %vm447, 0
        %vm452 = vcmask 257024
        %453 = vst.msk [vmem:[#allocation3] sm:$0xf] %vm452, 0
        %454 = vst.msk [vmem:[#allocation3 + $0x4] sm:$0xf] %vm452, 0
        %455 = vst.msk [vmem:[#allocation3 + $0x28] sm:$0xf] %vm452, 0
        %456 = vst.msk [vmem:[#allocation3 + $0x2c] sm:$0xf] %vm452, 0
        %457 = vst.msk [vmem:[#allocation4] sm:$0xf] %vm452, 0
        %458 = vst.msk [vmem:[#allocation4 + $0x4] sm:$0xf] %vm452, 0
        %459 = vst.msk [vmem:[#allocation4 + $0x28] sm:$0xf] %vm452, 0
        %460 = vst.msk [vmem:[#allocation4 + $0x2c] sm:$0xf] %vm452, 0
        %v461 = vld [vmem:[%s443] sm:$0xf]
        %v462 = vld [vmem:[%s443 + $0x4] sm:$0xf]
        %v463 = vld [vmem:[%s443 + $0x8] sm:$0xf]
        %v464 = vld [vmem:[%s443 + $0xc] sm:$0xf]
        %v465 = vld [vmem:[%s443 + $0x10] sm:$0xf]
        %v466 = vld [vmem:[%s443 + $0x14] sm:$0xf]
        %v467 = vld [vmem:[%s443 + $0x18] sm:$0xf]
        %v468 = vld [vmem:[%s443 + $0x1c] sm:$0xf]
        %469 = vst.msk [vmem:[#allocation2 + $0x8] sm:$0xf] %vm447, %v461
        %470 = vst.msk [vmem:[#allocation2 + $0xc] sm:$0xf] %vm447, %v462
        %471 = vst.msk [vmem:[#allocation2 + $0x10] sm:$0xf] %vm447, %v463
        %472 = vst.msk [vmem:[#allocation2 + $0x14] sm:$0xf] %vm447, %v464
        %473 = vst.msk [vmem:[#allocation2 + $0x18] sm:$0xf] %vm447, %v465
        %474 = vst.msk [vmem:[#allocation2 + $0x1c] sm:$0xf] %vm447, %v466
        %475 = vst.msk [vmem:[#allocation2 + $0x20] sm:$0xf] %vm447, %v467
        %476 = vst.msk [vmem:[#allocation2 + $0x24] sm:$0xf] %vm447, %v468
        %v477 = vlaneseq
        %v478 = vshrl.u32 %v477, 7
        %v479 = vadd.s32 %v478, 8
        %v480 = vadd.s32 %v478, 16
        %v481 = vadd.s32 %v478, 24
        %v482 = vadd.s32 %v478, 32
        %v483 = vadd.s32 %v478, 40
        %v484 = vadd.s32 %v478, 48
        %v485 = vadd.s32 %v478, 56
        %vm486 = vcmp.lt.s32.totalorder %v478, 0
        %v487 = vsub.s32 0, %v478
        %v488 = vsel %vm486, %v487, %v478
        %v489 = vshrl.u32 %v488, 3
        %v490 = vand.u32 %v488, 7
        %v491 = vsub.s32 0, %v490
        %v492 = vsel %vm486, %v491, %v490
        %vm493 = vcmp.lt.s32.totalorder %v479, 0
        %v494 = vsub.s32 0, %v479
        %v495 = vsel %vm493, %v494, %v479
        %v496 = vshrl.u32 %v495, 3
        %v497 = vand.u32 %v495, 7
        %v498 = vsub.s32 0, %v497
        %v499 = vsel %vm493, %v498, %v497
        %vm500 = vcmp.lt.s32.totalorder %v480, 0
        %v501 = vsub.s32 0, %v480
        %v502 = vsel %vm500, %v501, %v480
        %v503 = vshrl.u32 %v502, 3
        %v504 = vand.u32 %v502, 7
        %v505 = vsub.s32 0, %v504
        %v506 = vsel %vm500, %v505, %v504
        %vm507 = vcmp.lt.s32.totalorder %v481, 0
        %v508 = vsub.s32 0, %v481
        %v509 = vsel %vm507, %v508, %v481
        %v510 = vshrl.u32 %v509, 3
        %v511 = vand.u32 %v509, 7
        %v512 = vsub.s32 0, %v511
        %v513 = vsel %vm507, %v512, %v511
        %vm514 = vcmp.lt.s32.totalorder %v482, 0
        %v515 = vsub.s32 0, %v482
        %v516 = vsel %vm514, %v515, %v482
        %v517 = vshrl.u32 %v516, 3
        %v518 = vand.u32 %v516, 7
        %v519 = vsub.s32 0, %v518
        %v520 = vsel %vm514, %v519, %v518
        %vm521 = vcmp.lt.s32.totalorder %v483, 0
        %v522 = vsub.s32 0, %v483
        %v523 = vsel %vm521, %v522, %v483
        %v524 = vshrl.u32 %v523, 3
        %v525 = vand.u32 %v523, 7
        %v526 = vsub.s32 0, %v525
        %v527 = vsel %vm521, %v526, %v525
        %vm528 = vcmp.lt.s32.totalorder %v484, 0
        %v529 = vsub.s32 0, %v484
        %v530 = vsel %vm528, %v529, %v484
        %v531 = vshrl.u32 %v530, 3
        %v532 = vand.u32 %v530, 7
        %v533 = vsub.s32 0, %v532
        %v534 = vsel %vm528, %v533, %v532
        %vm535 = vcmp.lt.s32.totalorder %v485, 0
        %v536 = vsub.s32 0, %v485
        %v537 = vsel %vm535, %v536, %v485
        %v538 = vshrl.u32 %v537, 3
        %v539 = vand.u32 %v537, 7
        %v540 = vsub.s32 0, %v539
        %v541 = vsel %vm535, %v540, %v539
        %vm542 = vcmp.ne.s32.totalorder %v492, 0
        %vm543 = vcmp.ne.s32.totalorder %v499, 0
        %vm544 = vcmp.ne.s32.totalorder %v506, 0
        %vm545 = vcmp.ne.s32.totalorder %v513, 0
        %vm546 = vcmp.ne.s32.totalorder %v520, 0
        %vm547 = vcmp.ne.s32.totalorder %v527, 0
        %vm548 = vcmp.ne.s32.totalorder %v534, 0
        %vm549 = vcmp.ne.s32.totalorder %v541, 0
        %vm550 = vcmp.lt.s32.totalorder %v492, 0
        %vm551 = vcmp.lt.s32.totalorder %v499, 0
        %vm552 = vcmp.lt.s32.totalorder %v506, 0
        %vm553 = vcmp.lt.s32.totalorder %v513, 0
        %vm554 = vcmp.lt.s32.totalorder %v520, 0
        %vm555 = vcmp.lt.s32.totalorder %v527, 0
        %vm556 = vcmp.lt.s32.totalorder %v534, 0
        %vm557 = vcmp.lt.s32.totalorder %v541, 0
        %vm558 = vmand %vm550, %vm542
        %vm559 = vmand %vm551, %vm543
        %vm560 = vmand %vm552, %vm544
        %vm561 = vmand %vm553, %vm545
        %vm562 = vmand %vm554, %vm546
        %vm563 = vmand %vm555, %vm547
        %vm564 = vmand %vm556, %vm548
        %vm565 = vmand %vm557, %vm549
        %v566 = vadd.s32 %v492, 8
        %v567 = vadd.s32 %v499, 8
        %v568 = vadd.s32 %v506, 8
        %v569 = vadd.s32 %v513, 8
        %v570 = vadd.s32 %v520, 8
        %v571 = vadd.s32 %v527, 8
        %v572 = vadd.s32 %v534, 8
        %v573 = vadd.s32 %v541, 8
        %v574 = vsel %vm558, %v566, %v492
        %v575 = vsel %vm559, %v567, %v499
        %v576 = vsel %vm560, %v568, %v506
        %v577 = vsel %vm561, %v569, %v513
        %v578 = vsel %vm562, %v570, %v520
        %v579 = vsel %vm563, %v571, %v527
        %v580 = vsel %vm564, %v572, %v534
        %v581 = vsel %vm565, %v573, %v541
        %vm582 = vcmp.ne.s32.totalorder %v574, 0
        %vm583 = vcmp.ne.s32.totalorder %v575, 0
        %vm584 = vcmp.ne.s32.totalorder %v576, 0
        %vm585 = vcmp.ne.s32.totalorder %v577, 0
        %vm586 = vcmp.ne.s32.totalorder %v578, 0
        %vm587 = vcmp.ne.s32.totalorder %v579, 0
        %vm588 = vcmp.ne.s32.totalorder %v580, 0
        %vm589 = vcmp.ne.s32.totalorder %v581, 0
        %vm590 = vcmp.ne.s32.totalorder %v574, 7
        %vm591 = vcmp.ne.s32.totalorder %v575, 7
        %vm592 = vcmp.ne.s32.totalorder %v576, 7
        %vm593 = vcmp.ne.s32.totalorder %v577, 7
        %vm594 = vcmp.ne.s32.totalorder %v578, 7
        %vm595 = vcmp.ne.s32.totalorder %v579, 7
        %vm596 = vcmp.ne.s32.totalorder %v580, 7
        %vm597 = vcmp.ne.s32.totalorder %v581, 7
        %v598 = vld [vmem:[%s6] sm:$0x1]
        %v600 = vlaneseq
        %v601 = vshrl.u32 %v600, 7
        %v602 = vsub.s32 0, %v601
        %v603 = vrot.slane %v598, %v602
        %v605 = vld [vmem:[#allocation2] sm:$0x8]
        %v606 = vld [vmem:[#allocation2 + $0x4] sm:$0xf]
        %v607 = vld [vmem:[#allocation2 + $0x8] sm:$0xf]
        %v608 = vld [vmem:[#allocation2 + $0xc] sm:$0xf]
        %v609 = vld [vmem:[#allocation2 + $0x10] sm:$0xf]
        %v610 = vld [vmem:[#allocation2 + $0x14] sm:$0xf]
        %v611 = vld [vmem:[#allocation2 + $0x18] sm:$0xf]
        %v612 = vld [vmem:[#allocation2 + $0x1c] sm:$0xf]
        %v613 = vld [vmem:[#allocation2 + $0x20] sm:$0xf]
        %v614 = vsel %vm582, 1, 0
        %v615 = vsel %vm583, 1, 0
        %v616 = vsel %vm584, 1, 0
        %v617 = vsel %vm585, 1, 0
        %v618 = vsel %vm586, 1, 0
        %v619 = vsel %vm587, 1, 0
        %v620 = vsel %vm588, 1, 0
        %v621 = vsel %vm589, 1, 0
        %vm622 = vcmp.eq.s32.totalorder %v614, 1
        %vm623 = vcmp.eq.s32.totalorder %v615, 1
        %vm624 = vcmp.eq.s32.totalorder %v616, 1
        %vm625 = vcmp.eq.s32.totalorder %v617, 1
        %vm626 = vcmp.eq.s32.totalorder %v618, 1
        %vm627 = vcmp.eq.s32.totalorder %v619, 1
        %vm628 = vcmp.eq.s32.totalorder %v620, 1
        %vm629 = vcmp.eq.s32.totalorder %v621, 1
        %vm630 = vmpackc.low %vm622, %vm622
        %vm631 = vmpackc.low %vm623, %vm623
        %vm632 = vmpackc.low %vm624, %vm624
        %vm633 = vmpackc.low %vm625, %vm625
        %vm634 = vmpackc.low %vm626, %vm626
        %vm635 = vmpackc.low %vm627, %vm627
        %vm636 = vmpackc.low %vm628, %vm628
        %vm637 = vmpackc.low %vm629, %vm629
        %v638 = vsel %vm630, 65537, 0
        %v639 = vsel %vm631, 65537, 0
        %v640 = vsel %vm632, 65537, 0
        %v641 = vsel %vm633, 65537, 0
        %v642 = vsel %vm634, 65537, 0
        %v643 = vsel %vm635, 65537, 0
        %v644 = vsel %vm636, 65537, 0
        %v645 = vsel %vm637, 65537, 0
        %vm646 = vsmask.f32 3328
        %vm647 = vsmask.f32 7440
        %vm648 = vmor %vm646, %vm647
        %v650 = vshll.u32 %v638, 16
        %v652 = vrot.slane %v650, 5
        %v653 = vshrl.u32 %v638, 16
        %v655 = vrot.slane %v653, 4
        %v656 = vor.u32 %v655, %v652
        %v657 = vrot.slane %v656, 4
        %v659 = vshll.u32 %v639, 16
        %v661 = vrot.slane %v659, 5
        %v662 = vsel %vm648, %v657, %v661
        %v663 = vshrl.u32 %v639, 16
        %v665 = vrot.slane %v663, 4
        %v666 = vor.u32 %v665, %v661
        %v667 = vrot.slane %v666, 4
        %v669 = vshll.u32 %v640, 16
        %v671 = vrot.slane %v669, 5
        %v672 = vsel %vm648, %v667, %v671
        %v673 = vshrl.u32 %v640, 16
        %v675 = vrot.slane %v673, 4
        %v676 = vor.u32 %v675, %v671
        %v677 = vrot.slane %v676, 4
        %v679 = vshll.u32 %v641, 16
        %v681 = vrot.slane %v679, 5
        %v682 = vsel %vm648, %v677, %v681
        %v683 = vshrl.u32 %v641, 16
        %v685 = vrot.slane %v683, 4
        %v686 = vor.u32 %v685, %v681
        %v687 = vrot.slane %v686, 4
        %v689 = vshll.u32 %v642, 16
        %v691 = vrot.slane %v689, 5
        %v692 = vsel %vm648, %v687, %v691
        %v693 = vshrl.u32 %v642, 16
        %v695 = vrot.slane %v693, 4
        %v696 = vor.u32 %v695, %v691
        %v697 = vrot.slane %v696, 4
        %v699 = vshll.u32 %v643, 16
        %v701 = vrot.slane %v699, 5
        %v702 = vsel %vm648, %v697, %v701
        %v703 = vshrl.u32 %v643, 16
        %v705 = vrot.slane %v703, 4
        %v706 = vor.u32 %v705, %v701
        %v707 = vrot.slane %v706, 4
        %v709 = vshll.u32 %v644, 16
        %v711 = vrot.slane %v709, 5
        %v712 = vsel %vm648, %v707, %v711
        %v713 = vshrl.u32 %v644, 16
        %v715 = vrot.slane %v713, 4
        %v716 = vor.u32 %v715, %v711
        %v717 = vrot.slane %v716, 4
        %v719 = vshll.u32 %v645, 16
        %v721 = vrot.slane %v719, 5
        %v722 = vsel %vm648, %v717, %v721
        %v723 = vshrl.u32 %v645, 16
        %v725 = vrot.slane %v723, 4
        %v726 = vor.u32 %v725, %v721
        %v727 = vrot.slane %v726, 4
        %vm728 = vcmp.ne.s16.totalorder %v652, 0
        %vm729 = vcmp.ne.s16.totalorder %v662, 0
        %vm730 = vcmp.ne.s16.totalorder %v672, 0
        %vm731 = vcmp.ne.s16.totalorder %v682, 0
        %vm732 = vcmp.ne.s16.totalorder %v692, 0
        %vm733 = vcmp.ne.s16.totalorder %v702, 0
        %vm734 = vcmp.ne.s16.totalorder %v712, 0
        %vm735 = vcmp.ne.s16.totalorder %v722, 0
        %vm736 = vcmp.ne.s16.totalorder %v727, 0
        %v737 = vsel %vm728, %v605, 0
        %v738 = vsel %vm729, %v606, 0
        %v739 = vsel %vm730, %v607, 0
        %v740 = vsel %vm731, %v608, 0
        %v741 = vsel %vm732, %v609, 0
        %v742 = vsel %vm733, %v610, 0
        %v743 = vsel %vm734, %v611, 0
        %v744 = vsel %vm735, %v612, 0
        %v745 = vsel %vm736, %v613, 0
        %v746 = vld [vmem:[%s1] sm:$0xf]
        %v747 = vld [vmem:[%s1 + $0x4] sm:$0xf]
        %v757 = vunpack.c.l.b16 %v737
        %v758 = vunpack.c.l.b16 %v738
        %v759 = vunpack.c.l.b16 %v739
        %v760 = vunpack.c.l.b16 %v740
        %v761 = vunpack.c.l.b16 %v741
        %v762 = vunpack.c.l.b16 %v742
        %v763 = vunpack.c.l.b16 %v743
        %v764 = vunpack.c.l.b16 %v744
        %v765 = vunpack.c.l.b16 %v745
        %v766 = vpack.c.b16 %v758, %v757
        %v767 = vpack.c.b16 %v760, %v759
        %v768 = vpack.c.b16 %v762, %v761
        %v769 = vpack.c.b16 %v764, %v763
        %v770 = vpack.c.b16 %v765, %v765
        %vm771 = vsmask.f32 4352
        %v773 = vshrl.u32 %v766, 16
        %v775 = vrot.slane %v773, 3
        %v776 = vshll.u32 %v766, 16
        %v778 = vrot.slane %v776, 4
        %v779 = vor.u32 %v775, %v778
        %v781 = vshrl.u32 %v767, 16
        %v783 = vrot.slane %v781, 3
        %v784 = vshll.u32 %v767, 16
        %v786 = vrot.slane %v784, 4
        %v787 = vor.u32 %v783, %v786
        %v788 = vsel %vm771, %v779, %v787
        %v790 = vshrl.u32 %v768, 16
        %v792 = vrot.slane %v790, 3
        %v793 = vshll.u32 %v768, 16
        %v795 = vrot.slane %v793, 4
        %v796 = vor.u32 %v792, %v795
        %v797 = vsel %vm771, %v787, %v796
        %v799 = vshrl.u32 %v769, 16
        %v801 = vrot.slane %v799, 3
        %v802 = vshll.u32 %v769, 16
        %v804 = vrot.slane %v802, 4
        %v805 = vor.u32 %v801, %v804
        %v806 = vsel %vm771, %v796, %v805
        %v808 = vshrl.u32 %v770, 16
        %v810 = vrot.slane %v808, 3
        %v811 = vshll.u32 %v770, 16
        %v813 = vrot.slane %v811, 4
        %v814 = vor.u32 %v810, %v813
        %v815 = vsel %vm771, %v805, %v814
        %v818 = vunpack.c.l.b16 %v746
        %v819 = vunpack.c.l.b16 %v747
        %v820 = vpack.c.b16 %v819, %v818
        %vm822 = vcmask 130048
        %v824 = vsel %vm822, %v788, 0
        %v827 = vsel %vm822, %v797, 0
        %v830 = vsel %vm822, %v806, 0
        %v833 = vsel %vm822, %v815, 0
        %835 = vmatprep.subr.bf16.mxu0 0
        %836 = vmatpush1.bf16.msra.mxu0 0
        %837 = vmatprep.subr.bf16.mxu0 0
        %838 = vmatpush1.bf16.msra.mxu0 0
        %839 = vmatprep.subr.bf16.mxu0 0
        %840 = vmatpush1.bf16.msra.mxu0 0
        %841 = vmatprep.subr.bf16.mxu0 0
        %842 = vmatpush1.bf16.msra.mxu0 0
        %843 = vmatprep.subr.bf16.mxu0 0
        %844 = vmatpush1.bf16.msra.mxu0 0
        %845 = vmatprep.subr.bf16.mxu0 0
        %846 = vmatpush1.bf16.msra.mxu0 0
        %847 = vmatprep.subr.bf16.mxu0 0
        %848 = vmatpush1.bf16.msra.mxu0 0
        %849 = vmatprep.subr.bf16.mxu0 0
        %850 = vmatpush1.bf16.msra.mxu0 %v820
        %851 = vmatprep.subr.bf16.mxu0 0
        %852 = vmatpush2.bf16.msra.mxu0 0
        %853 = vmatprep.subr.bf16.mxu0 0
        %854 = vmatpush2.bf16.msra.mxu0 0
        %855 = vmatprep.subr.bf16.mxu0 0
        %856 = vmatpush2.bf16.msra.mxu0 0
        %857 = vmatprep.subr.bf16.mxu0 0
        %858 = vmatpush2.bf16.msra.mxu0 0
        %859 = vmatprep.subr.bf16.mxu0 0
        %860 = vmatpush2.bf16.msra.mxu0 0
        %861 = vmatprep.subr.bf16.mxu0 0
        %862 = vmatpush2.bf16.msra.mxu0 0
        %863 = vmatprep.subr.bf16.mxu0 0
        %864 = vmatpush2.bf16.msra.mxu0 0
        %865 = vmatprep.subr.bf16.mxu0 0
        %866 = vmatpush2.bf16.msra.mxu0 0
        %867 = vmatprep.mubr.bf16.mxu0 0
        %868 = vmatmul.mubr.bf16.gmra.mxu0 %v824
        %v869 = vpop.f32.mrf.mxu0
        %v870 = vadd.f32 0.0, %v869
        %v871 = vpop.f32.mrf.mxu0
        %v872 = vpop.f32.mrf.mxu0
        %v873 = vadd.f32 0.0, %v872
        %v874 = vpop.f32.mrf.mxu0
        %875 = vmatprep.mubr.bf16.mxu0 0
        %876 = vmatmul.mubr.bf16.gmra.mxu0 %v827
        %v877 = vpop.f32.mrf.mxu0
        %v878 = vadd.f32 0.0, %v877
        %v879 = vpop.f32.mrf.mxu0
        %v880 = vpop.f32.mrf.mxu0
        %v881 = vadd.f32 0.0, %v880
        %v882 = vpop.f32.mrf.mxu0
        %883 = vmatprep.mubr.bf16.mxu0 0
        %884 = vmatmul.mubr.bf16.gmra.mxu0 %v830
        %v885 = vpop.f32.mrf.mxu0
        %v886 = vadd.f32 0.0, %v885
        %v887 = vpop.f32.mrf.mxu0
        %v888 = vpop.f32.mrf.mxu0
        %v889 = vadd.f32 0.0, %v888
        %v890 = vpop.f32.mrf.mxu0
        %891 = vmatprep.mubr.bf16.mxu0 0
        %892 = vmatmul.mubr.bf16.gmra.mxu0 %v833
        %v893 = vpop.f32.mrf.mxu0
        %v894 = vadd.f32 0.0, %v893
        %v895 = vpop.f32.mrf.mxu0
        %v896 = vpop.f32.mrf.mxu0
        %v897 = vadd.f32 0.0, %v896
        %v898 = vpop.f32.mrf.mxu0
        %899 = vdwg.mxu0
        %v900 = vadd.f32 %v603, %v870
        %v901 = vadd.f32 %v603, %v873
        %v902 = vadd.f32 %v603, %v878
        %v903 = vadd.f32 %v603, %v881
        %v904 = vadd.f32 %v603, %v886
        %v905 = vadd.f32 %v603, %v889
        %v906 = vadd.f32 %v603, %v894
        %v907 = vadd.f32 %v603, %v897
        %s908 = scalar_lea.vmem %s1, 8
        %v909 = vld [vmem:[%s908] sm:$0xf]
        %v910 = vld [vmem:[%s908 + $0x4] sm:$0xf]
        %v919 = vunpack.c.l.b16 %v606
        %v920 = vunpack.c.l.b16 %v607
        %v921 = vunpack.c.l.b16 %v608
        %v922 = vunpack.c.l.b16 %v609
        %v923 = vunpack.c.l.b16 %v610
        %v924 = vunpack.c.l.b16 %v611
        %v925 = vunpack.c.l.b16 %v612
        %v926 = vunpack.c.l.b16 %v613
        %v927 = vpack.c.b16 %v920, %v919
        %v928 = vpack.c.b16 %v922, %v921
        %v929 = vpack.c.b16 %v924, %v923
        %v930 = vpack.c.b16 %v926, %v925
        %v933 = vunpack.c.l.b16 %v909
        %v934 = vunpack.c.l.b16 %v910
        %v935 = vpack.c.b16 %v934, %v933
        %v938 = vsel %vm822, %v927, 0
        %v941 = vsel %vm822, %v928, 0
        %v944 = vsel %vm822, %v929, 0
        %v947 = vsel %vm822, %v930, 0
        %949 = vmatprep.subr.bf16.mxu0 0
        %950 = vmatpush1.bf16.msra.mxu0 0
        %951 = vmatprep.subr.bf16.mxu0 0
        %952 = vmatpush1.bf16.msra.mxu0 0
        %953 = vmatprep.subr.bf16.mxu0 0
        %954 = vmatpush1.bf16.msra.mxu0 0
        %955 = vmatprep.subr.bf16.mxu0 0
        %956 = vmatpush1.bf16.msra.mxu0 0
        %957 = vmatprep.subr.bf16.mxu0 0
        %958 = vmatpush1.bf16.msra.mxu0 0
        %959 = vmatprep.subr.bf16.mxu0 0
        %960 = vmatpush1.bf16.msra.mxu0 0
        %961 = vmatprep.subr.bf16.mxu0 0
        %962 = vmatpush1.bf16.msra.mxu0 0
        %963 = vmatprep.subr.bf16.mxu0 0
        %964 = vmatpush1.bf16.msra.mxu0 %v935
        %965 = vmatprep.subr.bf16.mxu0 0
        %966 = vmatpush2.bf16.msra.mxu0 0
        %967 = vmatprep.subr.bf16.mxu0 0
        %968 = vmatpush2.bf16.msra.mxu0 0
        %969 = vmatprep.subr.bf16.mxu0 0
        %970 = vmatpush2.bf16.msra.mxu0 0
        %971 = vmatprep.subr.bf16.mxu0 0
        %972 = vmatpush2.bf16.msra.mxu0 0
        %973 = vmatprep.subr.bf16.mxu0 0
        %974 = vmatpush2.bf16.msra.mxu0 0
        %975 = vmatprep.subr.bf16.mxu0 0
        %976 = vmatpush2.bf16.msra.mxu0 0
        %977 = vmatprep.subr.bf16.mxu0 0
        %978 = vmatpush2.bf16.msra.mxu0 0
        %979 = vmatprep.subr.bf16.mxu0 0
        %980 = vmatpush2.bf16.msra.mxu0 0
        %981 = vmatprep.mubr.bf16.mxu0 0
        %982 = vmatmul.mubr.bf16.gmra.mxu0 %v938
        %v983 = vpop.f32.mrf.mxu0
        %v984 = vadd.f32 0.0, %v983
        %v985 = vpop.f32.mrf.mxu0
        %v986 = vpop.f32.mrf.mxu0
        %v987 = vadd.f32 0.0, %v986
        %v988 = vpop.f32.mrf.mxu0
        %989 = vmatprep.mubr.bf16.mxu0 0
        %990 = vmatmul.mubr.bf16.gmra.mxu0 %v941
        %v991 = vpop.f32.mrf.mxu0
        %v992 = vadd.f32 0.0, %v991
        %v993 = vpop.f32.mrf.mxu0
        %v994 = vpop.f32.mrf.mxu0
        %v995 = vadd.f32 0.0, %v994
        %v996 = vpop.f32.mrf.mxu0
        %997 = vmatprep.mubr.bf16.mxu0 0
        %998 = vmatmul.mubr.bf16.gmra.mxu0 %v944
        %v999 = vpop.f32.mrf.mxu0
        %v1000 = vadd.f32 0.0, %v999
        %v1001 = vpop.f32.mrf.mxu0
        %v1002 = vpop.f32.mrf.mxu0
        %v1003 = vadd.f32 0.0, %v1002
        %v1004 = vpop.f32.mrf.mxu0
        %1005 = vmatprep.mubr.bf16.mxu0 0
        %1006 = vmatmul.mubr.bf16.gmra.mxu0 %v947
        %v1007 = vpop.f32.mrf.mxu0
        %v1008 = vadd.f32 0.0, %v1007
        %v1009 = vpop.f32.mrf.mxu0
        %v1010 = vpop.f32.mrf.mxu0
        %v1011 = vadd.f32 0.0, %v1010
        %v1012 = vpop.f32.mrf.mxu0
        %1013 = vdwg.mxu0
        %v1014 = vadd.f32 %v900, %v984
        %v1015 = vadd.f32 %v901, %v987
        %v1016 = vadd.f32 %v902, %v992
        %v1017 = vadd.f32 %v903, %v995
        %v1018 = vadd.f32 %v904, %v1000
        %v1019 = vadd.f32 %v905, %v1003
        %v1020 = vadd.f32 %v906, %v1008
        %v1021 = vadd.f32 %v907, %v1011
        %v1022 = vld [vmem:[#allocation2 + $0x4] sm:$0xf]
        %v1023 = vld [vmem:[#allocation2 + $0x8] sm:$0xf]
        %v1024 = vld [vmem:[#allocation2 + $0xc] sm:$0xf]
        %v1025 = vld [vmem:[#allocation2 + $0x10] sm:$0xf]
        %v1026 = vld [vmem:[#allocation2 + $0x14] sm:$0xf]
        %v1027 = vld [vmem:[#allocation2 + $0x18] sm:$0xf]
        %v1028 = vld [vmem:[#allocation2 + $0x1c] sm:$0xf]
        %v1029 = vld [vmem:[#allocation2 + $0x20] sm:$0xf]
        %v1030 = vld [vmem:[#allocation2 + $0x24] sm:$0x1]
        %v1031 = vsel %vm590, 1, 0
        %v1032 = vsel %vm591, 1, 0
        %v1033 = vsel %vm592, 1, 0
        %v1034 = vsel %vm593, 1, 0
        %v1035 = vsel %vm594, 1, 0
        %v1036 = vsel %vm595, 1, 0
        %v1037 = vsel %vm596, 1, 0
        %v1038 = vsel %vm597, 1, 0
        %vm1039 = vcmp.eq.s32.totalorder %v1031, 1
        %vm1040 = vcmp.eq.s32.totalorder %v1032, 1
        %vm1041 = vcmp.eq.s32.totalorder %v1033, 1
        %vm1042 = vcmp.eq.s32.totalorder %v1034, 1
        %vm1043 = vcmp.eq.s32.totalorder %v1035, 1
        %vm1044 = vcmp.eq.s32.totalorder %v1036, 1
        %vm1045 = vcmp.eq.s32.totalorder %v1037, 1
        %vm1046 = vcmp.eq.s32.totalorder %v1038, 1
        %vm1047 = vmpackc.low %vm1039, %vm1039
        %vm1048 = vmpackc.low %vm1040, %vm1040
        %vm1049 = vmpackc.low %vm1041, %vm1041
        %vm1050 = vmpackc.low %vm1042, %vm1042
        %vm1051 = vmpackc.low %vm1043, %vm1043
        %vm1052 = vmpackc.low %vm1044, %vm1044
        %vm1053 = vmpackc.low %vm1045, %vm1045
        %vm1054 = vmpackc.low %vm1046, %vm1046
        %v1055 = vsel %vm1047, 65537, 0
        %v1056 = vsel %vm1048, 65537, 0
        %v1057 = vsel %vm1049, 65537, 0
        %v1058 = vsel %vm1050, 65537, 0
        %v1059 = vsel %vm1051, 65537, 0
        %v1060 = vsel %vm1052, 65537, 0
        %v1061 = vsel %vm1053, 65537, 0
        %v1062 = vsel %vm1054, 65537, 0
        %vm1063 = vsmask.f32 256
        %vm1064 = vsmask.f32 4368
        %vm1065 = vmor %vm1063, %vm1064
        %v1067 = vshrl.u32 %v1055, 16
        %v1069 = vrot.slane %v1067, 7
        %v1070 = vshll.u32 %v1055, 16
        %v1072 = vor.u32 %v1069, %v1070
        %v1073 = vrot.slane %v1069, 4
        %v1075 = vshrl.u32 %v1056, 16
        %v1077 = vrot.slane %v1075, 7
        %v1078 = vshll.u32 %v1056, 16
        %v1080 = vor.u32 %v1077, %v1078
        %v1081 = vsel %vm1065, %v1073, %v1080
        %v1082 = vrot.slane %v1077, 4
        %v1084 = vshrl.u32 %v1057, 16
        %v1086 = vrot.slane %v1084, 7
        %v1087 = vshll.u32 %v1057, 16
        %v1089 = vor.u32 %v1086, %v1087
        %v1090 = vsel %vm1065, %v1082, %v1089
        %v1091 = vrot.slane %v1086, 4
        %v1093 = vshrl.u32 %v1058, 16
        %v1095 = vrot.slane %v1093, 7
        %v1096 = vshll.u32 %v1058, 16
        %v1098 = vor.u32 %v1095, %v1096
        %v1099 = vsel %vm1065, %v1091, %v1098
        %v1100 = vrot.slane %v1095, 4
        %v1102 = vshrl.u32 %v1059, 16
        %v1104 = vrot.slane %v1102, 7
        %v1105 = vshll.u32 %v1059, 16
        %v1107 = vor.u32 %v1104, %v1105
        %v1108 = vsel %vm1065, %v1100, %v1107
        %v1109 = vrot.slane %v1104, 4
        %v1111 = vshrl.u32 %v1060, 16
        %v1113 = vrot.slane %v1111, 7
        %v1114 = vshll.u32 %v1060, 16
        %v1116 = vor.u32 %v1113, %v1114
        %v1117 = vsel %vm1065, %v1109, %v1116
        %v1118 = vrot.slane %v1113, 4
        %v1120 = vshrl.u32 %v1061, 16
        %v1122 = vrot.slane %v1120, 7
        %v1123 = vshll.u32 %v1061, 16
        %v1125 = vor.u32 %v1122, %v1123
        %v1126 = vsel %vm1065, %v1118, %v1125
        %v1127 = vrot.slane %v1122, 4
        %v1129 = vshrl.u32 %v1062, 16
        %v1131 = vrot.slane %v1129, 7
        %v1132 = vshll.u32 %v1062, 16
        %v1134 = vor.u32 %v1131, %v1132
        %v1135 = vsel %vm1065, %v1127, %v1134
        %v1136 = vrot.slane %v1131, 4
        %vm1137 = vcmp.ne.s16.totalorder %v1072, 0
        %vm1138 = vcmp.ne.s16.totalorder %v1081, 0
        %vm1139 = vcmp.ne.s16.totalorder %v1090, 0
        %vm1140 = vcmp.ne.s16.totalorder %v1099, 0
        %vm1141 = vcmp.ne.s16.totalorder %v1108, 0
        %vm1142 = vcmp.ne.s16.totalorder %v1117, 0
        %vm1143 = vcmp.ne.s16.totalorder %v1126, 0
        %vm1144 = vcmp.ne.s16.totalorder %v1135, 0
        %vm1145 = vcmp.ne.s16.totalorder %v1136, 0
        %v1146 = vsel %vm1137, %v1022, 0
        %v1147 = vsel %vm1138, %v1023, 0
        %v1148 = vsel %vm1139, %v1024, 0
        %v1149 = vsel %vm1140, %v1025, 0
        %v1150 = vsel %vm1141, %v1026, 0
        %v1151 = vsel %vm1142, %v1027, 0
        %v1152 = vsel %vm1143, %v1028, 0
        %v1153 = vsel %vm1144, %v1029, 0
        %v1154 = vsel %vm1145, %v1030, 0
        %s1155 = scalar_lea.vmem %s1, 16
        %v1156 = vld [vmem:[%s1155] sm:$0xf]
        %v1157 = vld [vmem:[%s1155 + $0x4] sm:$0xf]
        %v1167 = vunpack.c.l.b16 %v1146
        %v1168 = vunpack.c.l.b16 %v1147
        %v1169 = vunpack.c.l.b16 %v1148
        %v1170 = vunpack.c.l.b16 %v1149
        %v1171 = vunpack.c.l.b16 %v1150
        %v1172 = vunpack.c.l.b16 %v1151
        %v1173 = vunpack.c.l.b16 %v1152
        %v1174 = vunpack.c.l.b16 %v1153
        %v1175 = vunpack.c.l.b16 %v1154
        %v1176 = vpack.c.b16 %v1168, %v1167
        %v1177 = vpack.c.b16 %v1170, %v1169
        %v1178 = vpack.c.b16 %v1172, %v1171
        %v1179 = vpack.c.b16 %v1174, %v1173
        %v1180 = vpack.c.b16 %v1175, %v1175
        %vm1181 = vsmask.f32 7424
        %v1183 = vshrl.u32 %v1176, 16
        %v1185 = vshll.u32 %v1176, 16
        %v1187 = vrot.slane %v1185, 1
        %v1188 = vor.u32 %v1183, %v1187
        %v1190 = vshll.u32 %v1177, 16
        %v1192 = vrot.slane %v1190, 1
        %v1193 = vsel %vm1181, %v1188, %v1192
        %v1194 = vshrl.u32 %v1177, 16
        %v1196 = vor.u32 %v1194, %v1192
        %v1198 = vshll.u32 %v1178, 16
        %v1200 = vrot.slane %v1198, 1
        %v1201 = vsel %vm1181, %v1196, %v1200
        %v1202 = vshrl.u32 %v1178, 16
        %v1204 = vor.u32 %v1202, %v1200
        %v1206 = vshll.u32 %v1179, 16
        %v1208 = vrot.slane %v1206, 1
        %v1209 = vsel %vm1181, %v1204, %v1208
        %v1210 = vshrl.u32 %v1179, 16
        %v1212 = vor.u32 %v1210, %v1208
        %v1214 = vshll.u32 %v1180, 16
        %v1216 = vrot.slane %v1214, 1
        %v1217 = vsel %vm1181, %v1212, %v1216
        %v1220 = vunpack.c.l.b16 %v1156
        %v1221 = vunpack.c.l.b16 %v1157
        %v1222 = vpack.c.b16 %v1221, %v1220
        %v1225 = vsel %vm822, %v1193, 0
        %v1228 = vsel %vm822, %v1201, 0
        %v1231 = vsel %vm822, %v1209, 0
        %v1234 = vsel %vm822, %v1217, 0
        %1236 = vmatprep.subr.bf16.mxu0 0
        %1237 = vmatpush1.bf16.msra.mxu0 0
        %1238 = vmatprep.subr.bf16.mxu0 0
        %1239 = vmatpush1.bf16.msra.mxu0 0
        %1240 = vmatprep.subr.bf16.mxu0 0
        %1241 = vmatpush1.bf16.msra.mxu0 0
        %1242 = vmatprep.subr.bf16.mxu0 0
        %1243 = vmatpush1.bf16.msra.mxu0 0
        %1244 = vmatprep.subr.bf16.mxu0 0
        %1245 = vmatpush1.bf16.msra.mxu0 0
        %1246 = vmatprep.subr.bf16.mxu0 0
        %1247 = vmatpush1.bf16.msra.mxu0 0
        %1248 = vmatprep.subr.bf16.mxu0 0
        %1249 = vmatpush1.bf16.msra.mxu0 0
        %1250 = vmatprep.subr.bf16.mxu0 0
        %1251 = vmatpush1.bf16.msra.mxu0 %v1222
        %1252 = vmatprep.subr.bf16.mxu0 0
        %1253 = vmatpush2.bf16.msra.mxu0 0
        %1254 = vmatprep.subr.bf16.mxu0 0
        %1255 = vmatpush2.bf16.msra.mxu0 0
        %1256 = vmatprep.subr.bf16.mxu0 0
        %1257 = vmatpush2.bf16.msra.mxu0 0
        %1258 = vmatprep.subr.bf16.mxu0 0
        %1259 = vmatpush2.bf16.msra.mxu0 0
        %1260 = vmatprep.subr.bf16.mxu0 0
        %1261 = vmatpush2.bf16.msra.mxu0 0
        %1262 = vmatprep.subr.bf16.mxu0 0
        %1263 = vmatpush2.bf16.msra.mxu0 0
        %1264 = vmatprep.subr.bf16.mxu0 0
        %1265 = vmatpush2.bf16.msra.mxu0 0
        %1266 = vmatprep.subr.bf16.mxu0 0
        %1267 = vmatpush2.bf16.msra.mxu0 0
        %1268 = vmatprep.mubr.bf16.mxu0 0
        %1269 = vmatmul.mubr.bf16.gmra.mxu0 %v1225
        %v1270 = vpop.f32.mrf.mxu0
        %v1271 = vadd.f32 0.0, %v1270
        %v1272 = vpop.f32.mrf.mxu0
        %v1273 = vpop.f32.mrf.mxu0
        %v1274 = vadd.f32 0.0, %v1273
        %v1275 = vpop.f32.mrf.mxu0
        %1276 = vmatprep.mubr.bf16.mxu0 0
        %1277 = vmatmul.mubr.bf16.gmra.mxu0 %v1228
        %v1278 = vpop.f32.mrf.mxu0
        %v1279 = vadd.f32 0.0, %v1278
        %v1280 = vpop.f32.mrf.mxu0
        %v1281 = vpop.f32.mrf.mxu0
        %v1282 = vadd.f32 0.0, %v1281
        %v1283 = vpop.f32.mrf.mxu0
        %1284 = vmatprep.mubr.bf16.mxu0 0
        %1285 = vmatmul.mubr.bf16.gmra.mxu0 %v1231
        %v1286 = vpop.f32.mrf.mxu0
        %v1287 = vadd.f32 0.0, %v1286
        %v1288 = vpop.f32.mrf.mxu0
        %v1289 = vpop.f32.mrf.mxu0
        %v1290 = vadd.f32 0.0, %v1289
        %v1291 = vpop.f32.mrf.mxu0
        %1292 = vmatprep.mubr.bf16.mxu0 0
        %1293 = vmatmul.mubr.bf16.gmra.mxu0 %v1234
        %v1294 = vpop.f32.mrf.mxu0
        %v1295 = vadd.f32 0.0, %v1294
        %v1296 = vpop.f32.mrf.mxu0
        %v1297 = vpop.f32.mrf.mxu0
        %v1298 = vadd.f32 0.0, %v1297
        %v1299 = vpop.f32.mrf.mxu0
        %1300 = vdwg.mxu0
        %v1301 = vadd.f32 %v1014, %v1271
        %v1302 = vadd.f32 %v1015, %v1274
        %v1303 = vadd.f32 %v1016, %v1279
        %v1304 = vadd.f32 %v1017, %v1282
        %v1305 = vadd.f32 %v1018, %v1287
        %v1306 = vadd.f32 %v1019, %v1290
        %v1307 = vadd.f32 %v1020, %v1295
        %v1308 = vadd.f32 %v1021, %v1298
        %v1309 = vld [vmem:[#allocation2 + $0x4] sm:$0x8]
        %v1310 = vld [vmem:[#allocation2 + $0x24] sm:$0xf]
        %v1311 = vsel %vm728, %v1309, 0
        %v1312 = vsel %vm729, %v1023, 0
        %v1313 = vsel %vm730, %v1024, 0
        %v1314 = vsel %vm731, %v1025, 0
        %v1315 = vsel %vm732, %v1026, 0
        %v1316 = vsel %vm733, %v1027, 0
        %v1317 = vsel %vm734, %v1028, 0
        %v1318 = vsel %vm735, %v1029, 0
        %v1319 = vsel %vm736, %v1310, 0
        %s1320 = scalar_lea.vmem %s1, 24
        %v1321 = vld [vmem:[%s1320] sm:$0xf]
        %v1322 = vld [vmem:[%s1320 + $0x4] sm:$0xf]
        %v1332 = vunpack.c.l.b16 %v1311
        %v1333 = vunpack.c.l.b16 %v1312
        %v1334 = vunpack.c.l.b16 %v1313
        %v1335 = vunpack.c.l.b16 %v1314
        %v1336 = vunpack.c.l.b16 %v1315
        %v1337 = vunpack.c.l.b16 %v1316
        %v1338 = vunpack.c.l.b16 %v1317
        %v1339 = vunpack.c.l.b16 %v1318
        %v1340 = vunpack.c.l.b16 %v1319
        %v1341 = vpack.c.b16 %v1333, %v1332
        %v1342 = vpack.c.b16 %v1335, %v1334
        %v1343 = vpack.c.b16 %v1337, %v1336
        %v1344 = vpack.c.b16 %v1339, %v1338
        %v1345 = vpack.c.b16 %v1340, %v1340
        %v1347 = vshrl.u32 %v1341, 16
        %v1349 = vrot.slane %v1347, 3
        %v1350 = vshll.u32 %v1341, 16
        %v1352 = vrot.slane %v1350, 4
        %v1353 = vor.u32 %v1349, %v1352
        %v1355 = vshrl.u32 %v1342, 16
        %v1357 = vrot.slane %v1355, 3
        %v1358 = vshll.u32 %v1342, 16
        %v1360 = vrot.slane %v1358, 4
        %v1361 = vor.u32 %v1357, %v1360
        %v1362 = vsel %vm771, %v1353, %v1361
        %v1364 = vshrl.u32 %v1343, 16
        %v1366 = vrot.slane %v1364, 3
        %v1367 = vshll.u32 %v1343, 16
        %v1369 = vrot.slane %v1367, 4
        %v1370 = vor.u32 %v1366, %v1369
        %v1371 = vsel %vm771, %v1361, %v1370
        %v1373 = vshrl.u32 %v1344, 16
        %v1375 = vrot.slane %v1373, 3
        %v1376 = vshll.u32 %v1344, 16
        %v1378 = vrot.slane %v1376, 4
        %v1379 = vor.u32 %v1375, %v1378
        %v1380 = vsel %vm771, %v1370, %v1379
        %v1382 = vshrl.u32 %v1345, 16
        %v1384 = vrot.slane %v1382, 3
        %v1385 = vshll.u32 %v1345, 16
        %v1387 = vrot.slane %v1385, 4
        %v1388 = vor.u32 %v1384, %v1387
        %v1389 = vsel %vm771, %v1379, %v1388
        %v1392 = vunpack.c.l.b16 %v1321
        %v1393 = vunpack.c.l.b16 %v1322
        %v1394 = vpack.c.b16 %v1393, %v1392
        %v1397 = vsel %vm822, %v1362, 0
        %v1400 = vsel %vm822, %v1371, 0
        %v1403 = vsel %vm822, %v1380, 0
        %v1406 = vsel %vm822, %v1389, 0
        %1408 = vmatprep.subr.bf16.mxu0 0
        %1409 = vmatpush1.bf16.msra.mxu0 0
        %1410 = vmatprep.subr.bf16.mxu0 0
        %1411 = vmatpush1.bf16.msra.mxu0 0
        %1412 = vmatprep.subr.bf16.mxu0 0
        %1413 = vmatpush1.bf16.msra.mxu0 0
        %1414 = vmatprep.subr.bf16.mxu0 0
        %1415 = vmatpush1.bf16.msra.mxu0 0
        %1416 = vmatprep.subr.bf16.mxu0 0
        %1417 = vmatpush1.bf16.msra.mxu0 0
        %1418 = vmatprep.subr.bf16.mxu0 0
        %1419 = vmatpush1.bf16.msra.mxu0 0
        %1420 = vmatprep.subr.bf16.mxu0 0
        %1421 = vmatpush1.bf16.msra.mxu0 0
        %1422 = vmatprep.subr.bf16.mxu0 0
        %1423 = vmatpush1.bf16.msra.mxu0 %v1394
        %1424 = vmatprep.subr.bf16.mxu0 0
        %1425 = vmatpush2.bf16.msra.mxu0 0
        %1426 = vmatprep.subr.bf16.mxu0 0
        %1427 = vmatpush2.bf16.msra.mxu0 0
        %1428 = vmatprep.subr.bf16.mxu0 0
        %1429 = vmatpush2.bf16.msra.mxu0 0
        %1430 = vmatprep.subr.bf16.mxu0 0
        %1431 = vmatpush2.bf16.msra.mxu0 0
        %1432 = vmatprep.subr.bf16.mxu0 0
        %1433 = vmatpush2.bf16.msra.mxu0 0
        %1434 = vmatprep.subr.bf16.mxu0 0
        %1435 = vmatpush2.bf16.msra.mxu0 0
        %1436 = vmatprep.subr.bf16.mxu0 0
        %1437 = vmatpush2.bf16.msra.mxu0 0
        %1438 = vmatprep.subr.bf16.mxu0 0
        %1439 = vmatpush2.bf16.msra.mxu0 0
        %1440 = vmatprep.mubr.bf16.mxu0 0
        %1441 = vmatmul.mubr.bf16.gmra.mxu0 %v1397
        %v1442 = vpop.f32.mrf.mxu0
        %v1443 = vadd.f32 0.0, %v1442
        %v1444 = vpop.f32.mrf.mxu0
        %v1445 = vpop.f32.mrf.mxu0
        %v1446 = vadd.f32 0.0, %v1445
        %v1447 = vpop.f32.mrf.mxu0
        %1448 = vmatprep.mubr.bf16.mxu0 0
        %1449 = vmatmul.mubr.bf16.gmra.mxu0 %v1400
        %v1450 = vpop.f32.mrf.mxu0
        %v1451 = vadd.f32 0.0, %v1450
        %v1452 = vpop.f32.mrf.mxu0
        %v1453 = vpop.f32.mrf.mxu0
        %v1454 = vadd.f32 0.0, %v1453
        %v1455 = vpop.f32.mrf.mxu0
        %1456 = vmatprep.mubr.bf16.mxu0 0
        %1457 = vmatmul.mubr.bf16.gmra.mxu0 %v1403
        %v1458 = vpop.f32.mrf.mxu0
        %v1459 = vadd.f32 0.0, %v1458
        %v1460 = vpop.f32.mrf.mxu0
        %v1461 = vpop.f32.mrf.mxu0
        %v1462 = vadd.f32 0.0, %v1461
        %v1463 = vpop.f32.mrf.mxu0
        %1464 = vmatprep.mubr.bf16.mxu0 0
        %1465 = vmatmul.mubr.bf16.gmra.mxu0 %v1406
        %v1466 = vpop.f32.mrf.mxu0
        %v1467 = vadd.f32 0.0, %v1466
        %v1468 = vpop.f32.mrf.mxu0
        %v1469 = vpop.f32.mrf.mxu0
        %v1470 = vadd.f32 0.0, %v1469
        %v1471 = vpop.f32.mrf.mxu0
        %1472 = vdwg.mxu0
        %v1473 = vadd.f32 %v1301, %v1443
        %v1474 = vadd.f32 %v1302, %v1446
        %v1475 = vadd.f32 %v1303, %v1451
        %v1476 = vadd.f32 %v1304, %v1454
        %v1477 = vadd.f32 %v1305, %v1459
        %v1478 = vadd.f32 %v1306, %v1462
        %v1479 = vadd.f32 %v1307, %v1467
        %v1480 = vadd.f32 %v1308, %v1470
        %s1481 = scalar_lea.vmem %s1, 32
        %v1482 = vld [vmem:[%s1481] sm:$0xf]
        %v1483 = vld [vmem:[%s1481 + $0x4] sm:$0xf]
        %v1492 = vunpack.c.l.b16 %v1023
        %v1493 = vunpack.c.l.b16 %v1024
        %v1494 = vunpack.c.l.b16 %v1025
        %v1495 = vunpack.c.l.b16 %v1026
        %v1496 = vunpack.c.l.b16 %v1027
        %v1497 = vunpack.c.l.b16 %v1028
        %v1498 = vunpack.c.l.b16 %v1029
        %v1499 = vunpack.c.l.b16 %v1310
        %v1500 = vpack.c.b16 %v1493, %v1492
        %v1501 = vpack.c.b16 %v1495, %v1494
        %v1502 = vpack.c.b16 %v1497, %v1496
        %v1503 = vpack.c.b16 %v1499, %v1498
        %v1506 = vunpack.c.l.b16 %v1482
        %v1507 = vunpack.c.l.b16 %v1483
        %v1508 = vpack.c.b16 %v1507, %v1506
        %v1511 = vsel %vm822, %v1500, 0
        %v1514 = vsel %vm822, %v1501, 0
        %v1517 = vsel %vm822, %v1502, 0
        %v1520 = vsel %vm822, %v1503, 0
        %1522 = vmatprep.subr.bf16.mxu0 0
        %1523 = vmatpush1.bf16.msra.mxu0 0
        %1524 = vmatprep.subr.bf16.mxu0 0
        %1525 = vmatpush1.bf16.msra.mxu0 0
        %1526 = vmatprep.subr.bf16.mxu0 0
        %1527 = vmatpush1.bf16.msra.mxu0 0
        %1528 = vmatprep.subr.bf16.mxu0 0
        %1529 = vmatpush1.bf16.msra.mxu0 0
        %1530 = vmatprep.subr.bf16.mxu0 0
        %1531 = vmatpush1.bf16.msra.mxu0 0
        %1532 = vmatprep.subr.bf16.mxu0 0
        %1533 = vmatpush1.bf16.msra.mxu0 0
        %1534 = vmatprep.subr.bf16.mxu0 0
        %1535 = vmatpush1.bf16.msra.mxu0 0
        %1536 = vmatprep.subr.bf16.mxu0 0
        %1537 = vmatpush1.bf16.msra.mxu0 %v1508
        %1538 = vmatprep.subr.bf16.mxu0 0
        %1539 = vmatpush2.bf16.msra.mxu0 0
        %1540 = vmatprep.subr.bf16.mxu0 0
        %1541 = vmatpush2.bf16.msra.mxu0 0
        %1542 = vmatprep.subr.bf16.mxu0 0
        %1543 = vmatpush2.bf16.msra.mxu0 0
        %1544 = vmatprep.subr.bf16.mxu0 0
        %1545 = vmatpush2.bf16.msra.mxu0 0
        %1546 = vmatprep.subr.bf16.mxu0 0
        %1547 = vmatpush2.bf16.msra.mxu0 0
        %1548 = vmatprep.subr.bf16.mxu0 0
        %1549 = vmatpush2.bf16.msra.mxu0 0
        %1550 = vmatprep.subr.bf16.mxu0 0
        %1551 = vmatpush2.bf16.msra.mxu0 0
        %1552 = vmatprep.subr.bf16.mxu0 0
        %1553 = vmatpush2.bf16.msra.mxu0 0
        %1554 = vmatprep.mubr.bf16.mxu0 0
        %1555 = vmatmul.mubr.bf16.gmra.mxu0 %v1511
        %v1556 = vpop.f32.mrf.mxu0
        %v1557 = vadd.f32 0.0, %v1556
        %v1558 = vpop.f32.mrf.mxu0
        %v1559 = vpop.f32.mrf.mxu0
        %v1560 = vadd.f32 0.0, %v1559
        %v1561 = vpop.f32.mrf.mxu0
        %1562 = vmatprep.mubr.bf16.mxu0 0
        %1563 = vmatmul.mubr.bf16.gmra.mxu0 %v1514
        %v1564 = vpop.f32.mrf.mxu0
        %v1565 = vadd.f32 0.0, %v1564
        %v1566 = vpop.f32.mrf.mxu0
        %v1567 = vpop.f32.mrf.mxu0
        %v1568 = vadd.f32 0.0, %v1567
        %v1569 = vpop.f32.mrf.mxu0
        %1570 = vmatprep.mubr.bf16.mxu0 0
        %1571 = vmatmul.mubr.bf16.gmra.mxu0 %v1517
        %v1572 = vpop.f32.mrf.mxu0
        %v1573 = vadd.f32 0.0, %v1572
        %v1574 = vpop.f32.mrf.mxu0
        %v1575 = vpop.f32.mrf.mxu0
        %v1576 = vadd.f32 0.0, %v1575
        %v1577 = vpop.f32.mrf.mxu0
        %1578 = vmatprep.mubr.bf16.mxu0 0
        %1579 = vmatmul.mubr.bf16.gmra.mxu0 %v1520
        %v1580 = vpop.f32.mrf.mxu0
        %v1581 = vadd.f32 0.0, %v1580
        %v1582 = vpop.f32.mrf.mxu0
        %v1583 = vpop.f32.mrf.mxu0
        %v1584 = vadd.f32 0.0, %v1583
        %v1585 = vpop.f32.mrf.mxu0
        %1586 = vdwg.mxu0
        %v1587 = vadd.f32 %v1473, %v1557
        %v1588 = vadd.f32 %v1474, %v1560
        %v1589 = vadd.f32 %v1475, %v1565
        %v1590 = vadd.f32 %v1476, %v1568
        %v1591 = vadd.f32 %v1477, %v1573
        %v1592 = vadd.f32 %v1478, %v1576
        %v1593 = vadd.f32 %v1479, %v1581
        %v1594 = vadd.f32 %v1480, %v1584
        %v1595 = vld [vmem:[#allocation2 + $0x8] sm:$0xf]
        %v1596 = vld [vmem:[#allocation2 + $0xc] sm:$0xf]
        %v1597 = vld [vmem:[#allocation2 + $0x10] sm:$0xf]
        %v1598 = vld [vmem:[#allocation2 + $0x14] sm:$0xf]
        %v1599 = vld [vmem:[#allocation2 + $0x18] sm:$0xf]
        %v1600 = vld [vmem:[#allocation2 + $0x1c] sm:$0xf]
        %v1601 = vld [vmem:[#allocation2 + $0x20] sm:$0xf]
        %v1602 = vld [vmem:[#allocation2 + $0x24] sm:$0xf]
        %v1603 = vld [vmem:[#allocation2 + $0x28] sm:$0x1]
        %v1604 = vsel %vm1137, %v1595, 0
        %v1605 = vsel %vm1138, %v1596, 0
        %v1606 = vsel %vm1139, %v1597, 0
        %v1607 = vsel %vm1140, %v1598, 0
        %v1608 = vsel %vm1141, %v1599, 0
        %v1609 = vsel %vm1142, %v1600, 0
        %v1610 = vsel %vm1143, %v1601, 0
        %v1611 = vsel %vm1144, %v1602, 0
        %v1612 = vsel %vm1145, %v1603, 0
        %s1613 = scalar_lea.vmem %s1, 40
        %v1614 = vld [vmem:[%s1613] sm:$0xf]
        %v1615 = vld [vmem:[%s1613 + $0x4] sm:$0xf]
        %v1625 = vunpack.c.l.b16 %v1604
        %v1626 = vunpack.c.l.b16 %v1605
        %v1627 = vunpack.c.l.b16 %v1606
        %v1628 = vunpack.c.l.b16 %v1607
        %v1629 = vunpack.c.l.b16 %v1608
        %v1630 = vunpack.c.l.b16 %v1609
        %v1631 = vunpack.c.l.b16 %v1610
        %v1632 = vunpack.c.l.b16 %v1611
        %v1633 = vunpack.c.l.b16 %v1612
        %v1634 = vpack.c.b16 %v1626, %v1625
        %v1635 = vpack.c.b16 %v1628, %v1627
        %v1636 = vpack.c.b16 %v1630, %v1629
        %v1637 = vpack.c.b16 %v1632, %v1631
        %v1638 = vpack.c.b16 %v1633, %v1633
        %v1640 = vshrl.u32 %v1634, 16
        %v1642 = vshll.u32 %v1634, 16
        %v1644 = vrot.slane %v1642, 1
        %v1645 = vor.u32 %v1640, %v1644
        %v1647 = vshll.u32 %v1635, 16
        %v1649 = vrot.slane %v1647, 1
        %v1650 = vsel %vm1181, %v1645, %v1649
        %v1651 = vshrl.u32 %v1635, 16
        %v1653 = vor.u32 %v1651, %v1649
        %v1655 = vshll.u32 %v1636, 16
        %v1657 = vrot.slane %v1655, 1
        %v1658 = vsel %vm1181, %v1653, %v1657
        %v1659 = vshrl.u32 %v1636, 16
        %v1661 = vor.u32 %v1659, %v1657
        %v1663 = vshll.u32 %v1637, 16
        %v1665 = vrot.slane %v1663, 1
        %v1666 = vsel %vm1181, %v1661, %v1665
        %v1667 = vshrl.u32 %v1637, 16
        %v1669 = vor.u32 %v1667, %v1665
        %v1671 = vshll.u32 %v1638, 16
        %v1673 = vrot.slane %v1671, 1
        %v1674 = vsel %vm1181, %v1669, %v1673
        %v1677 = vunpack.c.l.b16 %v1614
        %v1678 = vunpack.c.l.b16 %v1615
        %v1679 = vpack.c.b16 %v1678, %v1677
        %v1682 = vsel %vm822, %v1650, 0
        %v1685 = vsel %vm822, %v1658, 0
        %v1688 = vsel %vm822, %v1666, 0
        %v1691 = vsel %vm822, %v1674, 0
        %1693 = vmatprep.subr.bf16.mxu0 0
        %1694 = vmatpush1.bf16.msra.mxu0 0
        %1695 = vmatprep.subr.bf16.mxu0 0
        %1696 = vmatpush1.bf16.msra.mxu0 0
        %1697 = vmatprep.subr.bf16.mxu0 0
        %1698 = vmatpush1.bf16.msra.mxu0 0
        %1699 = vmatprep.subr.bf16.mxu0 0
        %1700 = vmatpush1.bf16.msra.mxu0 0
        %1701 = vmatprep.subr.bf16.mxu0 0
        %1702 = vmatpush1.bf16.msra.mxu0 0
        %1703 = vmatprep.subr.bf16.mxu0 0
        %1704 = vmatpush1.bf16.msra.mxu0 0
        %1705 = vmatprep.subr.bf16.mxu0 0
        %1706 = vmatpush1.bf16.msra.mxu0 0
        %1707 = vmatprep.subr.bf16.mxu0 0
        %1708 = vmatpush1.bf16.msra.mxu0 %v1679
        %1709 = vmatprep.subr.bf16.mxu0 0
        %1710 = vmatpush2.bf16.msra.mxu0 0
        %1711 = vmatprep.subr.bf16.mxu0 0
        %1712 = vmatpush2.bf16.msra.mxu0 0
        %1713 = vmatprep.subr.bf16.mxu0 0
        %1714 = vmatpush2.bf16.msra.mxu0 0
        %1715 = vmatprep.subr.bf16.mxu0 0
        %1716 = vmatpush2.bf16.msra.mxu0 0
        %1717 = vmatprep.subr.bf16.mxu0 0
        %1718 = vmatpush2.bf16.msra.mxu0 0
        %1719 = vmatprep.subr.bf16.mxu0 0
        %1720 = vmatpush2.bf16.msra.mxu0 0
        %1721 = vmatprep.subr.bf16.mxu0 0
        %1722 = vmatpush2.bf16.msra.mxu0 0
        %1723 = vmatprep.subr.bf16.mxu0 0
        %1724 = vmatpush2.bf16.msra.mxu0 0
        %1725 = vmatprep.mubr.bf16.mxu0 0
        %1726 = vmatmul.mubr.bf16.gmra.mxu0 %v1682
        %v1727 = vpop.f32.mrf.mxu0
        %v1728 = vadd.f32 0.0, %v1727
        %v1729 = vpop.f32.mrf.mxu0
        %v1730 = vpop.f32.mrf.mxu0
        %v1731 = vadd.f32 0.0, %v1730
        %v1732 = vpop.f32.mrf.mxu0
        %1733 = vmatprep.mubr.bf16.mxu0 0
        %1734 = vmatmul.mubr.bf16.gmra.mxu0 %v1685
        %v1735 = vpop.f32.mrf.mxu0
        %v1736 = vadd.f32 0.0, %v1735
        %v1737 = vpop.f32.mrf.mxu0
        %v1738 = vpop.f32.mrf.mxu0
        %v1739 = vadd.f32 0.0, %v1738
        %v1740 = vpop.f32.mrf.mxu0
        %1741 = vmatprep.mubr.bf16.mxu0 0
        %1742 = vmatmul.mubr.bf16.gmra.mxu0 %v1688
        %v1743 = vpop.f32.mrf.mxu0
        %v1744 = vadd.f32 0.0, %v1743
        %v1745 = vpop.f32.mrf.mxu0
        %v1746 = vpop.f32.mrf.mxu0
        %v1747 = vadd.f32 0.0, %v1746
        %v1748 = vpop.f32.mrf.mxu0
        %1749 = vmatprep.mubr.bf16.mxu0 0
        %1750 = vmatmul.mubr.bf16.gmra.mxu0 %v1691
        %v1751 = vpop.f32.mrf.mxu0
        %v1752 = vadd.f32 0.0, %v1751
        %v1753 = vpop.f32.mrf.mxu0
        %v1754 = vpop.f32.mrf.mxu0
        %v1755 = vadd.f32 0.0, %v1754
        %v1756 = vpop.f32.mrf.mxu0
        %1757 = vdwg.mxu0
        %v1758 = vadd.f32 %v1587, %v1728
        %v1759 = vadd.f32 %v1588, %v1731
        %v1760 = vadd.f32 %v1589, %v1736
        %v1761 = vadd.f32 %v1590, %v1739
        %v1762 = vadd.f32 %v1591, %v1744
        %v1763 = vadd.f32 %v1592, %v1747
        %v1764 = vadd.f32 %v1593, %v1752
        %v1765 = vadd.f32 %v1594, %v1755
        %v1766 = vld [vmem:[#allocation2 + $0x8] sm:$0x8]
        %v1767 = vld [vmem:[#allocation2 + $0x28] sm:$0xf]
        %v1768 = vsel %vm728, %v1766, 0
        %v1769 = vsel %vm729, %v1596, 0
        %v1770 = vsel %vm730, %v1597, 0
        %v1771 = vsel %vm731, %v1598, 0
        %v1772 = vsel %vm732, %v1599, 0
        %v1773 = vsel %vm733, %v1600, 0
        %v1774 = vsel %vm734, %v1601, 0
        %v1775 = vsel %vm735, %v1602, 0
        %v1776 = vsel %vm736, %v1767, 0
        %s1777 = scalar_lea.vmem %s1, 48
        %v1778 = vld [vmem:[%s1777] sm:$0xf]
        %v1779 = vld [vmem:[%s1777 + $0x4] sm:$0xf]
        %v1789 = vunpack.c.l.b16 %v1768
        %v1790 = vunpack.c.l.b16 %v1769
        %v1791 = vunpack.c.l.b16 %v1770
        %v1792 = vunpack.c.l.b16 %v1771
        %v1793 = vunpack.c.l.b16 %v1772
        %v1794 = vunpack.c.l.b16 %v1773
        %v1795 = vunpack.c.l.b16 %v1774
        %v1796 = vunpack.c.l.b16 %v1775
        %v1797 = vunpack.c.l.b16 %v1776
        %v1798 = vpack.c.b16 %v1790, %v1789
        %v1799 = vpack.c.b16 %v1792, %v1791
        %v1800 = vpack.c.b16 %v1794, %v1793
        %v1801 = vpack.c.b16 %v1796, %v1795
        %v1802 = vpack.c.b16 %v1797, %v1797
        %v1804 = vshrl.u32 %v1798, 16
        %v1806 = vrot.slane %v1804, 3
        %v1807 = vshll.u32 %v1798, 16
        %v1809 = vrot.slane %v1807, 4
        %v1810 = vor.u32 %v1806, %v1809
        %v1812 = vshrl.u32 %v1799, 16
        %v1814 = vrot.slane %v1812, 3
        %v1815 = vshll.u32 %v1799, 16
        %v1817 = vrot.slane %v1815, 4
        %v1818 = vor.u32 %v1814, %v1817
        %v1819 = vsel %vm771, %v1810, %v1818
        %v1821 = vshrl.u32 %v1800, 16
        %v1823 = vrot.slane %v1821, 3
        %v1824 = vshll.u32 %v1800, 16
        %v1826 = vrot.slane %v1824, 4
        %v1827 = vor.u32 %v1823, %v1826
        %v1828 = vsel %vm771, %v1818, %v1827
        %v1830 = vshrl.u32 %v1801, 16
        %v1832 = vrot.slane %v1830, 3
        %v1833 = vshll.u32 %v1801, 16
        %v1835 = vrot.slane %v1833, 4
        %v1836 = vor.u32 %v1832, %v1835
        %v1837 = vsel %vm771, %v1827, %v1836
        %v1839 = vshrl.u32 %v1802, 16
        %v1841 = vrot.slane %v1839, 3
        %v1842 = vshll.u32 %v1802, 16
        %v1844 = vrot.slane %v1842, 4
        %v1845 = vor.u32 %v1841, %v1844
        %v1846 = vsel %vm771, %v1836, %v1845
        %v1849 = vunpack.c.l.b16 %v1778
        %v1850 = vunpack.c.l.b16 %v1779
        %v1851 = vpack.c.b16 %v1850, %v1849
        %v1854 = vsel %vm822, %v1819, 0
        %v1857 = vsel %vm822, %v1828, 0
        %v1860 = vsel %vm822, %v1837, 0
        %v1863 = vsel %vm822, %v1846, 0
        %1865 = vmatprep.subr.bf16.mxu0 0
        %1866 = vmatpush1.bf16.msra.mxu0 0
        %1867 = vmatprep.subr.bf16.mxu0 0
        %1868 = vmatpush1.bf16.msra.mxu0 0
        %1869 = vmatprep.subr.bf16.mxu0 0
        %1870 = vmatpush1.bf16.msra.mxu0 0
        %1871 = vmatprep.subr.bf16.mxu0 0
        %1872 = vmatpush1.bf16.msra.mxu0 0
        %1873 = vmatprep.subr.bf16.mxu0 0
        %1874 = vmatpush1.bf16.msra.mxu0 0
        %1875 = vmatprep.subr.bf16.mxu0 0
        %1876 = vmatpush1.bf16.msra.mxu0 0
        %1877 = vmatprep.subr.bf16.mxu0 0
        %1878 = vmatpush1.bf16.msra.mxu0 0
        %1879 = vmatprep.subr.bf16.mxu0 0
        %1880 = vmatpush1.bf16.msra.mxu0 %v1851
        %1881 = vmatprep.subr.bf16.mxu0 0
        %1882 = vmatpush2.bf16.msra.mxu0 0
        %1883 = vmatprep.subr.bf16.mxu0 0
        %1884 = vmatpush2.bf16.msra.mxu0 0
        %1885 = vmatprep.subr.bf16.mxu0 0
        %1886 = vmatpush2.bf16.msra.mxu0 0
        %1887 = vmatprep.subr.bf16.mxu0 0
        %1888 = vmatpush2.bf16.msra.mxu0 0
        %1889 = vmatprep.subr.bf16.mxu0 0
        %1890 = vmatpush2.bf16.msra.mxu0 0
        %1891 = vmatprep.subr.bf16.mxu0 0
        %1892 = vmatpush2.bf16.msra.mxu0 0
        %1893 = vmatprep.subr.bf16.mxu0 0
        %1894 = vmatpush2.bf16.msra.mxu0 0
        %1895 = vmatprep.subr.bf16.mxu0 0
        %1896 = vmatpush2.bf16.msra.mxu0 0
        %1897 = vmatprep.mubr.bf16.mxu0 0
        %1898 = vmatmul.mubr.bf16.gmra.mxu0 %v1854
        %v1899 = vpop.f32.mrf.mxu0
        %v1900 = vadd.f32 0.0, %v1899
        %v1901 = vpop.f32.mrf.mxu0
        %v1902 = vpop.f32.mrf.mxu0
        %v1903 = vadd.f32 0.0, %v1902
        %v1904 = vpop.f32.mrf.mxu0
        %1905 = vmatprep.mubr.bf16.mxu0 0
        %1906 = vmatmul.mubr.bf16.gmra.mxu0 %v1857
        %v1907 = vpop.f32.mrf.mxu0
        %v1908 = vadd.f32 0.0, %v1907
        %v1909 = vpop.f32.mrf.mxu0
        %v1910 = vpop.f32.mrf.mxu0
        %v1911 = vadd.f32 0.0, %v1910
        %v1912 = vpop.f32.mrf.mxu0
        %1913 = vmatprep.mubr.bf16.mxu0 0
        %1914 = vmatmul.mubr.bf16.gmra.mxu0 %v1860
        %v1915 = vpop.f32.mrf.mxu0
        %v1916 = vadd.f32 0.0, %v1915
        %v1917 = vpop.f32.mrf.mxu0
        %v1918 = vpop.f32.mrf.mxu0
        %v1919 = vadd.f32 0.0, %v1918
        %v1920 = vpop.f32.mrf.mxu0
        %1921 = vmatprep.mubr.bf16.mxu0 0
        %1922 = vmatmul.mubr.bf16.gmra.mxu0 %v1863
        %v1923 = vpop.f32.mrf.mxu0
        %v1924 = vadd.f32 0.0, %v1923
        %v1925 = vpop.f32.mrf.mxu0
        %v1926 = vpop.f32.mrf.mxu0
        %v1927 = vadd.f32 0.0, %v1926
        %v1928 = vpop.f32.mrf.mxu0
        %1929 = vdwg.mxu0
        %v1930 = vadd.f32 %v1758, %v1900
        %v1931 = vadd.f32 %v1759, %v1903
        %v1932 = vadd.f32 %v1760, %v1908
        %v1933 = vadd.f32 %v1761, %v1911
        %v1934 = vadd.f32 %v1762, %v1916
        %v1935 = vadd.f32 %v1763, %v1919
        %v1936 = vadd.f32 %v1764, %v1924
        %v1937 = vadd.f32 %v1765, %v1927
        %s1938 = scalar_lea.vmem %s1, 56
        %v1939 = vld [vmem:[%s1938] sm:$0xf]
        %v1940 = vld [vmem:[%s1938 + $0x4] sm:$0xf]
        %v1949 = vunpack.c.l.b16 %v1596
        %v1950 = vunpack.c.l.b16 %v1597
        %v1951 = vunpack.c.l.b16 %v1598
        %v1952 = vunpack.c.l.b16 %v1599
        %v1953 = vunpack.c.l.b16 %v1600
        %v1954 = vunpack.c.l.b16 %v1601
        %v1955 = vunpack.c.l.b16 %v1602
        %v1956 = vunpack.c.l.b16 %v1767
        %v1957 = vpack.c.b16 %v1950, %v1949
        %v1958 = vpack.c.b16 %v1952, %v1951
        %v1959 = vpack.c.b16 %v1954, %v1953
        %v1960 = vpack.c.b16 %v1956, %v1955
        %v1963 = vunpack.c.l.b16 %v1939
        %v1964 = vunpack.c.l.b16 %v1940
        %v1965 = vpack.c.b16 %v1964, %v1963
        %v1968 = vsel %vm822, %v1957, 0
        %v1971 = vsel %vm822, %v1958, 0
        %v1974 = vsel %vm822, %v1959, 0
        %v1977 = vsel %vm822, %v1960, 0
        %1979 = vmatprep.subr.bf16.mxu0 0
        %1980 = vmatpush1.bf16.msra.mxu0 0
        %1981 = vmatprep.subr.bf16.mxu0 0
        %1982 = vmatpush1.bf16.msra.mxu0 0
        %1983 = vmatprep.subr.bf16.mxu0 0
        %1984 = vmatpush1.bf16.msra.mxu0 0
        %1985 = vmatprep.subr.bf16.mxu0 0
        %1986 = vmatpush1.bf16.msra.mxu0 0
        %1987 = vmatprep.subr.bf16.mxu0 0
        %1988 = vmatpush1.bf16.msra.mxu0 0
        %1989 = vmatprep.subr.bf16.mxu0 0
        %1990 = vmatpush1.bf16.msra.mxu0 0
        %1991 = vmatprep.subr.bf16.mxu0 0
        %1992 = vmatpush1.bf16.msra.mxu0 0
        %1993 = vmatprep.subr.bf16.mxu0 0
        %1994 = vmatpush1.bf16.msra.mxu0 %v1965
        %1995 = vmatprep.subr.bf16.mxu0 0
        %1996 = vmatpush2.bf16.msra.mxu0 0
        %1997 = vmatprep.subr.bf16.mxu0 0
        %1998 = vmatpush2.bf16.msra.mxu0 0
        %1999 = vmatprep.subr.bf16.mxu0 0
        %2000 = vmatpush2.bf16.msra.mxu0 0
        %2001 = vmatprep.subr.bf16.mxu0 0
        %2002 = vmatpush2.bf16.msra.mxu0 0
        %2003 = vmatprep.subr.bf16.mxu0 0
        %2004 = vmatpush2.bf16.msra.mxu0 0
        %2005 = vmatprep.subr.bf16.mxu0 0
        %2006 = vmatpush2.bf16.msra.mxu0 0
        %2007 = vmatprep.subr.bf16.mxu0 0
        %2008 = vmatpush2.bf16.msra.mxu0 0
        %2009 = vmatprep.subr.bf16.mxu0 0
        %2010 = vmatpush2.bf16.msra.mxu0 0
        %2011 = vmatprep.mubr.bf16.mxu0 0
        %2012 = vmatmul.mubr.bf16.gmra.mxu0 %v1968
        %v2013 = vpop.f32.mrf.mxu0
        %v2014 = vadd.f32 0.0, %v2013
        %v2015 = vpop.f32.mrf.mxu0
        %v2016 = vpop.f32.mrf.mxu0
        %v2017 = vadd.f32 0.0, %v2016
        %v2018 = vpop.f32.mrf.mxu0
        %2019 = vmatprep.mubr.bf16.mxu0 0
        %2020 = vmatmul.mubr.bf16.gmra.mxu0 %v1971
        %v2021 = vpop.f32.mrf.mxu0
        %v2022 = vadd.f32 0.0, %v2021
        %v2023 = vpop.f32.mrf.mxu0
        %v2024 = vpop.f32.mrf.mxu0
        %v2025 = vadd.f32 0.0, %v2024
        %v2026 = vpop.f32.mrf.mxu0
        %2027 = vmatprep.mubr.bf16.mxu0 0
        %2028 = vmatmul.mubr.bf16.gmra.mxu0 %v1974
        %v2029 = vpop.f32.mrf.mxu0
        %v2030 = vadd.f32 0.0, %v2029
        %v2031 = vpop.f32.mrf.mxu0
        %v2032 = vpop.f32.mrf.mxu0
        %v2033 = vadd.f32 0.0, %v2032
        %v2034 = vpop.f32.mrf.mxu0
        %2035 = vmatprep.mubr.bf16.mxu0 0
        %2036 = vmatmul.mubr.bf16.gmra.mxu0 %v1977
        %v2037 = vpop.f32.mrf.mxu0
        %v2038 = vadd.f32 0.0, %v2037
        %v2039 = vpop.f32.mrf.mxu0
        %v2040 = vpop.f32.mrf.mxu0
        %v2041 = vadd.f32 0.0, %v2040
        %v2042 = vpop.f32.mrf.mxu0
        %2043 = vdwg.mxu0
        %v2044 = vadd.f32 %v1930, %v2014
        %v2045 = vadd.f32 %v1931, %v2017
        %v2046 = vadd.f32 %v1932, %v2022
        %v2047 = vadd.f32 %v1933, %v2025
        %v2048 = vadd.f32 %v1934, %v2030
        %v2049 = vadd.f32 %v1935, %v2033
        %v2050 = vadd.f32 %v1936, %v2038
        %v2051 = vadd.f32 %v1937, %v2041
        %v2052 = vld [vmem:[#allocation2 + $0xc] sm:$0xf]
        %v2053 = vld [vmem:[#allocation2 + $0x10] sm:$0xf]
        %v2054 = vld [vmem:[#allocation2 + $0x14] sm:$0xf]
        %v2055 = vld [vmem:[#allocation2 + $0x18] sm:$0xf]
        %v2056 = vld [vmem:[#allocation2 + $0x1c] sm:$0xf]
        %v2057 = vld [vmem:[#allocation2 + $0x20] sm:$0xf]
        %v2058 = vld [vmem:[#allocation2 + $0x24] sm:$0xf]
        %v2059 = vld [vmem:[#allocation2 + $0x28] sm:$0xf]
        %v2060 = vld [vmem:[#allocation2 + $0x2c] sm:$0x1]
        %v2061 = vsel %vm1137, %v2052, 0
        %v2062 = vsel %vm1138, %v2053, 0
        %v2063 = vsel %vm1139, %v2054, 0
        %v2064 = vsel %vm1140, %v2055, 0
        %v2065 = vsel %vm1141, %v2056, 0
        %v2066 = vsel %vm1142, %v2057, 0
        %v2067 = vsel %vm1143, %v2058, 0
        %v2068 = vsel %vm1144, %v2059, 0
        %v2069 = vsel %vm1145, %v2060, 0
        %s2070 = scalar_lea.vmem %s1, 64
        %v2071 = vld [vmem:[%s2070] sm:$0xf]
        %v2072 = vld [vmem:[%s2070 + $0x4] sm:$0xf]
        %v2082 = vunpack.c.l.b16 %v2061
        %v2083 = vunpack.c.l.b16 %v2062
        %v2084 = vunpack.c.l.b16 %v2063
        %v2085 = vunpack.c.l.b16 %v2064
        %v2086 = vunpack.c.l.b16 %v2065
        %v2087 = vunpack.c.l.b16 %v2066
        %v2088 = vunpack.c.l.b16 %v2067
        %v2089 = vunpack.c.l.b16 %v2068
        %v2090 = vunpack.c.l.b16 %v2069
        %v2091 = vpack.c.b16 %v2083, %v2082
        %v2092 = vpack.c.b16 %v2085, %v2084
        %v2093 = vpack.c.b16 %v2087, %v2086
        %v2094 = vpack.c.b16 %v2089, %v2088
        %v2095 = vpack.c.b16 %v2090, %v2090
        %v2097 = vshrl.u32 %v2091, 16
        %v2099 = vshll.u32 %v2091, 16
        %v2101 = vrot.slane %v2099, 1
        %v2102 = vor.u32 %v2097, %v2101
        %v2104 = vshll.u32 %v2092, 16
        %v2106 = vrot.slane %v2104, 1
        %v2107 = vsel %vm1181, %v2102, %v2106
        %v2108 = vshrl.u32 %v2092, 16
        %v2110 = vor.u32 %v2108, %v2106
        %v2112 = vshll.u32 %v2093, 16
        %v2114 = vrot.slane %v2112, 1
        %v2115 = vsel %vm1181, %v2110, %v2114
        %v2116 = vshrl.u32 %v2093, 16
        %v2118 = vor.u32 %v2116, %v2114
        %v2120 = vshll.u32 %v2094, 16
        %v2122 = vrot.slane %v2120, 1
        %v2123 = vsel %vm1181, %v2118, %v2122
        %v2124 = vshrl.u32 %v2094, 16
        %v2126 = vor.u32 %v2124, %v2122
        %v2128 = vshll.u32 %v2095, 16
        %v2130 = vrot.slane %v2128, 1
        %v2131 = vsel %vm1181, %v2126, %v2130
        %v2134 = vunpack.c.l.b16 %v2071
        %v2135 = vunpack.c.l.b16 %v2072
        %v2136 = vpack.c.b16 %v2135, %v2134
        %v2139 = vsel %vm822, %v2107, 0
        %v2142 = vsel %vm822, %v2115, 0
        %v2145 = vsel %vm822, %v2123, 0
        %v2148 = vsel %vm822, %v2131, 0
        %2150 = vmatprep.subr.bf16.mxu0 0
        %2151 = vmatpush1.bf16.msra.mxu0 0
        %2152 = vmatprep.subr.bf16.mxu0 0
        %2153 = vmatpush1.bf16.msra.mxu0 0
        %2154 = vmatprep.subr.bf16.mxu0 0
        %2155 = vmatpush1.bf16.msra.mxu0 0
        %2156 = vmatprep.subr.bf16.mxu0 0
        %2157 = vmatpush1.bf16.msra.mxu0 0
        %2158 = vmatprep.subr.bf16.mxu0 0
        %2159 = vmatpush1.bf16.msra.mxu0 0
        %2160 = vmatprep.subr.bf16.mxu0 0
        %2161 = vmatpush1.bf16.msra.mxu0 0
        %2162 = vmatprep.subr.bf16.mxu0 0
        %2163 = vmatpush1.bf16.msra.mxu0 0
        %2164 = vmatprep.subr.bf16.mxu0 0
        %2165 = vmatpush1.bf16.msra.mxu0 %v2136
        %2166 = vmatprep.subr.bf16.mxu0 0
        %2167 = vmatpush2.bf16.msra.mxu0 0
        %2168 = vmatprep.subr.bf16.mxu0 0
        %2169 = vmatpush2.bf16.msra.mxu0 0
        %2170 = vmatprep.subr.bf16.mxu0 0
        %2171 = vmatpush2.bf16.msra.mxu0 0
        %2172 = vmatprep.subr.bf16.mxu0 0
        %2173 = vmatpush2.bf16.msra.mxu0 0
        %2174 = vmatprep.subr.bf16.mxu0 0
        %2175 = vmatpush2.bf16.msra.mxu0 0
        %2176 = vmatprep.subr.bf16.mxu0 0
        %2177 = vmatpush2.bf16.msra.mxu0 0
        %2178 = vmatprep.subr.bf16.mxu0 0
        %2179 = vmatpush2.bf16.msra.mxu0 0
        %2180 = vmatprep.subr.bf16.mxu0 0
        %2181 = vmatpush2.bf16.msra.mxu0 0
        %2182 = vmatprep.mubr.bf16.mxu0 0
        %2183 = vmatmul.mubr.bf16.gmra.mxu0 %v2139
        %v2184 = vpop.f32.mrf.mxu0
        %v2185 = vadd.f32 0.0, %v2184
        %v2186 = vpop.f32.mrf.mxu0
        %v2187 = vpop.f32.mrf.mxu0
        %v2188 = vadd.f32 0.0, %v2187
        %v2189 = vpop.f32.mrf.mxu0
        %2190 = vmatprep.mubr.bf16.mxu0 0
        %2191 = vmatmul.mubr.bf16.gmra.mxu0 %v2142
        %v2192 = vpop.f32.mrf.mxu0
        %v2193 = vadd.f32 0.0, %v2192
        %v2194 = vpop.f32.mrf.mxu0
        %v2195 = vpop.f32.mrf.mxu0
        %v2196 = vadd.f32 0.0, %v2195
        %v2197 = vpop.f32.mrf.mxu0
        %2198 = vmatprep.mubr.bf16.mxu0 0
        %2199 = vmatmul.mubr.bf16.gmra.mxu0 %v2145
        %v2200 = vpop.f32.mrf.mxu0
        %v2201 = vadd.f32 0.0, %v2200
        %v2202 = vpop.f32.mrf.mxu0
        %v2203 = vpop.f32.mrf.mxu0
        %v2204 = vadd.f32 0.0, %v2203
        %v2205 = vpop.f32.mrf.mxu0
        %2206 = vmatprep.mubr.bf16.mxu0 0
        %2207 = vmatmul.mubr.bf16.gmra.mxu0 %v2148
        %v2208 = vpop.f32.mrf.mxu0
        %v2209 = vadd.f32 0.0, %v2208
        %v2210 = vpop.f32.mrf.mxu0
        %v2211 = vpop.f32.mrf.mxu0
        %v2212 = vadd.f32 0.0, %v2211
        %v2213 = vpop.f32.mrf.mxu0
        %2214 = vdwg.mxu0
        %v2215 = vadd.f32 %v2044, %v2185
        %v2216 = vadd.f32 %v2045, %v2188
        %v2217 = vadd.f32 %v2046, %v2193
        %v2218 = vadd.f32 %v2047, %v2196
        %v2219 = vadd.f32 %v2048, %v2201
        %v2220 = vadd.f32 %v2049, %v2204
        %v2221 = vadd.f32 %v2050, %v2209
        %v2222 = vadd.f32 %v2051, %v2212
        %v2223 = vmax.f32 %v2215, 0.0
        %v2224 = vmax.f32 %v2216, 0.0
        %v2225 = vmax.f32 %v2217, 0.0
        %v2226 = vmax.f32 %v2218, 0.0
        %v2227 = vmax.f32 %v2219, 0.0
        %v2228 = vmax.f32 %v2220, 0.0
        %v2229 = vmax.f32 %v2221, 0.0
        %v2230 = vmax.f32 %v2222, 0.0
        %v2231 = vpack.c.bf16 %v2224, %v2223
        %v2232 = vpack.c.bf16 %v2226, %v2225
        %v2233 = vpack.c.bf16 %v2228, %v2227
        %v2234 = vpack.c.bf16 %v2230, %v2229
        %v2239 = vunpack.c.l.b16 %v2231
        %v2240 = vunpack.c.h.b16 %v2231
        %v2241 = vunpack.c.l.b16 %v2232
        %v2242 = vunpack.c.h.b16 %v2232
        %v2243 = vunpack.c.l.b16 %v2233
        %v2244 = vunpack.c.h.b16 %v2233
        %v2245 = vunpack.c.l.b16 %v2234
        %v2246 = vunpack.c.h.b16 %v2234
        %v2247 = vpack.c.b16 %v2239, %v2239
        %v2248 = vpack.c.b16 %v2240, %v2240
        %v2249 = vpack.c.b16 %v2241, %v2241
        %v2250 = vpack.c.b16 %v2242, %v2242
        %v2251 = vpack.c.b16 %v2243, %v2243
        %v2252 = vpack.c.b16 %v2244, %v2244
        %v2253 = vpack.c.b16 %v2245, %v2245
        %v2254 = vpack.c.b16 %v2246, %v2246
        %2263 = vst.msk [vmem:[#allocation3 + $0x8] sm:$0xf] %vm452, %v2247
        %2264 = vst.msk [vmem:[#allocation3 + $0xc] sm:$0xf] %vm452, %v2248
        %2265 = vst.msk [vmem:[#allocation3 + $0x10] sm:$0xf] %vm452, %v2249
        %2266 = vst.msk [vmem:[#allocation3 + $0x14] sm:$0xf] %vm452, %v2250
        %2267 = vst.msk [vmem:[#allocation3 + $0x18] sm:$0xf] %vm452, %v2251
        %2268 = vst.msk [vmem:[#allocation3 + $0x1c] sm:$0xf] %vm452, %v2252
        %2269 = vst.msk [vmem:[#allocation3 + $0x20] sm:$0xf] %vm452, %v2253
        %2270 = vst.msk [vmem:[#allocation3 + $0x24] sm:$0xf] %vm452, %v2254
        %v2271 = vld [vmem:[%s7] sm:$0x1]
        %v2273 = vlaneseq
        %v2274 = vshrl.u32 %v2273, 7
        %v2275 = vsub.s32 0, %v2274
        %v2276 = vrot.slane %v2271, %v2275
        %v2278 = vld [vmem:[#allocation3] sm:$0x8]
        %v2279 = vld [vmem:[#allocation3 + $0x4] sm:$0xf]
        %v2280 = vld [vmem:[#allocation3 + $0x8] sm:$0xf]
        %v2281 = vld [vmem:[#allocation3 + $0xc] sm:$0xf]
        %v2282 = vld [vmem:[#allocation3 + $0x10] sm:$0xf]
        %v2283 = vld [vmem:[#allocation3 + $0x14] sm:$0xf]
        %v2284 = vld [vmem:[#allocation3 + $0x18] sm:$0xf]
        %v2285 = vld [vmem:[#allocation3 + $0x1c] sm:$0xf]
        %v2286 = vld [vmem:[#allocation3 + $0x20] sm:$0xf]
        %v2287 = vsel %vm728, %v2278, 0
        %v2288 = vsel %vm729, %v2279, 0
        %v2289 = vsel %vm730, %v2280, 0
        %v2290 = vsel %vm731, %v2281, 0
        %v2291 = vsel %vm732, %v2282, 0
        %v2292 = vsel %vm733, %v2283, 0
        %v2293 = vsel %vm734, %v2284, 0
        %v2294 = vsel %vm735, %v2285, 0
        %v2295 = vsel %vm736, %v2286, 0
        %v2296 = vld [vmem:[#allocation5] sm:$0xf]
        %v2297 = vld [vmem:[#allocation5 + $0x4] sm:$0xf]
        %v2298 = vld [vmem:[#allocation5 + $0x8] sm:$0xf]
        %v2299 = vld [vmem:[#allocation5 + $0xc] sm:$0xf]
        %v2309 = vunpack.c.l.b16 %v2287
        %v2310 = vunpack.c.l.b16 %v2288
        %v2311 = vunpack.c.l.b16 %v2289
        %v2312 = vunpack.c.l.b16 %v2290
        %v2313 = vunpack.c.l.b16 %v2291
        %v2314 = vunpack.c.l.b16 %v2292
        %v2315 = vunpack.c.l.b16 %v2293
        %v2316 = vunpack.c.l.b16 %v2294
        %v2317 = vunpack.c.l.b16 %v2295
        %v2318 = vpack.c.b16 %v2310, %v2309
        %v2319 = vpack.c.b16 %v2312, %v2311
        %v2320 = vpack.c.b16 %v2314, %v2313
        %v2321 = vpack.c.b16 %v2316, %v2315
        %v2322 = vpack.c.b16 %v2317, %v2317
        %v2324 = vshrl.u32 %v2318, 16
        %v2326 = vrot.slane %v2324, 3
        %v2327 = vshll.u32 %v2318, 16
        %v2329 = vrot.slane %v2327, 4
        %v2330 = vor.u32 %v2326, %v2329
        %v2332 = vshrl.u32 %v2319, 16
        %v2334 = vrot.slane %v2332, 3
        %v2335 = vshll.u32 %v2319, 16
        %v2337 = vrot.slane %v2335, 4
        %v2338 = vor.u32 %v2334, %v2337
        %v2339 = vsel %vm771, %v2330, %v2338
        %v2341 = vshrl.u32 %v2320, 16
        %v2343 = vrot.slane %v2341, 3
        %v2344 = vshll.u32 %v2320, 16
        %v2346 = vrot.slane %v2344, 4
        %v2347 = vor.u32 %v2343, %v2346
        %v2348 = vsel %vm771, %v2338, %v2347
        %v2350 = vshrl.u32 %v2321, 16
        %v2352 = vrot.slane %v2350, 3
        %v2353 = vshll.u32 %v2321, 16
        %v2355 = vrot.slane %v2353, 4
        %v2356 = vor.u32 %v2352, %v2355
        %v2357 = vsel %vm771, %v2347, %v2356
        %v2359 = vshrl.u32 %v2322, 16
        %v2361 = vrot.slane %v2359, 3
        %v2362 = vshll.u32 %v2322, 16
        %v2364 = vrot.slane %v2362, 4
        %v2365 = vor.u32 %v2361, %v2364
        %v2366 = vsel %vm771, %v2356, %v2365
        %v2371 = vunpack.c.l.b16 %v2296
        %v2372 = vunpack.c.l.b16 %v2297
        %v2373 = vunpack.c.l.b16 %v2298
        %v2374 = vunpack.c.l.b16 %v2299
        %v2375 = vpack.c.b16 %v2372, %v2371
        %v2376 = vpack.c.b16 %v2374, %v2373
        %vm2379 = vcmask 261120
        %v2381 = vsel %vm2379, %v2339, 0
        %v2384 = vsel %vm2379, %v2348, 0
        %v2387 = vsel %vm2379, %v2357, 0
        %v2390 = vsel %vm2379, %v2366, 0
        %2392 = vmatprep.subr.bf16.mxu0 0
        %2393 = vmatpush1.bf16.msra.mxu0 0
        %2394 = vmatprep.subr.bf16.mxu0 0
        %2395 = vmatpush1.bf16.msra.mxu0 0
        %2396 = vmatprep.subr.bf16.mxu0 0
        %2397 = vmatpush1.bf16.msra.mxu0 0
        %2398 = vmatprep.subr.bf16.mxu0 0
        %2399 = vmatpush1.bf16.msra.mxu0 0
        %2400 = vmatprep.subr.bf16.mxu0 0
        %2401 = vmatpush1.bf16.msra.mxu0 0
        %2402 = vmatprep.subr.bf16.mxu0 0
        %2403 = vmatpush1.bf16.msra.mxu0 0
        %2404 = vmatprep.subr.bf16.mxu0 0
        %2405 = vmatpush1.bf16.msra.mxu0 %v2376
        %2406 = vmatprep.subr.bf16.mxu0 0
        %2407 = vmatpush1.bf16.msra.mxu0 %v2375
        %2408 = vmatprep.subr.bf16.mxu0 0
        %2409 = vmatpush2.bf16.msra.mxu0 0
        %2410 = vmatprep.subr.bf16.mxu0 0
        %2411 = vmatpush2.bf16.msra.mxu0 0
        %2412 = vmatprep.subr.bf16.mxu0 0
        %2413 = vmatpush2.bf16.msra.mxu0 0
        %2414 = vmatprep.subr.bf16.mxu0 0
        %2415 = vmatpush2.bf16.msra.mxu0 0
        %2416 = vmatprep.subr.bf16.mxu0 0
        %2417 = vmatpush2.bf16.msra.mxu0 0
        %2418 = vmatprep.subr.bf16.mxu0 0
        %2419 = vmatpush2.bf16.msra.mxu0 0
        %2420 = vmatprep.subr.bf16.mxu0 0
        %2421 = vmatpush2.bf16.msra.mxu0 0
        %2422 = vmatprep.subr.bf16.mxu0 0
        %2423 = vmatpush2.bf16.msra.mxu0 0
        %2424 = vmatprep.mubr.bf16.mxu0 0
        %2425 = vmatmul.mubr.bf16.gmra.mxu0 %v2381
        %v2426 = vpop.f32.mrf.mxu0
        %v2427 = vadd.f32 0.0, %v2426
        %v2428 = vpop.f32.mrf.mxu0
        %v2429 = vpop.f32.mrf.mxu0
        %v2430 = vadd.f32 0.0, %v2429
        %v2431 = vpop.f32.mrf.mxu0
        %2432 = vmatprep.mubr.bf16.mxu0 0
        %2433 = vmatmul.mubr.bf16.gmra.mxu0 %v2384
        %v2434 = vpop.f32.mrf.mxu0
        %v2435 = vadd.f32 0.0, %v2434
        %v2436 = vpop.f32.mrf.mxu0
        %v2437 = vpop.f32.mrf.mxu0
        %v2438 = vadd.f32 0.0, %v2437
        %v2439 = vpop.f32.mrf.mxu0
        %2440 = vmatprep.mubr.bf16.mxu0 0
        %2441 = vmatmul.mubr.bf16.gmra.mxu0 %v2387
        %v2442 = vpop.f32.mrf.mxu0
        %v2443 = vadd.f32 0.0, %v2442
        %v2444 = vpop.f32.mrf.mxu0
        %v2445 = vpop.f32.mrf.mxu0
        %v2446 = vadd.f32 0.0, %v2445
        %v2447 = vpop.f32.mrf.mxu0
        %2448 = vmatprep.mubr.bf16.mxu0 0
        %2449 = vmatmul.mubr.bf16.gmra.mxu0 %v2390
        %v2450 = vpop.f32.mrf.mxu0
        %v2451 = vadd.f32 0.0, %v2450
        %v2452 = vpop.f32.mrf.mxu0
        %v2453 = vpop.f32.mrf.mxu0
        %v2454 = vadd.f32 0.0, %v2453
        %v2455 = vpop.f32.mrf.mxu0
        %2456 = vdwg.mxu0
        %v2457 = vadd.f32 %v2276, %v2427
        %v2458 = vadd.f32 %v2276, %v2430
        %v2459 = vadd.f32 %v2276, %v2435
        %v2460 = vadd.f32 %v2276, %v2438
        %v2461 = vadd.f32 %v2276, %v2443
        %v2462 = vadd.f32 %v2276, %v2446
        %v2463 = vadd.f32 %v2276, %v2451
        %v2464 = vadd.f32 %v2276, %v2454
        %s2465 = scalar_lea.vmem [#allocation5], 16
        %v2466 = vld [vmem:[%s2465] sm:$0xf]
        %v2467 = vld [vmem:[%s2465 + $0x4] sm:$0xf]
        %v2468 = vld [vmem:[%s2465 + $0x8] sm:$0xf]
        %v2469 = vld [vmem:[%s2465 + $0xc] sm:$0xf]
        %v2478 = vunpack.c.l.b16 %v2279
        %v2479 = vunpack.c.l.b16 %v2280
        %v2480 = vunpack.c.l.b16 %v2281
        %v2481 = vunpack.c.l.b16 %v2282
        %v2482 = vunpack.c.l.b16 %v2283
        %v2483 = vunpack.c.l.b16 %v2284
        %v2484 = vunpack.c.l.b16 %v2285
        %v2485 = vunpack.c.l.b16 %v2286
        %v2486 = vpack.c.b16 %v2479, %v2478
        %v2487 = vpack.c.b16 %v2481, %v2480
        %v2488 = vpack.c.b16 %v2483, %v2482
        %v2489 = vpack.c.b16 %v2485, %v2484
        %v2494 = vunpack.c.l.b16 %v2466
        %v2495 = vunpack.c.l.b16 %v2467
        %v2496 = vunpack.c.l.b16 %v2468
        %v2497 = vunpack.c.l.b16 %v2469
        %v2498 = vpack.c.b16 %v2495, %v2494
        %v2499 = vpack.c.b16 %v2497, %v2496
        %v2503 = vsel %vm2379, %v2486, 0
        %v2506 = vsel %vm2379, %v2487, 0
        %v2509 = vsel %vm2379, %v2488, 0
        %v2512 = vsel %vm2379, %v2489, 0
        %2514 = vmatprep.subr.bf16.mxu0 0
        %2515 = vmatpush1.bf16.msra.mxu0 0
        %2516 = vmatprep.subr.bf16.mxu0 0
        %2517 = vmatpush1.bf16.msra.mxu0 0
        %2518 = vmatprep.subr.bf16.mxu0 0
        %2519 = vmatpush1.bf16.msra.mxu0 0
        %2520 = vmatprep.subr.bf16.mxu0 0
        %2521 = vmatpush1.bf16.msra.mxu0 0
        %2522 = vmatprep.subr.bf16.mxu0 0
        %2523 = vmatpush1.bf16.msra.mxu0 0
        %2524 = vmatprep.subr.bf16.mxu0 0
        %2525 = vmatpush1.bf16.msra.mxu0 0
        %2526 = vmatprep.subr.bf16.mxu0 0
        %2527 = vmatpush1.bf16.msra.mxu0 %v2499
        %2528 = vmatprep.subr.bf16.mxu0 0
        %2529 = vmatpush1.bf16.msra.mxu0 %v2498
        %2530 = vmatprep.subr.bf16.mxu0 0
        %2531 = vmatpush2.bf16.msra.mxu0 0
        %2532 = vmatprep.subr.bf16.mxu0 0
        %2533 = vmatpush2.bf16.msra.mxu0 0
        %2534 = vmatprep.subr.bf16.mxu0 0
        %2535 = vmatpush2.bf16.msra.mxu0 0
        %2536 = vmatprep.subr.bf16.mxu0 0
        %2537 = vmatpush2.bf16.msra.mxu0 0
        %2538 = vmatprep.subr.bf16.mxu0 0
        %2539 = vmatpush2.bf16.msra.mxu0 0
        %2540 = vmatprep.subr.bf16.mxu0 0
        %2541 = vmatpush2.bf16.msra.mxu0 0
        %2542 = vmatprep.subr.bf16.mxu0 0
        %2543 = vmatpush2.bf16.msra.mxu0 0
        %2544 = vmatprep.subr.bf16.mxu0 0
        %2545 = vmatpush2.bf16.msra.mxu0 0
        %2546 = vmatprep.mubr.bf16.mxu0 0
        %2547 = vmatmul.mubr.bf16.gmra.mxu0 %v2503
        %v2548 = vpop.f32.mrf.mxu0
        %v2549 = vadd.f32 0.0, %v2548
        %v2550 = vpop.f32.mrf.mxu0
        %v2551 = vpop.f32.mrf.mxu0
        %v2552 = vadd.f32 0.0, %v2551
        %v2553 = vpop.f32.mrf.mxu0
        %2554 = vmatprep.mubr.bf16.mxu0 0
        %2555 = vmatmul.mubr.bf16.gmra.mxu0 %v2506
        %v2556 = vpop.f32.mrf.mxu0
        %v2557 = vadd.f32 0.0, %v2556
        %v2558 = vpop.f32.mrf.mxu0
        %v2559 = vpop.f32.mrf.mxu0
        %v2560 = vadd.f32 0.0, %v2559
        %v2561 = vpop.f32.mrf.mxu0
        %2562 = vmatprep.mubr.bf16.mxu0 0
        %2563 = vmatmul.mubr.bf16.gmra.mxu0 %v2509
        %v2564 = vpop.f32.mrf.mxu0
        %v2565 = vadd.f32 0.0, %v2564
        %v2566 = vpop.f32.mrf.mxu0
        %v2567 = vpop.f32.mrf.mxu0
        %v2568 = vadd.f32 0.0, %v2567
        %v2569 = vpop.f32.mrf.mxu0
        %2570 = vmatprep.mubr.bf16.mxu0 0
        %2571 = vmatmul.mubr.bf16.gmra.mxu0 %v2512
        %v2572 = vpop.f32.mrf.mxu0
        %v2573 = vadd.f32 0.0, %v2572
        %v2574 = vpop.f32.mrf.mxu0
        %v2575 = vpop.f32.mrf.mxu0
        %v2576 = vadd.f32 0.0, %v2575
        %v2577 = vpop.f32.mrf.mxu0
        %2578 = vdwg.mxu0
        %v2579 = vadd.f32 %v2457, %v2549
        %v2580 = vadd.f32 %v2458, %v2552
        %v2581 = vadd.f32 %v2459, %v2557
        %v2582 = vadd.f32 %v2460, %v2560
        %v2583 = vadd.f32 %v2461, %v2565
        %v2584 = vadd.f32 %v2462, %v2568
        %v2585 = vadd.f32 %v2463, %v2573
        %v2586 = vadd.f32 %v2464, %v2576
        %v2587 = vld [vmem:[#allocation3 + $0x4] sm:$0xf]
        %v2588 = vld [vmem:[#allocation3 + $0x8] sm:$0xf]
        %v2589 = vld [vmem:[#allocation3 + $0xc] sm:$0xf]
        %v2590 = vld [vmem:[#allocation3 + $0x10] sm:$0xf]
        %v2591 = vld [vmem:[#allocation3 + $0x14] sm:$0xf]
        %v2592 = vld [vmem:[#allocation3 + $0x18] sm:$0xf]
        %v2593 = vld [vmem:[#allocation3 + $0x1c] sm:$0xf]
        %v2594 = vld [vmem:[#allocation3 + $0x20] sm:$0xf]
        %v2595 = vld [vmem:[#allocation3 + $0x24] sm:$0x1]
        %v2596 = vsel %vm1137, %v2587, 0
        %v2597 = vsel %vm1138, %v2588, 0
        %v2598 = vsel %vm1139, %v2589, 0
        %v2599 = vsel %vm1140, %v2590, 0
        %v2600 = vsel %vm1141, %v2591, 0
        %v2601 = vsel %vm1142, %v2592, 0
        %v2602 = vsel %vm1143, %v2593, 0
        %v2603 = vsel %vm1144, %v2594, 0
        %v2604 = vsel %vm1145, %v2595, 0
        %s2605 = scalar_lea.vmem [#allocation5], 32
        %v2606 = vld [vmem:[%s2605] sm:$0xf]
        %v2607 = vld [vmem:[%s2605 + $0x4] sm:$0xf]
        %v2608 = vld [vmem:[%s2605 + $0x8] sm:$0xf]
        %v2609 = vld [vmem:[%s2605 + $0xc] sm:$0xf]
        %v2619 = vunpack.c.l.b16 %v2596
        %v2620 = vunpack.c.l.b16 %v2597
        %v2621 = vunpack.c.l.b16 %v2598
        %v2622 = vunpack.c.l.b16 %v2599
        %v2623 = vunpack.c.l.b16 %v2600
        %v2624 = vunpack.c.l.b16 %v2601
        %v2625 = vunpack.c.l.b16 %v2602
        %v2626 = vunpack.c.l.b16 %v2603
        %v2627 = vunpack.c.l.b16 %v2604
        %v2628 = vpack.c.b16 %v2620, %v2619
        %v2629 = vpack.c.b16 %v2622, %v2621
        %v2630 = vpack.c.b16 %v2624, %v2623
        %v2631 = vpack.c.b16 %v2626, %v2625
        %v2632 = vpack.c.b16 %v2627, %v2627
        %v2634 = vshrl.u32 %v2628, 16
        %v2636 = vshll.u32 %v2628, 16
        %v2638 = vrot.slane %v2636, 1
        %v2639 = vor.u32 %v2634, %v2638
        %v2641 = vshll.u32 %v2629, 16
        %v2643 = vrot.slane %v2641, 1
        %v2644 = vsel %vm1181, %v2639, %v2643
        %v2645 = vshrl.u32 %v2629, 16
        %v2647 = vor.u32 %v2645, %v2643
        %v2649 = vshll.u32 %v2630, 16
        %v2651 = vrot.slane %v2649, 1
        %v2652 = vsel %vm1181, %v2647, %v2651
        %v2653 = vshrl.u32 %v2630, 16
        %v2655 = vor.u32 %v2653, %v2651
        %v2657 = vshll.u32 %v2631, 16
        %v2659 = vrot.slane %v2657, 1
        %v2660 = vsel %vm1181, %v2655, %v2659
        %v2661 = vshrl.u32 %v2631, 16
        %v2663 = vor.u32 %v2661, %v2659
        %v2665 = vshll.u32 %v2632, 16
        %v2667 = vrot.slane %v2665, 1
        %v2668 = vsel %vm1181, %v2663, %v2667
        %v2673 = vunpack.c.l.b16 %v2606
        %v2674 = vunpack.c.l.b16 %v2607
        %v2675 = vunpack.c.l.b16 %v2608
        %v2676 = vunpack.c.l.b16 %v2609
        %v2677 = vpack.c.b16 %v2674, %v2673
        %v2678 = vpack.c.b16 %v2676, %v2675
        %v2682 = vsel %vm2379, %v2644, 0
        %v2685 = vsel %vm2379, %v2652, 0
        %v2688 = vsel %vm2379, %v2660, 0
        %v2691 = vsel %vm2379, %v2668, 0
        %2693 = vmatprep.subr.bf16.mxu0 0
        %2694 = vmatpush1.bf16.msra.mxu0 0
        %2695 = vmatprep.subr.bf16.mxu0 0
        %2696 = vmatpush1.bf16.msra.mxu0 0
        %2697 = vmatprep.subr.bf16.mxu0 0
        %2698 = vmatpush1.bf16.msra.mxu0 0
        %2699 = vmatprep.subr.bf16.mxu0 0
        %2700 = vmatpush1.bf16.msra.mxu0 0
        %2701 = vmatprep.subr.bf16.mxu0 0
        %2702 = vmatpush1.bf16.msra.mxu0 0
        %2703 = vmatprep.subr.bf16.mxu0 0
        %2704 = vmatpush1.bf16.msra.mxu0 0
        %2705 = vmatprep.subr.bf16.mxu0 0
        %2706 = vmatpush1.bf16.msra.mxu0 %v2678
        %2707 = vmatprep.subr.bf16.mxu0 0
        %2708 = vmatpush1.bf16.msra.mxu0 %v2677
        %2709 = vmatprep.subr.bf16.mxu0 0
        %2710 = vmatpush2.bf16.msra.mxu0 0
        %2711 = vmatprep.subr.bf16.mxu0 0
        %2712 = vmatpush2.bf16.msra.mxu0 0
        %2713 = vmatprep.subr.bf16.mxu0 0
        %2714 = vmatpush2.bf16.msra.mxu0 0
        %2715 = vmatprep.subr.bf16.mxu0 0
        %2716 = vmatpush2.bf16.msra.mxu0 0
        %2717 = vmatprep.subr.bf16.mxu0 0
        %2718 = vmatpush2.bf16.msra.mxu0 0
        %2719 = vmatprep.subr.bf16.mxu0 0
        %2720 = vmatpush2.bf16.msra.mxu0 0
        %2721 = vmatprep.subr.bf16.mxu0 0
        %2722 = vmatpush2.bf16.msra.mxu0 0
        %2723 = vmatprep.subr.bf16.mxu0 0
        %2724 = vmatpush2.bf16.msra.mxu0 0
        %2725 = vmatprep.mubr.bf16.mxu0 0
        %2726 = vmatmul.mubr.bf16.gmra.mxu0 %v2682
        %v2727 = vpop.f32.mrf.mxu0
        %v2728 = vadd.f32 0.0, %v2727
        %v2729 = vpop.f32.mrf.mxu0
        %v2730 = vpop.f32.mrf.mxu0
        %v2731 = vadd.f32 0.0, %v2730
        %v2732 = vpop.f32.mrf.mxu0
        %2733 = vmatprep.mubr.bf16.mxu0 0
        %2734 = vmatmul.mubr.bf16.gmra.mxu0 %v2685
        %v2735 = vpop.f32.mrf.mxu0
        %v2736 = vadd.f32 0.0, %v2735
        %v2737 = vpop.f32.mrf.mxu0
        %v2738 = vpop.f32.mrf.mxu0
        %v2739 = vadd.f32 0.0, %v2738
        %v2740 = vpop.f32.mrf.mxu0
        %2741 = vmatprep.mubr.bf16.mxu0 0
        %2742 = vmatmul.mubr.bf16.gmra.mxu0 %v2688
        %v2743 = vpop.f32.mrf.mxu0
        %v2744 = vadd.f32 0.0, %v2743
        %v2745 = vpop.f32.mrf.mxu0
        %v2746 = vpop.f32.mrf.mxu0
        %v2747 = vadd.f32 0.0, %v2746
        %v2748 = vpop.f32.mrf.mxu0
        %2749 = vmatprep.mubr.bf16.mxu0 0
        %2750 = vmatmul.mubr.bf16.gmra.mxu0 %v2691
        %v2751 = vpop.f32.mrf.mxu0
        %v2752 = vadd.f32 0.0, %v2751
        %v2753 = vpop.f32.mrf.mxu0
        %v2754 = vpop.f32.mrf.mxu0
        %v2755 = vadd.f32 0.0, %v2754
        %v2756 = vpop.f32.mrf.mxu0
        %2757 = vdwg.mxu0
        %v2758 = vadd.f32 %v2579, %v2728
        %v2759 = vadd.f32 %v2580, %v2731
        %v2760 = vadd.f32 %v2581, %v2736
        %v2761 = vadd.f32 %v2582, %v2739
        %v2762 = vadd.f32 %v2583, %v2744
        %v2763 = vadd.f32 %v2584, %v2747
        %v2764 = vadd.f32 %v2585, %v2752
        %v2765 = vadd.f32 %v2586, %v2755
        %v2766 = vld [vmem:[#allocation3 + $0x4] sm:$0x8]
        %v2767 = vld [vmem:[#allocation3 + $0x24] sm:$0xf]
        %v2768 = vsel %vm728, %v2766, 0
        %v2769 = vsel %vm729, %v2588, 0
        %v2770 = vsel %vm730, %v2589, 0
        %v2771 = vsel %vm731, %v2590, 0
        %v2772 = vsel %vm732, %v2591, 0
        %v2773 = vsel %vm733, %v2592, 0
        %v2774 = vsel %vm734, %v2593, 0
        %v2775 = vsel %vm735, %v2594, 0
        %v2776 = vsel %vm736, %v2767, 0
        %s2777 = scalar_lea.vmem [#allocation5], 48
        %v2778 = vld [vmem:[%s2777] sm:$0xf]
        %v2779 = vld [vmem:[%s2777 + $0x4] sm:$0xf]
        %v2780 = vld [vmem:[%s2777 + $0x8] sm:$0xf]
        %v2781 = vld [vmem:[%s2777 + $0xc] sm:$0xf]
        %v2791 = vunpack.c.l.b16 %v2768
        %v2792 = vunpack.c.l.b16 %v2769
        %v2793 = vunpack.c.l.b16 %v2770
        %v2794 = vunpack.c.l.b16 %v2771
        %v2795 = vunpack.c.l.b16 %v2772
        %v2796 = vunpack.c.l.b16 %v2773
        %v2797 = vunpack.c.l.b16 %v2774
        %v2798 = vunpack.c.l.b16 %v2775
        %v2799 = vunpack.c.l.b16 %v2776
        %v2800 = vpack.c.b16 %v2792, %v2791
        %v2801 = vpack.c.b16 %v2794, %v2793
        %v2802 = vpack.c.b16 %v2796, %v2795
        %v2803 = vpack.c.b16 %v2798, %v2797
        %v2804 = vpack.c.b16 %v2799, %v2799
        %v2806 = vshrl.u32 %v2800, 16
        %v2808 = vrot.slane %v2806, 3
        %v2809 = vshll.u32 %v2800, 16
        %v2811 = vrot.slane %v2809, 4
        %v2812 = vor.u32 %v2808, %v2811
        %v2814 = vshrl.u32 %v2801, 16
        %v2816 = vrot.slane %v2814, 3
        %v2817 = vshll.u32 %v2801, 16
        %v2819 = vrot.slane %v2817, 4
        %v2820 = vor.u32 %v2816, %v2819
        %v2821 = vsel %vm771, %v2812, %v2820
        %v2823 = vshrl.u32 %v2802, 16
        %v2825 = vrot.slane %v2823, 3
        %v2826 = vshll.u32 %v2802, 16
        %v2828 = vrot.slane %v2826, 4
        %v2829 = vor.u32 %v2825, %v2828
        %v2830 = vsel %vm771, %v2820, %v2829
        %v2832 = vshrl.u32 %v2803, 16
        %v2834 = vrot.slane %v2832, 3
        %v2835 = vshll.u32 %v2803, 16
        %v2837 = vrot.slane %v2835, 4
        %v2838 = vor.u32 %v2834, %v2837
        %v2839 = vsel %vm771, %v2829, %v2838
        %v2841 = vshrl.u32 %v2804, 16
        %v2843 = vrot.slane %v2841, 3
        %v2844 = vshll.u32 %v2804, 16
        %v2846 = vrot.slane %v2844, 4
        %v2847 = vor.u32 %v2843, %v2846
        %v2848 = vsel %vm771, %v2838, %v2847
        %v2853 = vunpack.c.l.b16 %v2778
        %v2854 = vunpack.c.l.b16 %v2779
        %v2855 = vunpack.c.l.b16 %v2780
        %v2856 = vunpack.c.l.b16 %v2781
        %v2857 = vpack.c.b16 %v2854, %v2853
        %v2858 = vpack.c.b16 %v2856, %v2855
        %v2862 = vsel %vm2379, %v2821, 0
        %v2865 = vsel %vm2379, %v2830, 0
        %v2868 = vsel %vm2379, %v2839, 0
        %v2871 = vsel %vm2379, %v2848, 0
        %2873 = vmatprep.subr.bf16.mxu0 0
        %2874 = vmatpush1.bf16.msra.mxu0 0
        %2875 = vmatprep.subr.bf16.mxu0 0
        %2876 = vmatpush1.bf16.msra.mxu0 0
        %2877 = vmatprep.subr.bf16.mxu0 0
        %2878 = vmatpush1.bf16.msra.mxu0 0
        %2879 = vmatprep.subr.bf16.mxu0 0
        %2880 = vmatpush1.bf16.msra.mxu0 0
        %2881 = vmatprep.subr.bf16.mxu0 0
        %2882 = vmatpush1.bf16.msra.mxu0 0
        %2883 = vmatprep.subr.bf16.mxu0 0
        %2884 = vmatpush1.bf16.msra.mxu0 0
        %2885 = vmatprep.subr.bf16.mxu0 0
        %2886 = vmatpush1.bf16.msra.mxu0 %v2858
        %2887 = vmatprep.subr.bf16.mxu0 0
        %2888 = vmatpush1.bf16.msra.mxu0 %v2857
        %2889 = vmatprep.subr.bf16.mxu0 0
        %2890 = vmatpush2.bf16.msra.mxu0 0
        %2891 = vmatprep.subr.bf16.mxu0 0
        %2892 = vmatpush2.bf16.msra.mxu0 0
        %2893 = vmatprep.subr.bf16.mxu0 0
        %2894 = vmatpush2.bf16.msra.mxu0 0
        %2895 = vmatprep.subr.bf16.mxu0 0
        %2896 = vmatpush2.bf16.msra.mxu0 0
        %2897 = vmatprep.subr.bf16.mxu0 0
        %2898 = vmatpush2.bf16.msra.mxu0 0
        %2899 = vmatprep.subr.bf16.mxu0 0
        %2900 = vmatpush2.bf16.msra.mxu0 0
        %2901 = vmatprep.subr.bf16.mxu0 0
        %2902 = vmatpush2.bf16.msra.mxu0 0
        %2903 = vmatprep.subr.bf16.mxu0 0
        %2904 = vmatpush2.bf16.msra.mxu0 0
        %2905 = vmatprep.mubr.bf16.mxu0 0
        %2906 = vmatmul.mubr.bf16.gmra.mxu0 %v2862
        %v2907 = vpop.f32.mrf.mxu0
        %v2908 = vadd.f32 0.0, %v2907
        %v2909 = vpop.f32.mrf.mxu0
        %v2910 = vpop.f32.mrf.mxu0
        %v2911 = vadd.f32 0.0, %v2910
        %v2912 = vpop.f32.mrf.mxu0
        %2913 = vmatprep.mubr.bf16.mxu0 0
        %2914 = vmatmul.mubr.bf16.gmra.mxu0 %v2865
        %v2915 = vpop.f32.mrf.mxu0
        %v2916 = vadd.f32 0.0, %v2915
        %v2917 = vpop.f32.mrf.mxu0
        %v2918 = vpop.f32.mrf.mxu0
        %v2919 = vadd.f32 0.0, %v2918
        %v2920 = vpop.f32.mrf.mxu0
        %2921 = vmatprep.mubr.bf16.mxu0 0
        %2922 = vmatmul.mubr.bf16.gmra.mxu0 %v2868
        %v2923 = vpop.f32.mrf.mxu0
        %v2924 = vadd.f32 0.0, %v2923
        %v2925 = vpop.f32.mrf.mxu0
        %v2926 = vpop.f32.mrf.mxu0
        %v2927 = vadd.f32 0.0, %v2926
        %v2928 = vpop.f32.mrf.mxu0
        %2929 = vmatprep.mubr.bf16.mxu0 0
        %2930 = vmatmul.mubr.bf16.gmra.mxu0 %v2871
        %v2931 = vpop.f32.mrf.mxu0
        %v2932 = vadd.f32 0.0, %v2931
        %v2933 = vpop.f32.mrf.mxu0
        %v2934 = vpop.f32.mrf.mxu0
        %v2935 = vadd.f32 0.0, %v2934
        %v2936 = vpop.f32.mrf.mxu0
        %2937 = vdwg.mxu0
        %v2938 = vadd.f32 %v2758, %v2908
        %v2939 = vadd.f32 %v2759, %v2911
        %v2940 = vadd.f32 %v2760, %v2916
        %v2941 = vadd.f32 %v2761, %v2919
        %v2942 = vadd.f32 %v2762, %v2924
        %v2943 = vadd.f32 %v2763, %v2927
        %v2944 = vadd.f32 %v2764, %v2932
        %v2945 = vadd.f32 %v2765, %v2935
        %s2946 = scalar_lea.vmem [#allocation5], 64
        %v2947 = vld [vmem:[%s2946] sm:$0xf]
        %v2948 = vld [vmem:[%s2946 + $0x4] sm:$0xf]
        %v2949 = vld [vmem:[%s2946 + $0x8] sm:$0xf]
        %v2950 = vld [vmem:[%s2946 + $0xc] sm:$0xf]
        %v2959 = vunpack.c.l.b16 %v2588
        %v2960 = vunpack.c.l.b16 %v2589
        %v2961 = vunpack.c.l.b16 %v2590
        %v2962 = vunpack.c.l.b16 %v2591
        %v2963 = vunpack.c.l.b16 %v2592
        %v2964 = vunpack.c.l.b16 %v2593
        %v2965 = vunpack.c.l.b16 %v2594
        %v2966 = vunpack.c.l.b16 %v2767
        %v2967 = vpack.c.b16 %v2960, %v2959
        %v2968 = vpack.c.b16 %v2962, %v2961
        %v2969 = vpack.c.b16 %v2964, %v2963
        %v2970 = vpack.c.b16 %v2966, %v2965
        %v2975 = vunpack.c.l.b16 %v2947
        %v2976 = vunpack.c.l.b16 %v2948
        %v2977 = vunpack.c.l.b16 %v2949
        %v2978 = vunpack.c.l.b16 %v2950
        %v2979 = vpack.c.b16 %v2976, %v2975
        %v2980 = vpack.c.b16 %v2978, %v2977
        %v2984 = vsel %vm2379, %v2967, 0
        %v2987 = vsel %vm2379, %v2968, 0
        %v2990 = vsel %vm2379, %v2969, 0
        %v2993 = vsel %vm2379, %v2970, 0
        %2995 = vmatprep.subr.bf16.mxu0 0
        %2996 = vmatpush1.bf16.msra.mxu0 0
        %2997 = vmatprep.subr.bf16.mxu0 0
        %2998 = vmatpush1.bf16.msra.mxu0 0
        %2999 = vmatprep.subr.bf16.mxu0 0
        %3000 = vmatpush1.bf16.msra.mxu0 0
        %3001 = vmatprep.subr.bf16.mxu0 0
        %3002 = vmatpush1.bf16.msra.mxu0 0
        %3003 = vmatprep.subr.bf16.mxu0 0
        %3004 = vmatpush1.bf16.msra.mxu0 0
        %3005 = vmatprep.subr.bf16.mxu0 0
        %3006 = vmatpush1.bf16.msra.mxu0 0
        %3007 = vmatprep.subr.bf16.mxu0 0
        %3008 = vmatpush1.bf16.msra.mxu0 %v2980
        %3009 = vmatprep.subr.bf16.mxu0 0
        %3010 = vmatpush1.bf16.msra.mxu0 %v2979
        %3011 = vmatprep.subr.bf16.mxu0 0
        %3012 = vmatpush2.bf16.msra.mxu0 0
        %3013 = vmatprep.subr.bf16.mxu0 0
        %3014 = vmatpush2.bf16.msra.mxu0 0
        %3015 = vmatprep.subr.bf16.mxu0 0
        %3016 = vmatpush2.bf16.msra.mxu0 0
        %3017 = vmatprep.subr.bf16.mxu0 0
        %3018 = vmatpush2.bf16.msra.mxu0 0
        %3019 = vmatprep.subr.bf16.mxu0 0
        %3020 = vmatpush2.bf16.msra.mxu0 0
        %3021 = vmatprep.subr.bf16.mxu0 0
        %3022 = vmatpush2.bf16.msra.mxu0 0
        %3023 = vmatprep.subr.bf16.mxu0 0
        %3024 = vmatpush2.bf16.msra.mxu0 0
        %3025 = vmatprep.subr.bf16.mxu0 0
        %3026 = vmatpush2.bf16.msra.mxu0 0
        %3027 = vmatprep.mubr.bf16.mxu0 0
        %3028 = vmatmul.mubr.bf16.gmra.mxu0 %v2984
        %v3029 = vpop.f32.mrf.mxu0
        %v3030 = vadd.f32 0.0, %v3029
        %v3031 = vpop.f32.mrf.mxu0
        %v3032 = vpop.f32.mrf.mxu0
        %v3033 = vadd.f32 0.0, %v3032
        %v3034 = vpop.f32.mrf.mxu0
        %3035 = vmatprep.mubr.bf16.mxu0 0
        %3036 = vmatmul.mubr.bf16.gmra.mxu0 %v2987
        %v3037 = vpop.f32.mrf.mxu0
        %v3038 = vadd.f32 0.0, %v3037
        %v3039 = vpop.f32.mrf.mxu0
        %v3040 = vpop.f32.mrf.mxu0
        %v3041 = vadd.f32 0.0, %v3040
        %v3042 = vpop.f32.mrf.mxu0
        %3043 = vmatprep.mubr.bf16.mxu0 0
        %3044 = vmatmul.mubr.bf16.gmra.mxu0 %v2990
        %v3045 = vpop.f32.mrf.mxu0
        %v3046 = vadd.f32 0.0, %v3045
        %v3047 = vpop.f32.mrf.mxu0
        %v3048 = vpop.f32.mrf.mxu0
        %v3049 = vadd.f32 0.0, %v3048
        %v3050 = vpop.f32.mrf.mxu0
        %3051 = vmatprep.mubr.bf16.mxu0 0
        %3052 = vmatmul.mubr.bf16.gmra.mxu0 %v2993
        %v3053 = vpop.f32.mrf.mxu0
        %v3054 = vadd.f32 0.0, %v3053
        %v3055 = vpop.f32.mrf.mxu0
        %v3056 = vpop.f32.mrf.mxu0
        %v3057 = vadd.f32 0.0, %v3056
        %v3058 = vpop.f32.mrf.mxu0
        %3059 = vdwg.mxu0
        %v3060 = vadd.f32 %v2938, %v3030
        %v3061 = vadd.f32 %v2939, %v3033
        %v3062 = vadd.f32 %v2940, %v3038
        %v3063 = vadd.f32 %v2941, %v3041
        %v3064 = vadd.f32 %v2942, %v3046
        %v3065 = vadd.f32 %v2943, %v3049
        %v3066 = vadd.f32 %v2944, %v3054
        %v3067 = vadd.f32 %v2945, %v3057
        %v3068 = vld [vmem:[#allocation3 + $0x8] sm:$0xf]
        %v3069 = vld [vmem:[#allocation3 + $0xc] sm:$0xf]
        %v3070 = vld [vmem:[#allocation3 + $0x10] sm:$0xf]
        %v3071 = vld [vmem:[#allocation3 + $0x14] sm:$0xf]
        %v3072 = vld [vmem:[#allocation3 + $0x18] sm:$0xf]
        %v3073 = vld [vmem:[#allocation3 + $0x1c] sm:$0xf]
        %v3074 = vld [vmem:[#allocation3 + $0x20] sm:$0xf]
        %v3075 = vld [vmem:[#allocation3 + $0x24] sm:$0xf]
        %v3076 = vld [vmem:[#allocation3 + $0x28] sm:$0x1]
        %v3077 = vsel %vm1137, %v3068, 0
        %v3078 = vsel %vm1138, %v3069, 0
        %v3079 = vsel %vm1139, %v3070, 0
        %v3080 = vsel %vm1140, %v3071, 0
        %v3081 = vsel %vm1141, %v3072, 0
        %v3082 = vsel %vm1142, %v3073, 0
        %v3083 = vsel %vm1143, %v3074, 0
        %v3084 = vsel %vm1144, %v3075, 0
        %v3085 = vsel %vm1145, %v3076, 0
        %s3086 = scalar_lea.vmem [#allocation5], 80
        %v3087 = vld [vmem:[%s3086] sm:$0xf]
        %v3088 = vld [vmem:[%s3086 + $0x4] sm:$0xf]
        %v3089 = vld [vmem:[%s3086 + $0x8] sm:$0xf]
        %v3090 = vld [vmem:[%s3086 + $0xc] sm:$0xf]
        %v3100 = vunpack.c.l.b16 %v3077
        %v3101 = vunpack.c.l.b16 %v3078
        %v3102 = vunpack.c.l.b16 %v3079
        %v3103 = vunpack.c.l.b16 %v3080
        %v3104 = vunpack.c.l.b16 %v3081
        %v3105 = vunpack.c.l.b16 %v3082
        %v3106 = vunpack.c.l.b16 %v3083
        %v3107 = vunpack.c.l.b16 %v3084
        %v3108 = vunpack.c.l.b16 %v3085
        %v3109 = vpack.c.b16 %v3101, %v3100
        %v3110 = vpack.c.b16 %v3103, %v3102
        %v3111 = vpack.c.b16 %v3105, %v3104
        %v3112 = vpack.c.b16 %v3107, %v3106
        %v3113 = vpack.c.b16 %v3108, %v3108
        %v3115 = vshrl.u32 %v3109, 16
        %v3117 = vshll.u32 %v3109, 16
        %v3119 = vrot.slane %v3117, 1
        %v3120 = vor.u32 %v3115, %v3119
        %v3122 = vshll.u32 %v3110, 16
        %v3124 = vrot.slane %v3122, 1
        %v3125 = vsel %vm1181, %v3120, %v3124
        %v3126 = vshrl.u32 %v3110, 16
        %v3128 = vor.u32 %v3126, %v3124
        %v3130 = vshll.u32 %v3111, 16
        %v3132 = vrot.slane %v3130, 1
        %v3133 = vsel %vm1181, %v3128, %v3132
        %v3134 = vshrl.u32 %v3111, 16
        %v3136 = vor.u32 %v3134, %v3132
        %v3138 = vshll.u32 %v3112, 16
        %v3140 = vrot.slane %v3138, 1
        %v3141 = vsel %vm1181, %v3136, %v3140
        %v3142 = vshrl.u32 %v3112, 16
        %v3144 = vor.u32 %v3142, %v3140
        %v3146 = vshll.u32 %v3113, 16
        %v3148 = vrot.slane %v3146, 1
        %v3149 = vsel %vm1181, %v3144, %v3148
        %v3154 = vunpack.c.l.b16 %v3087
        %v3155 = vunpack.c.l.b16 %v3088
        %v3156 = vunpack.c.l.b16 %v3089
        %v3157 = vunpack.c.l.b16 %v3090
        %v3158 = vpack.c.b16 %v3155, %v3154
        %v3159 = vpack.c.b16 %v3157, %v3156
        %v3163 = vsel %vm2379, %v3125, 0
        %v3166 = vsel %vm2379, %v3133, 0
        %v3169 = vsel %vm2379, %v3141, 0
        %v3172 = vsel %vm2379, %v3149, 0
        %3174 = vmatprep.subr.bf16.mxu0 0
        %3175 = vmatpush1.bf16.msra.mxu0 0
        %3176 = vmatprep.subr.bf16.mxu0 0
        %3177 = vmatpush1.bf16.msra.mxu0 0
        %3178 = vmatprep.subr.bf16.mxu0 0
        %3179 = vmatpush1.bf16.msra.mxu0 0
        %3180 = vmatprep.subr.bf16.mxu0 0
        %3181 = vmatpush1.bf16.msra.mxu0 0
        %3182 = vmatprep.subr.bf16.mxu0 0
        %3183 = vmatpush1.bf16.msra.mxu0 0
        %3184 = vmatprep.subr.bf16.mxu0 0
        %3185 = vmatpush1.bf16.msra.mxu0 0
        %3186 = vmatprep.subr.bf16.mxu0 0
        %3187 = vmatpush1.bf16.msra.mxu0 %v3159
        %3188 = vmatprep.subr.bf16.mxu0 0
        %3189 = vmatpush1.bf16.msra.mxu0 %v3158
        %3190 = vmatprep.subr.bf16.mxu0 0
        %3191 = vmatpush2.bf16.msra.mxu0 0
        %3192 = vmatprep.subr.bf16.mxu0 0
        %3193 = vmatpush2.bf16.msra.mxu0 0
        %3194 = vmatprep.subr.bf16.mxu0 0
        %3195 = vmatpush2.bf16.msra.mxu0 0
        %3196 = vmatprep.subr.bf16.mxu0 0
        %3197 = vmatpush2.bf16.msra.mxu0 0
        %3198 = vmatprep.subr.bf16.mxu0 0
        %3199 = vmatpush2.bf16.msra.mxu0 0
        %3200 = vmatprep.subr.bf16.mxu0 0
        %3201 = vmatpush2.bf16.msra.mxu0 0
        %3202 = vmatprep.subr.bf16.mxu0 0
        %3203 = vmatpush2.bf16.msra.mxu0 0
        %3204 = vmatprep.subr.bf16.mxu0 0
        %3205 = vmatpush2.bf16.msra.mxu0 0
        %3206 = vmatprep.mubr.bf16.mxu0 0
        %3207 = vmatmul.mubr.bf16.gmra.mxu0 %v3163
        %v3208 = vpop.f32.mrf.mxu0
        %v3209 = vadd.f32 0.0, %v3208
        %v3210 = vpop.f32.mrf.mxu0
        %v3211 = vpop.f32.mrf.mxu0
        %v3212 = vadd.f32 0.0, %v3211
        %v3213 = vpop.f32.mrf.mxu0
        %3214 = vmatprep.mubr.bf16.mxu0 0
        %3215 = vmatmul.mubr.bf16.gmra.mxu0 %v3166
        %v3216 = vpop.f32.mrf.mxu0
        %v3217 = vadd.f32 0.0, %v3216
        %v3218 = vpop.f32.mrf.mxu0
        %v3219 = vpop.f32.mrf.mxu0
        %v3220 = vadd.f32 0.0, %v3219
        %v3221 = vpop.f32.mrf.mxu0
        %3222 = vmatprep.mubr.bf16.mxu0 0
        %3223 = vmatmul.mubr.bf16.gmra.mxu0 %v3169
        %v3224 = vpop.f32.mrf.mxu0
        %v3225 = vadd.f32 0.0, %v3224
        %v3226 = vpop.f32.mrf.mxu0
        %v3227 = vpop.f32.mrf.mxu0
        %v3228 = vadd.f32 0.0, %v3227
        %v3229 = vpop.f32.mrf.mxu0
        %3230 = vmatprep.mubr.bf16.mxu0 0
        %3231 = vmatmul.mubr.bf16.gmra.mxu0 %v3172
        %v3232 = vpop.f32.mrf.mxu0
        %v3233 = vadd.f32 0.0, %v3232
        %v3234 = vpop.f32.mrf.mxu0
        %v3235 = vpop.f32.mrf.mxu0
        %v3236 = vadd.f32 0.0, %v3235
        %v3237 = vpop.f32.mrf.mxu0
        %3238 = vdwg.mxu0
        %v3239 = vadd.f32 %v3060, %v3209
        %v3240 = vadd.f32 %v3061, %v3212
        %v3241 = vadd.f32 %v3062, %v3217
        %v3242 = vadd.f32 %v3063, %v3220
        %v3243 = vadd.f32 %v3064, %v3225
        %v3244 = vadd.f32 %v3065, %v3228
        %v3245 = vadd.f32 %v3066, %v3233
        %v3246 = vadd.f32 %v3067, %v3236
        %v3247 = vld [vmem:[#allocation3 + $0x8] sm:$0x8]
        %v3248 = vld [vmem:[#allocation3 + $0x28] sm:$0xf]
        %v3249 = vsel %vm728, %v3247, 0
        %v3250 = vsel %vm729, %v3069, 0
        %v3251 = vsel %vm730, %v3070, 0
        %v3252 = vsel %vm731, %v3071, 0
        %v3253 = vsel %vm732, %v3072, 0
        %v3254 = vsel %vm733, %v3073, 0
        %v3255 = vsel %vm734, %v3074, 0
        %v3256 = vsel %vm735, %v3075, 0
        %v3257 = vsel %vm736, %v3248, 0
        %s3258 = scalar_lea.vmem [#allocation5], 96
        %v3259 = vld [vmem:[%s3258] sm:$0xf]
        %v3260 = vld [vmem:[%s3258 + $0x4] sm:$0xf]
        %v3261 = vld [vmem:[%s3258 + $0x8] sm:$0xf]
        %v3262 = vld [vmem:[%s3258 + $0xc] sm:$0xf]
        %v3272 = vunpack.c.l.b16 %v3249
        %v3273 = vunpack.c.l.b16 %v3250
        %v3274 = vunpack.c.l.b16 %v3251
        %v3275 = vunpack.c.l.b16 %v3252
        %v3276 = vunpack.c.l.b16 %v3253
        %v3277 = vunpack.c.l.b16 %v3254
        %v3278 = vunpack.c.l.b16 %v3255
        %v3279 = vunpack.c.l.b16 %v3256
        %v3280 = vunpack.c.l.b16 %v3257
        %v3281 = vpack.c.b16 %v3273, %v3272
        %v3282 = vpack.c.b16 %v3275, %v3274
        %v3283 = vpack.c.b16 %v3277, %v3276
        %v3284 = vpack.c.b16 %v3279, %v3278
        %v3285 = vpack.c.b16 %v3280, %v3280
        %v3287 = vshrl.u32 %v3281, 16
        %v3289 = vrot.slane %v3287, 3
        %v3290 = vshll.u32 %v3281, 16
        %v3292 = vrot.slane %v3290, 4
        %v3293 = vor.u32 %v3289, %v3292
        %v3295 = vshrl.u32 %v3282, 16
        %v3297 = vrot.slane %v3295, 3
        %v3298 = vshll.u32 %v3282, 16
        %v3300 = vrot.slane %v3298, 4
        %v3301 = vor.u32 %v3297, %v3300
        %v3302 = vsel %vm771, %v3293, %v3301
        %v3304 = vshrl.u32 %v3283, 16
        %v3306 = vrot.slane %v3304, 3
        %v3307 = vshll.u32 %v3283, 16
        %v3309 = vrot.slane %v3307, 4
        %v3310 = vor.u32 %v3306, %v3309
        %v3311 = vsel %vm771, %v3301, %v3310
        %v3313 = vshrl.u32 %v3284, 16
        %v3315 = vrot.slane %v3313, 3
        %v3316 = vshll.u32 %v3284, 16
        %v3318 = vrot.slane %v3316, 4
        %v3319 = vor.u32 %v3315, %v3318
        %v3320 = vsel %vm771, %v3310, %v3319
        %v3322 = vshrl.u32 %v3285, 16
        %v3324 = vrot.slane %v3322, 3
        %v3325 = vshll.u32 %v3285, 16
        %v3327 = vrot.slane %v3325, 4
        %v3328 = vor.u32 %v3324, %v3327
        %v3329 = vsel %vm771, %v3319, %v3328
        %v3334 = vunpack.c.l.b16 %v3259
        %v3335 = vunpack.c.l.b16 %v3260
        %v3336 = vunpack.c.l.b16 %v3261
        %v3337 = vunpack.c.l.b16 %v3262
        %v3338 = vpack.c.b16 %v3335, %v3334
        %v3339 = vpack.c.b16 %v3337, %v3336
        %v3343 = vsel %vm2379, %v3302, 0
        %v3346 = vsel %vm2379, %v3311, 0
        %v3349 = vsel %vm2379, %v3320, 0
        %v3352 = vsel %vm2379, %v3329, 0
        %3354 = vmatprep.subr.bf16.mxu0 0
        %3355 = vmatpush1.bf16.msra.mxu0 0
        %3356 = vmatprep.subr.bf16.mxu0 0
        %3357 = vmatpush1.bf16.msra.mxu0 0
        %3358 = vmatprep.subr.bf16.mxu0 0
        %3359 = vmatpush1.bf16.msra.mxu0 0
        %3360 = vmatprep.subr.bf16.mxu0 0
        %3361 = vmatpush1.bf16.msra.mxu0 0
        %3362 = vmatprep.subr.bf16.mxu0 0
        %3363 = vmatpush1.bf16.msra.mxu0 0
        %3364 = vmatprep.subr.bf16.mxu0 0
        %3365 = vmatpush1.bf16.msra.mxu0 0
        %3366 = vmatprep.subr.bf16.mxu0 0
        %3367 = vmatpush1.bf16.msra.mxu0 %v3339
        %3368 = vmatprep.subr.bf16.mxu0 0
        %3369 = vmatpush1.bf16.msra.mxu0 %v3338
        %3370 = vmatprep.subr.bf16.mxu0 0
        %3371 = vmatpush2.bf16.msra.mxu0 0
        %3372 = vmatprep.subr.bf16.mxu0 0
        %3373 = vmatpush2.bf16.msra.mxu0 0
        %3374 = vmatprep.subr.bf16.mxu0 0
        %3375 = vmatpush2.bf16.msra.mxu0 0
        %3376 = vmatprep.subr.bf16.mxu0 0
        %3377 = vmatpush2.bf16.msra.mxu0 0
        %3378 = vmatprep.subr.bf16.mxu0 0
        %3379 = vmatpush2.bf16.msra.mxu0 0
        %3380 = vmatprep.subr.bf16.mxu0 0
        %3381 = vmatpush2.bf16.msra.mxu0 0
        %3382 = vmatprep.subr.bf16.mxu0 0
        %3383 = vmatpush2.bf16.msra.mxu0 0
        %3384 = vmatprep.subr.bf16.mxu0 0
        %3385 = vmatpush2.bf16.msra.mxu0 0
        %3386 = vmatprep.mubr.bf16.mxu0 0
        %3387 = vmatmul.mubr.bf16.gmra.mxu0 %v3343
        %v3388 = vpop.f32.mrf.mxu0
        %v3389 = vadd.f32 0.0, %v3388
        %v3390 = vpop.f32.mrf.mxu0
        %v3391 = vpop.f32.mrf.mxu0
        %v3392 = vadd.f32 0.0, %v3391
        %v3393 = vpop.f32.mrf.mxu0
        %3394 = vmatprep.mubr.bf16.mxu0 0
        %3395 = vmatmul.mubr.bf16.gmra.mxu0 %v3346
        %v3396 = vpop.f32.mrf.mxu0
        %v3397 = vadd.f32 0.0, %v3396
        %v3398 = vpop.f32.mrf.mxu0
        %v3399 = vpop.f32.mrf.mxu0
        %v3400 = vadd.f32 0.0, %v3399
        %v3401 = vpop.f32.mrf.mxu0
        %3402 = vmatprep.mubr.bf16.mxu0 0
        %3403 = vmatmul.mubr.bf16.gmra.mxu0 %v3349
        %v3404 = vpop.f32.mrf.mxu0
        %v3405 = vadd.f32 0.0, %v3404
        %v3406 = vpop.f32.mrf.mxu0
        %v3407 = vpop.f32.mrf.mxu0
        %v3408 = vadd.f32 0.0, %v3407
        %v3409 = vpop.f32.mrf.mxu0
        %3410 = vmatprep.mubr.bf16.mxu0 0
        %3411 = vmatmul.mubr.bf16.gmra.mxu0 %v3352
        %v3412 = vpop.f32.mrf.mxu0
        %v3413 = vadd.f32 0.0, %v3412
        %v3414 = vpop.f32.mrf.mxu0
        %v3415 = vpop.f32.mrf.mxu0
        %v3416 = vadd.f32 0.0, %v3415
        %v3417 = vpop.f32.mrf.mxu0
        %3418 = vdwg.mxu0
        %v3419 = vadd.f32 %v3239, %v3389
        %v3420 = vadd.f32 %v3240, %v3392
        %v3421 = vadd.f32 %v3241, %v3397
        %v3422 = vadd.f32 %v3242, %v3400
        %v3423 = vadd.f32 %v3243, %v3405
        %v3424 = vadd.f32 %v3244, %v3408
        %v3425 = vadd.f32 %v3245, %v3413
        %v3426 = vadd.f32 %v3246, %v3416
        %s3427 = scalar_lea.vmem [#allocation5], 112
        %v3428 = vld [vmem:[%s3427] sm:$0xf]
        %v3429 = vld [vmem:[%s3427 + $0x4] sm:$0xf]
        %v3430 = vld [vmem:[%s3427 + $0x8] sm:$0xf]
        %v3431 = vld [vmem:[%s3427 + $0xc] sm:$0xf]
        %v3440 = vunpack.c.l.b16 %v3069
        %v3441 = vunpack.c.l.b16 %v3070
        %v3442 = vunpack.c.l.b16 %v3071
        %v3443 = vunpack.c.l.b16 %v3072
        %v3444 = vunpack.c.l.b16 %v3073
        %v3445 = vunpack.c.l.b16 %v3074
        %v3446 = vunpack.c.l.b16 %v3075
        %v3447 = vunpack.c.l.b16 %v3248
        %v3448 = vpack.c.b16 %v3441, %v3440
        %v3449 = vpack.c.b16 %v3443, %v3442
        %v3450 = vpack.c.b16 %v3445, %v3444
        %v3451 = vpack.c.b16 %v3447, %v3446
        %v3456 = vunpack.c.l.b16 %v3428
        %v3457 = vunpack.c.l.b16 %v3429
        %v3458 = vunpack.c.l.b16 %v3430
        %v3459 = vunpack.c.l.b16 %v3431
        %v3460 = vpack.c.b16 %v3457, %v3456
        %v3461 = vpack.c.b16 %v3459, %v3458
        %v3465 = vsel %vm2379, %v3448, 0
        %v3468 = vsel %vm2379, %v3449, 0
        %v3471 = vsel %vm2379, %v3450, 0
        %v3474 = vsel %vm2379, %v3451, 0
        %3476 = vmatprep.subr.bf16.mxu0 0
        %3477 = vmatpush1.bf16.msra.mxu0 0
        %3478 = vmatprep.subr.bf16.mxu0 0
        %3479 = vmatpush1.bf16.msra.mxu0 0
        %3480 = vmatprep.subr.bf16.mxu0 0
        %3481 = vmatpush1.bf16.msra.mxu0 0
        %3482 = vmatprep.subr.bf16.mxu0 0
        %3483 = vmatpush1.bf16.msra.mxu0 0
        %3484 = vmatprep.subr.bf16.mxu0 0
        %3485 = vmatpush1.bf16.msra.mxu0 0
        %3486 = vmatprep.subr.bf16.mxu0 0
        %3487 = vmatpush1.bf16.msra.mxu0 0
        %3488 = vmatprep.subr.bf16.mxu0 0
        %3489 = vmatpush1.bf16.msra.mxu0 %v3461
        %3490 = vmatprep.subr.bf16.mxu0 0
        %3491 = vmatpush1.bf16.msra.mxu0 %v3460
        %3492 = vmatprep.subr.bf16.mxu0 0
        %3493 = vmatpush2.bf16.msra.mxu0 0
        %3494 = vmatprep.subr.bf16.mxu0 0
        %3495 = vmatpush2.bf16.msra.mxu0 0
        %3496 = vmatprep.subr.bf16.mxu0 0
        %3497 = vmatpush2.bf16.msra.mxu0 0
        %3498 = vmatprep.subr.bf16.mxu0 0
        %3499 = vmatpush2.bf16.msra.mxu0 0
        %3500 = vmatprep.subr.bf16.mxu0 0
        %3501 = vmatpush2.bf16.msra.mxu0 0
        %3502 = vmatprep.subr.bf16.mxu0 0
        %3503 = vmatpush2.bf16.msra.mxu0 0
        %3504 = vmatprep.subr.bf16.mxu0 0
        %3505 = vmatpush2.bf16.msra.mxu0 0
        %3506 = vmatprep.subr.bf16.mxu0 0
        %3507 = vmatpush2.bf16.msra.mxu0 0
        %3508 = vmatprep.mubr.bf16.mxu0 0
        %3509 = vmatmul.mubr.bf16.gmra.mxu0 %v3465
        %v3510 = vpop.f32.mrf.mxu0
        %v3511 = vadd.f32 0.0, %v3510
        %v3512 = vpop.f32.mrf.mxu0
        %v3513 = vpop.f32.mrf.mxu0
        %v3514 = vadd.f32 0.0, %v3513
        %v3515 = vpop.f32.mrf.mxu0
        %3516 = vmatprep.mubr.bf16.mxu0 0
        %3517 = vmatmul.mubr.bf16.gmra.mxu0 %v3468
        %v3518 = vpop.f32.mrf.mxu0
        %v3519 = vadd.f32 0.0, %v3518
        %v3520 = vpop.f32.mrf.mxu0
        %v3521 = vpop.f32.mrf.mxu0
        %v3522 = vadd.f32 0.0, %v3521
        %v3523 = vpop.f32.mrf.mxu0
        %3524 = vmatprep.mubr.bf16.mxu0 0
        %3525 = vmatmul.mubr.bf16.gmra.mxu0 %v3471
        %v3526 = vpop.f32.mrf.mxu0
        %v3527 = vadd.f32 0.0, %v3526
        %v3528 = vpop.f32.mrf.mxu0
        %v3529 = vpop.f32.mrf.mxu0
        %v3530 = vadd.f32 0.0, %v3529
        %v3531 = vpop.f32.mrf.mxu0
        %3532 = vmatprep.mubr.bf16.mxu0 0
        %3533 = vmatmul.mubr.bf16.gmra.mxu0 %v3474
        %v3534 = vpop.f32.mrf.mxu0
        %v3535 = vadd.f32 0.0, %v3534
        %v3536 = vpop.f32.mrf.mxu0
        %v3537 = vpop.f32.mrf.mxu0
        %v3538 = vadd.f32 0.0, %v3537
        %v3539 = vpop.f32.mrf.mxu0
        %3540 = vdwg.mxu0
        %v3541 = vadd.f32 %v3419, %v3511
        %v3542 = vadd.f32 %v3420, %v3514
        %v3543 = vadd.f32 %v3421, %v3519
        %v3544 = vadd.f32 %v3422, %v3522
        %v3545 = vadd.f32 %v3423, %v3527
        %v3546 = vadd.f32 %v3424, %v3530
        %v3547 = vadd.f32 %v3425, %v3535
        %v3548 = vadd.f32 %v3426, %v3538
        %v3549 = vld [vmem:[#allocation3 + $0xc] sm:$0xf]
        %v3550 = vld [vmem:[#allocation3 + $0x10] sm:$0xf]
        %v3551 = vld [vmem:[#allocation3 + $0x14] sm:$0xf]
        %v3552 = vld [vmem:[#allocation3 + $0x18] sm:$0xf]
        %v3553 = vld [vmem:[#allocation3 + $0x1c] sm:$0xf]
        %v3554 = vld [vmem:[#allocation3 + $0x20] sm:$0xf]
        %v3555 = vld [vmem:[#allocation3 + $0x24] sm:$0xf]
        %v3556 = vld [vmem:[#allocation3 + $0x28] sm:$0xf]
        %v3557 = vld [vmem:[#allocation3 + $0x2c] sm:$0x1]
        %v3558 = vsel %vm1137, %v3549, 0
        %v3559 = vsel %vm1138, %v3550, 0
        %v3560 = vsel %vm1139, %v3551, 0
        %v3561 = vsel %vm1140, %v3552, 0
        %v3562 = vsel %vm1141, %v3553, 0
        %v3563 = vsel %vm1142, %v3554, 0
        %v3564 = vsel %vm1143, %v3555, 0
        %v3565 = vsel %vm1144, %v3556, 0
        %v3566 = vsel %vm1145, %v3557, 0
        %s3567 = scalar_lea.vmem [#allocation5], 128
        %v3568 = vld [vmem:[%s3567] sm:$0xf]
        %v3569 = vld [vmem:[%s3567 + $0x4] sm:$0xf]
        %v3570 = vld [vmem:[%s3567 + $0x8] sm:$0xf]
        %v3571 = vld [vmem:[%s3567 + $0xc] sm:$0xf]
        %v3581 = vunpack.c.l.b16 %v3558
        %v3582 = vunpack.c.l.b16 %v3559
        %v3583 = vunpack.c.l.b16 %v3560
        %v3584 = vunpack.c.l.b16 %v3561
        %v3585 = vunpack.c.l.b16 %v3562
        %v3586 = vunpack.c.l.b16 %v3563
        %v3587 = vunpack.c.l.b16 %v3564
        %v3588 = vunpack.c.l.b16 %v3565
        %v3589 = vunpack.c.l.b16 %v3566
        %v3590 = vpack.c.b16 %v3582, %v3581
        %v3591 = vpack.c.b16 %v3584, %v3583
        %v3592 = vpack.c.b16 %v3586, %v3585
        %v3593 = vpack.c.b16 %v3588, %v3587
        %v3594 = vpack.c.b16 %v3589, %v3589
        %v3596 = vshrl.u32 %v3590, 16
        %v3598 = vshll.u32 %v3590, 16
        %v3600 = vrot.slane %v3598, 1
        %v3601 = vor.u32 %v3596, %v3600
        %v3603 = vshll.u32 %v3591, 16
        %v3605 = vrot.slane %v3603, 1
        %v3606 = vsel %vm1181, %v3601, %v3605
        %v3607 = vshrl.u32 %v3591, 16
        %v3609 = vor.u32 %v3607, %v3605
        %v3611 = vshll.u32 %v3592, 16
        %v3613 = vrot.slane %v3611, 1
        %v3614 = vsel %vm1181, %v3609, %v3613
        %v3615 = vshrl.u32 %v3592, 16
        %v3617 = vor.u32 %v3615, %v3613
        %v3619 = vshll.u32 %v3593, 16
        %v3621 = vrot.slane %v3619, 1
        %v3622 = vsel %vm1181, %v3617, %v3621
        %v3623 = vshrl.u32 %v3593, 16
        %v3625 = vor.u32 %v3623, %v3621
        %v3627 = vshll.u32 %v3594, 16
        %v3629 = vrot.slane %v3627, 1
        %v3630 = vsel %vm1181, %v3625, %v3629
        %v3635 = vunpack.c.l.b16 %v3568
        %v3636 = vunpack.c.l.b16 %v3569
        %v3637 = vunpack.c.l.b16 %v3570
        %v3638 = vunpack.c.l.b16 %v3571
        %v3639 = vpack.c.b16 %v3636, %v3635
        %v3640 = vpack.c.b16 %v3638, %v3637
        %v3644 = vsel %vm2379, %v3606, 0
        %v3647 = vsel %vm2379, %v3614, 0
        %v3650 = vsel %vm2379, %v3622, 0
        %v3653 = vsel %vm2379, %v3630, 0
        %3655 = vmatprep.subr.bf16.mxu0 0
        %3656 = vmatpush1.bf16.msra.mxu0 0
        %3657 = vmatprep.subr.bf16.mxu0 0
        %3658 = vmatpush1.bf16.msra.mxu0 0
        %3659 = vmatprep.subr.bf16.mxu0 0
        %3660 = vmatpush1.bf16.msra.mxu0 0
        %3661 = vmatprep.subr.bf16.mxu0 0
        %3662 = vmatpush1.bf16.msra.mxu0 0
        %3663 = vmatprep.subr.bf16.mxu0 0
        %3664 = vmatpush1.bf16.msra.mxu0 0
        %3665 = vmatprep.subr.bf16.mxu0 0
        %3666 = vmatpush1.bf16.msra.mxu0 0
        %3667 = vmatprep.subr.bf16.mxu0 0
        %3668 = vmatpush1.bf16.msra.mxu0 %v3640
        %3669 = vmatprep.subr.bf16.mxu0 0
        %3670 = vmatpush1.bf16.msra.mxu0 %v3639
        %3671 = vmatprep.subr.bf16.mxu0 0
        %3672 = vmatpush2.bf16.msra.mxu0 0
        %3673 = vmatprep.subr.bf16.mxu0 0
        %3674 = vmatpush2.bf16.msra.mxu0 0
        %3675 = vmatprep.subr.bf16.mxu0 0
        %3676 = vmatpush2.bf16.msra.mxu0 0
        %3677 = vmatprep.subr.bf16.mxu0 0
        %3678 = vmatpush2.bf16.msra.mxu0 0
        %3679 = vmatprep.subr.bf16.mxu0 0
        %3680 = vmatpush2.bf16.msra.mxu0 0
        %3681 = vmatprep.subr.bf16.mxu0 0
        %3682 = vmatpush2.bf16.msra.mxu0 0
        %3683 = vmatprep.subr.bf16.mxu0 0
        %3684 = vmatpush2.bf16.msra.mxu0 0
        %3685 = vmatprep.subr.bf16.mxu0 0
        %3686 = vmatpush2.bf16.msra.mxu0 0
        %3687 = vmatprep.mubr.bf16.mxu0 0
        %3688 = vmatmul.mubr.bf16.gmra.mxu0 %v3644
        %v3689 = vpop.f32.mrf.mxu0
        %v3690 = vadd.f32 0.0, %v3689
        %v3691 = vpop.f32.mrf.mxu0
        %v3692 = vpop.f32.mrf.mxu0
        %v3693 = vadd.f32 0.0, %v3692
        %v3694 = vpop.f32.mrf.mxu0
        %3695 = vmatprep.mubr.bf16.mxu0 0
        %3696 = vmatmul.mubr.bf16.gmra.mxu0 %v3647
        %v3697 = vpop.f32.mrf.mxu0
        %v3698 = vadd.f32 0.0, %v3697
        %v3699 = vpop.f32.mrf.mxu0
        %v3700 = vpop.f32.mrf.mxu0
        %v3701 = vadd.f32 0.0, %v3700
        %v3702 = vpop.f32.mrf.mxu0
        %3703 = vmatprep.mubr.bf16.mxu0 0
        %3704 = vmatmul.mubr.bf16.gmra.mxu0 %v3650
        %v3705 = vpop.f32.mrf.mxu0
        %v3706 = vadd.f32 0.0, %v3705
        %v3707 = vpop.f32.mrf.mxu0
        %v3708 = vpop.f32.mrf.mxu0
        %v3709 = vadd.f32 0.0, %v3708
        %v3710 = vpop.f32.mrf.mxu0
        %3711 = vmatprep.mubr.bf16.mxu0 0
        %3712 = vmatmul.mubr.bf16.gmra.mxu0 %v3653
        %v3713 = vpop.f32.mrf.mxu0
        %v3714 = vadd.f32 0.0, %v3713
        %v3715 = vpop.f32.mrf.mxu0
        %v3716 = vpop.f32.mrf.mxu0
        %v3717 = vadd.f32 0.0, %v3716
        %v3718 = vpop.f32.mrf.mxu0
        %3719 = vdwg.mxu0
        %v3720 = vadd.f32 %v3541, %v3690
        %v3721 = vadd.f32 %v3542, %v3693
        %v3722 = vadd.f32 %v3543, %v3698
        %v3723 = vadd.f32 %v3544, %v3701
        %v3724 = vadd.f32 %v3545, %v3706
        %v3725 = vadd.f32 %v3546, %v3709
        %v3726 = vadd.f32 %v3547, %v3714
        %v3727 = vadd.f32 %v3548, %v3717
        %v3728 = vmax.f32 %v3720, 0.0
        %v3729 = vmax.f32 %v3721, 0.0
        %v3730 = vmax.f32 %v3722, 0.0
        %v3731 = vmax.f32 %v3723, 0.0
        %v3732 = vmax.f32 %v3724, 0.0
        %v3733 = vmax.f32 %v3725, 0.0
        %v3734 = vmax.f32 %v3726, 0.0
        %v3735 = vmax.f32 %v3727, 0.0
        %v3736 = vpack.c.bf16 %v3729, %v3728
        %v3737 = vpack.c.bf16 %v3731, %v3730
        %v3738 = vpack.c.bf16 %v3733, %v3732
        %v3739 = vpack.c.bf16 %v3735, %v3734
        %v3744 = vunpack.c.l.b16 %v3736
        %v3745 = vunpack.c.h.b16 %v3736
        %v3746 = vunpack.c.l.b16 %v3737
        %v3747 = vunpack.c.h.b16 %v3737
        %v3748 = vunpack.c.l.b16 %v3738
        %v3749 = vunpack.c.h.b16 %v3738
        %v3750 = vunpack.c.l.b16 %v3739
        %v3751 = vunpack.c.h.b16 %v3739
        %v3752 = vpack.c.b16 %v3744, %v3744
        %v3753 = vpack.c.b16 %v3745, %v3745
        %v3754 = vpack.c.b16 %v3746, %v3746
        %v3755 = vpack.c.b16 %v3747, %v3747
        %v3756 = vpack.c.b16 %v3748, %v3748
        %v3757 = vpack.c.b16 %v3749, %v3749
        %v3758 = vpack.c.b16 %v3750, %v3750
        %v3759 = vpack.c.b16 %v3751, %v3751
        %3768 = vst.msk [vmem:[#allocation4 + $0x8] sm:$0xf] %vm452, %v3752
        %3769 = vst.msk [vmem:[#allocation4 + $0xc] sm:$0xf] %vm452, %v3753
        %3770 = vst.msk [vmem:[#allocation4 + $0x10] sm:$0xf] %vm452, %v3754
        %3771 = vst.msk [vmem:[#allocation4 + $0x14] sm:$0xf] %vm452, %v3755
        %3772 = vst.msk [vmem:[#allocation4 + $0x18] sm:$0xf] %vm452, %v3756
        %3773 = vst.msk [vmem:[#allocation4 + $0x1c] sm:$0xf] %vm452, %v3757
        %3774 = vst.msk [vmem:[#allocation4 + $0x20] sm:$0xf] %vm452, %v3758
        %3775 = vst.msk [vmem:[#allocation4 + $0x24] sm:$0xf] %vm452, %v3759
        %v3776 = vld [vmem:[%s8] sm:$0x1]
        %v3778 = vlaneseq
        %v3779 = vshrl.u32 %v3778, 7
        %v3780 = vsub.s32 0, %v3779
        %v3781 = vrot.slane %v3776, %v3780
        %v3783 = vld [vmem:[#allocation4] sm:$0x8]
        %v3784 = vld [vmem:[#allocation4 + $0x4] sm:$0xf]
        %v3785 = vld [vmem:[#allocation4 + $0x8] sm:$0xf]
        %v3786 = vld [vmem:[#allocation4 + $0xc] sm:$0xf]
        %v3787 = vld [vmem:[#allocation4 + $0x10] sm:$0xf]
        %v3788 = vld [vmem:[#allocation4 + $0x14] sm:$0xf]
        %v3789 = vld [vmem:[#allocation4 + $0x18] sm:$0xf]
        %v3790 = vld [vmem:[#allocation4 + $0x1c] sm:$0xf]
        %v3791 = vld [vmem:[#allocation4 + $0x20] sm:$0xf]
        %v3792 = vsel %vm728, %v3783, 0
        %v3793 = vsel %vm729, %v3784, 0
        %v3794 = vsel %vm730, %v3785, 0
        %v3795 = vsel %vm731, %v3786, 0
        %v3796 = vsel %vm732, %v3787, 0
        %v3797 = vsel %vm733, %v3788, 0
        %v3798 = vsel %vm734, %v3789, 0
        %v3799 = vsel %vm735, %v3790, 0
        %v3800 = vsel %vm736, %v3791, 0
        %v3801 = vld [vmem:[#allocation8] sm:$0xf]
        %v3802 = vld [vmem:[#allocation8 + $0x4] sm:$0xf]
        %v3803 = vld [vmem:[#allocation8 + $0x8] sm:$0xf]
        %v3804 = vld [vmem:[#allocation8 + $0xc] sm:$0xf]
        %v3814 = vunpack.c.l.b16 %v3792
        %v3815 = vunpack.c.l.b16 %v3793
        %v3816 = vunpack.c.l.b16 %v3794
        %v3817 = vunpack.c.l.b16 %v3795
        %v3818 = vunpack.c.l.b16 %v3796
        %v3819 = vunpack.c.l.b16 %v3797
        %v3820 = vunpack.c.l.b16 %v3798
        %v3821 = vunpack.c.l.b16 %v3799
        %v3822 = vunpack.c.l.b16 %v3800
        %v3823 = vpack.c.b16 %v3815, %v3814
        %v3824 = vpack.c.b16 %v3817, %v3816
        %v3825 = vpack.c.b16 %v3819, %v3818
        %v3826 = vpack.c.b16 %v3821, %v3820
        %v3827 = vpack.c.b16 %v3822, %v3822
        %v3829 = vshrl.u32 %v3823, 16
        %v3831 = vrot.slane %v3829, 3
        %v3832 = vshll.u32 %v3823, 16
        %v3834 = vrot.slane %v3832, 4
        %v3835 = vor.u32 %v3831, %v3834
        %v3837 = vshrl.u32 %v3824, 16
        %v3839 = vrot.slane %v3837, 3
        %v3840 = vshll.u32 %v3824, 16
        %v3842 = vrot.slane %v3840, 4
        %v3843 = vor.u32 %v3839, %v3842
        %v3844 = vsel %vm771, %v3835, %v3843
        %v3846 = vshrl.u32 %v3825, 16
        %v3848 = vrot.slane %v3846, 3
        %v3849 = vshll.u32 %v3825, 16
        %v3851 = vrot.slane %v3849, 4
        %v3852 = vor.u32 %v3848, %v3851
        %v3853 = vsel %vm771, %v3843, %v3852
        %v3855 = vshrl.u32 %v3826, 16
        %v3857 = vrot.slane %v3855, 3
        %v3858 = vshll.u32 %v3826, 16
        %v3860 = vrot.slane %v3858, 4
        %v3861 = vor.u32 %v3857, %v3860
        %v3862 = vsel %vm771, %v3852, %v3861
        %v3864 = vshrl.u32 %v3827, 16
        %v3866 = vrot.slane %v3864, 3
        %v3867 = vshll.u32 %v3827, 16
        %v3869 = vrot.slane %v3867, 4
        %v3870 = vor.u32 %v3866, %v3869
        %v3871 = vsel %vm771, %v3861, %v3870
        %v3876 = vunpack.c.l.b16 %v3801
        %v3877 = vunpack.c.l.b16 %v3802
        %v3878 = vunpack.c.l.b16 %v3803
        %v3879 = vunpack.c.l.b16 %v3804
        %v3880 = vpack.c.b16 %v3877, %v3876
        %v3881 = vpack.c.b16 %v3879, %v3878
        %v3885 = vsel %vm2379, %v3844, 0
        %v3888 = vsel %vm2379, %v3853, 0
        %v3891 = vsel %vm2379, %v3862, 0
        %v3894 = vsel %vm2379, %v3871, 0
        %3896 = vmatprep.subr.bf16.mxu0 0
        %3897 = vmatpush1.bf16.msra.mxu0 0
        %3898 = vmatprep.subr.bf16.mxu0 0
        %3899 = vmatpush1.bf16.msra.mxu0 0
        %3900 = vmatprep.subr.bf16.mxu0 0
        %3901 = vmatpush1.bf16.msra.mxu0 0
        %3902 = vmatprep.subr.bf16.mxu0 0
        %3903 = vmatpush1.bf16.msra.mxu0 0
        %3904 = vmatprep.subr.bf16.mxu0 0
        %3905 = vmatpush1.bf16.msra.mxu0 0
        %3906 = vmatprep.subr.bf16.mxu0 0
        %3907 = vmatpush1.bf16.msra.mxu0 0
        %3908 = vmatprep.subr.bf16.mxu0 0
        %3909 = vmatpush1.bf16.msra.mxu0 %v3881
        %3910 = vmatprep.subr.bf16.mxu0 0
        %3911 = vmatpush1.bf16.msra.mxu0 %v3880
        %3912 = vmatprep.subr.bf16.mxu0 0
        %3913 = vmatpush2.bf16.msra.mxu0 0
        %3914 = vmatprep.subr.bf16.mxu0 0
        %3915 = vmatpush2.bf16.msra.mxu0 0
        %3916 = vmatprep.subr.bf16.mxu0 0
        %3917 = vmatpush2.bf16.msra.mxu0 0
        %3918 = vmatprep.subr.bf16.mxu0 0
        %3919 = vmatpush2.bf16.msra.mxu0 0
        %3920 = vmatprep.subr.bf16.mxu0 0
        %3921 = vmatpush2.bf16.msra.mxu0 0
        %3922 = vmatprep.subr.bf16.mxu0 0
        %3923 = vmatpush2.bf16.msra.mxu0 0
        %3924 = vmatprep.subr.bf16.mxu0 0
        %3925 = vmatpush2.bf16.msra.mxu0 0
        %3926 = vmatprep.subr.bf16.mxu0 0
        %3927 = vmatpush2.bf16.msra.mxu0 0
        %3928 = vmatprep.mubr.bf16.mxu0 0
        %3929 = vmatmul.mubr.bf16.gmra.mxu0 %v3885
        %v3930 = vpop.f32.mrf.mxu0
        %v3931 = vadd.f32 0.0, %v3930
        %v3932 = vpop.f32.mrf.mxu0
        %v3933 = vpop.f32.mrf.mxu0
        %v3934 = vadd.f32 0.0, %v3933
        %v3935 = vpop.f32.mrf.mxu0
        %3936 = vmatprep.mubr.bf16.mxu0 0
        %3937 = vmatmul.mubr.bf16.gmra.mxu0 %v3888
        %v3938 = vpop.f32.mrf.mxu0
        %v3939 = vadd.f32 0.0, %v3938
        %v3940 = vpop.f32.mrf.mxu0
        %v3941 = vpop.f32.mrf.mxu0
        %v3942 = vadd.f32 0.0, %v3941
        %v3943 = vpop.f32.mrf.mxu0
        %3944 = vmatprep.mubr.bf16.mxu0 0
        %3945 = vmatmul.mubr.bf16.gmra.mxu0 %v3891
        %v3946 = vpop.f32.mrf.mxu0
        %v3947 = vadd.f32 0.0, %v3946
        %v3948 = vpop.f32.mrf.mxu0
        %v3949 = vpop.f32.mrf.mxu0
        %v3950 = vadd.f32 0.0, %v3949
        %v3951 = vpop.f32.mrf.mxu0
        %3952 = vmatprep.mubr.bf16.mxu0 0
        %3953 = vmatmul.mubr.bf16.gmra.mxu0 %v3894
        %v3954 = vpop.f32.mrf.mxu0
        %v3955 = vadd.f32 0.0, %v3954
        %v3956 = vpop.f32.mrf.mxu0
        %v3957 = vpop.f32.mrf.mxu0
        %v3958 = vadd.f32 0.0, %v3957
        %v3959 = vpop.f32.mrf.mxu0
        %3960 = vdwg.mxu0
        %v3961 = vadd.f32 %v3781, %v3931
        %v3962 = vadd.f32 %v3781, %v3934
        %v3963 = vadd.f32 %v3781, %v3939
        %v3964 = vadd.f32 %v3781, %v3942
        %v3965 = vadd.f32 %v3781, %v3947
        %v3966 = vadd.f32 %v3781, %v3950
        %v3967 = vadd.f32 %v3781, %v3955
        %v3968 = vadd.f32 %v3781, %v3958
        %s3969 = scalar_lea.vmem [#allocation8], 16
        %v3970 = vld [vmem:[%s3969] sm:$0xf]
        %v3971 = vld [vmem:[%s3969 + $0x4] sm:$0xf]
        %v3972 = vld [vmem:[%s3969 + $0x8] sm:$0xf]
        %v3973 = vld [vmem:[%s3969 + $0xc] sm:$0xf]
        %v3982 = vunpack.c.l.b16 %v3784
        %v3983 = vunpack.c.l.b16 %v3785
        %v3984 = vunpack.c.l.b16 %v3786
        %v3985 = vunpack.c.l.b16 %v3787
        %v3986 = vunpack.c.l.b16 %v3788
        %v3987 = vunpack.c.l.b16 %v3789
        %v3988 = vunpack.c.l.b16 %v3790
        %v3989 = vunpack.c.l.b16 %v3791
        %v3990 = vpack.c.b16 %v3983, %v3982
        %v3991 = vpack.c.b16 %v3985, %v3984
        %v3992 = vpack.c.b16 %v3987, %v3986
        %v3993 = vpack.c.b16 %v3989, %v3988
        %v3998 = vunpack.c.l.b16 %v3970
        %v3999 = vunpack.c.l.b16 %v3971
        %v4000 = vunpack.c.l.b16 %v3972
        %v4001 = vunpack.c.l.b16 %v3973
        %v4002 = vpack.c.b16 %v3999, %v3998
        %v4003 = vpack.c.b16 %v4001, %v4000
        %v4007 = vsel %vm2379, %v3990, 0
        %v4010 = vsel %vm2379, %v3991, 0
        %v4013 = vsel %vm2379, %v3992, 0
        %v4016 = vsel %vm2379, %v3993, 0
        %4018 = vmatprep.subr.bf16.mxu0 0
        %4019 = vmatpush1.bf16.msra.mxu0 0
        %4020 = vmatprep.subr.bf16.mxu0 0
        %4021 = vmatpush1.bf16.msra.mxu0 0
        %4022 = vmatprep.subr.bf16.mxu0 0
        %4023 = vmatpush1.bf16.msra.mxu0 0
        %4024 = vmatprep.subr.bf16.mxu0 0
        %4025 = vmatpush1.bf16.msra.mxu0 0
        %4026 = vmatprep.subr.bf16.mxu0 0
        %4027 = vmatpush1.bf16.msra.mxu0 0
        %4028 = vmatprep.subr.bf16.mxu0 0
        %4029 = vmatpush1.bf16.msra.mxu0 0
        %4030 = vmatprep.subr.bf16.mxu0 0
        %4031 = vmatpush1.bf16.msra.mxu0 %v4003
        %4032 = vmatprep.subr.bf16.mxu0 0
        %4033 = vmatpush1.bf16.msra.mxu0 %v4002
        %4034 = vmatprep.subr.bf16.mxu0 0
        %4035 = vmatpush2.bf16.msra.mxu0 0
        %4036 = vmatprep.subr.bf16.mxu0 0
        %4037 = vmatpush2.bf16.msra.mxu0 0
        %4038 = vmatprep.subr.bf16.mxu0 0
        %4039 = vmatpush2.bf16.msra.mxu0 0
        %4040 = vmatprep.subr.bf16.mxu0 0
        %4041 = vmatpush2.bf16.msra.mxu0 0
        %4042 = vmatprep.subr.bf16.mxu0 0
        %4043 = vmatpush2.bf16.msra.mxu0 0
        %4044 = vmatprep.subr.bf16.mxu0 0
        %4045 = vmatpush2.bf16.msra.mxu0 0
        %4046 = vmatprep.subr.bf16.mxu0 0
        %4047 = vmatpush2.bf16.msra.mxu0 0
        %4048 = vmatprep.subr.bf16.mxu0 0
        %4049 = vmatpush2.bf16.msra.mxu0 0
        %4050 = vmatprep.mubr.bf16.mxu0 0
        %4051 = vmatmul.mubr.bf16.gmra.mxu0 %v4007
        %v4052 = vpop.f32.mrf.mxu0
        %v4053 = vadd.f32 0.0, %v4052
        %v4054 = vpop.f32.mrf.mxu0
        %v4055 = vpop.f32.mrf.mxu0
        %v4056 = vadd.f32 0.0, %v4055
        %v4057 = vpop.f32.mrf.mxu0
        %4058 = vmatprep.mubr.bf16.mxu0 0
        %4059 = vmatmul.mubr.bf16.gmra.mxu0 %v4010
        %v4060 = vpop.f32.mrf.mxu0
        %v4061 = vadd.f32 0.0, %v4060
        %v4062 = vpop.f32.mrf.mxu0
        %v4063 = vpop.f32.mrf.mxu0
        %v4064 = vadd.f32 0.0, %v4063
        %v4065 = vpop.f32.mrf.mxu0
        %4066 = vmatprep.mubr.bf16.mxu0 0
        %4067 = vmatmul.mubr.bf16.gmra.mxu0 %v4013
        %v4068 = vpop.f32.mrf.mxu0
        %v4069 = vadd.f32 0.0, %v4068
        %v4070 = vpop.f32.mrf.mxu0
        %v4071 = vpop.f32.mrf.mxu0
        %v4072 = vadd.f32 0.0, %v4071
        %v4073 = vpop.f32.mrf.mxu0
        %4074 = vmatprep.mubr.bf16.mxu0 0
        %4075 = vmatmul.mubr.bf16.gmra.mxu0 %v4016
        %v4076 = vpop.f32.mrf.mxu0
        %v4077 = vadd.f32 0.0, %v4076
        %v4078 = vpop.f32.mrf.mxu0
        %v4079 = vpop.f32.mrf.mxu0
        %v4080 = vadd.f32 0.0, %v4079
        %v4081 = vpop.f32.mrf.mxu0
        %4082 = vdwg.mxu0
        %v4083 = vadd.f32 %v3961, %v4053
        %v4084 = vadd.f32 %v3962, %v4056
        %v4085 = vadd.f32 %v3963, %v4061
        %v4086 = vadd.f32 %v3964, %v4064
        %v4087 = vadd.f32 %v3965, %v4069
        %v4088 = vadd.f32 %v3966, %v4072
        %v4089 = vadd.f32 %v3967, %v4077
        %v4090 = vadd.f32 %v3968, %v4080
        %v4091 = vld [vmem:[#allocation4 + $0x4] sm:$0xf]
        %v4092 = vld [vmem:[#allocation4 + $0x8] sm:$0xf]
        %v4093 = vld [vmem:[#allocation4 + $0xc] sm:$0xf]
        %v4094 = vld [vmem:[#allocation4 + $0x10] sm:$0xf]
        %v4095 = vld [vmem:[#allocation4 + $0x14] sm:$0xf]
        %v4096 = vld [vmem:[#allocation4 + $0x18] sm:$0xf]
        %v4097 = vld [vmem:[#allocation4 + $0x1c] sm:$0xf]
        %v4098 = vld [vmem:[#allocation4 + $0x20] sm:$0xf]
        %v4099 = vld [vmem:[#allocation4 + $0x24] sm:$0x1]
        %v4100 = vsel %vm1137, %v4091, 0
        %v4101 = vsel %vm1138, %v4092, 0
        %v4102 = vsel %vm1139, %v4093, 0
        %v4103 = vsel %vm1140, %v4094, 0
        %v4104 = vsel %vm1141, %v4095, 0
        %v4105 = vsel %vm1142, %v4096, 0
        %v4106 = vsel %vm1143, %v4097, 0
        %v4107 = vsel %vm1144, %v4098, 0
        %v4108 = vsel %vm1145, %v4099, 0
        %s4109 = scalar_lea.vmem [#allocation8], 32
        %v4110 = vld [vmem:[%s4109] sm:$0xf]
        %v4111 = vld [vmem:[%s4109 + $0x4] sm:$0xf]
        %v4112 = vld [vmem:[%s4109 + $0x8] sm:$0xf]
        %v4113 = vld [vmem:[%s4109 + $0xc] sm:$0xf]
        %v4123 = vunpack.c.l.b16 %v4100
        %v4124 = vunpack.c.l.b16 %v4101
        %v4125 = vunpack.c.l.b16 %v4102
        %v4126 = vunpack.c.l.b16 %v4103
        %v4127 = vunpack.c.l.b16 %v4104
        %v4128 = vunpack.c.l.b16 %v4105
        %v4129 = vunpack.c.l.b16 %v4106
        %v4130 = vunpack.c.l.b16 %v4107
        %v4131 = vunpack.c.l.b16 %v4108
        %v4132 = vpack.c.b16 %v4124, %v4123
        %v4133 = vpack.c.b16 %v4126, %v4125
        %v4134 = vpack.c.b16 %v4128, %v4127
        %v4135 = vpack.c.b16 %v4130, %v4129
        %v4136 = vpack.c.b16 %v4131, %v4131
        %v4138 = vshrl.u32 %v4132, 16
        %v4140 = vshll.u32 %v4132, 16
        %v4142 = vrot.slane %v4140, 1
        %v4143 = vor.u32 %v4138, %v4142
        %v4145 = vshll.u32 %v4133, 16
        %v4147 = vrot.slane %v4145, 1
        %v4148 = vsel %vm1181, %v4143, %v4147
        %v4149 = vshrl.u32 %v4133, 16
        %v4151 = vor.u32 %v4149, %v4147
        %v4153 = vshll.u32 %v4134, 16
        %v4155 = vrot.slane %v4153, 1
        %v4156 = vsel %vm1181, %v4151, %v4155
        %v4157 = vshrl.u32 %v4134, 16
        %v4159 = vor.u32 %v4157, %v4155
        %v4161 = vshll.u32 %v4135, 16
        %v4163 = vrot.slane %v4161, 1
        %v4164 = vsel %vm1181, %v4159, %v4163
        %v4165 = vshrl.u32 %v4135, 16
        %v4167 = vor.u32 %v4165, %v4163
        %v4169 = vshll.u32 %v4136, 16
        %v4171 = vrot.slane %v4169, 1
        %v4172 = vsel %vm1181, %v4167, %v4171
        %v4177 = vunpack.c.l.b16 %v4110
        %v4178 = vunpack.c.l.b16 %v4111
        %v4179 = vunpack.c.l.b16 %v4112
        %v4180 = vunpack.c.l.b16 %v4113
        %v4181 = vpack.c.b16 %v4178, %v4177
        %v4182 = vpack.c.b16 %v4180, %v4179
        %v4186 = vsel %vm2379, %v4148, 0
        %v4189 = vsel %vm2379, %v4156, 0
        %v4192 = vsel %vm2379, %v4164, 0
        %v4195 = vsel %vm2379, %v4172, 0
        %4197 = vmatprep.subr.bf16.mxu0 0
        %4198 = vmatpush1.bf16.msra.mxu0 0
        %4199 = vmatprep.subr.bf16.mxu0 0
        %4200 = vmatpush1.bf16.msra.mxu0 0
        %4201 = vmatprep.subr.bf16.mxu0 0
        %4202 = vmatpush1.bf16.msra.mxu0 0
        %4203 = vmatprep.subr.bf16.mxu0 0
        %4204 = vmatpush1.bf16.msra.mxu0 0
        %4205 = vmatprep.subr.bf16.mxu0 0
        %4206 = vmatpush1.bf16.msra.mxu0 0
        %4207 = vmatprep.subr.bf16.mxu0 0
        %4208 = vmatpush1.bf16.msra.mxu0 0
        %4209 = vmatprep.subr.bf16.mxu0 0
        %4210 = vmatpush1.bf16.msra.mxu0 %v4182
        %4211 = vmatprep.subr.bf16.mxu0 0
        %4212 = vmatpush1.bf16.msra.mxu0 %v4181
        %4213 = vmatprep.subr.bf16.mxu0 0
        %4214 = vmatpush2.bf16.msra.mxu0 0
        %4215 = vmatprep.subr.bf16.mxu0 0
        %4216 = vmatpush2.bf16.msra.mxu0 0
        %4217 = vmatprep.subr.bf16.mxu0 0
        %4218 = vmatpush2.bf16.msra.mxu0 0
        %4219 = vmatprep.subr.bf16.mxu0 0
        %4220 = vmatpush2.bf16.msra.mxu0 0
        %4221 = vmatprep.subr.bf16.mxu0 0
        %4222 = vmatpush2.bf16.msra.mxu0 0
        %4223 = vmatprep.subr.bf16.mxu0 0
        %4224 = vmatpush2.bf16.msra.mxu0 0
        %4225 = vmatprep.subr.bf16.mxu0 0
        %4226 = vmatpush2.bf16.msra.mxu0 0
        %4227 = vmatprep.subr.bf16.mxu0 0
        %4228 = vmatpush2.bf16.msra.mxu0 0
        %4229 = vmatprep.mubr.bf16.mxu0 0
        %4230 = vmatmul.mubr.bf16.gmra.mxu0 %v4186
        %v4231 = vpop.f32.mrf.mxu0
        %v4232 = vadd.f32 0.0, %v4231
        %v4233 = vpop.f32.mrf.mxu0
        %v4234 = vpop.f32.mrf.mxu0
        %v4235 = vadd.f32 0.0, %v4234
        %v4236 = vpop.f32.mrf.mxu0
        %4237 = vmatprep.mubr.bf16.mxu0 0
        %4238 = vmatmul.mubr.bf16.gmra.mxu0 %v4189
        %v4239 = vpop.f32.mrf.mxu0
        %v4240 = vadd.f32 0.0, %v4239
        %v4241 = vpop.f32.mrf.mxu0
        %v4242 = vpop.f32.mrf.mxu0
        %v4243 = vadd.f32 0.0, %v4242
        %v4244 = vpop.f32.mrf.mxu0
        %4245 = vmatprep.mubr.bf16.mxu0 0
        %4246 = vmatmul.mubr.bf16.gmra.mxu0 %v4192
        %v4247 = vpop.f32.mrf.mxu0
        %v4248 = vadd.f32 0.0, %v4247
        %v4249 = vpop.f32.mrf.mxu0
        %v4250 = vpop.f32.mrf.mxu0
        %v4251 = vadd.f32 0.0, %v4250
        %v4252 = vpop.f32.mrf.mxu0
        %4253 = vmatprep.mubr.bf16.mxu0 0
        %4254 = vmatmul.mubr.bf16.gmra.mxu0 %v4195
        %v4255 = vpop.f32.mrf.mxu0
        %v4256 = vadd.f32 0.0, %v4255
        %v4257 = vpop.f32.mrf.mxu0
        %v4258 = vpop.f32.mrf.mxu0
        %v4259 = vadd.f32 0.0, %v4258
        %v4260 = vpop.f32.mrf.mxu0
        %4261 = vdwg.mxu0
        %v4262 = vadd.f32 %v4083, %v4232
        %v4263 = vadd.f32 %v4084, %v4235
        %v4264 = vadd.f32 %v4085, %v4240
        %v4265 = vadd.f32 %v4086, %v4243
        %v4266 = vadd.f32 %v4087, %v4248
        %v4267 = vadd.f32 %v4088, %v4251
        %v4268 = vadd.f32 %v4089, %v4256
        %v4269 = vadd.f32 %v4090, %v4259
        %v4270 = vld [vmem:[#allocation4 + $0x4] sm:$0x8]
        %v4271 = vld [vmem:[#allocation4 + $0x24] sm:$0xf]
        %v4272 = vsel %vm728, %v4270, 0
        %v4273 = vsel %vm729, %v4092, 0
        %v4274 = vsel %vm730, %v4093, 0
        %v4275 = vsel %vm731, %v4094, 0
        %v4276 = vsel %vm732, %v4095, 0
        %v4277 = vsel %vm733, %v4096, 0
        %v4278 = vsel %vm734, %v4097, 0
        %v4279 = vsel %vm735, %v4098, 0
        %v4280 = vsel %vm736, %v4271, 0
        %s4281 = scalar_lea.vmem [#allocation8], 48
        %v4282 = vld [vmem:[%s4281] sm:$0xf]
        %v4283 = vld [vmem:[%s4281 + $0x4] sm:$0xf]
        %v4284 = vld [vmem:[%s4281 + $0x8] sm:$0xf]
        %v4285 = vld [vmem:[%s4281 + $0xc] sm:$0xf]
        %v4295 = vunpack.c.l.b16 %v4272
        %v4296 = vunpack.c.l.b16 %v4273
        %v4297 = vunpack.c.l.b16 %v4274
        %v4298 = vunpack.c.l.b16 %v4275
        %v4299 = vunpack.c.l.b16 %v4276
        %v4300 = vunpack.c.l.b16 %v4277
        %v4301 = vunpack.c.l.b16 %v4278
        %v4302 = vunpack.c.l.b16 %v4279
        %v4303 = vunpack.c.l.b16 %v4280
        %v4304 = vpack.c.b16 %v4296, %v4295
        %v4305 = vpack.c.b16 %v4298, %v4297
        %v4306 = vpack.c.b16 %v4300, %v4299
        %v4307 = vpack.c.b16 %v4302, %v4301
        %v4308 = vpack.c.b16 %v4303, %v4303
        %v4310 = vshrl.u32 %v4304, 16
        %v4312 = vrot.slane %v4310, 3
        %v4313 = vshll.u32 %v4304, 16
        %v4315 = vrot.slane %v4313, 4
        %v4316 = vor.u32 %v4312, %v4315
        %v4318 = vshrl.u32 %v4305, 16
        %v4320 = vrot.slane %v4318, 3
        %v4321 = vshll.u32 %v4305, 16
        %v4323 = vrot.slane %v4321, 4
        %v4324 = vor.u32 %v4320, %v4323
        %v4325 = vsel %vm771, %v4316, %v4324
        %v4327 = vshrl.u32 %v4306, 16
        %v4329 = vrot.slane %v4327, 3
        %v4330 = vshll.u32 %v4306, 16
        %v4332 = vrot.slane %v4330, 4
        %v4333 = vor.u32 %v4329, %v4332
        %v4334 = vsel %vm771, %v4324, %v4333
        %v4336 = vshrl.u32 %v4307, 16
        %v4338 = vrot.slane %v4336, 3
        %v4339 = vshll.u32 %v4307, 16
        %v4341 = vrot.slane %v4339, 4
        %v4342 = vor.u32 %v4338, %v4341
        %v4343 = vsel %vm771, %v4333, %v4342
        %v4345 = vshrl.u32 %v4308, 16
        %v4347 = vrot.slane %v4345, 3
        %v4348 = vshll.u32 %v4308, 16
        %v4350 = vrot.slane %v4348, 4
        %v4351 = vor.u32 %v4347, %v4350
        %v4352 = vsel %vm771, %v4342, %v4351
        %v4357 = vunpack.c.l.b16 %v4282
        %v4358 = vunpack.c.l.b16 %v4283
        %v4359 = vunpack.c.l.b16 %v4284
        %v4360 = vunpack.c.l.b16 %v4285
        %v4361 = vpack.c.b16 %v4358, %v4357
        %v4362 = vpack.c.b16 %v4360, %v4359
        %v4366 = vsel %vm2379, %v4325, 0
        %v4369 = vsel %vm2379, %v4334, 0
        %v4372 = vsel %vm2379, %v4343, 0
        %v4375 = vsel %vm2379, %v4352, 0
        %4377 = vmatprep.subr.bf16.mxu0 0
        %4378 = vmatpush1.bf16.msra.mxu0 0
        %4379 = vmatprep.subr.bf16.mxu0 0
        %4380 = vmatpush1.bf16.msra.mxu0 0
        %4381 = vmatprep.subr.bf16.mxu0 0
        %4382 = vmatpush1.bf16.msra.mxu0 0
        %4383 = vmatprep.subr.bf16.mxu0 0
        %4384 = vmatpush1.bf16.msra.mxu0 0
        %4385 = vmatprep.subr.bf16.mxu0 0
        %4386 = vmatpush1.bf16.msra.mxu0 0
        %4387 = vmatprep.subr.bf16.mxu0 0
        %4388 = vmatpush1.bf16.msra.mxu0 0
        %4389 = vmatprep.subr.bf16.mxu0 0
        %4390 = vmatpush1.bf16.msra.mxu0 %v4362
        %4391 = vmatprep.subr.bf16.mxu0 0
        %4392 = vmatpush1.bf16.msra.mxu0 %v4361
        %4393 = vmatprep.subr.bf16.mxu0 0
        %4394 = vmatpush2.bf16.msra.mxu0 0
        %4395 = vmatprep.subr.bf16.mxu0 0
        %4396 = vmatpush2.bf16.msra.mxu0 0
        %4397 = vmatprep.subr.bf16.mxu0 0
        %4398 = vmatpush2.bf16.msra.mxu0 0
        %4399 = vmatprep.subr.bf16.mxu0 0
        %4400 = vmatpush2.bf16.msra.mxu0 0
        %4401 = vmatprep.subr.bf16.mxu0 0
        %4402 = vmatpush2.bf16.msra.mxu0 0
        %4403 = vmatprep.subr.bf16.mxu0 0
        %4404 = vmatpush2.bf16.msra.mxu0 0
        %4405 = vmatprep.subr.bf16.mxu0 0
        %4406 = vmatpush2.bf16.msra.mxu0 0
        %4407 = vmatprep.subr.bf16.mxu0 0
        %4408 = vmatpush2.bf16.msra.mxu0 0
        %4409 = vmatprep.mubr.bf16.mxu0 0
        %4410 = vmatmul.mubr.bf16.gmra.mxu0 %v4366
        %v4411 = vpop.f32.mrf.mxu0
        %v4412 = vadd.f32 0.0, %v4411
        %v4413 = vpop.f32.mrf.mxu0
        %v4414 = vpop.f32.mrf.mxu0
        %v4415 = vadd.f32 0.0, %v4414
        %v4416 = vpop.f32.mrf.mxu0
        %4417 = vmatprep.mubr.bf16.mxu0 0
        %4418 = vmatmul.mubr.bf16.gmra.mxu0 %v4369
        %v4419 = vpop.f32.mrf.mxu0
        %v4420 = vadd.f32 0.0, %v4419
        %v4421 = vpop.f32.mrf.mxu0
        %v4422 = vpop.f32.mrf.mxu0
        %v4423 = vadd.f32 0.0, %v4422
        %v4424 = vpop.f32.mrf.mxu0
        %4425 = vmatprep.mubr.bf16.mxu0 0
        %4426 = vmatmul.mubr.bf16.gmra.mxu0 %v4372
        %v4427 = vpop.f32.mrf.mxu0
        %v4428 = vadd.f32 0.0, %v4427
        %v4429 = vpop.f32.mrf.mxu0
        %v4430 = vpop.f32.mrf.mxu0
        %v4431 = vadd.f32 0.0, %v4430
        %v4432 = vpop.f32.mrf.mxu0
        %4433 = vmatprep.mubr.bf16.mxu0 0
        %4434 = vmatmul.mubr.bf16.gmra.mxu0 %v4375
        %v4435 = vpop.f32.mrf.mxu0
        %v4436 = vadd.f32 0.0, %v4435
        %v4437 = vpop.f32.mrf.mxu0
        %v4438 = vpop.f32.mrf.mxu0
        %v4439 = vadd.f32 0.0, %v4438
        %v4440 = vpop.f32.mrf.mxu0
        %4441 = vdwg.mxu0
        %v4442 = vadd.f32 %v4262, %v4412
        %v4443 = vadd.f32 %v4263, %v4415
        %v4444 = vadd.f32 %v4264, %v4420
        %v4445 = vadd.f32 %v4265, %v4423
        %v4446 = vadd.f32 %v4266, %v4428
        %v4447 = vadd.f32 %v4267, %v4431
        %v4448 = vadd.f32 %v4268, %v4436
        %v4449 = vadd.f32 %v4269, %v4439
        %s4450 = scalar_lea.vmem [#allocation8], 64
        %v4451 = vld [vmem:[%s4450] sm:$0xf]
        %v4452 = vld [vmem:[%s4450 + $0x4] sm:$0xf]
        %v4453 = vld [vmem:[%s4450 + $0x8] sm:$0xf]
        %v4454 = vld [vmem:[%s4450 + $0xc] sm:$0xf]
        %v4463 = vunpack.c.l.b16 %v4092
        %v4464 = vunpack.c.l.b16 %v4093
        %v4465 = vunpack.c.l.b16 %v4094
        %v4466 = vunpack.c.l.b16 %v4095
        %v4467 = vunpack.c.l.b16 %v4096
        %v4468 = vunpack.c.l.b16 %v4097
        %v4469 = vunpack.c.l.b16 %v4098
        %v4470 = vunpack.c.l.b16 %v4271
        %v4471 = vpack.c.b16 %v4464, %v4463
        %v4472 = vpack.c.b16 %v4466, %v4465
        %v4473 = vpack.c.b16 %v4468, %v4467
        %v4474 = vpack.c.b16 %v4470, %v4469
        %v4479 = vunpack.c.l.b16 %v4451
        %v4480 = vunpack.c.l.b16 %v4452
        %v4481 = vunpack.c.l.b16 %v4453
        %v4482 = vunpack.c.l.b16 %v4454
        %v4483 = vpack.c.b16 %v4480, %v4479
        %v4484 = vpack.c.b16 %v4482, %v4481
        %v4488 = vsel %vm2379, %v4471, 0
        %v4491 = vsel %vm2379, %v4472, 0
        %v4494 = vsel %vm2379, %v4473, 0
        %v4497 = vsel %vm2379, %v4474, 0
        %4499 = vmatprep.subr.bf16.mxu0 0
        %4500 = vmatpush1.bf16.msra.mxu0 0
        %4501 = vmatprep.subr.bf16.mxu0 0
        %4502 = vmatpush1.bf16.msra.mxu0 0
        %4503 = vmatprep.subr.bf16.mxu0 0
        %4504 = vmatpush1.bf16.msra.mxu0 0
        %4505 = vmatprep.subr.bf16.mxu0 0
        %4506 = vmatpush1.bf16.msra.mxu0 0
        %4507 = vmatprep.subr.bf16.mxu0 0
        %4508 = vmatpush1.bf16.msra.mxu0 0
        %4509 = vmatprep.subr.bf16.mxu0 0
        %4510 = vmatpush1.bf16.msra.mxu0 0
        %4511 = vmatprep.subr.bf16.mxu0 0
        %4512 = vmatpush1.bf16.msra.mxu0 %v4484
        %4513 = vmatprep.subr.bf16.mxu0 0
        %4514 = vmatpush1.bf16.msra.mxu0 %v4483
        %4515 = vmatprep.subr.bf16.mxu0 0
        %4516 = vmatpush2.bf16.msra.mxu0 0
        %4517 = vmatprep.subr.bf16.mxu0 0
        %4518 = vmatpush2.bf16.msra.mxu0 0
        %4519 = vmatprep.subr.bf16.mxu0 0
        %4520 = vmatpush2.bf16.msra.mxu0 0
        %4521 = vmatprep.subr.bf16.mxu0 0
        %4522 = vmatpush2.bf16.msra.mxu0 0
        %4523 = vmatprep.subr.bf16.mxu0 0
        %4524 = vmatpush2.bf16.msra.mxu0 0
        %4525 = vmatprep.subr.bf16.mxu0 0
        %4526 = vmatpush2.bf16.msra.mxu0 0
        %4527 = vmatprep.subr.bf16.mxu0 0
        %4528 = vmatpush2.bf16.msra.mxu0 0
        %4529 = vmatprep.subr.bf16.mxu0 0
        %4530 = vmatpush2.bf16.msra.mxu0 0
        %4531 = vmatprep.mubr.bf16.mxu0 0
        %4532 = vmatmul.mubr.bf16.gmra.mxu0 %v4488
        %v4533 = vpop.f32.mrf.mxu0
        %v4534 = vadd.f32 0.0, %v4533
        %v4535 = vpop.f32.mrf.mxu0
        %v4536 = vpop.f32.mrf.mxu0
        %v4537 = vadd.f32 0.0, %v4536
        %v4538 = vpop.f32.mrf.mxu0
        %4539 = vmatprep.mubr.bf16.mxu0 0
        %4540 = vmatmul.mubr.bf16.gmra.mxu0 %v4491
        %v4541 = vpop.f32.mrf.mxu0
        %v4542 = vadd.f32 0.0, %v4541
        %v4543 = vpop.f32.mrf.mxu0
        %v4544 = vpop.f32.mrf.mxu0
        %v4545 = vadd.f32 0.0, %v4544
        %v4546 = vpop.f32.mrf.mxu0
        %4547 = vmatprep.mubr.bf16.mxu0 0
        %4548 = vmatmul.mubr.bf16.gmra.mxu0 %v4494
        %v4549 = vpop.f32.mrf.mxu0
        %v4550 = vadd.f32 0.0, %v4549
        %v4551 = vpop.f32.mrf.mxu0
        %v4552 = vpop.f32.mrf.mxu0
        %v4553 = vadd.f32 0.0, %v4552
        %v4554 = vpop.f32.mrf.mxu0
        %4555 = vmatprep.mubr.bf16.mxu0 0
        %4556 = vmatmul.mubr.bf16.gmra.mxu0 %v4497
        %v4557 = vpop.f32.mrf.mxu0
        %v4558 = vadd.f32 0.0, %v4557
        %v4559 = vpop.f32.mrf.mxu0
        %v4560 = vpop.f32.mrf.mxu0
        %v4561 = vadd.f32 0.0, %v4560
        %v4562 = vpop.f32.mrf.mxu0
        %4563 = vdwg.mxu0
        %v4564 = vadd.f32 %v4442, %v4534
        %v4565 = vadd.f32 %v4443, %v4537
        %v4566 = vadd.f32 %v4444, %v4542
        %v4567 = vadd.f32 %v4445, %v4545
        %v4568 = vadd.f32 %v4446, %v4550
        %v4569 = vadd.f32 %v4447, %v4553
        %v4570 = vadd.f32 %v4448, %v4558
        %v4571 = vadd.f32 %v4449, %v4561
        %v4572 = vld [vmem:[#allocation4 + $0x8] sm:$0xf]
        %v4573 = vld [vmem:[#allocation4 + $0xc] sm:$0xf]
        %v4574 = vld [vmem:[#allocation4 + $0x10] sm:$0xf]
        %v4575 = vld [vmem:[#allocation4 + $0x14] sm:$0xf]
        %v4576 = vld [vmem:[#allocation4 + $0x18] sm:$0xf]
        %v4577 = vld [vmem:[#allocation4 + $0x1c] sm:$0xf]
        %v4578 = vld [vmem:[#allocation4 + $0x20] sm:$0xf]
        %v4579 = vld [vmem:[#allocation4 + $0x24] sm:$0xf]
        %v4580 = vld [vmem:[#allocation4 + $0x28] sm:$0x1]
        %v4581 = vsel %vm1137, %v4572, 0
        %v4582 = vsel %vm1138, %v4573, 0
        %v4583 = vsel %vm1139, %v4574, 0
        %v4584 = vsel %vm1140, %v4575, 0
        %v4585 = vsel %vm1141, %v4576, 0
        %v4586 = vsel %vm1142, %v4577, 0
        %v4587 = vsel %vm1143, %v4578, 0
        %v4588 = vsel %vm1144, %v4579, 0
        %v4589 = vsel %vm1145, %v4580, 0
        %s4590 = scalar_lea.vmem [#allocation8], 80
        %v4591 = vld [vmem:[%s4590] sm:$0xf]
        %v4592 = vld [vmem:[%s4590 + $0x4] sm:$0xf]
        %v4593 = vld [vmem:[%s4590 + $0x8] sm:$0xf]
        %v4594 = vld [vmem:[%s4590 + $0xc] sm:$0xf]
        %v4604 = vunpack.c.l.b16 %v4581
        %v4605 = vunpack.c.l.b16 %v4582
        %v4606 = vunpack.c.l.b16 %v4583
        %v4607 = vunpack.c.l.b16 %v4584
        %v4608 = vunpack.c.l.b16 %v4585
        %v4609 = vunpack.c.l.b16 %v4586
        %v4610 = vunpack.c.l.b16 %v4587
        %v4611 = vunpack.c.l.b16 %v4588
        %v4612 = vunpack.c.l.b16 %v4589
        %v4613 = vpack.c.b16 %v4605, %v4604
        %v4614 = vpack.c.b16 %v4607, %v4606
        %v4615 = vpack.c.b16 %v4609, %v4608
        %v4616 = vpack.c.b16 %v4611, %v4610
        %v4617 = vpack.c.b16 %v4612, %v4612
        %v4619 = vshrl.u32 %v4613, 16
        %v4621 = vshll.u32 %v4613, 16
        %v4623 = vrot.slane %v4621, 1
        %v4624 = vor.u32 %v4619, %v4623
        %v4626 = vshll.u32 %v4614, 16
        %v4628 = vrot.slane %v4626, 1
        %v4629 = vsel %vm1181, %v4624, %v4628
        %v4630 = vshrl.u32 %v4614, 16
        %v4632 = vor.u32 %v4630, %v4628
        %v4634 = vshll.u32 %v4615, 16
        %v4636 = vrot.slane %v4634, 1
        %v4637 = vsel %vm1181, %v4632, %v4636
        %v4638 = vshrl.u32 %v4615, 16
        %v4640 = vor.u32 %v4638, %v4636
        %v4642 = vshll.u32 %v4616, 16
        %v4644 = vrot.slane %v4642, 1
        %v4645 = vsel %vm1181, %v4640, %v4644
        %v4646 = vshrl.u32 %v4616, 16
        %v4648 = vor.u32 %v4646, %v4644
        %v4650 = vshll.u32 %v4617, 16
        %v4652 = vrot.slane %v4650, 1
        %v4653 = vsel %vm1181, %v4648, %v4652
        %v4658 = vunpack.c.l.b16 %v4591
        %v4659 = vunpack.c.l.b16 %v4592
        %v4660 = vunpack.c.l.b16 %v4593
        %v4661 = vunpack.c.l.b16 %v4594
        %v4662 = vpack.c.b16 %v4659, %v4658
        %v4663 = vpack.c.b16 %v4661, %v4660
        %v4667 = vsel %vm2379, %v4629, 0
        %v4670 = vsel %vm2379, %v4637, 0
        %v4673 = vsel %vm2379, %v4645, 0
        %v4676 = vsel %vm2379, %v4653, 0
        %4678 = vmatprep.subr.bf16.mxu0 0
        %4679 = vmatpush1.bf16.msra.mxu0 0
        %4680 = vmatprep.subr.bf16.mxu0 0
        %4681 = vmatpush1.bf16.msra.mxu0 0
        %4682 = vmatprep.subr.bf16.mxu0 0
        %4683 = vmatpush1.bf16.msra.mxu0 0
        %4684 = vmatprep.subr.bf16.mxu0 0
        %4685 = vmatpush1.bf16.msra.mxu0 0
        %4686 = vmatprep.subr.bf16.mxu0 0
        %4687 = vmatpush1.bf16.msra.mxu0 0
        %4688 = vmatprep.subr.bf16.mxu0 0
        %4689 = vmatpush1.bf16.msra.mxu0 0
        %4690 = vmatprep.subr.bf16.mxu0 0
        %4691 = vmatpush1.bf16.msra.mxu0 %v4663
        %4692 = vmatprep.subr.bf16.mxu0 0
        %4693 = vmatpush1.bf16.msra.mxu0 %v4662
        %4694 = vmatprep.subr.bf16.mxu0 0
        %4695 = vmatpush2.bf16.msra.mxu0 0
        %4696 = vmatprep.subr.bf16.mxu0 0
        %4697 = vmatpush2.bf16.msra.mxu0 0
        %4698 = vmatprep.subr.bf16.mxu0 0
        %4699 = vmatpush2.bf16.msra.mxu0 0
        %4700 = vmatprep.subr.bf16.mxu0 0
        %4701 = vmatpush2.bf16.msra.mxu0 0
        %4702 = vmatprep.subr.bf16.mxu0 0
        %4703 = vmatpush2.bf16.msra.mxu0 0
        %4704 = vmatprep.subr.bf16.mxu0 0
        %4705 = vmatpush2.bf16.msra.mxu0 0
        %4706 = vmatprep.subr.bf16.mxu0 0
        %4707 = vmatpush2.bf16.msra.mxu0 0
        %4708 = vmatprep.subr.bf16.mxu0 0
        %4709 = vmatpush2.bf16.msra.mxu0 0
        %4710 = vmatprep.mubr.bf16.mxu0 0
        %4711 = vmatmul.mubr.bf16.gmra.mxu0 %v4667
        %v4712 = vpop.f32.mrf.mxu0
        %v4713 = vadd.f32 0.0, %v4712
        %v4714 = vpop.f32.mrf.mxu0
        %v4715 = vpop.f32.mrf.mxu0
        %v4716 = vadd.f32 0.0, %v4715
        %v4717 = vpop.f32.mrf.mxu0
        %4718 = vmatprep.mubr.bf16.mxu0 0
        %4719 = vmatmul.mubr.bf16.gmra.mxu0 %v4670
        %v4720 = vpop.f32.mrf.mxu0
        %v4721 = vadd.f32 0.0, %v4720
        %v4722 = vpop.f32.mrf.mxu0
        %v4723 = vpop.f32.mrf.mxu0
        %v4724 = vadd.f32 0.0, %v4723
        %v4725 = vpop.f32.mrf.mxu0
        %4726 = vmatprep.mubr.bf16.mxu0 0
        %4727 = vmatmul.mubr.bf16.gmra.mxu0 %v4673
        %v4728 = vpop.f32.mrf.mxu0
        %v4729 = vadd.f32 0.0, %v4728
        %v4730 = vpop.f32.mrf.mxu0
        %v4731 = vpop.f32.mrf.mxu0
        %v4732 = vadd.f32 0.0, %v4731
        %v4733 = vpop.f32.mrf.mxu0
        %4734 = vmatprep.mubr.bf16.mxu0 0
        %4735 = vmatmul.mubr.bf16.gmra.mxu0 %v4676
        %v4736 = vpop.f32.mrf.mxu0
        %v4737 = vadd.f32 0.0, %v4736
        %v4738 = vpop.f32.mrf.mxu0
        %v4739 = vpop.f32.mrf.mxu0
        %v4740 = vadd.f32 0.0, %v4739
        %v4741 = vpop.f32.mrf.mxu0
        %4742 = vdwg.mxu0
        %v4743 = vadd.f32 %v4564, %v4713
        %v4744 = vadd.f32 %v4565, %v4716
        %v4745 = vadd.f32 %v4566, %v4721
        %v4746 = vadd.f32 %v4567, %v4724
        %v4747 = vadd.f32 %v4568, %v4729
        %v4748 = vadd.f32 %v4569, %v4732
        %v4749 = vadd.f32 %v4570, %v4737
        %v4750 = vadd.f32 %v4571, %v4740
        %v4751 = vld [vmem:[#allocation4 + $0x8] sm:$0x8]
        %v4752 = vld [vmem:[#allocation4 + $0x28] sm:$0xf]
        %v4753 = vsel %vm728, %v4751, 0
        %v4754 = vsel %vm729, %v4573, 0
        %v4755 = vsel %vm730, %v4574, 0
        %v4756 = vsel %vm731, %v4575, 0
        %v4757 = vsel %vm732, %v4576, 0
        %v4758 = vsel %vm733, %v4577, 0
        %v4759 = vsel %vm734, %v4578, 0
        %v4760 = vsel %vm735, %v4579, 0
        %v4761 = vsel %vm736, %v4752, 0
        %s4762 = scalar_lea.vmem [#allocation8], 96
        %v4763 = vld [vmem:[%s4762] sm:$0xf]
        %v4764 = vld [vmem:[%s4762 + $0x4] sm:$0xf]
        %v4765 = vld [vmem:[%s4762 + $0x8] sm:$0xf]
        %v4766 = vld [vmem:[%s4762 + $0xc] sm:$0xf]
        %v4776 = vunpack.c.l.b16 %v4753
        %v4777 = vunpack.c.l.b16 %v4754
        %v4778 = vunpack.c.l.b16 %v4755
        %v4779 = vunpack.c.l.b16 %v4756
        %v4780 = vunpack.c.l.b16 %v4757
        %v4781 = vunpack.c.l.b16 %v4758
        %v4782 = vunpack.c.l.b16 %v4759
        %v4783 = vunpack.c.l.b16 %v4760
        %v4784 = vunpack.c.l.b16 %v4761
        %v4785 = vpack.c.b16 %v4777, %v4776
        %v4786 = vpack.c.b16 %v4779, %v4778
        %v4787 = vpack.c.b16 %v4781, %v4780
        %v4788 = vpack.c.b16 %v4783, %v4782
        %v4789 = vpack.c.b16 %v4784, %v4784
        %v4791 = vshrl.u32 %v4785, 16
        %v4793 = vrot.slane %v4791, 3
        %v4794 = vshll.u32 %v4785, 16
        %v4796 = vrot.slane %v4794, 4
        %v4797 = vor.u32 %v4793, %v4796
        %v4799 = vshrl.u32 %v4786, 16
        %v4801 = vrot.slane %v4799, 3
        %v4802 = vshll.u32 %v4786, 16
        %v4804 = vrot.slane %v4802, 4
        %v4805 = vor.u32 %v4801, %v4804
        %v4806 = vsel %vm771, %v4797, %v4805
        %v4808 = vshrl.u32 %v4787, 16
        %v4810 = vrot.slane %v4808, 3
        %v4811 = vshll.u32 %v4787, 16
        %v4813 = vrot.slane %v4811, 4
        %v4814 = vor.u32 %v4810, %v4813
        %v4815 = vsel %vm771, %v4805, %v4814
        %v4817 = vshrl.u32 %v4788, 16
        %v4819 = vrot.slane %v4817, 3
        %v4820 = vshll.u32 %v4788, 16
        %v4822 = vrot.slane %v4820, 4
        %v4823 = vor.u32 %v4819, %v4822
        %v4824 = vsel %vm771, %v4814, %v4823
        %v4826 = vshrl.u32 %v4789, 16
        %v4828 = vrot.slane %v4826, 3
        %v4829 = vshll.u32 %v4789, 16
        %v4831 = vrot.slane %v4829, 4
        %v4832 = vor.u32 %v4828, %v4831
        %v4833 = vsel %vm771, %v4823, %v4832
        %v4838 = vunpack.c.l.b16 %v4763
        %v4839 = vunpack.c.l.b16 %v4764
        %v4840 = vunpack.c.l.b16 %v4765
        %v4841 = vunpack.c.l.b16 %v4766
        %v4842 = vpack.c.b16 %v4839, %v4838
        %v4843 = vpack.c.b16 %v4841, %v4840
        %v4847 = vsel %vm2379, %v4806, 0
        %v4850 = vsel %vm2379, %v4815, 0
        %v4853 = vsel %vm2379, %v4824, 0
        %v4856 = vsel %vm2379, %v4833, 0
        %4858 = vmatprep.subr.bf16.mxu0 0
        %4859 = vmatpush1.bf16.msra.mxu0 0
        %4860 = vmatprep.subr.bf16.mxu0 0
        %4861 = vmatpush1.bf16.msra.mxu0 0
        %4862 = vmatprep.subr.bf16.mxu0 0
        %4863 = vmatpush1.bf16.msra.mxu0 0
        %4864 = vmatprep.subr.bf16.mxu0 0
        %4865 = vmatpush1.bf16.msra.mxu0 0
        %4866 = vmatprep.subr.bf16.mxu0 0
        %4867 = vmatpush1.bf16.msra.mxu0 0
        %4868 = vmatprep.subr.bf16.mxu0 0
        %4869 = vmatpush1.bf16.msra.mxu0 0
        %4870 = vmatprep.subr.bf16.mxu0 0
        %4871 = vmatpush1.bf16.msra.mxu0 %v4843
        %4872 = vmatprep.subr.bf16.mxu0 0
        %4873 = vmatpush1.bf16.msra.mxu0 %v4842
        %4874 = vmatprep.subr.bf16.mxu0 0
        %4875 = vmatpush2.bf16.msra.mxu0 0
        %4876 = vmatprep.subr.bf16.mxu0 0
        %4877 = vmatpush2.bf16.msra.mxu0 0
        %4878 = vmatprep.subr.bf16.mxu0 0
        %4879 = vmatpush2.bf16.msra.mxu0 0
        %4880 = vmatprep.subr.bf16.mxu0 0
        %4881 = vmatpush2.bf16.msra.mxu0 0
        %4882 = vmatprep.subr.bf16.mxu0 0
        %4883 = vmatpush2.bf16.msra.mxu0 0
        %4884 = vmatprep.subr.bf16.mxu0 0
        %4885 = vmatpush2.bf16.msra.mxu0 0
        %4886 = vmatprep.subr.bf16.mxu0 0
        %4887 = vmatpush2.bf16.msra.mxu0 0
        %4888 = vmatprep.subr.bf16.mxu0 0
        %4889 = vmatpush2.bf16.msra.mxu0 0
        %4890 = vmatprep.mubr.bf16.mxu0 0
        %4891 = vmatmul.mubr.bf16.gmra.mxu0 %v4847
        %v4892 = vpop.f32.mrf.mxu0
        %v4893 = vadd.f32 0.0, %v4892
        %v4894 = vpop.f32.mrf.mxu0
        %v4895 = vpop.f32.mrf.mxu0
        %v4896 = vadd.f32 0.0, %v4895
        %v4897 = vpop.f32.mrf.mxu0
        %4898 = vmatprep.mubr.bf16.mxu0 0
        %4899 = vmatmul.mubr.bf16.gmra.mxu0 %v4850
        %v4900 = vpop.f32.mrf.mxu0
        %v4901 = vadd.f32 0.0, %v4900
        %v4902 = vpop.f32.mrf.mxu0
        %v4903 = vpop.f32.mrf.mxu0
        %v4904 = vadd.f32 0.0, %v4903
        %v4905 = vpop.f32.mrf.mxu0
        %4906 = vmatprep.mubr.bf16.mxu0 0
        %4907 = vmatmul.mubr.bf16.gmra.mxu0 %v4853
        %v4908 = vpop.f32.mrf.mxu0
        %v4909 = vadd.f32 0.0, %v4908
        %v4910 = vpop.f32.mrf.mxu0
        %v4911 = vpop.f32.mrf.mxu0
        %v4912 = vadd.f32 0.0, %v4911
        %v4913 = vpop.f32.mrf.mxu0
        %4914 = vmatprep.mubr.bf16.mxu0 0
        %4915 = vmatmul.mubr.bf16.gmra.mxu0 %v4856
        %v4916 = vpop.f32.mrf.mxu0
        %v4917 = vadd.f32 0.0, %v4916
        %v4918 = vpop.f32.mrf.mxu0
        %v4919 = vpop.f32.mrf.mxu0
        %v4920 = vadd.f32 0.0, %v4919
        %v4921 = vpop.f32.mrf.mxu0
        %4922 = vdwg.mxu0
        %v4923 = vadd.f32 %v4743, %v4893
        %v4924 = vadd.f32 %v4744, %v4896
        %v4925 = vadd.f32 %v4745, %v4901
        %v4926 = vadd.f32 %v4746, %v4904
        %v4927 = vadd.f32 %v4747, %v4909
        %v4928 = vadd.f32 %v4748, %v4912
        %v4929 = vadd.f32 %v4749, %v4917
        %v4930 = vadd.f32 %v4750, %v4920
        %s4931 = scalar_lea.vmem [#allocation8], 112
        %v4932 = vld [vmem:[%s4931] sm:$0xf]
        %v4933 = vld [vmem:[%s4931 + $0x4] sm:$0xf]
        %v4934 = vld [vmem:[%s4931 + $0x8] sm:$0xf]
        %v4935 = vld [vmem:[%s4931 + $0xc] sm:$0xf]
        %v4944 = vunpack.c.l.b16 %v4573
        %v4945 = vunpack.c.l.b16 %v4574
        %v4946 = vunpack.c.l.b16 %v4575
        %v4947 = vunpack.c.l.b16 %v4576
        %v4948 = vunpack.c.l.b16 %v4577
        %v4949 = vunpack.c.l.b16 %v4578
        %v4950 = vunpack.c.l.b16 %v4579
        %v4951 = vunpack.c.l.b16 %v4752
        %v4952 = vpack.c.b16 %v4945, %v4944
        %v4953 = vpack.c.b16 %v4947, %v4946
        %v4954 = vpack.c.b16 %v4949, %v4948
        %v4955 = vpack.c.b16 %v4951, %v4950
        %v4960 = vunpack.c.l.b16 %v4932
        %v4961 = vunpack.c.l.b16 %v4933
        %v4962 = vunpack.c.l.b16 %v4934
        %v4963 = vunpack.c.l.b16 %v4935
        %v4964 = vpack.c.b16 %v4961, %v4960
        %v4965 = vpack.c.b16 %v4963, %v4962
        %v4969 = vsel %vm2379, %v4952, 0
        %v4972 = vsel %vm2379, %v4953, 0
        %v4975 = vsel %vm2379, %v4954, 0
        %v4978 = vsel %vm2379, %v4955, 0
        %4980 = vmatprep.subr.bf16.mxu0 0
        %4981 = vmatpush1.bf16.msra.mxu0 0
        %4982 = vmatprep.subr.bf16.mxu0 0
        %4983 = vmatpush1.bf16.msra.mxu0 0
        %4984 = vmatprep.subr.bf16.mxu0 0
        %4985 = vmatpush1.bf16.msra.mxu0 0
        %4986 = vmatprep.subr.bf16.mxu0 0
        %4987 = vmatpush1.bf16.msra.mxu0 0
        %4988 = vmatprep.subr.bf16.mxu0 0
        %4989 = vmatpush1.bf16.msra.mxu0 0
        %4990 = vmatprep.subr.bf16.mxu0 0
        %4991 = vmatpush1.bf16.msra.mxu0 0
        %4992 = vmatprep.subr.bf16.mxu0 0
        %4993 = vmatpush1.bf16.msra.mxu0 %v4965
        %4994 = vmatprep.subr.bf16.mxu0 0
        %4995 = vmatpush1.bf16.msra.mxu0 %v4964
        %4996 = vmatprep.subr.bf16.mxu0 0
        %4997 = vmatpush2.bf16.msra.mxu0 0
        %4998 = vmatprep.subr.bf16.mxu0 0
        %4999 = vmatpush2.bf16.msra.mxu0 0
        %5000 = vmatprep.subr.bf16.mxu0 0
        %5001 = vmatpush2.bf16.msra.mxu0 0
        %5002 = vmatprep.subr.bf16.mxu0 0
        %5003 = vmatpush2.bf16.msra.mxu0 0
        %5004 = vmatprep.subr.bf16.mxu0 0
        %5005 = vmatpush2.bf16.msra.mxu0 0
        %5006 = vmatprep.subr.bf16.mxu0 0
        %5007 = vmatpush2.bf16.msra.mxu0 0
        %5008 = vmatprep.subr.bf16.mxu0 0
        %5009 = vmatpush2.bf16.msra.mxu0 0
        %5010 = vmatprep.subr.bf16.mxu0 0
        %5011 = vmatpush2.bf16.msra.mxu0 0
        %5012 = vmatprep.mubr.bf16.mxu0 0
        %5013 = vmatmul.mubr.bf16.gmra.mxu0 %v4969
        %v5014 = vpop.f32.mrf.mxu0
        %v5015 = vadd.f32 0.0, %v5014
        %v5016 = vpop.f32.mrf.mxu0
        %v5017 = vpop.f32.mrf.mxu0
        %v5018 = vadd.f32 0.0, %v5017
        %v5019 = vpop.f32.mrf.mxu0
        %5020 = vmatprep.mubr.bf16.mxu0 0
        %5021 = vmatmul.mubr.bf16.gmra.mxu0 %v4972
        %v5022 = vpop.f32.mrf.mxu0
        %v5023 = vadd.f32 0.0, %v5022
        %v5024 = vpop.f32.mrf.mxu0
        %v5025 = vpop.f32.mrf.mxu0
        %v5026 = vadd.f32 0.0, %v5025
        %v5027 = vpop.f32.mrf.mxu0
        %5028 = vmatprep.mubr.bf16.mxu0 0
        %5029 = vmatmul.mubr.bf16.gmra.mxu0 %v4975
        %v5030 = vpop.f32.mrf.mxu0
        %v5031 = vadd.f32 0.0, %v5030
        %v5032 = vpop.f32.mrf.mxu0
        %v5033 = vpop.f32.mrf.mxu0
        %v5034 = vadd.f32 0.0, %v5033
        %v5035 = vpop.f32.mrf.mxu0
        %5036 = vmatprep.mubr.bf16.mxu0 0
        %5037 = vmatmul.mubr.bf16.gmra.mxu0 %v4978
        %v5038 = vpop.f32.mrf.mxu0
        %v5039 = vadd.f32 0.0, %v5038
        %v5040 = vpop.f32.mrf.mxu0
        %v5041 = vpop.f32.mrf.mxu0
        %v5042 = vadd.f32 0.0, %v5041
        %v5043 = vpop.f32.mrf.mxu0
        %5044 = vdwg.mxu0
        %v5045 = vadd.f32 %v4923, %v5015
        %v5046 = vadd.f32 %v4924, %v5018
        %v5047 = vadd.f32 %v4925, %v5023
        %v5048 = vadd.f32 %v4926, %v5026
        %v5049 = vadd.f32 %v4927, %v5031
        %v5050 = vadd.f32 %v4928, %v5034
        %v5051 = vadd.f32 %v4929, %v5039
        %v5052 = vadd.f32 %v4930, %v5042
        %v5053 = vld [vmem:[#allocation4 + $0xc] sm:$0xf]
        %v5054 = vld [vmem:[#allocation4 + $0x10] sm:$0xf]
        %v5055 = vld [vmem:[#allocation4 + $0x14] sm:$0xf]
        %v5056 = vld [vmem:[#allocation4 + $0x18] sm:$0xf]
        %v5057 = vld [vmem:[#allocation4 + $0x1c] sm:$0xf]
        %v5058 = vld [vmem:[#allocation4 + $0x20] sm:$0xf]
        %v5059 = vld [vmem:[#allocation4 + $0x24] sm:$0xf]
        %v5060 = vld [vmem:[#allocation4 + $0x28] sm:$0xf]
        %v5061 = vld [vmem:[#allocation4 + $0x2c] sm:$0x1]
        %v5062 = vsel %vm1137, %v5053, 0
        %v5063 = vsel %vm1138, %v5054, 0
        %v5064 = vsel %vm1139, %v5055, 0
        %v5065 = vsel %vm1140, %v5056, 0
        %v5066 = vsel %vm1141, %v5057, 0
        %v5067 = vsel %vm1142, %v5058, 0
        %v5068 = vsel %vm1143, %v5059, 0
        %v5069 = vsel %vm1144, %v5060, 0
        %v5070 = vsel %vm1145, %v5061, 0
        %s5071 = scalar_lea.vmem [#allocation8], 128
        %v5072 = vld [vmem:[%s5071] sm:$0xf]
        %v5073 = vld [vmem:[%s5071 + $0x4] sm:$0xf]
        %v5074 = vld [vmem:[%s5071 + $0x8] sm:$0xf]
        %v5075 = vld [vmem:[%s5071 + $0xc] sm:$0xf]
        %v5085 = vunpack.c.l.b16 %v5062
        %v5086 = vunpack.c.l.b16 %v5063
        %v5087 = vunpack.c.l.b16 %v5064
        %v5088 = vunpack.c.l.b16 %v5065
        %v5089 = vunpack.c.l.b16 %v5066
        %v5090 = vunpack.c.l.b16 %v5067
        %v5091 = vunpack.c.l.b16 %v5068
        %v5092 = vunpack.c.l.b16 %v5069
        %v5093 = vunpack.c.l.b16 %v5070
        %v5094 = vpack.c.b16 %v5086, %v5085
        %v5095 = vpack.c.b16 %v5088, %v5087
        %v5096 = vpack.c.b16 %v5090, %v5089
        %v5097 = vpack.c.b16 %v5092, %v5091
        %v5098 = vpack.c.b16 %v5093, %v5093
        %v5100 = vshrl.u32 %v5094, 16
        %v5102 = vshll.u32 %v5094, 16
        %v5104 = vrot.slane %v5102, 1
        %v5105 = vor.u32 %v5100, %v5104
        %v5107 = vshll.u32 %v5095, 16
        %v5109 = vrot.slane %v5107, 1
        %v5110 = vsel %vm1181, %v5105, %v5109
        %v5111 = vshrl.u32 %v5095, 16
        %v5113 = vor.u32 %v5111, %v5109
        %v5115 = vshll.u32 %v5096, 16
        %v5117 = vrot.slane %v5115, 1
        %v5118 = vsel %vm1181, %v5113, %v5117
        %v5119 = vshrl.u32 %v5096, 16
        %v5121 = vor.u32 %v5119, %v5117
        %v5123 = vshll.u32 %v5097, 16
        %v5125 = vrot.slane %v5123, 1
        %v5126 = vsel %vm1181, %v5121, %v5125
        %v5127 = vshrl.u32 %v5097, 16
        %v5129 = vor.u32 %v5127, %v5125
        %v5131 = vshll.u32 %v5098, 16
        %v5133 = vrot.slane %v5131, 1
        %v5134 = vsel %vm1181, %v5129, %v5133
        %v5139 = vunpack.c.l.b16 %v5072
        %v5140 = vunpack.c.l.b16 %v5073
        %v5141 = vunpack.c.l.b16 %v5074
        %v5142 = vunpack.c.l.b16 %v5075
        %v5143 = vpack.c.b16 %v5140, %v5139
        %v5144 = vpack.c.b16 %v5142, %v5141
        %v5148 = vsel %vm2379, %v5110, 0
        %v5151 = vsel %vm2379, %v5118, 0
        %v5154 = vsel %vm2379, %v5126, 0
        %v5157 = vsel %vm2379, %v5134, 0
        %5159 = vmatprep.subr.bf16.mxu0 0
        %5160 = vmatpush1.bf16.msra.mxu0 0
        %5161 = vmatprep.subr.bf16.mxu0 0
        %5162 = vmatpush1.bf16.msra.mxu0 0
        %5163 = vmatprep.subr.bf16.mxu0 0
        %5164 = vmatpush1.bf16.msra.mxu0 0
        %5165 = vmatprep.subr.bf16.mxu0 0
        %5166 = vmatpush1.bf16.msra.mxu0 0
        %5167 = vmatprep.subr.bf16.mxu0 0
        %5168 = vmatpush1.bf16.msra.mxu0 0
        %5169 = vmatprep.subr.bf16.mxu0 0
        %5170 = vmatpush1.bf16.msra.mxu0 0
        %5171 = vmatprep.subr.bf16.mxu0 0
        %5172 = vmatpush1.bf16.msra.mxu0 %v5144
        %5173 = vmatprep.subr.bf16.mxu0 0
        %5174 = vmatpush1.bf16.msra.mxu0 %v5143
        %5175 = vmatprep.subr.bf16.mxu0 0
        %5176 = vmatpush2.bf16.msra.mxu0 0
        %5177 = vmatprep.subr.bf16.mxu0 0
        %5178 = vmatpush2.bf16.msra.mxu0 0
        %5179 = vmatprep.subr.bf16.mxu0 0
        %5180 = vmatpush2.bf16.msra.mxu0 0
        %5181 = vmatprep.subr.bf16.mxu0 0
        %5182 = vmatpush2.bf16.msra.mxu0 0
        %5183 = vmatprep.subr.bf16.mxu0 0
        %5184 = vmatpush2.bf16.msra.mxu0 0
        %5185 = vmatprep.subr.bf16.mxu0 0
        %5186 = vmatpush2.bf16.msra.mxu0 0
        %5187 = vmatprep.subr.bf16.mxu0 0
        %5188 = vmatpush2.bf16.msra.mxu0 0
        %5189 = vmatprep.subr.bf16.mxu0 0
        %5190 = vmatpush2.bf16.msra.mxu0 0
        %5191 = vmatprep.mubr.bf16.mxu0 0
        %5192 = vmatmul.mubr.bf16.gmra.mxu0 %v5148
        %v5193 = vpop.f32.mrf.mxu0
        %v5194 = vadd.f32 0.0, %v5193
        %v5195 = vpop.f32.mrf.mxu0
        %v5196 = vpop.f32.mrf.mxu0
        %v5197 = vadd.f32 0.0, %v5196
        %v5198 = vpop.f32.mrf.mxu0
        %5199 = vmatprep.mubr.bf16.mxu0 0
        %5200 = vmatmul.mubr.bf16.gmra.mxu0 %v5151
        %v5201 = vpop.f32.mrf.mxu0
        %v5202 = vadd.f32 0.0, %v5201
        %v5203 = vpop.f32.mrf.mxu0
        %v5204 = vpop.f32.mrf.mxu0
        %v5205 = vadd.f32 0.0, %v5204
        %v5206 = vpop.f32.mrf.mxu0
        %5207 = vmatprep.mubr.bf16.mxu0 0
        %5208 = vmatmul.mubr.bf16.gmra.mxu0 %v5154
        %v5209 = vpop.f32.mrf.mxu0
        %v5210 = vadd.f32 0.0, %v5209
        %v5211 = vpop.f32.mrf.mxu0
        %v5212 = vpop.f32.mrf.mxu0
        %v5213 = vadd.f32 0.0, %v5212
        %v5214 = vpop.f32.mrf.mxu0
        %5215 = vmatprep.mubr.bf16.mxu0 0
        %5216 = vmatmul.mubr.bf16.gmra.mxu0 %v5157
        %v5217 = vpop.f32.mrf.mxu0
        %v5218 = vadd.f32 0.0, %v5217
        %v5219 = vpop.f32.mrf.mxu0
        %v5220 = vpop.f32.mrf.mxu0
        %v5221 = vadd.f32 0.0, %v5220
        %v5222 = vpop.f32.mrf.mxu0
        %5223 = vdwg.mxu0
        %v5224 = vadd.f32 %v5045, %v5194
        %v5225 = vadd.f32 %v5046, %v5197
        %v5226 = vadd.f32 %v5047, %v5202
        %v5227 = vadd.f32 %v5048, %v5205
        %v5228 = vadd.f32 %v5049, %v5210
        %v5229 = vadd.f32 %v5050, %v5213
        %v5230 = vadd.f32 %v5051, %v5218
        %v5231 = vadd.f32 %v5052, %v5221
        %v5232 = vmax.f32 %v5224, 0.0
        %v5233 = vmax.f32 %v5225, 0.0
        %v5234 = vmax.f32 %v5226, 0.0
        %v5235 = vmax.f32 %v5227, 0.0
        %v5236 = vmax.f32 %v5228, 0.0
        %v5237 = vmax.f32 %v5229, 0.0
        %v5238 = vmax.f32 %v5230, 0.0
        %v5239 = vmax.f32 %v5231, 0.0
        %v5240 = vpack.c.bf16 %v5233, %v5232
        %v5241 = vpack.c.bf16 %v5235, %v5234
        %v5242 = vpack.c.bf16 %v5237, %v5236
        %v5243 = vpack.c.bf16 %v5239, %v5238
        %v5248 = vunpack.c.l.b16 %v5240
        %v5249 = vunpack.c.h.b16 %v5240
        %v5250 = vunpack.c.l.b16 %v5241
        %v5251 = vunpack.c.h.b16 %v5241
        %v5252 = vunpack.c.l.b16 %v5242
        %v5253 = vunpack.c.h.b16 %v5242
        %v5254 = vunpack.c.l.b16 %v5243
        %v5255 = vunpack.c.h.b16 %v5243
        %v5256 = vpack.c.b16 %v5248, %v5248
        %v5257 = vpack.c.b16 %v5249, %v5249
        %v5258 = vpack.c.b16 %v5250, %v5250
        %v5259 = vpack.c.b16 %v5251, %v5251
        %v5260 = vpack.c.b16 %v5252, %v5252
        %v5261 = vpack.c.b16 %v5253, %v5253
        %v5262 = vpack.c.b16 %v5254, %v5254
        %v5263 = vpack.c.b16 %v5255, %v5255
        %5272 = vst.msk [vmem:[#allocation3 + $0x8] sm:$0xf] %vm452, %v5256
        %5273 = vst.msk [vmem:[#allocation3 + $0xc] sm:$0xf] %vm452, %v5257
        %5274 = vst.msk [vmem:[#allocation3 + $0x10] sm:$0xf] %vm452, %v5258
        %5275 = vst.msk [vmem:[#allocation3 + $0x14] sm:$0xf] %vm452, %v5259
        %5276 = vst.msk [vmem:[#allocation3 + $0x18] sm:$0xf] %vm452, %v5260
        %5277 = vst.msk [vmem:[#allocation3 + $0x1c] sm:$0xf] %vm452, %v5261
        %5278 = vst.msk [vmem:[#allocation3 + $0x20] sm:$0xf] %vm452, %v5262
        %5279 = vst.msk [vmem:[#allocation3 + $0x24] sm:$0xf] %vm452, %v5263
        %v5280 = vld [vmem:[%s9] sm:$0x1]
        %v5282 = vlaneseq
        %v5283 = vshrl.u32 %v5282, 7
        %v5284 = vsub.s32 0, %v5283
        %v5285 = vrot.slane %v5280, %v5284
        %v5287 = vld [vmem:[#allocation3] sm:$0x8]
        %v5288 = vld [vmem:[#allocation3 + $0x4] sm:$0xf]
        %v5289 = vld [vmem:[#allocation3 + $0x8] sm:$0xf]
        %v5290 = vld [vmem:[#allocation3 + $0xc] sm:$0xf]
        %v5291 = vld [vmem:[#allocation3 + $0x10] sm:$0xf]
        %v5292 = vld [vmem:[#allocation3 + $0x14] sm:$0xf]
        %v5293 = vld [vmem:[#allocation3 + $0x18] sm:$0xf]
        %v5294 = vld [vmem:[#allocation3 + $0x1c] sm:$0xf]
        %v5295 = vld [vmem:[#allocation3 + $0x20] sm:$0xf]
        %v5296 = vsel %vm728, %v5287, 0
        %v5297 = vsel %vm729, %v5288, 0
        %v5298 = vsel %vm730, %v5289, 0
        %v5299 = vsel %vm731, %v5290, 0
        %v5300 = vsel %vm732, %v5291, 0
        %v5301 = vsel %vm733, %v5292, 0
        %v5302 = vsel %vm734, %v5293, 0
        %v5303 = vsel %vm735, %v5294, 0
        %v5304 = vsel %vm736, %v5295, 0
        %v5305 = vld [vmem:[#allocation10] sm:$0xf]
        %v5306 = vld [vmem:[#allocation10 + $0x4] sm:$0xf]
        %v5307 = vld [vmem:[#allocation10 + $0x8] sm:$0xf]
        %v5308 = vld [vmem:[#allocation10 + $0xc] sm:$0xf]
        %v5318 = vunpack.c.l.b16 %v5296
        %v5319 = vunpack.c.l.b16 %v5297
        %v5320 = vunpack.c.l.b16 %v5298
        %v5321 = vunpack.c.l.b16 %v5299
        %v5322 = vunpack.c.l.b16 %v5300
        %v5323 = vunpack.c.l.b16 %v5301
        %v5324 = vunpack.c.l.b16 %v5302
        %v5325 = vunpack.c.l.b16 %v5303
        %v5326 = vunpack.c.l.b16 %v5304
        %v5327 = vpack.c.b16 %v5319, %v5318
        %v5328 = vpack.c.b16 %v5321, %v5320
        %v5329 = vpack.c.b16 %v5323, %v5322
        %v5330 = vpack.c.b16 %v5325, %v5324
        %v5331 = vpack.c.b16 %v5326, %v5326
        %v5333 = vshrl.u32 %v5327, 16
        %v5335 = vrot.slane %v5333, 3
        %v5336 = vshll.u32 %v5327, 16
        %v5338 = vrot.slane %v5336, 4
        %v5339 = vor.u32 %v5335, %v5338
        %v5341 = vshrl.u32 %v5328, 16
        %v5343 = vrot.slane %v5341, 3
        %v5344 = vshll.u32 %v5328, 16
        %v5346 = vrot.slane %v5344, 4
        %v5347 = vor.u32 %v5343, %v5346
        %v5348 = vsel %vm771, %v5339, %v5347
        %v5350 = vshrl.u32 %v5329, 16
        %v5352 = vrot.slane %v5350, 3
        %v5353 = vshll.u32 %v5329, 16
        %v5355 = vrot.slane %v5353, 4
        %v5356 = vor.u32 %v5352, %v5355
        %v5357 = vsel %vm771, %v5347, %v5356
        %v5359 = vshrl.u32 %v5330, 16
        %v5361 = vrot.slane %v5359, 3
        %v5362 = vshll.u32 %v5330, 16
        %v5364 = vrot.slane %v5362, 4
        %v5365 = vor.u32 %v5361, %v5364
        %v5366 = vsel %vm771, %v5356, %v5365
        %v5368 = vshrl.u32 %v5331, 16
        %v5370 = vrot.slane %v5368, 3
        %v5371 = vshll.u32 %v5331, 16
        %v5373 = vrot.slane %v5371, 4
        %v5374 = vor.u32 %v5370, %v5373
        %v5375 = vsel %vm771, %v5365, %v5374
        %v5380 = vunpack.c.l.b16 %v5305
        %v5381 = vunpack.c.l.b16 %v5306
        %v5382 = vunpack.c.l.b16 %v5307
        %v5383 = vunpack.c.l.b16 %v5308
        %v5384 = vpack.c.b16 %v5381, %v5380
        %v5385 = vpack.c.b16 %v5383, %v5382
        %v5389 = vsel %vm2379, %v5348, 0
        %v5392 = vsel %vm2379, %v5357, 0
        %v5395 = vsel %vm2379, %v5366, 0
        %v5398 = vsel %vm2379, %v5375, 0
        %5400 = vmatprep.subr.bf16.mxu0 0
        %5401 = vmatpush1.bf16.msra.mxu0 0
        %5402 = vmatprep.subr.bf16.mxu0 0
        %5403 = vmatpush1.bf16.msra.mxu0 0
        %5404 = vmatprep.subr.bf16.mxu0 0
        %5405 = vmatpush1.bf16.msra.mxu0 0
        %5406 = vmatprep.subr.bf16.mxu0 0
        %5407 = vmatpush1.bf16.msra.mxu0 0
        %5408 = vmatprep.subr.bf16.mxu0 0
        %5409 = vmatpush1.bf16.msra.mxu0 0
        %5410 = vmatprep.subr.bf16.mxu0 0
        %5411 = vmatpush1.bf16.msra.mxu0 0
        %5412 = vmatprep.subr.bf16.mxu0 0
        %5413 = vmatpush1.bf16.msra.mxu0 %v5385
        %5414 = vmatprep.subr.bf16.mxu0 0
        %5415 = vmatpush1.bf16.msra.mxu0 %v5384
        %5416 = vmatprep.subr.bf16.mxu0 0
        %5417 = vmatpush2.bf16.msra.mxu0 0
        %5418 = vmatprep.subr.bf16.mxu0 0
        %5419 = vmatpush2.bf16.msra.mxu0 0
        %5420 = vmatprep.subr.bf16.mxu0 0
        %5421 = vmatpush2.bf16.msra.mxu0 0
        %5422 = vmatprep.subr.bf16.mxu0 0
        %5423 = vmatpush2.bf16.msra.mxu0 0
        %5424 = vmatprep.subr.bf16.mxu0 0
        %5425 = vmatpush2.bf16.msra.mxu0 0
        %5426 = vmatprep.subr.bf16.mxu0 0
        %5427 = vmatpush2.bf16.msra.mxu0 0
        %5428 = vmatprep.subr.bf16.mxu0 0
        %5429 = vmatpush2.bf16.msra.mxu0 0
        %5430 = vmatprep.subr.bf16.mxu0 0
        %5431 = vmatpush2.bf16.msra.mxu0 0
        %5432 = vmatprep.mubr.bf16.mxu0 0
        %5433 = vmatmul.mubr.bf16.gmra.mxu0 %v5389
        %v5434 = vpop.f32.mrf.mxu0
        %v5435 = vadd.f32 0.0, %v5434
        %v5436 = vpop.f32.mrf.mxu0
        %v5437 = vpop.f32.mrf.mxu0
        %v5438 = vadd.f32 0.0, %v5437
        %v5439 = vpop.f32.mrf.mxu0
        %5440 = vmatprep.mubr.bf16.mxu0 0
        %5441 = vmatmul.mubr.bf16.gmra.mxu0 %v5392
        %v5442 = vpop.f32.mrf.mxu0
        %v5443 = vadd.f32 0.0, %v5442
        %v5444 = vpop.f32.mrf.mxu0
        %v5445 = vpop.f32.mrf.mxu0
        %v5446 = vadd.f32 0.0, %v5445
        %v5447 = vpop.f32.mrf.mxu0
        %5448 = vmatprep.mubr.bf16.mxu0 0
        %5449 = vmatmul.mubr.bf16.gmra.mxu0 %v5395
        %v5450 = vpop.f32.mrf.mxu0
        %v5451 = vadd.f32 0.0, %v5450
        %v5452 = vpop.f32.mrf.mxu0
        %v5453 = vpop.f32.mrf.mxu0
        %v5454 = vadd.f32 0.0, %v5453
        %v5455 = vpop.f32.mrf.mxu0
        %5456 = vmatprep.mubr.bf16.mxu0 0
        %5457 = vmatmul.mubr.bf16.gmra.mxu0 %v5398
        %v5458 = vpop.f32.mrf.mxu0
        %v5459 = vadd.f32 0.0, %v5458
        %v5460 = vpop.f32.mrf.mxu0
        %v5461 = vpop.f32.mrf.mxu0
        %v5462 = vadd.f32 0.0, %v5461
        %v5463 = vpop.f32.mrf.mxu0
        %5464 = vdwg.mxu0
        %v5465 = vadd.f32 %v5285, %v5435
        %v5466 = vadd.f32 %v5285, %v5438
        %v5467 = vadd.f32 %v5285, %v5443
        %v5468 = vadd.f32 %v5285, %v5446
        %v5469 = vadd.f32 %v5285, %v5451
        %v5470 = vadd.f32 %v5285, %v5454
        %v5471 = vadd.f32 %v5285, %v5459
        %v5472 = vadd.f32 %v5285, %v5462
        %s5473 = scalar_lea.vmem [#allocation10], 16
        %v5474 = vld [vmem:[%s5473] sm:$0xf]
        %v5475 = vld [vmem:[%s5473 + $0x4] sm:$0xf]
        %v5476 = vld [vmem:[%s5473 + $0x8] sm:$0xf]
        %v5477 = vld [vmem:[%s5473 + $0xc] sm:$0xf]
        %v5486 = vunpack.c.l.b16 %v5288
        %v5487 = vunpack.c.l.b16 %v5289
        %v5488 = vunpack.c.l.b16 %v5290
        %v5489 = vunpack.c.l.b16 %v5291
        %v5490 = vunpack.c.l.b16 %v5292
        %v5491 = vunpack.c.l.b16 %v5293
        %v5492 = vunpack.c.l.b16 %v5294
        %v5493 = vunpack.c.l.b16 %v5295
        %v5494 = vpack.c.b16 %v5487, %v5486
        %v5495 = vpack.c.b16 %v5489, %v5488
        %v5496 = vpack.c.b16 %v5491, %v5490
        %v5497 = vpack.c.b16 %v5493, %v5492
        %v5502 = vunpack.c.l.b16 %v5474
        %v5503 = vunpack.c.l.b16 %v5475
        %v5504 = vunpack.c.l.b16 %v5476
        %v5505 = vunpack.c.l.b16 %v5477
        %v5506 = vpack.c.b16 %v5503, %v5502
        %v5507 = vpack.c.b16 %v5505, %v5504
        %v5511 = vsel %vm2379, %v5494, 0
        %v5514 = vsel %vm2379, %v5495, 0
        %v5517 = vsel %vm2379, %v5496, 0
        %v5520 = vsel %vm2379, %v5497, 0
        %5522 = vmatprep.subr.bf16.mxu0 0
        %5523 = vmatpush1.bf16.msra.mxu0 0
        %5524 = vmatprep.subr.bf16.mxu0 0
        %5525 = vmatpush1.bf16.msra.mxu0 0
        %5526 = vmatprep.subr.bf16.mxu0 0
        %5527 = vmatpush1.bf16.msra.mxu0 0
        %5528 = vmatprep.subr.bf16.mxu0 0
        %5529 = vmatpush1.bf16.msra.mxu0 0
        %5530 = vmatprep.subr.bf16.mxu0 0
        %5531 = vmatpush1.bf16.msra.mxu0 0
        %5532 = vmatprep.subr.bf16.mxu0 0
        %5533 = vmatpush1.bf16.msra.mxu0 0
        %5534 = vmatprep.subr.bf16.mxu0 0
        %5535 = vmatpush1.bf16.msra.mxu0 %v5507
        %5536 = vmatprep.subr.bf16.mxu0 0
        %5537 = vmatpush1.bf16.msra.mxu0 %v5506
        %5538 = vmatprep.subr.bf16.mxu0 0
        %5539 = vmatpush2.bf16.msra.mxu0 0
        %5540 = vmatprep.subr.bf16.mxu0 0
        %5541 = vmatpush2.bf16.msra.mxu0 0
        %5542 = vmatprep.subr.bf16.mxu0 0
        %5543 = vmatpush2.bf16.msra.mxu0 0
        %5544 = vmatprep.subr.bf16.mxu0 0
        %5545 = vmatpush2.bf16.msra.mxu0 0
        %5546 = vmatprep.subr.bf16.mxu0 0
        %5547 = vmatpush2.bf16.msra.mxu0 0
        %5548 = vmatprep.subr.bf16.mxu0 0
        %5549 = vmatpush2.bf16.msra.mxu0 0
        %5550 = vmatprep.subr.bf16.mxu0 0
        %5551 = vmatpush2.bf16.msra.mxu0 0
        %5552 = vmatprep.subr.bf16.mxu0 0
        %5553 = vmatpush2.bf16.msra.mxu0 0
        %5554 = vmatprep.mubr.bf16.mxu0 0
        %5555 = vmatmul.mubr.bf16.gmra.mxu0 %v5511
        %v5556 = vpop.f32.mrf.mxu0
        %v5557 = vadd.f32 0.0, %v5556
        %v5558 = vpop.f32.mrf.mxu0
        %v5559 = vpop.f32.mrf.mxu0
        %v5560 = vadd.f32 0.0, %v5559
        %v5561 = vpop.f32.mrf.mxu0
        %5562 = vmatprep.mubr.bf16.mxu0 0
        %5563 = vmatmul.mubr.bf16.gmra.mxu0 %v5514
        %v5564 = vpop.f32.mrf.mxu0
        %v5565 = vadd.f32 0.0, %v5564
        %v5566 = vpop.f32.mrf.mxu0
        %v5567 = vpop.f32.mrf.mxu0
        %v5568 = vadd.f32 0.0, %v5567
        %v5569 = vpop.f32.mrf.mxu0
        %5570 = vmatprep.mubr.bf16.mxu0 0
        %5571 = vmatmul.mubr.bf16.gmra.mxu0 %v5517
        %v5572 = vpop.f32.mrf.mxu0
        %v5573 = vadd.f32 0.0, %v5572
        %v5574 = vpop.f32.mrf.mxu0
        %v5575 = vpop.f32.mrf.mxu0
        %v5576 = vadd.f32 0.0, %v5575
        %v5577 = vpop.f32.mrf.mxu0
        %5578 = vmatprep.mubr.bf16.mxu0 0
        %5579 = vmatmul.mubr.bf16.gmra.mxu0 %v5520
        %v5580 = vpop.f32.mrf.mxu0
        %v5581 = vadd.f32 0.0, %v5580
        %v5582 = vpop.f32.mrf.mxu0
        %v5583 = vpop.f32.mrf.mxu0
        %v5584 = vadd.f32 0.0, %v5583
        %v5585 = vpop.f32.mrf.mxu0
        %5586 = vdwg.mxu0
        %v5587 = vadd.f32 %v5465, %v5557
        %v5588 = vadd.f32 %v5466, %v5560
        %v5589 = vadd.f32 %v5467, %v5565
        %v5590 = vadd.f32 %v5468, %v5568
        %v5591 = vadd.f32 %v5469, %v5573
        %v5592 = vadd.f32 %v5470, %v5576
        %v5593 = vadd.f32 %v5471, %v5581
        %v5594 = vadd.f32 %v5472, %v5584
        %v5595 = vld [vmem:[#allocation3 + $0x4] sm:$0xf]
        %v5596 = vld [vmem:[#allocation3 + $0x8] sm:$0xf]
        %v5597 = vld [vmem:[#allocation3 + $0xc] sm:$0xf]
        %v5598 = vld [vmem:[#allocation3 + $0x10] sm:$0xf]
        %v5599 = vld [vmem:[#allocation3 + $0x14] sm:$0xf]
        %v5600 = vld [vmem:[#allocation3 + $0x18] sm:$0xf]
        %v5601 = vld [vmem:[#allocation3 + $0x1c] sm:$0xf]
        %v5602 = vld [vmem:[#allocation3 + $0x20] sm:$0xf]
        %v5603 = vld [vmem:[#allocation3 + $0x24] sm:$0x1]
        %v5604 = vsel %vm1137, %v5595, 0
        %v5605 = vsel %vm1138, %v5596, 0
        %v5606 = vsel %vm1139, %v5597, 0
        %v5607 = vsel %vm1140, %v5598, 0
        %v5608 = vsel %vm1141, %v5599, 0
        %v5609 = vsel %vm1142, %v5600, 0
        %v5610 = vsel %vm1143, %v5601, 0
        %v5611 = vsel %vm1144, %v5602, 0
        %v5612 = vsel %vm1145, %v5603, 0
        %s5613 = scalar_lea.vmem [#allocation10], 32
        %v5614 = vld [vmem:[%s5613] sm:$0xf]
        %v5615 = vld [vmem:[%s5613 + $0x4] sm:$0xf]
        %v5616 = vld [vmem:[%s5613 + $0x8] sm:$0xf]
        %v5617 = vld [vmem:[%s5613 + $0xc] sm:$0xf]
        %v5627 = vunpack.c.l.b16 %v5604
        %v5628 = vunpack.c.l.b16 %v5605
        %v5629 = vunpack.c.l.b16 %v5606
        %v5630 = vunpack.c.l.b16 %v5607
        %v5631 = vunpack.c.l.b16 %v5608
        %v5632 = vunpack.c.l.b16 %v5609
        %v5633 = vunpack.c.l.b16 %v5610
        %v5634 = vunpack.c.l.b16 %v5611
        %v5635 = vunpack.c.l.b16 %v5612
        %v5636 = vpack.c.b16 %v5628, %v5627
        %v5637 = vpack.c.b16 %v5630, %v5629
        %v5638 = vpack.c.b16 %v5632, %v5631
        %v5639 = vpack.c.b16 %v5634, %v5633
        %v5640 = vpack.c.b16 %v5635, %v5635
        %v5642 = vshrl.u32 %v5636, 16
        %v5644 = vshll.u32 %v5636, 16
        %v5646 = vrot.slane %v5644, 1
        %v5647 = vor.u32 %v5642, %v5646
        %v5649 = vshll.u32 %v5637, 16
        %v5651 = vrot.slane %v5649, 1
        %v5652 = vsel %vm1181, %v5647, %v5651
        %v5653 = vshrl.u32 %v5637, 16
        %v5655 = vor.u32 %v5653, %v5651
        %v5657 = vshll.u32 %v5638, 16
        %v5659 = vrot.slane %v5657, 1
        %v5660 = vsel %vm1181, %v5655, %v5659
        %v5661 = vshrl.u32 %v5638, 16
        %v5663 = vor.u32 %v5661, %v5659
        %v5665 = vshll.u32 %v5639, 16
        %v5667 = vrot.slane %v5665, 1
        %v5668 = vsel %vm1181, %v5663, %v5667
        %v5669 = vshrl.u32 %v5639, 16
        %v5671 = vor.u32 %v5669, %v5667
        %v5673 = vshll.u32 %v5640, 16
        %v5675 = vrot.slane %v5673, 1
        %v5676 = vsel %vm1181, %v5671, %v5675
        %v5681 = vunpack.c.l.b16 %v5614
        %v5682 = vunpack.c.l.b16 %v5615
        %v5683 = vunpack.c.l.b16 %v5616
        %v5684 = vunpack.c.l.b16 %v5617
        %v5685 = vpack.c.b16 %v5682, %v5681
        %v5686 = vpack.c.b16 %v5684, %v5683
        %v5690 = vsel %vm2379, %v5652, 0
        %v5693 = vsel %vm2379, %v5660, 0
        %v5696 = vsel %vm2379, %v5668, 0
        %v5699 = vsel %vm2379, %v5676, 0
        %5701 = vmatprep.subr.bf16.mxu0 0
        %5702 = vmatpush1.bf16.msra.mxu0 0
        %5703 = vmatprep.subr.bf16.mxu0 0
        %5704 = vmatpush1.bf16.msra.mxu0 0
        %5705 = vmatprep.subr.bf16.mxu0 0
        %5706 = vmatpush1.bf16.msra.mxu0 0
        %5707 = vmatprep.subr.bf16.mxu0 0
        %5708 = vmatpush1.bf16.msra.mxu0 0
        %5709 = vmatprep.subr.bf16.mxu0 0
        %5710 = vmatpush1.bf16.msra.mxu0 0
        %5711 = vmatprep.subr.bf16.mxu0 0
        %5712 = vmatpush1.bf16.msra.mxu0 0
        %5713 = vmatprep.subr.bf16.mxu0 0
        %5714 = vmatpush1.bf16.msra.mxu0 %v5686
        %5715 = vmatprep.subr.bf16.mxu0 0
        %5716 = vmatpush1.bf16.msra.mxu0 %v5685
        %5717 = vmatprep.subr.bf16.mxu0 0
        %5718 = vmatpush2.bf16.msra.mxu0 0
        %5719 = vmatprep.subr.bf16.mxu0 0
        %5720 = vmatpush2.bf16.msra.mxu0 0
        %5721 = vmatprep.subr.bf16.mxu0 0
        %5722 = vmatpush2.bf16.msra.mxu0 0
        %5723 = vmatprep.subr.bf16.mxu0 0
        %5724 = vmatpush2.bf16.msra.mxu0 0
        %5725 = vmatprep.subr.bf16.mxu0 0
        %5726 = vmatpush2.bf16.msra.mxu0 0
        %5727 = vmatprep.subr.bf16.mxu0 0
        %5728 = vmatpush2.bf16.msra.mxu0 0
        %5729 = vmatprep.subr.bf16.mxu0 0
        %5730 = vmatpush2.bf16.msra.mxu0 0
        %5731 = vmatprep.subr.bf16.mxu0 0
        %5732 = vmatpush2.bf16.msra.mxu0 0
        %5733 = vmatprep.mubr.bf16.mxu0 0
        %5734 = vmatmul.mubr.bf16.gmra.mxu0 %v5690
        %v5735 = vpop.f32.mrf.mxu0
        %v5736 = vadd.f32 0.0, %v5735
        %v5737 = vpop.f32.mrf.mxu0
        %v5738 = vpop.f32.mrf.mxu0
        %v5739 = vadd.f32 0.0, %v5738
        %v5740 = vpop.f32.mrf.mxu0
        %5741 = vmatprep.mubr.bf16.mxu0 0
        %5742 = vmatmul.mubr.bf16.gmra.mxu0 %v5693
        %v5743 = vpop.f32.mrf.mxu0
        %v5744 = vadd.f32 0.0, %v5743
        %v5745 = vpop.f32.mrf.mxu0
        %v5746 = vpop.f32.mrf.mxu0
        %v5747 = vadd.f32 0.0, %v5746
        %v5748 = vpop.f32.mrf.mxu0
        %5749 = vmatprep.mubr.bf16.mxu0 0
        %5750 = vmatmul.mubr.bf16.gmra.mxu0 %v5696
        %v5751 = vpop.f32.mrf.mxu0
        %v5752 = vadd.f32 0.0, %v5751
        %v5753 = vpop.f32.mrf.mxu0
        %v5754 = vpop.f32.mrf.mxu0
        %v5755 = vadd.f32 0.0, %v5754
        %v5756 = vpop.f32.mrf.mxu0
        %5757 = vmatprep.mubr.bf16.mxu0 0
        %5758 = vmatmul.mubr.bf16.gmra.mxu0 %v5699
        %v5759 = vpop.f32.mrf.mxu0
        %v5760 = vadd.f32 0.0, %v5759
        %v5761 = vpop.f32.mrf.mxu0
        %v5762 = vpop.f32.mrf.mxu0
        %v5763 = vadd.f32 0.0, %v5762
        %v5764 = vpop.f32.mrf.mxu0
        %5765 = vdwg.mxu0
        %v5766 = vadd.f32 %v5587, %v5736
        %v5767 = vadd.f32 %v5588, %v5739
        %v5768 = vadd.f32 %v5589, %v5744
        %v5769 = vadd.f32 %v5590, %v5747
        %v5770 = vadd.f32 %v5591, %v5752
        %v5771 = vadd.f32 %v5592, %v5755
        %v5772 = vadd.f32 %v5593, %v5760
        %v5773 = vadd.f32 %v5594, %v5763
        %v5774 = vld [vmem:[#allocation3 + $0x4] sm:$0x8]
        %v5775 = vld [vmem:[#allocation3 + $0x24] sm:$0xf]
        %v5776 = vsel %vm728, %v5774, 0
        %v5777 = vsel %vm729, %v5596, 0
        %v5778 = vsel %vm730, %v5597, 0
        %v5779 = vsel %vm731, %v5598, 0
        %v5780 = vsel %vm732, %v5599, 0
        %v5781 = vsel %vm733, %v5600, 0
        %v5782 = vsel %vm734, %v5601, 0
        %v5783 = vsel %vm735, %v5602, 0
        %v5784 = vsel %vm736, %v5775, 0
        %s5785 = scalar_lea.vmem [#allocation10], 48
        %v5786 = vld [vmem:[%s5785] sm:$0xf]
        %v5787 = vld [vmem:[%s5785 + $0x4] sm:$0xf]
        %v5788 = vld [vmem:[%s5785 + $0x8] sm:$0xf]
        %v5789 = vld [vmem:[%s5785 + $0xc] sm:$0xf]
        %v5799 = vunpack.c.l.b16 %v5776
        %v5800 = vunpack.c.l.b16 %v5777
        %v5801 = vunpack.c.l.b16 %v5778
        %v5802 = vunpack.c.l.b16 %v5779
        %v5803 = vunpack.c.l.b16 %v5780
        %v5804 = vunpack.c.l.b16 %v5781
        %v5805 = vunpack.c.l.b16 %v5782
        %v5806 = vunpack.c.l.b16 %v5783
        %v5807 = vunpack.c.l.b16 %v5784
        %v5808 = vpack.c.b16 %v5800, %v5799
        %v5809 = vpack.c.b16 %v5802, %v5801
        %v5810 = vpack.c.b16 %v5804, %v5803
        %v5811 = vpack.c.b16 %v5806, %v5805
        %v5812 = vpack.c.b16 %v5807, %v5807
        %v5814 = vshrl.u32 %v5808, 16
        %v5816 = vrot.slane %v5814, 3
        %v5817 = vshll.u32 %v5808, 16
        %v5819 = vrot.slane %v5817, 4
        %v5820 = vor.u32 %v5816, %v5819
        %v5822 = vshrl.u32 %v5809, 16
        %v5824 = vrot.slane %v5822, 3
        %v5825 = vshll.u32 %v5809, 16
        %v5827 = vrot.slane %v5825, 4
        %v5828 = vor.u32 %v5824, %v5827
        %v5829 = vsel %vm771, %v5820, %v5828
        %v5831 = vshrl.u32 %v5810, 16
        %v5833 = vrot.slane %v5831, 3
        %v5834 = vshll.u32 %v5810, 16
        %v5836 = vrot.slane %v5834, 4
        %v5837 = vor.u32 %v5833, %v5836
        %v5838 = vsel %vm771, %v5828, %v5837
        %v5840 = vshrl.u32 %v5811, 16
        %v5842 = vrot.slane %v5840, 3
        %v5843 = vshll.u32 %v5811, 16
        %v5845 = vrot.slane %v5843, 4
        %v5846 = vor.u32 %v5842, %v5845
        %v5847 = vsel %vm771, %v5837, %v5846
        %v5849 = vshrl.u32 %v5812, 16
        %v5851 = vrot.slane %v5849, 3
        %v5852 = vshll.u32 %v5812, 16
        %v5854 = vrot.slane %v5852, 4
        %v5855 = vor.u32 %v5851, %v5854
        %v5856 = vsel %vm771, %v5846, %v5855
        %v5861 = vunpack.c.l.b16 %v5786
        %v5862 = vunpack.c.l.b16 %v5787
        %v5863 = vunpack.c.l.b16 %v5788
        %v5864 = vunpack.c.l.b16 %v5789
        %v5865 = vpack.c.b16 %v5862, %v5861
        %v5866 = vpack.c.b16 %v5864, %v5863
        %v5870 = vsel %vm2379, %v5829, 0
        %v5873 = vsel %vm2379, %v5838, 0
        %v5876 = vsel %vm2379, %v5847, 0
        %v5879 = vsel %vm2379, %v5856, 0
        %5881 = vmatprep.subr.bf16.mxu0 0
        %5882 = vmatpush1.bf16.msra.mxu0 0
        %5883 = vmatprep.subr.bf16.mxu0 0
        %5884 = vmatpush1.bf16.msra.mxu0 0
        %5885 = vmatprep.subr.bf16.mxu0 0
        %5886 = vmatpush1.bf16.msra.mxu0 0
        %5887 = vmatprep.subr.bf16.mxu0 0
        %5888 = vmatpush1.bf16.msra.mxu0 0
        %5889 = vmatprep.subr.bf16.mxu0 0
        %5890 = vmatpush1.bf16.msra.mxu0 0
        %5891 = vmatprep.subr.bf16.mxu0 0
        %5892 = vmatpush1.bf16.msra.mxu0 0
        %5893 = vmatprep.subr.bf16.mxu0 0
        %5894 = vmatpush1.bf16.msra.mxu0 %v5866
        %5895 = vmatprep.subr.bf16.mxu0 0
        %5896 = vmatpush1.bf16.msra.mxu0 %v5865
        %5897 = vmatprep.subr.bf16.mxu0 0
        %5898 = vmatpush2.bf16.msra.mxu0 0
        %5899 = vmatprep.subr.bf16.mxu0 0
        %5900 = vmatpush2.bf16.msra.mxu0 0
        %5901 = vmatprep.subr.bf16.mxu0 0
        %5902 = vmatpush2.bf16.msra.mxu0 0
        %5903 = vmatprep.subr.bf16.mxu0 0
        %5904 = vmatpush2.bf16.msra.mxu0 0
        %5905 = vmatprep.subr.bf16.mxu0 0
        %5906 = vmatpush2.bf16.msra.mxu0 0
        %5907 = vmatprep.subr.bf16.mxu0 0
        %5908 = vmatpush2.bf16.msra.mxu0 0
        %5909 = vmatprep.subr.bf16.mxu0 0
        %5910 = vmatpush2.bf16.msra.mxu0 0
        %5911 = vmatprep.subr.bf16.mxu0 0
        %5912 = vmatpush2.bf16.msra.mxu0 0
        %5913 = vmatprep.mubr.bf16.mxu0 0
        %5914 = vmatmul.mubr.bf16.gmra.mxu0 %v5870
        %v5915 = vpop.f32.mrf.mxu0
        %v5916 = vadd.f32 0.0, %v5915
        %v5917 = vpop.f32.mrf.mxu0
        %v5918 = vpop.f32.mrf.mxu0
        %v5919 = vadd.f32 0.0, %v5918
        %v5920 = vpop.f32.mrf.mxu0
        %5921 = vmatprep.mubr.bf16.mxu0 0
        %5922 = vmatmul.mubr.bf16.gmra.mxu0 %v5873
        %v5923 = vpop.f32.mrf.mxu0
        %v5924 = vadd.f32 0.0, %v5923
        %v5925 = vpop.f32.mrf.mxu0
        %v5926 = vpop.f32.mrf.mxu0
        %v5927 = vadd.f32 0.0, %v5926
        %v5928 = vpop.f32.mrf.mxu0
        %5929 = vmatprep.mubr.bf16.mxu0 0
        %5930 = vmatmul.mubr.bf16.gmra.mxu0 %v5876
        %v5931 = vpop.f32.mrf.mxu0
        %v5932 = vadd.f32 0.0, %v5931
        %v5933 = vpop.f32.mrf.mxu0
        %v5934 = vpop.f32.mrf.mxu0
        %v5935 = vadd.f32 0.0, %v5934
        %v5936 = vpop.f32.mrf.mxu0
        %5937 = vmatprep.mubr.bf16.mxu0 0
        %5938 = vmatmul.mubr.bf16.gmra.mxu0 %v5879
        %v5939 = vpop.f32.mrf.mxu0
        %v5940 = vadd.f32 0.0, %v5939
        %v5941 = vpop.f32.mrf.mxu0
        %v5942 = vpop.f32.mrf.mxu0
        %v5943 = vadd.f32 0.0, %v5942
        %v5944 = vpop.f32.mrf.mxu0
        %5945 = vdwg.mxu0
        %v5946 = vadd.f32 %v5766, %v5916
        %v5947 = vadd.f32 %v5767, %v5919
        %v5948 = vadd.f32 %v5768, %v5924
        %v5949 = vadd.f32 %v5769, %v5927
        %v5950 = vadd.f32 %v5770, %v5932
        %v5951 = vadd.f32 %v5771, %v5935
        %v5952 = vadd.f32 %v5772, %v5940
        %v5953 = vadd.f32 %v5773, %v5943
        %s5954 = scalar_lea.vmem [#allocation10], 64
        %v5955 = vld [vmem:[%s5954] sm:$0xf]
        %v5956 = vld [vmem:[%s5954 + $0x4] sm:$0xf]
        %v5957 = vld [vmem:[%s5954 + $0x8] sm:$0xf]
        %v5958 = vld [vmem:[%s5954 + $0xc] sm:$0xf]
        %v5967 = vunpack.c.l.b16 %v5596
        %v5968 = vunpack.c.l.b16 %v5597
        %v5969 = vunpack.c.l.b16 %v5598
        %v5970 = vunpack.c.l.b16 %v5599
        %v5971 = vunpack.c.l.b16 %v5600
        %v5972 = vunpack.c.l.b16 %v5601
        %v5973 = vunpack.c.l.b16 %v5602
        %v5974 = vunpack.c.l.b16 %v5775
        %v5975 = vpack.c.b16 %v5968, %v5967
        %v5976 = vpack.c.b16 %v5970, %v5969
        %v5977 = vpack.c.b16 %v5972, %v5971
        %v5978 = vpack.c.b16 %v5974, %v5973
        %v5983 = vunpack.c.l.b16 %v5955
        %v5984 = vunpack.c.l.b16 %v5956
        %v5985 = vunpack.c.l.b16 %v5957
        %v5986 = vunpack.c.l.b16 %v5958
        %v5987 = vpack.c.b16 %v5984, %v5983
        %v5988 = vpack.c.b16 %v5986, %v5985
        %v5992 = vsel %vm2379, %v5975, 0
        %v5995 = vsel %vm2379, %v5976, 0
        %v5998 = vsel %vm2379, %v5977, 0
        %v6001 = vsel %vm2379, %v5978, 0
        %6003 = vmatprep.subr.bf16.mxu0 0
        %6004 = vmatpush1.bf16.msra.mxu0 0
        %6005 = vmatprep.subr.bf16.mxu0 0
        %6006 = vmatpush1.bf16.msra.mxu0 0
        %6007 = vmatprep.subr.bf16.mxu0 0
        %6008 = vmatpush1.bf16.msra.mxu0 0
        %6009 = vmatprep.subr.bf16.mxu0 0
        %6010 = vmatpush1.bf16.msra.mxu0 0
        %6011 = vmatprep.subr.bf16.mxu0 0
        %6012 = vmatpush1.bf16.msra.mxu0 0
        %6013 = vmatprep.subr.bf16.mxu0 0
        %6014 = vmatpush1.bf16.msra.mxu0 0
        %6015 = vmatprep.subr.bf16.mxu0 0
        %6016 = vmatpush1.bf16.msra.mxu0 %v5988
        %6017 = vmatprep.subr.bf16.mxu0 0
        %6018 = vmatpush1.bf16.msra.mxu0 %v5987
        %6019 = vmatprep.subr.bf16.mxu0 0
        %6020 = vmatpush2.bf16.msra.mxu0 0
        %6021 = vmatprep.subr.bf16.mxu0 0
        %6022 = vmatpush2.bf16.msra.mxu0 0
        %6023 = vmatprep.subr.bf16.mxu0 0
        %6024 = vmatpush2.bf16.msra.mxu0 0
        %6025 = vmatprep.subr.bf16.mxu0 0
        %6026 = vmatpush2.bf16.msra.mxu0 0
        %6027 = vmatprep.subr.bf16.mxu0 0
        %6028 = vmatpush2.bf16.msra.mxu0 0
        %6029 = vmatprep.subr.bf16.mxu0 0
        %6030 = vmatpush2.bf16.msra.mxu0 0
        %6031 = vmatprep.subr.bf16.mxu0 0
        %6032 = vmatpush2.bf16.msra.mxu0 0
        %6033 = vmatprep.subr.bf16.mxu0 0
        %6034 = vmatpush2.bf16.msra.mxu0 0
        %6035 = vmatprep.mubr.bf16.mxu0 0
        %6036 = vmatmul.mubr.bf16.gmra.mxu0 %v5992
        %v6037 = vpop.f32.mrf.mxu0
        %v6038 = vadd.f32 0.0, %v6037
        %v6039 = vpop.f32.mrf.mxu0
        %v6040 = vpop.f32.mrf.mxu0
        %v6041 = vadd.f32 0.0, %v6040
        %v6042 = vpop.f32.mrf.mxu0
        %6043 = vmatprep.mubr.bf16.mxu0 0
        %6044 = vmatmul.mubr.bf16.gmra.mxu0 %v5995
        %v6045 = vpop.f32.mrf.mxu0
        %v6046 = vadd.f32 0.0, %v6045
        %v6047 = vpop.f32.mrf.mxu0
        %v6048 = vpop.f32.mrf.mxu0
        %v6049 = vadd.f32 0.0, %v6048
        %v6050 = vpop.f32.mrf.mxu0
        %6051 = vmatprep.mubr.bf16.mxu0 0
        %6052 = vmatmul.mubr.bf16.gmra.mxu0 %v5998
        %v6053 = vpop.f32.mrf.mxu0
        %v6054 = vadd.f32 0.0, %v6053
        %v6055 = vpop.f32.mrf.mxu0
        %v6056 = vpop.f32.mrf.mxu0
        %v6057 = vadd.f32 0.0, %v6056
        %v6058 = vpop.f32.mrf.mxu0
        %6059 = vmatprep.mubr.bf16.mxu0 0
        %6060 = vmatmul.mubr.bf16.gmra.mxu0 %v6001
        %v6061 = vpop.f32.mrf.mxu0
        %v6062 = vadd.f32 0.0, %v6061
        %v6063 = vpop.f32.mrf.mxu0
        %v6064 = vpop.f32.mrf.mxu0
        %v6065 = vadd.f32 0.0, %v6064
        %v6066 = vpop.f32.mrf.mxu0
        %6067 = vdwg.mxu0
        %v6068 = vadd.f32 %v5946, %v6038
        %v6069 = vadd.f32 %v5947, %v6041
        %v6070 = vadd.f32 %v5948, %v6046
        %v6071 = vadd.f32 %v5949, %v6049
        %v6072 = vadd.f32 %v5950, %v6054
        %v6073 = vadd.f32 %v5951, %v6057
        %v6074 = vadd.f32 %v5952, %v6062
        %v6075 = vadd.f32 %v5953, %v6065
        %v6076 = vld [vmem:[#allocation3 + $0x8] sm:$0xf]
        %v6077 = vld [vmem:[#allocation3 + $0xc] sm:$0xf]
        %v6078 = vld [vmem:[#allocation3 + $0x10] sm:$0xf]
        %v6079 = vld [vmem:[#allocation3 + $0x14] sm:$0xf]
        %v6080 = vld [vmem:[#allocation3 + $0x18] sm:$0xf]
        %v6081 = vld [vmem:[#allocation3 + $0x1c] sm:$0xf]
        %v6082 = vld [vmem:[#allocation3 + $0x20] sm:$0xf]
        %v6083 = vld [vmem:[#allocation3 + $0x24] sm:$0xf]
        %v6084 = vld [vmem:[#allocation3 + $0x28] sm:$0x1]
        %v6085 = vsel %vm1137, %v6076, 0
        %v6086 = vsel %vm1138, %v6077, 0
        %v6087 = vsel %vm1139, %v6078, 0
        %v6088 = vsel %vm1140, %v6079, 0
        %v6089 = vsel %vm1141, %v6080, 0
        %v6090 = vsel %vm1142, %v6081, 0
        %v6091 = vsel %vm1143, %v6082, 0
        %v6092 = vsel %vm1144, %v6083, 0
        %v6093 = vsel %vm1145, %v6084, 0
        %s6094 = scalar_lea.vmem [#allocation10], 80
        %v6095 = vld [vmem:[%s6094] sm:$0xf]
        %v6096 = vld [vmem:[%s6094 + $0x4] sm:$0xf]
        %v6097 = vld [vmem:[%s6094 + $0x8] sm:$0xf]
        %v6098 = vld [vmem:[%s6094 + $0xc] sm:$0xf]
        %v6108 = vunpack.c.l.b16 %v6085
        %v6109 = vunpack.c.l.b16 %v6086
        %v6110 = vunpack.c.l.b16 %v6087
        %v6111 = vunpack.c.l.b16 %v6088
        %v6112 = vunpack.c.l.b16 %v6089
        %v6113 = vunpack.c.l.b16 %v6090
        %v6114 = vunpack.c.l.b16 %v6091
        %v6115 = vunpack.c.l.b16 %v6092
        %v6116 = vunpack.c.l.b16 %v6093
        %v6117 = vpack.c.b16 %v6109, %v6108
        %v6118 = vpack.c.b16 %v6111, %v6110
        %v6119 = vpack.c.b16 %v6113, %v6112
        %v6120 = vpack.c.b16 %v6115, %v6114
        %v6121 = vpack.c.b16 %v6116, %v6116
        %v6123 = vshrl.u32 %v6117, 16
        %v6125 = vshll.u32 %v6117, 16
        %v6127 = vrot.slane %v6125, 1
        %v6128 = vor.u32 %v6123, %v6127
        %v6130 = vshll.u32 %v6118, 16
        %v6132 = vrot.slane %v6130, 1
        %v6133 = vsel %vm1181, %v6128, %v6132
        %v6134 = vshrl.u32 %v6118, 16
        %v6136 = vor.u32 %v6134, %v6132
        %v6138 = vshll.u32 %v6119, 16
        %v6140 = vrot.slane %v6138, 1
        %v6141 = vsel %vm1181, %v6136, %v6140
        %v6142 = vshrl.u32 %v6119, 16
        %v6144 = vor.u32 %v6142, %v6140
        %v6146 = vshll.u32 %v6120, 16
        %v6148 = vrot.slane %v6146, 1
        %v6149 = vsel %vm1181, %v6144, %v6148
        %v6150 = vshrl.u32 %v6120, 16
        %v6152 = vor.u32 %v6150, %v6148
        %v6154 = vshll.u32 %v6121, 16
        %v6156 = vrot.slane %v6154, 1
        %v6157 = vsel %vm1181, %v6152, %v6156
        %v6162 = vunpack.c.l.b16 %v6095
        %v6163 = vunpack.c.l.b16 %v6096
        %v6164 = vunpack.c.l.b16 %v6097
        %v6165 = vunpack.c.l.b16 %v6098
        %v6166 = vpack.c.b16 %v6163, %v6162
        %v6167 = vpack.c.b16 %v6165, %v6164
        %v6171 = vsel %vm2379, %v6133, 0
        %v6174 = vsel %vm2379, %v6141, 0
        %v6177 = vsel %vm2379, %v6149, 0
        %v6180 = vsel %vm2379, %v6157, 0
        %6182 = vmatprep.subr.bf16.mxu0 0
        %6183 = vmatpush1.bf16.msra.mxu0 0
        %6184 = vmatprep.subr.bf16.mxu0 0
        %6185 = vmatpush1.bf16.msra.mxu0 0
        %6186 = vmatprep.subr.bf16.mxu0 0
        %6187 = vmatpush1.bf16.msra.mxu0 0
        %6188 = vmatprep.subr.bf16.mxu0 0
        %6189 = vmatpush1.bf16.msra.mxu0 0
        %6190 = vmatprep.subr.bf16.mxu0 0
        %6191 = vmatpush1.bf16.msra.mxu0 0
        %6192 = vmatprep.subr.bf16.mxu0 0
        %6193 = vmatpush1.bf16.msra.mxu0 0
        %6194 = vmatprep.subr.bf16.mxu0 0
        %6195 = vmatpush1.bf16.msra.mxu0 %v6167
        %6196 = vmatprep.subr.bf16.mxu0 0
        %6197 = vmatpush1.bf16.msra.mxu0 %v6166
        %6198 = vmatprep.subr.bf16.mxu0 0
        %6199 = vmatpush2.bf16.msra.mxu0 0
        %6200 = vmatprep.subr.bf16.mxu0 0
        %6201 = vmatpush2.bf16.msra.mxu0 0
        %6202 = vmatprep.subr.bf16.mxu0 0
        %6203 = vmatpush2.bf16.msra.mxu0 0
        %6204 = vmatprep.subr.bf16.mxu0 0
        %6205 = vmatpush2.bf16.msra.mxu0 0
        %6206 = vmatprep.subr.bf16.mxu0 0
        %6207 = vmatpush2.bf16.msra.mxu0 0
        %6208 = vmatprep.subr.bf16.mxu0 0
        %6209 = vmatpush2.bf16.msra.mxu0 0
        %6210 = vmatprep.subr.bf16.mxu0 0
        %6211 = vmatpush2.bf16.msra.mxu0 0
        %6212 = vmatprep.subr.bf16.mxu0 0
        %6213 = vmatpush2.bf16.msra.mxu0 0
        %6214 = vmatprep.mubr.bf16.mxu0 0
        %6215 = vmatmul.mubr.bf16.gmra.mxu0 %v6171
        %v6216 = vpop.f32.mrf.mxu0
        %v6217 = vadd.f32 0.0, %v6216
        %v6218 = vpop.f32.mrf.mxu0
        %v6219 = vpop.f32.mrf.mxu0
        %v6220 = vadd.f32 0.0, %v6219
        %v6221 = vpop.f32.mrf.mxu0
        %6222 = vmatprep.mubr.bf16.mxu0 0
        %6223 = vmatmul.mubr.bf16.gmra.mxu0 %v6174
        %v6224 = vpop.f32.mrf.mxu0
        %v6225 = vadd.f32 0.0, %v6224
        %v6226 = vpop.f32.mrf.mxu0
        %v6227 = vpop.f32.mrf.mxu0
        %v6228 = vadd.f32 0.0, %v6227
        %v6229 = vpop.f32.mrf.mxu0
        %6230 = vmatprep.mubr.bf16.mxu0 0
        %6231 = vmatmul.mubr.bf16.gmra.mxu0 %v6177
        %v6232 = vpop.f32.mrf.mxu0
        %v6233 = vadd.f32 0.0, %v6232
        %v6234 = vpop.f32.mrf.mxu0
        %v6235 = vpop.f32.mrf.mxu0
        %v6236 = vadd.f32 0.0, %v6235
        %v6237 = vpop.f32.mrf.mxu0
        %6238 = vmatprep.mubr.bf16.mxu0 0
        %6239 = vmatmul.mubr.bf16.gmra.mxu0 %v6180
        %v6240 = vpop.f32.mrf.mxu0
        %v6241 = vadd.f32 0.0, %v6240
        %v6242 = vpop.f32.mrf.mxu0
        %v6243 = vpop.f32.mrf.mxu0
        %v6244 = vadd.f32 0.0, %v6243
        %v6245 = vpop.f32.mrf.mxu0
        %6246 = vdwg.mxu0
        %v6247 = vadd.f32 %v6068, %v6217
        %v6248 = vadd.f32 %v6069, %v6220
        %v6249 = vadd.f32 %v6070, %v6225
        %v6250 = vadd.f32 %v6071, %v6228
        %v6251 = vadd.f32 %v6072, %v6233
        %v6252 = vadd.f32 %v6073, %v6236
        %v6253 = vadd.f32 %v6074, %v6241
        %v6254 = vadd.f32 %v6075, %v6244
        %v6255 = vld [vmem:[#allocation3 + $0x8] sm:$0x8]
        %v6256 = vld [vmem:[#allocation3 + $0x28] sm:$0xf]
        %v6257 = vsel %vm728, %v6255, 0
        %v6258 = vsel %vm729, %v6077, 0
        %v6259 = vsel %vm730, %v6078, 0
        %v6260 = vsel %vm731, %v6079, 0
        %v6261 = vsel %vm732, %v6080, 0
        %v6262 = vsel %vm733, %v6081, 0
        %v6263 = vsel %vm734, %v6082, 0
        %v6264 = vsel %vm735, %v6083, 0
        %v6265 = vsel %vm736, %v6256, 0
        %s6266 = scalar_lea.vmem [#allocation10], 96
        %v6267 = vld [vmem:[%s6266] sm:$0xf]
        %v6268 = vld [vmem:[%s6266 + $0x4] sm:$0xf]
        %v6269 = vld [vmem:[%s6266 + $0x8] sm:$0xf]
        %v6270 = vld [vmem:[%s6266 + $0xc] sm:$0xf]
        %v6280 = vunpack.c.l.b16 %v6257
        %v6281 = vunpack.c.l.b16 %v6258
        %v6282 = vunpack.c.l.b16 %v6259
        %v6283 = vunpack.c.l.b16 %v6260
        %v6284 = vunpack.c.l.b16 %v6261
        %v6285 = vunpack.c.l.b16 %v6262
        %v6286 = vunpack.c.l.b16 %v6263
        %v6287 = vunpack.c.l.b16 %v6264
        %v6288 = vunpack.c.l.b16 %v6265
        %v6289 = vpack.c.b16 %v6281, %v6280
        %v6290 = vpack.c.b16 %v6283, %v6282
        %v6291 = vpack.c.b16 %v6285, %v6284
        %v6292 = vpack.c.b16 %v6287, %v6286
        %v6293 = vpack.c.b16 %v6288, %v6288
        %v6295 = vshrl.u32 %v6289, 16
        %v6297 = vrot.slane %v6295, 3
        %v6298 = vshll.u32 %v6289, 16
        %v6300 = vrot.slane %v6298, 4
        %v6301 = vor.u32 %v6297, %v6300
        %v6303 = vshrl.u32 %v6290, 16
        %v6305 = vrot.slane %v6303, 3
        %v6306 = vshll.u32 %v6290, 16
        %v6308 = vrot.slane %v6306, 4
        %v6309 = vor.u32 %v6305, %v6308
        %v6310 = vsel %vm771, %v6301, %v6309
        %v6312 = vshrl.u32 %v6291, 16
        %v6314 = vrot.slane %v6312, 3
        %v6315 = vshll.u32 %v6291, 16
        %v6317 = vrot.slane %v6315, 4
        %v6318 = vor.u32 %v6314, %v6317
        %v6319 = vsel %vm771, %v6309, %v6318
        %v6321 = vshrl.u32 %v6292, 16
        %v6323 = vrot.slane %v6321, 3
        %v6324 = vshll.u32 %v6292, 16
        %v6326 = vrot.slane %v6324, 4
        %v6327 = vor.u32 %v6323, %v6326
        %v6328 = vsel %vm771, %v6318, %v6327
        %v6330 = vshrl.u32 %v6293, 16
        %v6332 = vrot.slane %v6330, 3
        %v6333 = vshll.u32 %v6293, 16
        %v6335 = vrot.slane %v6333, 4
        %v6336 = vor.u32 %v6332, %v6335
        %v6337 = vsel %vm771, %v6327, %v6336
        %v6342 = vunpack.c.l.b16 %v6267
        %v6343 = vunpack.c.l.b16 %v6268
        %v6344 = vunpack.c.l.b16 %v6269
        %v6345 = vunpack.c.l.b16 %v6270
        %v6346 = vpack.c.b16 %v6343, %v6342
        %v6347 = vpack.c.b16 %v6345, %v6344
        %v6351 = vsel %vm2379, %v6310, 0
        %v6354 = vsel %vm2379, %v6319, 0
        %v6357 = vsel %vm2379, %v6328, 0
        %v6360 = vsel %vm2379, %v6337, 0
        %6362 = vmatprep.subr.bf16.mxu0 0
        %6363 = vmatpush1.bf16.msra.mxu0 0
        %6364 = vmatprep.subr.bf16.mxu0 0
        %6365 = vmatpush1.bf16.msra.mxu0 0
        %6366 = vmatprep.subr.bf16.mxu0 0
        %6367 = vmatpush1.bf16.msra.mxu0 0
        %6368 = vmatprep.subr.bf16.mxu0 0
        %6369 = vmatpush1.bf16.msra.mxu0 0
        %6370 = vmatprep.subr.bf16.mxu0 0
        %6371 = vmatpush1.bf16.msra.mxu0 0
        %6372 = vmatprep.subr.bf16.mxu0 0
        %6373 = vmatpush1.bf16.msra.mxu0 0
        %6374 = vmatprep.subr.bf16.mxu0 0
        %6375 = vmatpush1.bf16.msra.mxu0 %v6347
        %6376 = vmatprep.subr.bf16.mxu0 0
        %6377 = vmatpush1.bf16.msra.mxu0 %v6346
        %6378 = vmatprep.subr.bf16.mxu0 0
        %6379 = vmatpush2.bf16.msra.mxu0 0
        %6380 = vmatprep.subr.bf16.mxu0 0
        %6381 = vmatpush2.bf16.msra.mxu0 0
        %6382 = vmatprep.subr.bf16.mxu0 0
        %6383 = vmatpush2.bf16.msra.mxu0 0
        %6384 = vmatprep.subr.bf16.mxu0 0
        %6385 = vmatpush2.bf16.msra.mxu0 0
        %6386 = vmatprep.subr.bf16.mxu0 0
        %6387 = vmatpush2.bf16.msra.mxu0 0
        %6388 = vmatprep.subr.bf16.mxu0 0
        %6389 = vmatpush2.bf16.msra.mxu0 0
        %6390 = vmatprep.subr.bf16.mxu0 0
        %6391 = vmatpush2.bf16.msra.mxu0 0
        %6392 = vmatprep.subr.bf16.mxu0 0
        %6393 = vmatpush2.bf16.msra.mxu0 0
        %6394 = vmatprep.mubr.bf16.mxu0 0
        %6395 = vmatmul.mubr.bf16.gmra.mxu0 %v6351
        %v6396 = vpop.f32.mrf.mxu0
        %v6397 = vadd.f32 0.0, %v6396
        %v6398 = vpop.f32.mrf.mxu0
        %v6399 = vpop.f32.mrf.mxu0
        %v6400 = vadd.f32 0.0, %v6399
        %v6401 = vpop.f32.mrf.mxu0
        %6402 = vmatprep.mubr.bf16.mxu0 0
        %6403 = vmatmul.mubr.bf16.gmra.mxu0 %v6354
        %v6404 = vpop.f32.mrf.mxu0
        %v6405 = vadd.f32 0.0, %v6404
        %v6406 = vpop.f32.mrf.mxu0
        %v6407 = vpop.f32.mrf.mxu0
        %v6408 = vadd.f32 0.0, %v6407
        %v6409 = vpop.f32.mrf.mxu0
        %6410 = vmatprep.mubr.bf16.mxu0 0
        %6411 = vmatmul.mubr.bf16.gmra.mxu0 %v6357
        %v6412 = vpop.f32.mrf.mxu0
        %v6413 = vadd.f32 0.0, %v6412
        %v6414 = vpop.f32.mrf.mxu0
        %v6415 = vpop.f32.mrf.mxu0
        %v6416 = vadd.f32 0.0, %v6415
        %v6417 = vpop.f32.mrf.mxu0
        %6418 = vmatprep.mubr.bf16.mxu0 0
        %6419 = vmatmul.mubr.bf16.gmra.mxu0 %v6360
        %v6420 = vpop.f32.mrf.mxu0
        %v6421 = vadd.f32 0.0, %v6420
        %v6422 = vpop.f32.mrf.mxu0
        %v6423 = vpop.f32.mrf.mxu0
        %v6424 = vadd.f32 0.0, %v6423
        %v6425 = vpop.f32.mrf.mxu0
        %6426 = vdwg.mxu0
        %v6427 = vadd.f32 %v6247, %v6397
        %v6428 = vadd.f32 %v6248, %v6400
        %v6429 = vadd.f32 %v6249, %v6405
        %v6430 = vadd.f32 %v6250, %v6408
        %v6431 = vadd.f32 %v6251, %v6413
        %v6432 = vadd.f32 %v6252, %v6416
        %v6433 = vadd.f32 %v6253, %v6421
        %v6434 = vadd.f32 %v6254, %v6424
        %s6435 = scalar_lea.vmem [#allocation10], 112
        %v6436 = vld [vmem:[%s6435] sm:$0xf]
        %v6437 = vld [vmem:[%s6435 + $0x4] sm:$0xf]
        %v6438 = vld [vmem:[%s6435 + $0x8] sm:$0xf]
        %v6439 = vld [vmem:[%s6435 + $0xc] sm:$0xf]
        %v6448 = vunpack.c.l.b16 %v6077
        %v6449 = vunpack.c.l.b16 %v6078
        %v6450 = vunpack.c.l.b16 %v6079
        %v6451 = vunpack.c.l.b16 %v6080
        %v6452 = vunpack.c.l.b16 %v6081
        %v6453 = vunpack.c.l.b16 %v6082
        %v6454 = vunpack.c.l.b16 %v6083
        %v6455 = vunpack.c.l.b16 %v6256
        %v6456 = vpack.c.b16 %v6449, %v6448
        %v6457 = vpack.c.b16 %v6451, %v6450
        %v6458 = vpack.c.b16 %v6453, %v6452
        %v6459 = vpack.c.b16 %v6455, %v6454
        %v6464 = vunpack.c.l.b16 %v6436
        %v6465 = vunpack.c.l.b16 %v6437
        %v6466 = vunpack.c.l.b16 %v6438
        %v6467 = vunpack.c.l.b16 %v6439
        %v6468 = vpack.c.b16 %v6465, %v6464
        %v6469 = vpack.c.b16 %v6467, %v6466
        %v6473 = vsel %vm2379, %v6456, 0
        %v6476 = vsel %vm2379, %v6457, 0
        %v6479 = vsel %vm2379, %v6458, 0
        %v6482 = vsel %vm2379, %v6459, 0
        %6484 = vmatprep.subr.bf16.mxu0 0
        %6485 = vmatpush1.bf16.msra.mxu0 0
        %6486 = vmatprep.subr.bf16.mxu0 0
        %6487 = vmatpush1.bf16.msra.mxu0 0
        %6488 = vmatprep.subr.bf16.mxu0 0
        %6489 = vmatpush1.bf16.msra.mxu0 0
        %6490 = vmatprep.subr.bf16.mxu0 0
        %6491 = vmatpush1.bf16.msra.mxu0 0
        %6492 = vmatprep.subr.bf16.mxu0 0
        %6493 = vmatpush1.bf16.msra.mxu0 0
        %6494 = vmatprep.subr.bf16.mxu0 0
        %6495 = vmatpush1.bf16.msra.mxu0 0
        %6496 = vmatprep.subr.bf16.mxu0 0
        %6497 = vmatpush1.bf16.msra.mxu0 %v6469
        %6498 = vmatprep.subr.bf16.mxu0 0
        %6499 = vmatpush1.bf16.msra.mxu0 %v6468
        %6500 = vmatprep.subr.bf16.mxu0 0
        %6501 = vmatpush2.bf16.msra.mxu0 0
        %6502 = vmatprep.subr.bf16.mxu0 0
        %6503 = vmatpush2.bf16.msra.mxu0 0
        %6504 = vmatprep.subr.bf16.mxu0 0
        %6505 = vmatpush2.bf16.msra.mxu0 0
        %6506 = vmatprep.subr.bf16.mxu0 0
        %6507 = vmatpush2.bf16.msra.mxu0 0
        %6508 = vmatprep.subr.bf16.mxu0 0
        %6509 = vmatpush2.bf16.msra.mxu0 0
        %6510 = vmatprep.subr.bf16.mxu0 0
        %6511 = vmatpush2.bf16.msra.mxu0 0
        %6512 = vmatprep.subr.bf16.mxu0 0
        %6513 = vmatpush2.bf16.msra.mxu0 0
        %6514 = vmatprep.subr.bf16.mxu0 0
        %6515 = vmatpush2.bf16.msra.mxu0 0
        %6516 = vmatprep.mubr.bf16.mxu0 0
        %6517 = vmatmul.mubr.bf16.gmra.mxu0 %v6473
        %v6518 = vpop.f32.mrf.mxu0
        %v6519 = vadd.f32 0.0, %v6518
        %v6520 = vpop.f32.mrf.mxu0
        %v6521 = vpop.f32.mrf.mxu0
        %v6522 = vadd.f32 0.0, %v6521
        %v6523 = vpop.f32.mrf.mxu0
        %6524 = vmatprep.mubr.bf16.mxu0 0
        %6525 = vmatmul.mubr.bf16.gmra.mxu0 %v6476
        %v6526 = vpop.f32.mrf.mxu0
        %v6527 = vadd.f32 0.0, %v6526
        %v6528 = vpop.f32.mrf.mxu0
        %v6529 = vpop.f32.mrf.mxu0
        %v6530 = vadd.f32 0.0, %v6529
        %v6531 = vpop.f32.mrf.mxu0
        %6532 = vmatprep.mubr.bf16.mxu0 0
        %6533 = vmatmul.mubr.bf16.gmra.mxu0 %v6479
        %v6534 = vpop.f32.mrf.mxu0
        %v6535 = vadd.f32 0.0, %v6534
        %v6536 = vpop.f32.mrf.mxu0
        %v6537 = vpop.f32.mrf.mxu0
        %v6538 = vadd.f32 0.0, %v6537
        %v6539 = vpop.f32.mrf.mxu0
        %6540 = vmatprep.mubr.bf16.mxu0 0
        %6541 = vmatmul.mubr.bf16.gmra.mxu0 %v6482
        %v6542 = vpop.f32.mrf.mxu0
        %v6543 = vadd.f32 0.0, %v6542
        %v6544 = vpop.f32.mrf.mxu0
        %v6545 = vpop.f32.mrf.mxu0
        %v6546 = vadd.f32 0.0, %v6545
        %v6547 = vpop.f32.mrf.mxu0
        %6548 = vdwg.mxu0
        %v6549 = vadd.f32 %v6427, %v6519
        %v6550 = vadd.f32 %v6428, %v6522
        %v6551 = vadd.f32 %v6429, %v6527
        %v6552 = vadd.f32 %v6430, %v6530
        %v6553 = vadd.f32 %v6431, %v6535
        %v6554 = vadd.f32 %v6432, %v6538
        %v6555 = vadd.f32 %v6433, %v6543
        %v6556 = vadd.f32 %v6434, %v6546
        %v6557 = vld [vmem:[#allocation3 + $0xc] sm:$0xf]
        %v6558 = vld [vmem:[#allocation3 + $0x10] sm:$0xf]
        %v6559 = vld [vmem:[#allocation3 + $0x14] sm:$0xf]
        %v6560 = vld [vmem:[#allocation3 + $0x18] sm:$0xf]
        %v6561 = vld [vmem:[#allocation3 + $0x1c] sm:$0xf]
        %v6562 = vld [vmem:[#allocation3 + $0x20] sm:$0xf]
        %v6563 = vld [vmem:[#allocation3 + $0x24] sm:$0xf]
        %v6564 = vld [vmem:[#allocation3 + $0x28] sm:$0xf]
        %v6565 = vld [vmem:[#allocation3 + $0x2c] sm:$0x1]
        %v6566 = vsel %vm1137, %v6557, 0
        %v6567 = vsel %vm1138, %v6558, 0
        %v6568 = vsel %vm1139, %v6559, 0
        %v6569 = vsel %vm1140, %v6560, 0
        %v6570 = vsel %vm1141, %v6561, 0
        %v6571 = vsel %vm1142, %v6562, 0
        %v6572 = vsel %vm1143, %v6563, 0
        %v6573 = vsel %vm1144, %v6564, 0
        %v6574 = vsel %vm1145, %v6565, 0
        %s6575 = scalar_lea.vmem [#allocation10], 128
        %v6576 = vld [vmem:[%s6575] sm:$0xf]
        %v6577 = vld [vmem:[%s6575 + $0x4] sm:$0xf]
        %v6578 = vld [vmem:[%s6575 + $0x8] sm:$0xf]
        %v6579 = vld [vmem:[%s6575 + $0xc] sm:$0xf]
        %v6589 = vunpack.c.l.b16 %v6566
        %v6590 = vunpack.c.l.b16 %v6567
        %v6591 = vunpack.c.l.b16 %v6568
        %v6592 = vunpack.c.l.b16 %v6569
        %v6593 = vunpack.c.l.b16 %v6570
        %v6594 = vunpack.c.l.b16 %v6571
        %v6595 = vunpack.c.l.b16 %v6572
        %v6596 = vunpack.c.l.b16 %v6573
        %v6597 = vunpack.c.l.b16 %v6574
        %v6598 = vpack.c.b16 %v6590, %v6589
        %v6599 = vpack.c.b16 %v6592, %v6591
        %v6600 = vpack.c.b16 %v6594, %v6593
        %v6601 = vpack.c.b16 %v6596, %v6595
        %v6602 = vpack.c.b16 %v6597, %v6597
        %v6604 = vshrl.u32 %v6598, 16
        %v6606 = vshll.u32 %v6598, 16
        %v6608 = vrot.slane %v6606, 1
        %v6609 = vor.u32 %v6604, %v6608
        %v6611 = vshll.u32 %v6599, 16
        %v6613 = vrot.slane %v6611, 1
        %v6614 = vsel %vm1181, %v6609, %v6613
        %v6615 = vshrl.u32 %v6599, 16
        %v6617 = vor.u32 %v6615, %v6613
        %v6619 = vshll.u32 %v6600, 16
        %v6621 = vrot.slane %v6619, 1
        %v6622 = vsel %vm1181, %v6617, %v6621
        %v6623 = vshrl.u32 %v6600, 16
        %v6625 = vor.u32 %v6623, %v6621
        %v6627 = vshll.u32 %v6601, 16
        %v6629 = vrot.slane %v6627, 1
        %v6630 = vsel %vm1181, %v6625, %v6629
        %v6631 = vshrl.u32 %v6601, 16
        %v6633 = vor.u32 %v6631, %v6629
        %v6635 = vshll.u32 %v6602, 16
        %v6637 = vrot.slane %v6635, 1
        %v6638 = vsel %vm1181, %v6633, %v6637
        %v6643 = vunpack.c.l.b16 %v6576
        %v6644 = vunpack.c.l.b16 %v6577
        %v6645 = vunpack.c.l.b16 %v6578
        %v6646 = vunpack.c.l.b16 %v6579
        %v6647 = vpack.c.b16 %v6644, %v6643
        %v6648 = vpack.c.b16 %v6646, %v6645
        %v6652 = vsel %vm2379, %v6614, 0
        %v6655 = vsel %vm2379, %v6622, 0
        %v6658 = vsel %vm2379, %v6630, 0
        %v6661 = vsel %vm2379, %v6638, 0
        %6663 = vmatprep.subr.bf16.mxu0 0
        %6664 = vmatpush1.bf16.msra.mxu0 0
        %6665 = vmatprep.subr.bf16.mxu0 0
        %6666 = vmatpush1.bf16.msra.mxu0 0
        %6667 = vmatprep.subr.bf16.mxu0 0
        %6668 = vmatpush1.bf16.msra.mxu0 0
        %6669 = vmatprep.subr.bf16.mxu0 0
        %6670 = vmatpush1.bf16.msra.mxu0 0
        %6671 = vmatprep.subr.bf16.mxu0 0
        %6672 = vmatpush1.bf16.msra.mxu0 0
        %6673 = vmatprep.subr.bf16.mxu0 0
        %6674 = vmatpush1.bf16.msra.mxu0 0
        %6675 = vmatprep.subr.bf16.mxu0 0
        %6676 = vmatpush1.bf16.msra.mxu0 %v6648
        %6677 = vmatprep.subr.bf16.mxu0 0
        %6678 = vmatpush1.bf16.msra.mxu0 %v6647
        %6679 = vmatprep.subr.bf16.mxu0 0
        %6680 = vmatpush2.bf16.msra.mxu0 0
        %6681 = vmatprep.subr.bf16.mxu0 0
        %6682 = vmatpush2.bf16.msra.mxu0 0
        %6683 = vmatprep.subr.bf16.mxu0 0
        %6684 = vmatpush2.bf16.msra.mxu0 0
        %6685 = vmatprep.subr.bf16.mxu0 0
        %6686 = vmatpush2.bf16.msra.mxu0 0
        %6687 = vmatprep.subr.bf16.mxu0 0
        %6688 = vmatpush2.bf16.msra.mxu0 0
        %6689 = vmatprep.subr.bf16.mxu0 0
        %6690 = vmatpush2.bf16.msra.mxu0 0
        %6691 = vmatprep.subr.bf16.mxu0 0
        %6692 = vmatpush2.bf16.msra.mxu0 0
        %6693 = vmatprep.subr.bf16.mxu0 0
        %6694 = vmatpush2.bf16.msra.mxu0 0
        %6695 = vmatprep.mubr.bf16.mxu0 0
        %6696 = vmatmul.mubr.bf16.gmra.mxu0 %v6652
        %v6697 = vpop.f32.mrf.mxu0
        %v6698 = vadd.f32 0.0, %v6697
        %v6699 = vpop.f32.mrf.mxu0
        %v6700 = vpop.f32.mrf.mxu0
        %v6701 = vadd.f32 0.0, %v6700
        %v6702 = vpop.f32.mrf.mxu0
        %6703 = vmatprep.mubr.bf16.mxu0 0
        %6704 = vmatmul.mubr.bf16.gmra.mxu0 %v6655
        %v6705 = vpop.f32.mrf.mxu0
        %v6706 = vadd.f32 0.0, %v6705
        %v6707 = vpop.f32.mrf.mxu0
        %v6708 = vpop.f32.mrf.mxu0
        %v6709 = vadd.f32 0.0, %v6708
        %v6710 = vpop.f32.mrf.mxu0
        %6711 = vmatprep.mubr.bf16.mxu0 0
        %6712 = vmatmul.mubr.bf16.gmra.mxu0 %v6658
        %v6713 = vpop.f32.mrf.mxu0
        %v6714 = vadd.f32 0.0, %v6713
        %v6715 = vpop.f32.mrf.mxu0
        %v6716 = vpop.f32.mrf.mxu0
        %v6717 = vadd.f32 0.0, %v6716
        %v6718 = vpop.f32.mrf.mxu0
        %6719 = vmatprep.mubr.bf16.mxu0 0
        %6720 = vmatmul.mubr.bf16.gmra.mxu0 %v6661
        %v6721 = vpop.f32.mrf.mxu0
        %v6722 = vadd.f32 0.0, %v6721
        %v6723 = vpop.f32.mrf.mxu0
        %v6724 = vpop.f32.mrf.mxu0
        %v6725 = vadd.f32 0.0, %v6724
        %v6726 = vpop.f32.mrf.mxu0
        %6727 = vdwg.mxu0
        %v6728 = vadd.f32 %v6549, %v6698
        %v6729 = vadd.f32 %v6550, %v6701
        %v6730 = vadd.f32 %v6551, %v6706
        %v6731 = vadd.f32 %v6552, %v6709
        %v6732 = vadd.f32 %v6553, %v6714
        %v6733 = vadd.f32 %v6554, %v6717
        %v6734 = vadd.f32 %v6555, %v6722
        %v6735 = vadd.f32 %v6556, %v6725
        %v6736 = vmax.f32 %v6728, 0.0
        %v6737 = vmax.f32 %v6729, 0.0
        %v6738 = vmax.f32 %v6730, 0.0
        %v6739 = vmax.f32 %v6731, 0.0
        %v6740 = vmax.f32 %v6732, 0.0
        %v6741 = vmax.f32 %v6733, 0.0
        %v6742 = vmax.f32 %v6734, 0.0
        %v6743 = vmax.f32 %v6735, 0.0
        %v6744 = vpack.c.bf16 %v6737, %v6736
        %v6745 = vpack.c.bf16 %v6739, %v6738
        %v6746 = vpack.c.bf16 %v6741, %v6740
        %v6747 = vpack.c.bf16 %v6743, %v6742
        %v6752 = vunpack.c.l.b16 %v6744
        %v6753 = vunpack.c.h.b16 %v6744
        %v6754 = vunpack.c.l.b16 %v6745
        %v6755 = vunpack.c.h.b16 %v6745
        %v6756 = vunpack.c.l.b16 %v6746
        %v6757 = vunpack.c.h.b16 %v6746
        %v6758 = vunpack.c.l.b16 %v6747
        %v6759 = vunpack.c.h.b16 %v6747
        %v6760 = vpack.c.b16 %v6752, %v6752
        %v6761 = vpack.c.b16 %v6753, %v6753
        %v6762 = vpack.c.b16 %v6754, %v6754
        %v6763 = vpack.c.b16 %v6755, %v6755
        %v6764 = vpack.c.b16 %v6756, %v6756
        %v6765 = vpack.c.b16 %v6757, %v6757
        %v6766 = vpack.c.b16 %v6758, %v6758
        %v6767 = vpack.c.b16 %v6759, %v6759
        %6776 = vst.msk [vmem:[#allocation4 + $0x8] sm:$0xf] %vm452, %v6760
        %6777 = vst.msk [vmem:[#allocation4 + $0xc] sm:$0xf] %vm452, %v6761
        %6778 = vst.msk [vmem:[#allocation4 + $0x10] sm:$0xf] %vm452, %v6762
        %6779 = vst.msk [vmem:[#allocation4 + $0x14] sm:$0xf] %vm452, %v6763
        %6780 = vst.msk [vmem:[#allocation4 + $0x18] sm:$0xf] %vm452, %v6764
        %6781 = vst.msk [vmem:[#allocation4 + $0x1c] sm:$0xf] %vm452, %v6765
        %6782 = vst.msk [vmem:[#allocation4 + $0x20] sm:$0xf] %vm452, %v6766
        %6783 = vst.msk [vmem:[#allocation4 + $0x24] sm:$0xf] %vm452, %v6767
        %v6784 = vld [vmem:[%s10] sm:$0x1]
        %v6786 = vlaneseq
        %v6787 = vshrl.u32 %v6786, 7
        %v6788 = vsub.s32 0, %v6787
        %v6789 = vrot.slane %v6784, %v6788
        %v6791 = vld [vmem:[#allocation4] sm:$0x8]
        %v6792 = vld [vmem:[#allocation4 + $0x4] sm:$0xf]
        %v6793 = vld [vmem:[#allocation4 + $0x8] sm:$0xf]
        %v6794 = vld [vmem:[#allocation4 + $0xc] sm:$0xf]
        %v6795 = vld [vmem:[#allocation4 + $0x10] sm:$0xf]
        %v6796 = vld [vmem:[#allocation4 + $0x14] sm:$0xf]
        %v6797 = vld [vmem:[#allocation4 + $0x18] sm:$0xf]
        %v6798 = vld [vmem:[#allocation4 + $0x1c] sm:$0xf]
        %v6799 = vld [vmem:[#allocation4 + $0x20] sm:$0xf]
        %v6800 = vsel %vm728, %v6791, 0
        %v6801 = vsel %vm729, %v6792, 0
        %v6802 = vsel %vm730, %v6793, 0
        %v6803 = vsel %vm731, %v6794, 0
        %v6804 = vsel %vm732, %v6795, 0
        %v6805 = vsel %vm733, %v6796, 0
        %v6806 = vsel %vm734, %v6797, 0
        %v6807 = vsel %vm735, %v6798, 0
        %v6808 = vsel %vm736, %v6799, 0
        %v6809 = vld [vmem:[#allocation11] sm:$0xf]
        %v6810 = vld [vmem:[#allocation11 + $0x4] sm:$0xf]
        %v6811 = vld [vmem:[#allocation11 + $0x8] sm:$0xf]
        %v6812 = vld [vmem:[#allocation11 + $0xc] sm:$0xf]
        %v6822 = vunpack.c.l.b16 %v6800
        %v6823 = vunpack.c.l.b16 %v6801
        %v6824 = vunpack.c.l.b16 %v6802
        %v6825 = vunpack.c.l.b16 %v6803
        %v6826 = vunpack.c.l.b16 %v6804
        %v6827 = vunpack.c.l.b16 %v6805
        %v6828 = vunpack.c.l.b16 %v6806
        %v6829 = vunpack.c.l.b16 %v6807
        %v6830 = vunpack.c.l.b16 %v6808
        %v6831 = vpack.c.b16 %v6823, %v6822
        %v6832 = vpack.c.b16 %v6825, %v6824
        %v6833 = vpack.c.b16 %v6827, %v6826
        %v6834 = vpack.c.b16 %v6829, %v6828
        %v6835 = vpack.c.b16 %v6830, %v6830
        %v6837 = vshrl.u32 %v6831, 16
        %v6839 = vrot.slane %v6837, 3
        %v6840 = vshll.u32 %v6831, 16
        %v6842 = vrot.slane %v6840, 4
        %v6843 = vor.u32 %v6839, %v6842
        %v6845 = vshrl.u32 %v6832, 16
        %v6847 = vrot.slane %v6845, 3
        %v6848 = vshll.u32 %v6832, 16
        %v6850 = vrot.slane %v6848, 4
        %v6851 = vor.u32 %v6847, %v6850
        %v6852 = vsel %vm771, %v6843, %v6851
        %v6854 = vshrl.u32 %v6833, 16
        %v6856 = vrot.slane %v6854, 3
        %v6857 = vshll.u32 %v6833, 16
        %v6859 = vrot.slane %v6857, 4
        %v6860 = vor.u32 %v6856, %v6859
        %v6861 = vsel %vm771, %v6851, %v6860
        %v6863 = vshrl.u32 %v6834, 16
        %v6865 = vrot.slane %v6863, 3
        %v6866 = vshll.u32 %v6834, 16
        %v6868 = vrot.slane %v6866, 4
        %v6869 = vor.u32 %v6865, %v6868
        %v6870 = vsel %vm771, %v6860, %v6869
        %v6872 = vshrl.u32 %v6835, 16
        %v6874 = vrot.slane %v6872, 3
        %v6875 = vshll.u32 %v6835, 16
        %v6877 = vrot.slane %v6875, 4
        %v6878 = vor.u32 %v6874, %v6877
        %v6879 = vsel %vm771, %v6869, %v6878
        %v6884 = vunpack.c.l.b16 %v6809
        %v6885 = vunpack.c.l.b16 %v6810
        %v6886 = vunpack.c.l.b16 %v6811
        %v6887 = vunpack.c.l.b16 %v6812
        %v6888 = vpack.c.b16 %v6885, %v6884
        %v6889 = vpack.c.b16 %v6887, %v6886
        %v6893 = vsel %vm2379, %v6852, 0
        %v6896 = vsel %vm2379, %v6861, 0
        %v6899 = vsel %vm2379, %v6870, 0
        %v6902 = vsel %vm2379, %v6879, 0
        %6904 = vmatprep.subr.bf16.mxu0 0
        %6905 = vmatpush1.bf16.msra.mxu0 0
        %6906 = vmatprep.subr.bf16.mxu0 0
        %6907 = vmatpush1.bf16.msra.mxu0 0
        %6908 = vmatprep.subr.bf16.mxu0 0
        %6909 = vmatpush1.bf16.msra.mxu0 0
        %6910 = vmatprep.subr.bf16.mxu0 0
        %6911 = vmatpush1.bf16.msra.mxu0 0
        %6912 = vmatprep.subr.bf16.mxu0 0
        %6913 = vmatpush1.bf16.msra.mxu0 0
        %6914 = vmatprep.subr.bf16.mxu0 0
        %6915 = vmatpush1.bf16.msra.mxu0 0
        %6916 = vmatprep.subr.bf16.mxu0 0
        %6917 = vmatpush1.bf16.msra.mxu0 %v6889
        %6918 = vmatprep.subr.bf16.mxu0 0
        %6919 = vmatpush1.bf16.msra.mxu0 %v6888
        %6920 = vmatprep.subr.bf16.mxu0 0
        %6921 = vmatpush2.bf16.msra.mxu0 0
        %6922 = vmatprep.subr.bf16.mxu0 0
        %6923 = vmatpush2.bf16.msra.mxu0 0
        %6924 = vmatprep.subr.bf16.mxu0 0
        %6925 = vmatpush2.bf16.msra.mxu0 0
        %6926 = vmatprep.subr.bf16.mxu0 0
        %6927 = vmatpush2.bf16.msra.mxu0 0
        %6928 = vmatprep.subr.bf16.mxu0 0
        %6929 = vmatpush2.bf16.msra.mxu0 0
        %6930 = vmatprep.subr.bf16.mxu0 0
        %6931 = vmatpush2.bf16.msra.mxu0 0
        %6932 = vmatprep.subr.bf16.mxu0 0
        %6933 = vmatpush2.bf16.msra.mxu0 0
        %6934 = vmatprep.subr.bf16.mxu0 0
        %6935 = vmatpush2.bf16.msra.mxu0 0
        %6936 = vmatprep.mubr.bf16.mxu0 0
        %6937 = vmatmul.mubr.bf16.gmra.mxu0 %v6893
        %v6938 = vpop.f32.mrf.mxu0
        %v6939 = vadd.f32 0.0, %v6938
        %v6940 = vpop.f32.mrf.mxu0
        %v6941 = vpop.f32.mrf.mxu0
        %v6942 = vadd.f32 0.0, %v6941
        %v6943 = vpop.f32.mrf.mxu0
        %6944 = vmatprep.mubr.bf16.mxu0 0
        %6945 = vmatmul.mubr.bf16.gmra.mxu0 %v6896
        %v6946 = vpop.f32.mrf.mxu0
        %v6947 = vadd.f32 0.0, %v6946
        %v6948 = vpop.f32.mrf.mxu0
        %v6949 = vpop.f32.mrf.mxu0
        %v6950 = vadd.f32 0.0, %v6949
        %v6951 = vpop.f32.mrf.mxu0
        %6952 = vmatprep.mubr.bf16.mxu0 0
        %6953 = vmatmul.mubr.bf16.gmra.mxu0 %v6899
        %v6954 = vpop.f32.mrf.mxu0
        %v6955 = vadd.f32 0.0, %v6954
        %v6956 = vpop.f32.mrf.mxu0
        %v6957 = vpop.f32.mrf.mxu0
        %v6958 = vadd.f32 0.0, %v6957
        %v6959 = vpop.f32.mrf.mxu0
        %6960 = vmatprep.mubr.bf16.mxu0 0
        %6961 = vmatmul.mubr.bf16.gmra.mxu0 %v6902
        %v6962 = vpop.f32.mrf.mxu0
        %v6963 = vadd.f32 0.0, %v6962
        %v6964 = vpop.f32.mrf.mxu0
        %v6965 = vpop.f32.mrf.mxu0
        %v6966 = vadd.f32 0.0, %v6965
        %v6967 = vpop.f32.mrf.mxu0
        %6968 = vdwg.mxu0
        %v6969 = vadd.f32 %v6789, %v6939
        %v6970 = vadd.f32 %v6789, %v6942
        %v6971 = vadd.f32 %v6789, %v6947
        %v6972 = vadd.f32 %v6789, %v6950
        %v6973 = vadd.f32 %v6789, %v6955
        %v6974 = vadd.f32 %v6789, %v6958
        %v6975 = vadd.f32 %v6789, %v6963
        %v6976 = vadd.f32 %v6789, %v6966
        %s6977 = scalar_lea.vmem [#allocation11], 16
        %v6978 = vld [vmem:[%s6977] sm:$0xf]
        %v6979 = vld [vmem:[%s6977 + $0x4] sm:$0xf]
        %v6980 = vld [vmem:[%s6977 + $0x8] sm:$0xf]
        %v6981 = vld [vmem:[%s6977 + $0xc] sm:$0xf]
        %v6990 = vunpack.c.l.b16 %v6792
        %v6991 = vunpack.c.l.b16 %v6793
        %v6992 = vunpack.c.l.b16 %v6794
        %v6993 = vunpack.c.l.b16 %v6795
        %v6994 = vunpack.c.l.b16 %v6796
        %v6995 = vunpack.c.l.b16 %v6797
        %v6996 = vunpack.c.l.b16 %v6798
        %v6997 = vunpack.c.l.b16 %v6799
        %v6998 = vpack.c.b16 %v6991, %v6990
        %v6999 = vpack.c.b16 %v6993, %v6992
        %v7000 = vpack.c.b16 %v6995, %v6994
        %v7001 = vpack.c.b16 %v6997, %v6996
        %v7006 = vunpack.c.l.b16 %v6978
        %v7007 = vunpack.c.l.b16 %v6979
        %v7008 = vunpack.c.l.b16 %v6980
        %v7009 = vunpack.c.l.b16 %v6981
        %v7010 = vpack.c.b16 %v7007, %v7006
        %v7011 = vpack.c.b16 %v7009, %v7008
        %v7015 = vsel %vm2379, %v6998, 0
        %v7018 = vsel %vm2379, %v6999, 0
        %v7021 = vsel %vm2379, %v7000, 0
        %v7024 = vsel %vm2379, %v7001, 0
        %7026 = vmatprep.subr.bf16.mxu0 0
        %7027 = vmatpush1.bf16.msra.mxu0 0
        %7028 = vmatprep.subr.bf16.mxu0 0
        %7029 = vmatpush1.bf16.msra.mxu0 0
        %7030 = vmatprep.subr.bf16.mxu0 0
        %7031 = vmatpush1.bf16.msra.mxu0 0
        %7032 = vmatprep.subr.bf16.mxu0 0
        %7033 = vmatpush1.bf16.msra.mxu0 0
        %7034 = vmatprep.subr.bf16.mxu0 0
        %7035 = vmatpush1.bf16.msra.mxu0 0
        %7036 = vmatprep.subr.bf16.mxu0 0
        %7037 = vmatpush1.bf16.msra.mxu0 0
        %7038 = vmatprep.subr.bf16.mxu0 0
        %7039 = vmatpush1.bf16.msra.mxu0 %v7011
        %7040 = vmatprep.subr.bf16.mxu0 0
        %7041 = vmatpush1.bf16.msra.mxu0 %v7010
        %7042 = vmatprep.subr.bf16.mxu0 0
        %7043 = vmatpush2.bf16.msra.mxu0 0
        %7044 = vmatprep.subr.bf16.mxu0 0
        %7045 = vmatpush2.bf16.msra.mxu0 0
        %7046 = vmatprep.subr.bf16.mxu0 0
        %7047 = vmatpush2.bf16.msra.mxu0 0
        %7048 = vmatprep.subr.bf16.mxu0 0
        %7049 = vmatpush2.bf16.msra.mxu0 0
        %7050 = vmatprep.subr.bf16.mxu0 0
        %7051 = vmatpush2.bf16.msra.mxu0 0
        %7052 = vmatprep.subr.bf16.mxu0 0
        %7053 = vmatpush2.bf16.msra.mxu0 0
        %7054 = vmatprep.subr.bf16.mxu0 0
        %7055 = vmatpush2.bf16.msra.mxu0 0
        %7056 = vmatprep.subr.bf16.mxu0 0
        %7057 = vmatpush2.bf16.msra.mxu0 0
        %7058 = vmatprep.mubr.bf16.mxu0 0
        %7059 = vmatmul.mubr.bf16.gmra.mxu0 %v7015
        %v7060 = vpop.f32.mrf.mxu0
        %v7061 = vadd.f32 0.0, %v7060
        %v7062 = vpop.f32.mrf.mxu0
        %v7063 = vpop.f32.mrf.mxu0
        %v7064 = vadd.f32 0.0, %v7063
        %v7065 = vpop.f32.mrf.mxu0
        %7066 = vmatprep.mubr.bf16.mxu0 0
        %7067 = vmatmul.mubr.bf16.gmra.mxu0 %v7018
        %v7068 = vpop.f32.mrf.mxu0
        %v7069 = vadd.f32 0.0, %v7068
        %v7070 = vpop.f32.mrf.mxu0
        %v7071 = vpop.f32.mrf.mxu0
        %v7072 = vadd.f32 0.0, %v7071
        %v7073 = vpop.f32.mrf.mxu0
        %7074 = vmatprep.mubr.bf16.mxu0 0
        %7075 = vmatmul.mubr.bf16.gmra.mxu0 %v7021
        %v7076 = vpop.f32.mrf.mxu0
        %v7077 = vadd.f32 0.0, %v7076
        %v7078 = vpop.f32.mrf.mxu0
        %v7079 = vpop.f32.mrf.mxu0
        %v7080 = vadd.f32 0.0, %v7079
        %v7081 = vpop.f32.mrf.mxu0
        %7082 = vmatprep.mubr.bf16.mxu0 0
        %7083 = vmatmul.mubr.bf16.gmra.mxu0 %v7024
        %v7084 = vpop.f32.mrf.mxu0
        %v7085 = vadd.f32 0.0, %v7084
        %v7086 = vpop.f32.mrf.mxu0
        %v7087 = vpop.f32.mrf.mxu0
        %v7088 = vadd.f32 0.0, %v7087
        %v7089 = vpop.f32.mrf.mxu0
        %7090 = vdwg.mxu0
        %v7091 = vadd.f32 %v6969, %v7061
        %v7092 = vadd.f32 %v6970, %v7064
        %v7093 = vadd.f32 %v6971, %v7069
        %v7094 = vadd.f32 %v6972, %v7072
        %v7095 = vadd.f32 %v6973, %v7077
        %v7096 = vadd.f32 %v6974, %v7080
        %v7097 = vadd.f32 %v6975, %v7085
        %v7098 = vadd.f32 %v6976, %v7088
        %v7099 = vld [vmem:[#allocation4 + $0x4] sm:$0xf]
        %v7100 = vld [vmem:[#allocation4 + $0x8] sm:$0xf]
        %v7101 = vld [vmem:[#allocation4 + $0xc] sm:$0xf]
        %v7102 = vld [vmem:[#allocation4 + $0x10] sm:$0xf]
        %v7103 = vld [vmem:[#allocation4 + $0x14] sm:$0xf]
        %v7104 = vld [vmem:[#allocation4 + $0x18] sm:$0xf]
        %v7105 = vld [vmem:[#allocation4 + $0x1c] sm:$0xf]
        %v7106 = vld [vmem:[#allocation4 + $0x20] sm:$0xf]
        %v7107 = vld [vmem:[#allocation4 + $0x24] sm:$0x1]
        %v7108 = vsel %vm1137, %v7099, 0
        %v7109 = vsel %vm1138, %v7100, 0
        %v7110 = vsel %vm1139, %v7101, 0
        %v7111 = vsel %vm1140, %v7102, 0
        %v7112 = vsel %vm1141, %v7103, 0
        %v7113 = vsel %vm1142, %v7104, 0
        %v7114 = vsel %vm1143, %v7105, 0
        %v7115 = vsel %vm1144, %v7106, 0
        %v7116 = vsel %vm1145, %v7107, 0
        %s7117 = scalar_lea.vmem [#allocation11], 32
        %v7118 = vld [vmem:[%s7117] sm:$0xf]
        %v7119 = vld [vmem:[%s7117 + $0x4] sm:$0xf]
        %v7120 = vld [vmem:[%s7117 + $0x8] sm:$0xf]
        %v7121 = vld [vmem:[%s7117 + $0xc] sm:$0xf]
        %v7131 = vunpack.c.l.b16 %v7108
        %v7132 = vunpack.c.l.b16 %v7109
        %v7133 = vunpack.c.l.b16 %v7110
        %v7134 = vunpack.c.l.b16 %v7111
        %v7135 = vunpack.c.l.b16 %v7112
        %v7136 = vunpack.c.l.b16 %v7113
        %v7137 = vunpack.c.l.b16 %v7114
        %v7138 = vunpack.c.l.b16 %v7115
        %v7139 = vunpack.c.l.b16 %v7116
        %v7140 = vpack.c.b16 %v7132, %v7131
        %v7141 = vpack.c.b16 %v7134, %v7133
        %v7142 = vpack.c.b16 %v7136, %v7135
        %v7143 = vpack.c.b16 %v7138, %v7137
        %v7144 = vpack.c.b16 %v7139, %v7139
        %v7146 = vshrl.u32 %v7140, 16
        %v7148 = vshll.u32 %v7140, 16
        %v7150 = vrot.slane %v7148, 1
        %v7151 = vor.u32 %v7146, %v7150
        %v7153 = vshll.u32 %v7141, 16
        %v7155 = vrot.slane %v7153, 1
        %v7156 = vsel %vm1181, %v7151, %v7155
        %v7157 = vshrl.u32 %v7141, 16
        %v7159 = vor.u32 %v7157, %v7155
        %v7161 = vshll.u32 %v7142, 16
        %v7163 = vrot.slane %v7161, 1
        %v7164 = vsel %vm1181, %v7159, %v7163
        %v7165 = vshrl.u32 %v7142, 16
        %v7167 = vor.u32 %v7165, %v7163
        %v7169 = vshll.u32 %v7143, 16
        %v7171 = vrot.slane %v7169, 1
        %v7172 = vsel %vm1181, %v7167, %v7171
        %v7173 = vshrl.u32 %v7143, 16
        %v7175 = vor.u32 %v7173, %v7171
        %v7177 = vshll.u32 %v7144, 16
        %v7179 = vrot.slane %v7177, 1
        %v7180 = vsel %vm1181, %v7175, %v7179
        %v7185 = vunpack.c.l.b16 %v7118
        %v7186 = vunpack.c.l.b16 %v7119
        %v7187 = vunpack.c.l.b16 %v7120
        %v7188 = vunpack.c.l.b16 %v7121
        %v7189 = vpack.c.b16 %v7186, %v7185
        %v7190 = vpack.c.b16 %v7188, %v7187
        %v7194 = vsel %vm2379, %v7156, 0
        %v7197 = vsel %vm2379, %v7164, 0
        %v7200 = vsel %vm2379, %v7172, 0
        %v7203 = vsel %vm2379, %v7180, 0
        %7205 = vmatprep.subr.bf16.mxu0 0
        %7206 = vmatpush1.bf16.msra.mxu0 0
        %7207 = vmatprep.subr.bf16.mxu0 0
        %7208 = vmatpush1.bf16.msra.mxu0 0
        %7209 = vmatprep.subr.bf16.mxu0 0
        %7210 = vmatpush1.bf16.msra.mxu0 0
        %7211 = vmatprep.subr.bf16.mxu0 0
        %7212 = vmatpush1.bf16.msra.mxu0 0
        %7213 = vmatprep.subr.bf16.mxu0 0
        %7214 = vmatpush1.bf16.msra.mxu0 0
        %7215 = vmatprep.subr.bf16.mxu0 0
        %7216 = vmatpush1.bf16.msra.mxu0 0
        %7217 = vmatprep.subr.bf16.mxu0 0
        %7218 = vmatpush1.bf16.msra.mxu0 %v7190
        %7219 = vmatprep.subr.bf16.mxu0 0
        %7220 = vmatpush1.bf16.msra.mxu0 %v7189
        %7221 = vmatprep.subr.bf16.mxu0 0
        %7222 = vmatpush2.bf16.msra.mxu0 0
        %7223 = vmatprep.subr.bf16.mxu0 0
        %7224 = vmatpush2.bf16.msra.mxu0 0
        %7225 = vmatprep.subr.bf16.mxu0 0
        %7226 = vmatpush2.bf16.msra.mxu0 0
        %7227 = vmatprep.subr.bf16.mxu0 0
        %7228 = vmatpush2.bf16.msra.mxu0 0
        %7229 = vmatprep.subr.bf16.mxu0 0
        %7230 = vmatpush2.bf16.msra.mxu0 0
        %7231 = vmatprep.subr.bf16.mxu0 0
        %7232 = vmatpush2.bf16.msra.mxu0 0
        %7233 = vmatprep.subr.bf16.mxu0 0
        %7234 = vmatpush2.bf16.msra.mxu0 0
        %7235 = vmatprep.subr.bf16.mxu0 0
        %7236 = vmatpush2.bf16.msra.mxu0 0
        %7237 = vmatprep.mubr.bf16.mxu0 0
        %7238 = vmatmul.mubr.bf16.gmra.mxu0 %v7194
        %v7239 = vpop.f32.mrf.mxu0
        %v7240 = vadd.f32 0.0, %v7239
        %v7241 = vpop.f32.mrf.mxu0
        %v7242 = vpop.f32.mrf.mxu0
        %v7243 = vadd.f32 0.0, %v7242
        %v7244 = vpop.f32.mrf.mxu0
        %7245 = vmatprep.mubr.bf16.mxu0 0
        %7246 = vmatmul.mubr.bf16.gmra.mxu0 %v7197
        %v7247 = vpop.f32.mrf.mxu0
        %v7248 = vadd.f32 0.0, %v7247
        %v7249 = vpop.f32.mrf.mxu0
        %v7250 = vpop.f32.mrf.mxu0
        %v7251 = vadd.f32 0.0, %v7250
        %v7252 = vpop.f32.mrf.mxu0
        %7253 = vmatprep.mubr.bf16.mxu0 0
        %7254 = vmatmul.mubr.bf16.gmra.mxu0 %v7200
        %v7255 = vpop.f32.mrf.mxu0
        %v7256 = vadd.f32 0.0, %v7255
        %v7257 = vpop.f32.mrf.mxu0
        %v7258 = vpop.f32.mrf.mxu0
        %v7259 = vadd.f32 0.0, %v7258
        %v7260 = vpop.f32.mrf.mxu0
        %7261 = vmatprep.mubr.bf16.mxu0 0
        %7262 = vmatmul.mubr.bf16.gmra.mxu0 %v7203
        %v7263 = vpop.f32.mrf.mxu0
        %v7264 = vadd.f32 0.0, %v7263
        %v7265 = vpop.f32.mrf.mxu0
        %v7266 = vpop.f32.mrf.mxu0
        %v7267 = vadd.f32 0.0, %v7266
        %v7268 = vpop.f32.mrf.mxu0
        %7269 = vdwg.mxu0
        %v7270 = vadd.f32 %v7091, %v7240
        %v7271 = vadd.f32 %v7092, %v7243
        %v7272 = vadd.f32 %v7093, %v7248
        %v7273 = vadd.f32 %v7094, %v7251
        %v7274 = vadd.f32 %v7095, %v7256
        %v7275 = vadd.f32 %v7096, %v7259
        %v7276 = vadd.f32 %v7097, %v7264
        %v7277 = vadd.f32 %v7098, %v7267
        %v7278 = vld [vmem:[#allocation4 + $0x4] sm:$0x8]
        %v7279 = vld [vmem:[#allocation4 + $0x24] sm:$0xf]
        %v7280 = vsel %vm728, %v7278, 0
        %v7281 = vsel %vm729, %v7100, 0
        %v7282 = vsel %vm730, %v7101, 0
        %v7283 = vsel %vm731, %v7102, 0
        %v7284 = vsel %vm732, %v7103, 0
        %v7285 = vsel %vm733, %v7104, 0
        %v7286 = vsel %vm734, %v7105, 0
        %v7287 = vsel %vm735, %v7106, 0
        %v7288 = vsel %vm736, %v7279, 0
        %s7289 = scalar_lea.vmem [#allocation11], 48
        %v7290 = vld [vmem:[%s7289] sm:$0xf]
        %v7291 = vld [vmem:[%s7289 + $0x4] sm:$0xf]
        %v7292 = vld [vmem:[%s7289 + $0x8] sm:$0xf]
        %v7293 = vld [vmem:[%s7289 + $0xc] sm:$0xf]
        %v7303 = vunpack.c.l.b16 %v7280
        %v7304 = vunpack.c.l.b16 %v7281
        %v7305 = vunpack.c.l.b16 %v7282
        %v7306 = vunpack.c.l.b16 %v7283
        %v7307 = vunpack.c.l.b16 %v7284
        %v7308 = vunpack.c.l.b16 %v7285
        %v7309 = vunpack.c.l.b16 %v7286
        %v7310 = vunpack.c.l.b16 %v7287
        %v7311 = vunpack.c.l.b16 %v7288
        %v7312 = vpack.c.b16 %v7304, %v7303
        %v7313 = vpack.c.b16 %v7306, %v7305
        %v7314 = vpack.c.b16 %v7308, %v7307
        %v7315 = vpack.c.b16 %v7310, %v7309
        %v7316 = vpack.c.b16 %v7311, %v7311
        %v7318 = vshrl.u32 %v7312, 16
        %v7320 = vrot.slane %v7318, 3
        %v7321 = vshll.u32 %v7312, 16
        %v7323 = vrot.slane %v7321, 4
        %v7324 = vor.u32 %v7320, %v7323
        %v7326 = vshrl.u32 %v7313, 16
        %v7328 = vrot.slane %v7326, 3
        %v7329 = vshll.u32 %v7313, 16
        %v7331 = vrot.slane %v7329, 4
        %v7332 = vor.u32 %v7328, %v7331
        %v7333 = vsel %vm771, %v7324, %v7332
        %v7335 = vshrl.u32 %v7314, 16
        %v7337 = vrot.slane %v7335, 3
        %v7338 = vshll.u32 %v7314, 16
        %v7340 = vrot.slane %v7338, 4
        %v7341 = vor.u32 %v7337, %v7340
        %v7342 = vsel %vm771, %v7332, %v7341
        %v7344 = vshrl.u32 %v7315, 16
        %v7346 = vrot.slane %v7344, 3
        %v7347 = vshll.u32 %v7315, 16
        %v7349 = vrot.slane %v7347, 4
        %v7350 = vor.u32 %v7346, %v7349
        %v7351 = vsel %vm771, %v7341, %v7350
        %v7353 = vshrl.u32 %v7316, 16
        %v7355 = vrot.slane %v7353, 3
        %v7356 = vshll.u32 %v7316, 16
        %v7358 = vrot.slane %v7356, 4
        %v7359 = vor.u32 %v7355, %v7358
        %v7360 = vsel %vm771, %v7350, %v7359
        %v7365 = vunpack.c.l.b16 %v7290
        %v7366 = vunpack.c.l.b16 %v7291
        %v7367 = vunpack.c.l.b16 %v7292
        %v7368 = vunpack.c.l.b16 %v7293
        %v7369 = vpack.c.b16 %v7366, %v7365
        %v7370 = vpack.c.b16 %v7368, %v7367
        %v7374 = vsel %vm2379, %v7333, 0
        %v7377 = vsel %vm2379, %v7342, 0
        %v7380 = vsel %vm2379, %v7351, 0
        %v7383 = vsel %vm2379, %v7360, 0
        %7385 = vmatprep.subr.bf16.mxu0 0
        %7386 = vmatpush1.bf16.msra.mxu0 0
        %7387 = vmatprep.subr.bf16.mxu0 0
        %7388 = vmatpush1.bf16.msra.mxu0 0
        %7389 = vmatprep.subr.bf16.mxu0 0
        %7390 = vmatpush1.bf16.msra.mxu0 0
        %7391 = vmatprep.subr.bf16.mxu0 0
        %7392 = vmatpush1.bf16.msra.mxu0 0
        %7393 = vmatprep.subr.bf16.mxu0 0
        %7394 = vmatpush1.bf16.msra.mxu0 0
        %7395 = vmatprep.subr.bf16.mxu0 0
        %7396 = vmatpush1.bf16.msra.mxu0 0
        %7397 = vmatprep.subr.bf16.mxu0 0
        %7398 = vmatpush1.bf16.msra.mxu0 %v7370
        %7399 = vmatprep.subr.bf16.mxu0 0
        %7400 = vmatpush1.bf16.msra.mxu0 %v7369
        %7401 = vmatprep.subr.bf16.mxu0 0
        %7402 = vmatpush2.bf16.msra.mxu0 0
        %7403 = vmatprep.subr.bf16.mxu0 0
        %7404 = vmatpush2.bf16.msra.mxu0 0
        %7405 = vmatprep.subr.bf16.mxu0 0
        %7406 = vmatpush2.bf16.msra.mxu0 0
        %7407 = vmatprep.subr.bf16.mxu0 0
        %7408 = vmatpush2.bf16.msra.mxu0 0
        %7409 = vmatprep.subr.bf16.mxu0 0
        %7410 = vmatpush2.bf16.msra.mxu0 0
        %7411 = vmatprep.subr.bf16.mxu0 0
        %7412 = vmatpush2.bf16.msra.mxu0 0
        %7413 = vmatprep.subr.bf16.mxu0 0
        %7414 = vmatpush2.bf16.msra.mxu0 0
        %7415 = vmatprep.subr.bf16.mxu0 0
        %7416 = vmatpush2.bf16.msra.mxu0 0
        %7417 = vmatprep.mubr.bf16.mxu0 0
        %7418 = vmatmul.mubr.bf16.gmra.mxu0 %v7374
        %v7419 = vpop.f32.mrf.mxu0
        %v7420 = vadd.f32 0.0, %v7419
        %v7421 = vpop.f32.mrf.mxu0
        %v7422 = vpop.f32.mrf.mxu0
        %v7423 = vadd.f32 0.0, %v7422
        %v7424 = vpop.f32.mrf.mxu0
        %7425 = vmatprep.mubr.bf16.mxu0 0
        %7426 = vmatmul.mubr.bf16.gmra.mxu0 %v7377
        %v7427 = vpop.f32.mrf.mxu0
        %v7428 = vadd.f32 0.0, %v7427
        %v7429 = vpop.f32.mrf.mxu0
        %v7430 = vpop.f32.mrf.mxu0
        %v7431 = vadd.f32 0.0, %v7430
        %v7432 = vpop.f32.mrf.mxu0
        %7433 = vmatprep.mubr.bf16.mxu0 0
        %7434 = vmatmul.mubr.bf16.gmra.mxu0 %v7380
        %v7435 = vpop.f32.mrf.mxu0
        %v7436 = vadd.f32 0.0, %v7435
        %v7437 = vpop.f32.mrf.mxu0
        %v7438 = vpop.f32.mrf.mxu0
        %v7439 = vadd.f32 0.0, %v7438
        %v7440 = vpop.f32.mrf.mxu0
        %7441 = vmatprep.mubr.bf16.mxu0 0
        %7442 = vmatmul.mubr.bf16.gmra.mxu0 %v7383
        %v7443 = vpop.f32.mrf.mxu0
        %v7444 = vadd.f32 0.0, %v7443
        %v7445 = vpop.f32.mrf.mxu0
        %v7446 = vpop.f32.mrf.mxu0
        %v7447 = vadd.f32 0.0, %v7446
        %v7448 = vpop.f32.mrf.mxu0
        %7449 = vdwg.mxu0
        %v7450 = vadd.f32 %v7270, %v7420
        %v7451 = vadd.f32 %v7271, %v7423
        %v7452 = vadd.f32 %v7272, %v7428
        %v7453 = vadd.f32 %v7273, %v7431
        %v7454 = vadd.f32 %v7274, %v7436
        %v7455 = vadd.f32 %v7275, %v7439
        %v7456 = vadd.f32 %v7276, %v7444
        %v7457 = vadd.f32 %v7277, %v7447
        %s7458 = scalar_lea.vmem [#allocation11], 64
        %v7459 = vld [vmem:[%s7458] sm:$0xf]
        %v7460 = vld [vmem:[%s7458 + $0x4] sm:$0xf]
        %v7461 = vld [vmem:[%s7458 + $0x8] sm:$0xf]
        %v7462 = vld [vmem:[%s7458 + $0xc] sm:$0xf]
        %v7471 = vunpack.c.l.b16 %v7100
        %v7472 = vunpack.c.l.b16 %v7101
        %v7473 = vunpack.c.l.b16 %v7102
        %v7474 = vunpack.c.l.b16 %v7103
        %v7475 = vunpack.c.l.b16 %v7104
        %v7476 = vunpack.c.l.b16 %v7105
        %v7477 = vunpack.c.l.b16 %v7106
        %v7478 = vunpack.c.l.b16 %v7279
        %v7479 = vpack.c.b16 %v7472, %v7471
        %v7480 = vpack.c.b16 %v7474, %v7473
        %v7481 = vpack.c.b16 %v7476, %v7475
        %v7482 = vpack.c.b16 %v7478, %v7477
        %v7487 = vunpack.c.l.b16 %v7459
        %v7488 = vunpack.c.l.b16 %v7460
        %v7489 = vunpack.c.l.b16 %v7461
        %v7490 = vunpack.c.l.b16 %v7462
        %v7491 = vpack.c.b16 %v7488, %v7487
        %v7492 = vpack.c.b16 %v7490, %v7489
        %v7496 = vsel %vm2379, %v7479, 0
        %v7499 = vsel %vm2379, %v7480, 0
        %v7502 = vsel %vm2379, %v7481, 0
        %v7505 = vsel %vm2379, %v7482, 0
        %7507 = vmatprep.subr.bf16.mxu0 0
        %7508 = vmatpush1.bf16.msra.mxu0 0
        %7509 = vmatprep.subr.bf16.mxu0 0
        %7510 = vmatpush1.bf16.msra.mxu0 0
        %7511 = vmatprep.subr.bf16.mxu0 0
        %7512 = vmatpush1.bf16.msra.mxu0 0
        %7513 = vmatprep.subr.bf16.mxu0 0
        %7514 = vmatpush1.bf16.msra.mxu0 0
        %7515 = vmatprep.subr.bf16.mxu0 0
        %7516 = vmatpush1.bf16.msra.mxu0 0
        %7517 = vmatprep.subr.bf16.mxu0 0
        %7518 = vmatpush1.bf16.msra.mxu0 0
        %7519 = vmatprep.subr.bf16.mxu0 0
        %7520 = vmatpush1.bf16.msra.mxu0 %v7492
        %7521 = vmatprep.subr.bf16.mxu0 0
        %7522 = vmatpush1.bf16.msra.mxu0 %v7491
        %7523 = vmatprep.subr.bf16.mxu0 0
        %7524 = vmatpush2.bf16.msra.mxu0 0
        %7525 = vmatprep.subr.bf16.mxu0 0
        %7526 = vmatpush2.bf16.msra.mxu0 0
        %7527 = vmatprep.subr.bf16.mxu0 0
        %7528 = vmatpush2.bf16.msra.mxu0 0
        %7529 = vmatprep.subr.bf16.mxu0 0
        %7530 = vmatpush2.bf16.msra.mxu0 0
        %7531 = vmatprep.subr.bf16.mxu0 0
        %7532 = vmatpush2.bf16.msra.mxu0 0
        %7533 = vmatprep.subr.bf16.mxu0 0
        %7534 = vmatpush2.bf16.msra.mxu0 0
        %7535 = vmatprep.subr.bf16.mxu0 0
        %7536 = vmatpush2.bf16.msra.mxu0 0
        %7537 = vmatprep.subr.bf16.mxu0 0
        %7538 = vmatpush2.bf16.msra.mxu0 0
        %7539 = vmatprep.mubr.bf16.mxu0 0
        %7540 = vmatmul.mubr.bf16.gmra.mxu0 %v7496
        %v7541 = vpop.f32.mrf.mxu0
        %v7542 = vadd.f32 0.0, %v7541
        %v7543 = vpop.f32.mrf.mxu0
        %v7544 = vpop.f32.mrf.mxu0
        %v7545 = vadd.f32 0.0, %v7544
        %v7546 = vpop.f32.mrf.mxu0
        %7547 = vmatprep.mubr.bf16.mxu0 0
        %7548 = vmatmul.mubr.bf16.gmra.mxu0 %v7499
        %v7549 = vpop.f32.mrf.mxu0
        %v7550 = vadd.f32 0.0, %v7549
        %v7551 = vpop.f32.mrf.mxu0
        %v7552 = vpop.f32.mrf.mxu0
        %v7553 = vadd.f32 0.0, %v7552
        %v7554 = vpop.f32.mrf.mxu0
        %7555 = vmatprep.mubr.bf16.mxu0 0
        %7556 = vmatmul.mubr.bf16.gmra.mxu0 %v7502
        %v7557 = vpop.f32.mrf.mxu0
        %v7558 = vadd.f32 0.0, %v7557
        %v7559 = vpop.f32.mrf.mxu0
        %v7560 = vpop.f32.mrf.mxu0
        %v7561 = vadd.f32 0.0, %v7560
        %v7562 = vpop.f32.mrf.mxu0
        %7563 = vmatprep.mubr.bf16.mxu0 0
        %7564 = vmatmul.mubr.bf16.gmra.mxu0 %v7505
        %v7565 = vpop.f32.mrf.mxu0
        %v7566 = vadd.f32 0.0, %v7565
        %v7567 = vpop.f32.mrf.mxu0
        %v7568 = vpop.f32.mrf.mxu0
        %v7569 = vadd.f32 0.0, %v7568
        %v7570 = vpop.f32.mrf.mxu0
        %7571 = vdwg.mxu0
        %v7572 = vadd.f32 %v7450, %v7542
        %v7573 = vadd.f32 %v7451, %v7545
        %v7574 = vadd.f32 %v7452, %v7550
        %v7575 = vadd.f32 %v7453, %v7553
        %v7576 = vadd.f32 %v7454, %v7558
        %v7577 = vadd.f32 %v7455, %v7561
        %v7578 = vadd.f32 %v7456, %v7566
        %v7579 = vadd.f32 %v7457, %v7569
        %v7580 = vld [vmem:[#allocation4 + $0x8] sm:$0xf]
        %v7581 = vld [vmem:[#allocation4 + $0xc] sm:$0xf]
        %v7582 = vld [vmem:[#allocation4 + $0x10] sm:$0xf]
        %v7583 = vld [vmem:[#allocation4 + $0x14] sm:$0xf]
        %v7584 = vld [vmem:[#allocation4 + $0x18] sm:$0xf]
        %v7585 = vld [vmem:[#allocation4 + $0x1c] sm:$0xf]
        %v7586 = vld [vmem:[#allocation4 + $0x20] sm:$0xf]
        %v7587 = vld [vmem:[#allocation4 + $0x24] sm:$0xf]
        %v7588 = vld [vmem:[#allocation4 + $0x28] sm:$0x1]
        %v7589 = vsel %vm1137, %v7580, 0
        %v7590 = vsel %vm1138, %v7581, 0
        %v7591 = vsel %vm1139, %v7582, 0
        %v7592 = vsel %vm1140, %v7583, 0
        %v7593 = vsel %vm1141, %v7584, 0
        %v7594 = vsel %vm1142, %v7585, 0
        %v7595 = vsel %vm1143, %v7586, 0
        %v7596 = vsel %vm1144, %v7587, 0
        %v7597 = vsel %vm1145, %v7588, 0
        %s7598 = scalar_lea.vmem [#allocation11], 80
        %v7599 = vld [vmem:[%s7598] sm:$0xf]
        %v7600 = vld [vmem:[%s7598 + $0x4] sm:$0xf]
        %v7601 = vld [vmem:[%s7598 + $0x8] sm:$0xf]
        %v7602 = vld [vmem:[%s7598 + $0xc] sm:$0xf]
        %v7612 = vunpack.c.l.b16 %v7589
        %v7613 = vunpack.c.l.b16 %v7590
        %v7614 = vunpack.c.l.b16 %v7591
        %v7615 = vunpack.c.l.b16 %v7592
        %v7616 = vunpack.c.l.b16 %v7593
        %v7617 = vunpack.c.l.b16 %v7594
        %v7618 = vunpack.c.l.b16 %v7595
        %v7619 = vunpack.c.l.b16 %v7596
        %v7620 = vunpack.c.l.b16 %v7597
        %v7621 = vpack.c.b16 %v7613, %v7612
        %v7622 = vpack.c.b16 %v7615, %v7614
        %v7623 = vpack.c.b16 %v7617, %v7616
        %v7624 = vpack.c.b16 %v7619, %v7618
        %v7625 = vpack.c.b16 %v7620, %v7620
        %v7627 = vshrl.u32 %v7621, 16
        %v7629 = vshll.u32 %v7621, 16
        %v7631 = vrot.slane %v7629, 1
        %v7632 = vor.u32 %v7627, %v7631
        %v7634 = vshll.u32 %v7622, 16
        %v7636 = vrot.slane %v7634, 1
        %v7637 = vsel %vm1181, %v7632, %v7636
        %v7638 = vshrl.u32 %v7622, 16
        %v7640 = vor.u32 %v7638, %v7636
        %v7642 = vshll.u32 %v7623, 16
        %v7644 = vrot.slane %v7642, 1
        %v7645 = vsel %vm1181, %v7640, %v7644
        %v7646 = vshrl.u32 %v7623, 16
        %v7648 = vor.u32 %v7646, %v7644
        %v7650 = vshll.u32 %v7624, 16
        %v7652 = vrot.slane %v7650, 1
        %v7653 = vsel %vm1181, %v7648, %v7652
        %v7654 = vshrl.u32 %v7624, 16
        %v7656 = vor.u32 %v7654, %v7652
        %v7658 = vshll.u32 %v7625, 16
        %v7660 = vrot.slane %v7658, 1
        %v7661 = vsel %vm1181, %v7656, %v7660
        %v7666 = vunpack.c.l.b16 %v7599
        %v7667 = vunpack.c.l.b16 %v7600
        %v7668 = vunpack.c.l.b16 %v7601
        %v7669 = vunpack.c.l.b16 %v7602
        %v7670 = vpack.c.b16 %v7667, %v7666
        %v7671 = vpack.c.b16 %v7669, %v7668
        %v7675 = vsel %vm2379, %v7637, 0
        %v7678 = vsel %vm2379, %v7645, 0
        %v7681 = vsel %vm2379, %v7653, 0
        %v7684 = vsel %vm2379, %v7661, 0
        %7686 = vmatprep.subr.bf16.mxu0 0
        %7687 = vmatpush1.bf16.msra.mxu0 0
        %7688 = vmatprep.subr.bf16.mxu0 0
        %7689 = vmatpush1.bf16.msra.mxu0 0
        %7690 = vmatprep.subr.bf16.mxu0 0
        %7691 = vmatpush1.bf16.msra.mxu0 0
        %7692 = vmatprep.subr.bf16.mxu0 0
        %7693 = vmatpush1.bf16.msra.mxu0 0
        %7694 = vmatprep.subr.bf16.mxu0 0
        %7695 = vmatpush1.bf16.msra.mxu0 0
        %7696 = vmatprep.subr.bf16.mxu0 0
        %7697 = vmatpush1.bf16.msra.mxu0 0
        %7698 = vmatprep.subr.bf16.mxu0 0
        %7699 = vmatpush1.bf16.msra.mxu0 %v7671
        %7700 = vmatprep.subr.bf16.mxu0 0
        %7701 = vmatpush1.bf16.msra.mxu0 %v7670
        %7702 = vmatprep.subr.bf16.mxu0 0
        %7703 = vmatpush2.bf16.msra.mxu0 0
        %7704 = vmatprep.subr.bf16.mxu0 0
        %7705 = vmatpush2.bf16.msra.mxu0 0
        %7706 = vmatprep.subr.bf16.mxu0 0
        %7707 = vmatpush2.bf16.msra.mxu0 0
        %7708 = vmatprep.subr.bf16.mxu0 0
        %7709 = vmatpush2.bf16.msra.mxu0 0
        %7710 = vmatprep.subr.bf16.mxu0 0
        %7711 = vmatpush2.bf16.msra.mxu0 0
        %7712 = vmatprep.subr.bf16.mxu0 0
        %7713 = vmatpush2.bf16.msra.mxu0 0
        %7714 = vmatprep.subr.bf16.mxu0 0
        %7715 = vmatpush2.bf16.msra.mxu0 0
        %7716 = vmatprep.subr.bf16.mxu0 0
        %7717 = vmatpush2.bf16.msra.mxu0 0
        %7718 = vmatprep.mubr.bf16.mxu0 0
        %7719 = vmatmul.mubr.bf16.gmra.mxu0 %v7675
        %v7720 = vpop.f32.mrf.mxu0
        %v7721 = vadd.f32 0.0, %v7720
        %v7722 = vpop.f32.mrf.mxu0
        %v7723 = vpop.f32.mrf.mxu0
        %v7724 = vadd.f32 0.0, %v7723
        %v7725 = vpop.f32.mrf.mxu0
        %7726 = vmatprep.mubr.bf16.mxu0 0
        %7727 = vmatmul.mubr.bf16.gmra.mxu0 %v7678
        %v7728 = vpop.f32.mrf.mxu0
        %v7729 = vadd.f32 0.0, %v7728
        %v7730 = vpop.f32.mrf.mxu0
        %v7731 = vpop.f32.mrf.mxu0
        %v7732 = vadd.f32 0.0, %v7731
        %v7733 = vpop.f32.mrf.mxu0
        %7734 = vmatprep.mubr.bf16.mxu0 0
        %7735 = vmatmul.mubr.bf16.gmra.mxu0 %v7681
        %v7736 = vpop.f32.mrf.mxu0
        %v7737 = vadd.f32 0.0, %v7736
        %v7738 = vpop.f32.mrf.mxu0
        %v7739 = vpop.f32.mrf.mxu0
        %v7740 = vadd.f32 0.0, %v7739
        %v7741 = vpop.f32.mrf.mxu0
        %7742 = vmatprep.mubr.bf16.mxu0 0
        %7743 = vmatmul.mubr.bf16.gmra.mxu0 %v7684
        %v7744 = vpop.f32.mrf.mxu0
        %v7745 = vadd.f32 0.0, %v7744
        %v7746 = vpop.f32.mrf.mxu0
        %v7747 = vpop.f32.mrf.mxu0
        %v7748 = vadd.f32 0.0, %v7747
        %v7749 = vpop.f32.mrf.mxu0
        %7750 = vdwg.mxu0
        %v7751 = vadd.f32 %v7572, %v7721
        %v7752 = vadd.f32 %v7573, %v7724
        %v7753 = vadd.f32 %v7574, %v7729
        %v7754 = vadd.f32 %v7575, %v7732
        %v7755 = vadd.f32 %v7576, %v7737
        %v7756 = vadd.f32 %v7577, %v7740
        %v7757 = vadd.f32 %v7578, %v7745
        %v7758 = vadd.f32 %v7579, %v7748
        %v7759 = vld [vmem:[#allocation4 + $0x8] sm:$0x8]
        %v7760 = vld [vmem:[#allocation4 + $0x28] sm:$0xf]
        %v7761 = vsel %vm728, %v7759, 0
        %v7762 = vsel %vm729, %v7581, 0
        %v7763 = vsel %vm730, %v7582, 0
        %v7764 = vsel %vm731, %v7583, 0
        %v7765 = vsel %vm732, %v7584, 0
        %v7766 = vsel %vm733, %v7585, 0
        %v7767 = vsel %vm734, %v7586, 0
        %v7768 = vsel %vm735, %v7587, 0
        %v7769 = vsel %vm736, %v7760, 0
        %s7770 = scalar_lea.vmem [#allocation11], 96
        %v7771 = vld [vmem:[%s7770] sm:$0xf]
        %v7772 = vld [vmem:[%s7770 + $0x4] sm:$0xf]
        %v7773 = vld [vmem:[%s7770 + $0x8] sm:$0xf]
        %v7774 = vld [vmem:[%s7770 + $0xc] sm:$0xf]
        %v7784 = vunpack.c.l.b16 %v7761
        %v7785 = vunpack.c.l.b16 %v7762
        %v7786 = vunpack.c.l.b16 %v7763
        %v7787 = vunpack.c.l.b16 %v7764
        %v7788 = vunpack.c.l.b16 %v7765
        %v7789 = vunpack.c.l.b16 %v7766
        %v7790 = vunpack.c.l.b16 %v7767
        %v7791 = vunpack.c.l.b16 %v7768
        %v7792 = vunpack.c.l.b16 %v7769
        %v7793 = vpack.c.b16 %v7785, %v7784
        %v7794 = vpack.c.b16 %v7787, %v7786
        %v7795 = vpack.c.b16 %v7789, %v7788
        %v7796 = vpack.c.b16 %v7791, %v7790
        %v7797 = vpack.c.b16 %v7792, %v7792
        %v7799 = vshrl.u32 %v7793, 16
        %v7801 = vrot.slane %v7799, 3
        %v7802 = vshll.u32 %v7793, 16
        %v7804 = vrot.slane %v7802, 4
        %v7805 = vor.u32 %v7801, %v7804
        %v7807 = vshrl.u32 %v7794, 16
        %v7809 = vrot.slane %v7807, 3
        %v7810 = vshll.u32 %v7794, 16
        %v7812 = vrot.slane %v7810, 4
        %v7813 = vor.u32 %v7809, %v7812
        %v7814 = vsel %vm771, %v7805, %v7813
        %v7816 = vshrl.u32 %v7795, 16
        %v7818 = vrot.slane %v7816, 3
        %v7819 = vshll.u32 %v7795, 16
        %v7821 = vrot.slane %v7819, 4
        %v7822 = vor.u32 %v7818, %v7821
        %v7823 = vsel %vm771, %v7813, %v7822
        %v7825 = vshrl.u32 %v7796, 16
        %v7827 = vrot.slane %v7825, 3
        %v7828 = vshll.u32 %v7796, 16
        %v7830 = vrot.slane %v7828, 4
        %v7831 = vor.u32 %v7827, %v7830
        %v7832 = vsel %vm771, %v7822, %v7831
        %v7834 = vshrl.u32 %v7797, 16
        %v7836 = vrot.slane %v7834, 3
        %v7837 = vshll.u32 %v7797, 16
        %v7839 = vrot.slane %v7837, 4
        %v7840 = vor.u32 %v7836, %v7839
        %v7841 = vsel %vm771, %v7831, %v7840
        %v7846 = vunpack.c.l.b16 %v7771
        %v7847 = vunpack.c.l.b16 %v7772
        %v7848 = vunpack.c.l.b16 %v7773
        %v7849 = vunpack.c.l.b16 %v7774
        %v7850 = vpack.c.b16 %v7847, %v7846
        %v7851 = vpack.c.b16 %v7849, %v7848
        %v7855 = vsel %vm2379, %v7814, 0
        %v7858 = vsel %vm2379, %v7823, 0
        %v7861 = vsel %vm2379, %v7832, 0
        %v7864 = vsel %vm2379, %v7841, 0
        %7866 = vmatprep.subr.bf16.mxu0 0
        %7867 = vmatpush1.bf16.msra.mxu0 0
        %7868 = vmatprep.subr.bf16.mxu0 0
        %7869 = vmatpush1.bf16.msra.mxu0 0
        %7870 = vmatprep.subr.bf16.mxu0 0
        %7871 = vmatpush1.bf16.msra.mxu0 0
        %7872 = vmatprep.subr.bf16.mxu0 0
        %7873 = vmatpush1.bf16.msra.mxu0 0
        %7874 = vmatprep.subr.bf16.mxu0 0
        %7875 = vmatpush1.bf16.msra.mxu0 0
        %7876 = vmatprep.subr.bf16.mxu0 0
        %7877 = vmatpush1.bf16.msra.mxu0 0
        %7878 = vmatprep.subr.bf16.mxu0 0
        %7879 = vmatpush1.bf16.msra.mxu0 %v7851
        %7880 = vmatprep.subr.bf16.mxu0 0
        %7881 = vmatpush1.bf16.msra.mxu0 %v7850
        %7882 = vmatprep.subr.bf16.mxu0 0
        %7883 = vmatpush2.bf16.msra.mxu0 0
        %7884 = vmatprep.subr.bf16.mxu0 0
        %7885 = vmatpush2.bf16.msra.mxu0 0
        %7886 = vmatprep.subr.bf16.mxu0 0
        %7887 = vmatpush2.bf16.msra.mxu0 0
        %7888 = vmatprep.subr.bf16.mxu0 0
        %7889 = vmatpush2.bf16.msra.mxu0 0
        %7890 = vmatprep.subr.bf16.mxu0 0
        %7891 = vmatpush2.bf16.msra.mxu0 0
        %7892 = vmatprep.subr.bf16.mxu0 0
        %7893 = vmatpush2.bf16.msra.mxu0 0
        %7894 = vmatprep.subr.bf16.mxu0 0
        %7895 = vmatpush2.bf16.msra.mxu0 0
        %7896 = vmatprep.subr.bf16.mxu0 0
        %7897 = vmatpush2.bf16.msra.mxu0 0
        %7898 = vmatprep.mubr.bf16.mxu0 0
        %7899 = vmatmul.mubr.bf16.gmra.mxu0 %v7855
        %v7900 = vpop.f32.mrf.mxu0
        %v7901 = vadd.f32 0.0, %v7900
        %v7902 = vpop.f32.mrf.mxu0
        %v7903 = vpop.f32.mrf.mxu0
        %v7904 = vadd.f32 0.0, %v7903
        %v7905 = vpop.f32.mrf.mxu0
        %7906 = vmatprep.mubr.bf16.mxu0 0
        %7907 = vmatmul.mubr.bf16.gmra.mxu0 %v7858
        %v7908 = vpop.f32.mrf.mxu0
        %v7909 = vadd.f32 0.0, %v7908
        %v7910 = vpop.f32.mrf.mxu0
        %v7911 = vpop.f32.mrf.mxu0
        %v7912 = vadd.f32 0.0, %v7911
        %v7913 = vpop.f32.mrf.mxu0
        %7914 = vmatprep.mubr.bf16.mxu0 0
        %7915 = vmatmul.mubr.bf16.gmra.mxu0 %v7861
        %v7916 = vpop.f32.mrf.mxu0
        %v7917 = vadd.f32 0.0, %v7916
        %v7918 = vpop.f32.mrf.mxu0
        %v7919 = vpop.f32.mrf.mxu0
        %v7920 = vadd.f32 0.0, %v7919
        %v7921 = vpop.f32.mrf.mxu0
        %7922 = vmatprep.mubr.bf16.mxu0 0
        %7923 = vmatmul.mubr.bf16.gmra.mxu0 %v7864
        %v7924 = vpop.f32.mrf.mxu0
        %v7925 = vadd.f32 0.0, %v7924
        %v7926 = vpop.f32.mrf.mxu0
        %v7927 = vpop.f32.mrf.mxu0
        %v7928 = vadd.f32 0.0, %v7927
        %v7929 = vpop.f32.mrf.mxu0
        %7930 = vdwg.mxu0
        %v7931 = vadd.f32 %v7751, %v7901
        %v7932 = vadd.f32 %v7752, %v7904
        %v7933 = vadd.f32 %v7753, %v7909
        %v7934 = vadd.f32 %v7754, %v7912
        %v7935 = vadd.f32 %v7755, %v7917
        %v7936 = vadd.f32 %v7756, %v7920
        %v7937 = vadd.f32 %v7757, %v7925
        %v7938 = vadd.f32 %v7758, %v7928
        %s7939 = scalar_lea.vmem [#allocation11], 112
        %v7940 = vld [vmem:[%s7939] sm:$0xf]
        %v7941 = vld [vmem:[%s7939 + $0x4] sm:$0xf]
        %v7942 = vld [vmem:[%s7939 + $0x8] sm:$0xf]
        %v7943 = vld [vmem:[%s7939 + $0xc] sm:$0xf]
        %v7952 = vunpack.c.l.b16 %v7581
        %v7953 = vunpack.c.l.b16 %v7582
        %v7954 = vunpack.c.l.b16 %v7583
        %v7955 = vunpack.c.l.b16 %v7584
        %v7956 = vunpack.c.l.b16 %v7585
        %v7957 = vunpack.c.l.b16 %v7586
        %v7958 = vunpack.c.l.b16 %v7587
        %v7959 = vunpack.c.l.b16 %v7760
        %v7960 = vpack.c.b16 %v7953, %v7952
        %v7961 = vpack.c.b16 %v7955, %v7954
        %v7962 = vpack.c.b16 %v7957, %v7956
        %v7963 = vpack.c.b16 %v7959, %v7958
        %v7968 = vunpack.c.l.b16 %v7940
        %v7969 = vunpack.c.l.b16 %v7941
        %v7970 = vunpack.c.l.b16 %v7942
        %v7971 = vunpack.c.l.b16 %v7943
        %v7972 = vpack.c.b16 %v7969, %v7968
        %v7973 = vpack.c.b16 %v7971, %v7970
        %v7977 = vsel %vm2379, %v7960, 0
        %v7980 = vsel %vm2379, %v7961, 0
        %v7983 = vsel %vm2379, %v7962, 0
        %v7986 = vsel %vm2379, %v7963, 0
        %7988 = vmatprep.subr.bf16.mxu0 0
        %7989 = vmatpush1.bf16.msra.mxu0 0
        %7990 = vmatprep.subr.bf16.mxu0 0
        %7991 = vmatpush1.bf16.msra.mxu0 0
        %7992 = vmatprep.subr.bf16.mxu0 0
        %7993 = vmatpush1.bf16.msra.mxu0 0
        %7994 = vmatprep.subr.bf16.mxu0 0
        %7995 = vmatpush1.bf16.msra.mxu0 0
        %7996 = vmatprep.subr.bf16.mxu0 0
        %7997 = vmatpush1.bf16.msra.mxu0 0
        %7998 = vmatprep.subr.bf16.mxu0 0
        %7999 = vmatpush1.bf16.msra.mxu0 0
        %8000 = vmatprep.subr.bf16.mxu0 0
        %8001 = vmatpush1.bf16.msra.mxu0 %v7973
        %8002 = vmatprep.subr.bf16.mxu0 0
        %8003 = vmatpush1.bf16.msra.mxu0 %v7972
        %8004 = vmatprep.subr.bf16.mxu0 0
        %8005 = vmatpush2.bf16.msra.mxu0 0
        %8006 = vmatprep.subr.bf16.mxu0 0
        %8007 = vmatpush2.bf16.msra.mxu0 0
        %8008 = vmatprep.subr.bf16.mxu0 0
        %8009 = vmatpush2.bf16.msra.mxu0 0
        %8010 = vmatprep.subr.bf16.mxu0 0
        %8011 = vmatpush2.bf16.msra.mxu0 0
        %8012 = vmatprep.subr.bf16.mxu0 0
        %8013 = vmatpush2.bf16.msra.mxu0 0
        %8014 = vmatprep.subr.bf16.mxu0 0
        %8015 = vmatpush2.bf16.msra.mxu0 0
        %8016 = vmatprep.subr.bf16.mxu0 0
        %8017 = vmatpush2.bf16.msra.mxu0 0
        %8018 = vmatprep.subr.bf16.mxu0 0
        %8019 = vmatpush2.bf16.msra.mxu0 0
        %8020 = vmatprep.mubr.bf16.mxu0 0
        %8021 = vmatmul.mubr.bf16.gmra.mxu0 %v7977
        %v8022 = vpop.f32.mrf.mxu0
        %v8023 = vadd.f32 0.0, %v8022
        %v8024 = vpop.f32.mrf.mxu0
        %v8025 = vpop.f32.mrf.mxu0
        %v8026 = vadd.f32 0.0, %v8025
        %v8027 = vpop.f32.mrf.mxu0
        %8028 = vmatprep.mubr.bf16.mxu0 0
        %8029 = vmatmul.mubr.bf16.gmra.mxu0 %v7980
        %v8030 = vpop.f32.mrf.mxu0
        %v8031 = vadd.f32 0.0, %v8030
        %v8032 = vpop.f32.mrf.mxu0
        %v8033 = vpop.f32.mrf.mxu0
        %v8034 = vadd.f32 0.0, %v8033
        %v8035 = vpop.f32.mrf.mxu0
        %8036 = vmatprep.mubr.bf16.mxu0 0
        %8037 = vmatmul.mubr.bf16.gmra.mxu0 %v7983
        %v8038 = vpop.f32.mrf.mxu0
        %v8039 = vadd.f32 0.0, %v8038
        %v8040 = vpop.f32.mrf.mxu0
        %v8041 = vpop.f32.mrf.mxu0
        %v8042 = vadd.f32 0.0, %v8041
        %v8043 = vpop.f32.mrf.mxu0
        %8044 = vmatprep.mubr.bf16.mxu0 0
        %8045 = vmatmul.mubr.bf16.gmra.mxu0 %v7986
        %v8046 = vpop.f32.mrf.mxu0
        %v8047 = vadd.f32 0.0, %v8046
        %v8048 = vpop.f32.mrf.mxu0
        %v8049 = vpop.f32.mrf.mxu0
        %v8050 = vadd.f32 0.0, %v8049
        %v8051 = vpop.f32.mrf.mxu0
        %8052 = vdwg.mxu0
        %v8053 = vadd.f32 %v7931, %v8023
        %v8054 = vadd.f32 %v7932, %v8026
        %v8055 = vadd.f32 %v7933, %v8031
        %v8056 = vadd.f32 %v7934, %v8034
        %v8057 = vadd.f32 %v7935, %v8039
        %v8058 = vadd.f32 %v7936, %v8042
        %v8059 = vadd.f32 %v7937, %v8047
        %v8060 = vadd.f32 %v7938, %v8050
        %v8061 = vld [vmem:[#allocation4 + $0xc] sm:$0xf]
        %v8062 = vld [vmem:[#allocation4 + $0x10] sm:$0xf]
        %v8063 = vld [vmem:[#allocation4 + $0x14] sm:$0xf]
        %v8064 = vld [vmem:[#allocation4 + $0x18] sm:$0xf]
        %v8065 = vld [vmem:[#allocation4 + $0x1c] sm:$0xf]
        %v8066 = vld [vmem:[#allocation4 + $0x20] sm:$0xf]
        %v8067 = vld [vmem:[#allocation4 + $0x24] sm:$0xf]
        %v8068 = vld [vmem:[#allocation4 + $0x28] sm:$0xf]
        %v8069 = vld [vmem:[#allocation4 + $0x2c] sm:$0x1]
        %v8070 = vsel %vm1137, %v8061, 0
        %v8071 = vsel %vm1138, %v8062, 0
        %v8072 = vsel %vm1139, %v8063, 0
        %v8073 = vsel %vm1140, %v8064, 0
        %v8074 = vsel %vm1141, %v8065, 0
        %v8075 = vsel %vm1142, %v8066, 0
        %v8076 = vsel %vm1143, %v8067, 0
        %v8077 = vsel %vm1144, %v8068, 0
        %v8078 = vsel %vm1145, %v8069, 0
        %s8079 = scalar_lea.vmem [#allocation11], 128
        %v8080 = vld [vmem:[%s8079] sm:$0xf]
        %v8081 = vld [vmem:[%s8079 + $0x4] sm:$0xf]
        %v8082 = vld [vmem:[%s8079 + $0x8] sm:$0xf]
        %v8083 = vld [vmem:[%s8079 + $0xc] sm:$0xf]
        %v8093 = vunpack.c.l.b16 %v8070
        %v8094 = vunpack.c.l.b16 %v8071
        %v8095 = vunpack.c.l.b16 %v8072
        %v8096 = vunpack.c.l.b16 %v8073
        %v8097 = vunpack.c.l.b16 %v8074
        %v8098 = vunpack.c.l.b16 %v8075
        %v8099 = vunpack.c.l.b16 %v8076
        %v8100 = vunpack.c.l.b16 %v8077
        %v8101 = vunpack.c.l.b16 %v8078
        %v8102 = vpack.c.b16 %v8094, %v8093
        %v8103 = vpack.c.b16 %v8096, %v8095
        %v8104 = vpack.c.b16 %v8098, %v8097
        %v8105 = vpack.c.b16 %v8100, %v8099
        %v8106 = vpack.c.b16 %v8101, %v8101
        %v8108 = vshrl.u32 %v8102, 16
        %v8110 = vshll.u32 %v8102, 16
        %v8112 = vrot.slane %v8110, 1
        %v8113 = vor.u32 %v8108, %v8112
        %v8115 = vshll.u32 %v8103, 16
        %v8117 = vrot.slane %v8115, 1
        %v8118 = vsel %vm1181, %v8113, %v8117
        %v8119 = vshrl.u32 %v8103, 16
        %v8121 = vor.u32 %v8119, %v8117
        %v8123 = vshll.u32 %v8104, 16
        %v8125 = vrot.slane %v8123, 1
        %v8126 = vsel %vm1181, %v8121, %v8125
        %v8127 = vshrl.u32 %v8104, 16
        %v8129 = vor.u32 %v8127, %v8125
        %v8131 = vshll.u32 %v8105, 16
        %v8133 = vrot.slane %v8131, 1
        %v8134 = vsel %vm1181, %v8129, %v8133
        %v8135 = vshrl.u32 %v8105, 16
        %v8137 = vor.u32 %v8135, %v8133
        %v8139 = vshll.u32 %v8106, 16
        %v8141 = vrot.slane %v8139, 1
        %v8142 = vsel %vm1181, %v8137, %v8141
        %v8147 = vunpack.c.l.b16 %v8080
        %v8148 = vunpack.c.l.b16 %v8081
        %v8149 = vunpack.c.l.b16 %v8082
        %v8150 = vunpack.c.l.b16 %v8083
        %v8151 = vpack.c.b16 %v8148, %v8147
        %v8152 = vpack.c.b16 %v8150, %v8149
        %v8156 = vsel %vm2379, %v8118, 0
        %v8159 = vsel %vm2379, %v8126, 0
        %v8162 = vsel %vm2379, %v8134, 0
        %v8165 = vsel %vm2379, %v8142, 0
        %8167 = vmatprep.subr.bf16.mxu0 0
        %8168 = vmatpush1.bf16.msra.mxu0 0
        %8169 = vmatprep.subr.bf16.mxu0 0
        %8170 = vmatpush1.bf16.msra.mxu0 0
        %8171 = vmatprep.subr.bf16.mxu0 0
        %8172 = vmatpush1.bf16.msra.mxu0 0
        %8173 = vmatprep.subr.bf16.mxu0 0
        %8174 = vmatpush1.bf16.msra.mxu0 0
        %8175 = vmatprep.subr.bf16.mxu0 0
        %8176 = vmatpush1.bf16.msra.mxu0 0
        %8177 = vmatprep.subr.bf16.mxu0 0
        %8178 = vmatpush1.bf16.msra.mxu0 0
        %8179 = vmatprep.subr.bf16.mxu0 0
        %8180 = vmatpush1.bf16.msra.mxu0 %v8152
        %8181 = vmatprep.subr.bf16.mxu0 0
        %8182 = vmatpush1.bf16.msra.mxu0 %v8151
        %8183 = vmatprep.subr.bf16.mxu0 0
        %8184 = vmatpush2.bf16.msra.mxu0 0
        %8185 = vmatprep.subr.bf16.mxu0 0
        %8186 = vmatpush2.bf16.msra.mxu0 0
        %8187 = vmatprep.subr.bf16.mxu0 0
        %8188 = vmatpush2.bf16.msra.mxu0 0
        %8189 = vmatprep.subr.bf16.mxu0 0
        %8190 = vmatpush2.bf16.msra.mxu0 0
        %8191 = vmatprep.subr.bf16.mxu0 0
        %8192 = vmatpush2.bf16.msra.mxu0 0
        %8193 = vmatprep.subr.bf16.mxu0 0
        %8194 = vmatpush2.bf16.msra.mxu0 0
        %8195 = vmatprep.subr.bf16.mxu0 0
        %8196 = vmatpush2.bf16.msra.mxu0 0
        %8197 = vmatprep.subr.bf16.mxu0 0
        %8198 = vmatpush2.bf16.msra.mxu0 0
        %8199 = vmatprep.mubr.bf16.mxu0 0
        %8200 = vmatmul.mubr.bf16.gmra.mxu0 %v8156
        %v8201 = vpop.f32.mrf.mxu0
        %v8202 = vadd.f32 0.0, %v8201
        %v8203 = vpop.f32.mrf.mxu0
        %v8204 = vpop.f32.mrf.mxu0
        %v8205 = vadd.f32 0.0, %v8204
        %v8206 = vpop.f32.mrf.mxu0
        %8207 = vmatprep.mubr.bf16.mxu0 0
        %8208 = vmatmul.mubr.bf16.gmra.mxu0 %v8159
        %v8209 = vpop.f32.mrf.mxu0
        %v8210 = vadd.f32 0.0, %v8209
        %v8211 = vpop.f32.mrf.mxu0
        %v8212 = vpop.f32.mrf.mxu0
        %v8213 = vadd.f32 0.0, %v8212
        %v8214 = vpop.f32.mrf.mxu0
        %8215 = vmatprep.mubr.bf16.mxu0 0
        %8216 = vmatmul.mubr.bf16.gmra.mxu0 %v8162
        %v8217 = vpop.f32.mrf.mxu0
        %v8218 = vadd.f32 0.0, %v8217
        %v8219 = vpop.f32.mrf.mxu0
        %v8220 = vpop.f32.mrf.mxu0
        %v8221 = vadd.f32 0.0, %v8220
        %v8222 = vpop.f32.mrf.mxu0
        %8223 = vmatprep.mubr.bf16.mxu0 0
        %8224 = vmatmul.mubr.bf16.gmra.mxu0 %v8165
        %v8225 = vpop.f32.mrf.mxu0
        %v8226 = vadd.f32 0.0, %v8225
        %v8227 = vpop.f32.mrf.mxu0
        %v8228 = vpop.f32.mrf.mxu0
        %v8229 = vadd.f32 0.0, %v8228
        %v8230 = vpop.f32.mrf.mxu0
        %8231 = vdwg.mxu0
        %v8232 = vadd.f32 %v8053, %v8202
        %v8233 = vadd.f32 %v8054, %v8205
        %v8234 = vadd.f32 %v8055, %v8210
        %v8235 = vadd.f32 %v8056, %v8213
        %v8236 = vadd.f32 %v8057, %v8218
        %v8237 = vadd.f32 %v8058, %v8221
        %v8238 = vadd.f32 %v8059, %v8226
        %v8239 = vadd.f32 %v8060, %v8229
        %8240 = vst [vmem:[%s438] sm:$0xff] %v8232
        %8241 = vst [vmem:[%s438 + $0x8] sm:$0xff] %v8233
        %8242 = vst [vmem:[%s438 + $0x10] sm:$0xff] %v8234
        %8243 = vst [vmem:[%s438 + $0x18] sm:$0xff] %v8235
        %8244 = vst [vmem:[%s438 + $0x20] sm:$0xff] %v8236
        %8245 = vst [vmem:[%s438 + $0x28] sm:$0xff] %v8237
        %8246 = vst [vmem:[%s438 + $0x30] sm:$0xff] %v8238
        %8247 = vst [vmem:[%s438 + $0x38] sm:$0xff] %v8239
        %s8248 = sand.u32 %s272, 1
        %s8249 = scalar_lea.sflag [#allocation7], %s8248
        %s8250 = sand.u32 %s272, 1
        %s8251 = smul.addr %s8250, 64
        %s8252 = scalar_lea.vmem [#allocation13], %s8251
        // Predicated region
        $region81: #{tpu_custom_call.1} parent=63 // pred_check
          %p8253 = pneg %p282
        $region82: #{tpu_custom_call.1} parent=63 // pred_check_branch
          %8255 = sbr.rel (%p8253) target = $region84
        $region83: #{tpu_custom_call.1} parent=63 // pred_region
          %s8257 = ssub.s32 1024, 1024
          %8258 = vsyncadd %s8249, %s8257
          %s8259 = smul.addr %s28, 8
          %s8260 = smul.addr %s8259, 128
          %s8261 = scalar_lea.hbm %s11, %s8260
          %s8262 = sshll.u32 %s8252, 4
          %s8263 = int_to_ptr.vmem [resolvable:$true] %s8262
          %8268 = dma.vmem_to_hbm [thread:$0]  %s8263, 1024, %s8261, %s8249, 128, 128, 8
        $region84: #{tpu_custom_call.1} parent=63 // pred_fallthru
          _
      $region64: #{tpu_custom_call.1} parent=5 // pred_fallthru
        _
      %p8269 = scmp.le.s32.totalorder 2, %s23
      // Predicated region
      $region85: #{tpu_custom_call.1} parent=5 // pred_check
        %p8270 = pneg %p8269
      $region86: #{tpu_custom_call.1} parent=5 // pred_check_branch
        %8272 = sbr.rel (%p8270) target = $region88
      $region87: #{tpu_custom_call.1} parent=5 // pred_region
        %s8273 = ssub.s32 %s23, 2
        // Predicated region
        $region89: #{tpu_custom_call.1} parent=87 // pred_check
          %p8274 = pneg %p288
        $region90: #{tpu_custom_call.1} parent=87 // pred_check_branch
          %8276 = sbr.rel (%p8274) target = $region92
        $region91: #{tpu_custom_call.1} parent=87 // pred_region
          %s8277 = sand.u32 %s273, 1
          %s8278 = scalar_lea.sflag [#allocation7], %s8277
          %s8279 = sand.u32 %s273, 1
          %s8280 = smul.addr %s8279, 64
          %s8281 = scalar_lea.vmem [#allocation13], %s8280
          %8282 = dma.done %s8278, 1024
        $region92: #{tpu_custom_call.1} parent=87 // pred_fallthru
          _
      $region88: #{tpu_custom_call.1} parent=5 // pred_fallthru
        _
    $region6: #{tpu_custom_call.1} parent=1 // loop_footer
      %s27 = sadd.s32 1, %s23
    $region7: #{tpu_custom_call.1} parent=1 // loop_footer_branch
      %22 = sbr.rel target = $region3
    $region8: #{tpu_custom_call.1} parent=1 // loop_exit
      _
    %8283 = vsyncpa [#allocation6], 1
    %s8284 = scalar_lea.sflag [#allocation6], 1
    %8285 = vsyncpa %s8284, 1
    %8286 = vsyncpa [#allocation9], 1
    %8287 = vsyncpa [#allocation12], 1
    %8288 = vsyncpa [#allocation7], 1
    %s8289 = scalar_lea.sflag [#allocation7], 1
    %8290 = vsyncpa %s8289, 1

</llo_original>
